<compile_context>
chip_gen: v7x
topology: tpu7x:2x2x1
jax: 0.10.0
libtpu: 0.0.40
codegen_flags: <defaults>
</compile_context>

<pallas_src>
import jax
import jax.numpy as jnp
from jax.experimental import pallas as pl
from jax.experimental.pallas import tpu as pltpu

# Scoped-VMEM ceiling: <=~48-56 MiB keeps headroom on v7x (64 MiB/TC); v5e/v6e could go higher.
VMEM_LIMIT_BYTES = 48 * 1024 * 1024


def _vmem():
    return pl.BlockSpec(memory_space=pltpu.MemorySpace.VMEM)


def _const_spec(shape):
    # full-array block, constant index_map -> stays VMEM-resident across grid steps
    return pl.BlockSpec(shape, lambda *_: (0,) * len(shape))


def _softmax_last(x):
    m = jnp.max(x, axis=-1, keepdims=True)
    e = jnp.exp(x - m)
    return e * pl.reciprocal(jnp.sum(e, axis=-1, keepdims=True), approx=True)


def _dot_t(p, q):
    # p @ q^T without materializing a transpose (MXU-native contraction)
    return jax.lax.dot_general(p, q, (((1,), (1,)), ((), ())),
                               preferred_element_type=jnp.float32)


# ----------------------------- fused bidirectional LSTM -----------------------------

def bilstm_kernel(x_ref, lens_ref,
                  wih_f_ref, whh_f_ref, b_f_ref,
                  wih_b_ref, whh_b_ref, b_b_ref,
                  out_f_ref, out_b_ref):
    """x_ref: (T*B, D) bf16, time-major flat (row = t*B + b).  Outputs (T, B, H) f32.

    Forward & backward directions share one unrolled time loop; packed-sequence
    semantics via zeroing (h, c) and the per-step output at padded steps.
    """
    T, B, H = out_f_ref.shape

    # ---- hoisted input projection: ONE big matmul per gate per direction ----
    x2 = x_ref[...]                                                   # (T*B, D) bf16
    def proj(wih_ref, b_ref):
        return [jnp.dot(x2, wih_ref[k], preferred_element_type=jnp.float32) + b_ref[k]
                for k in range(4)]                                    # gate order [i, f, g, o]
    gx_f = proj(wih_f_ref, b_f_ref)                                   # 4 x (T*B, H) f32
    gx_b = proj(wih_b_ref, b_b_ref)

    # lens stays a VMEM vector (it is used as a vector mask, not as scalars)
    lens = lens_ref[...]                                              # (B, 1) int32

    def cell(gx, t, h, c, whh_ref, valid):
        hb = h.astype(jnp.bfloat16)
        r0 = t * B                                                    # static, 8-aligned slab
        def gate(k):
            return gx[k][r0:r0 + B, :] + jnp.dot(
                hb, whh_ref[k], preferred_element_type=jnp.float32)
        i = jax.nn.sigmoid(gate(0))
        f = jax.nn.sigmoid(gate(1))
        g = jnp.tanh(gate(2))
        o = jax.nn.sigmoid(gate(3))
        c = jnp.where(valid, f * c + i * g, 0.0)
        h = jnp.where(valid, o * jnp.tanh(c), 0.0)
        return h, c

    zeros = jnp.zeros((B, H), jnp.float32)
    h_f = c_f = h_b = c_b = zeros
    # T is small & static here -> full unroll (LLO visibility).
    # TODO(synk): production T -> lax.fori_loop(unroll=2..4) + VMEM scratch for gx.
    for t in range(T):
        tb = T - 1 - t
        h_f, c_f = cell(gx_f, t, h_f, c_f, whh_f_ref, lens > t)
        h_b, c_b = cell(gx_b, tb, h_b, c_b, whh_b_ref, lens > tb)
        out_f_ref[t] = h_f                                            # dense (B, H) store
        out_b_ref[tb] = h_b


def bilstm(x_tm, lens, p_fwd, p_bwd):
    """x_tm: (T, B, D) bf16 time-major, lens: (B, 1) int32 -> two (T, B, H) f32 outputs."""
    T, B, D = x_tm.shape
    H = p_fwd["whh"].shape[-1]
    x2 = x_tm.reshape(T * B, D)                     # free leading-dim reshape in HBM
    return pl.pallas_call(
        bilstm_kernel,
        out_shape=(jax.ShapeDtypeStruct((T, B, H), jnp.float32),
                   jax.ShapeDtypeStruct((T, B, H), jnp.float32)),
        in_specs=[_vmem()] * 8,
        out_specs=(_vmem(), _vmem()),
        compiler_params=pltpu.CompilerParams(vmem_limit_bytes=VMEM_LIMIT_BYTES),
    )(x2, lens, p_fwd["wih"], p_fwd["whh"], p_fwd["b"],
      p_bwd["wih"], p_bwd["whh"], p_bwd["b"])


# ----------------------------- cross attention -----------------------------

def cross_attn_kernel(lens_ref, enc_f_ref, enc_b_ref, w_ref, bias_ref, out_ref):
    """One (text_a, text_b) pair per grid step.

    enc_*_ref: (2, 1, T, H) bf16 (index 0 = a, 1 = b; fwd/bwd halves in separate refs,
    so no materialized [fwd;bwd] concat).  lens_ref: (2, Bp) int32 in SMEM.
    """
    i = pl.program_id(0)
    T = enc_f_ref.shape[2]

    a_f = enc_f_ref[0, 0]; a_b = enc_b_ref[0, 0]          # (T, H) bf16
    b_f = enc_f_ref[1, 0]; b_b = enc_b_ref[1, 0]
    len_a = lens_ref[0, i]
    len_b = lens_ref[1, i]

    # both score orientations via MXU matmuls -> every softmax reduces along lanes
    s = _dot_t(a_f, b_f) + _dot_t(a_b, b_b)               # (Ta, Tb) f32
    sT = _dot_t(b_f, a_f) + _dot_t(b_b, a_b)              # (Tb, Ta) f32

    kiota = jax.lax.broadcasted_iota(jnp.int32, (1, T), 1)
    row_attn = _softmax_last(jnp.where(kiota < len_b, s, -1e9)).astype(jnp.bfloat16)
    col_attn = _softmax_last(jnp.where(kiota < len_a, sT, -1e9)).astype(jnp.bfloat16)

    attn_a_f = jnp.dot(row_attn, b_f, preferred_element_type=jnp.float32)
    attn_a_b = jnp.dot(row_attn, b_b, preferred_element_type=jnp.float32)
    attn_b_f = jnp.dot(col_attn, a_f, preferred_element_type=jnp.float32)
    attn_b_b = jnp.dot(col_attn, a_b, preferred_element_type=jnp.float32)

    def mm(x, k):
        return jnp.dot(x.astype(jnp.bfloat16), w_ref[k],
                       preferred_element_type=jnp.float32)

    a_f32, a_b32 = a_f.astype(jnp.float32), a_b.astype(jnp.float32)
    b_f32, b_b32 = b_f.astype(jnp.float32), b_b.astype(jnp.float32)
    diff_a_f, diff_a_b = a_f32 - attn_a_f, a_b32 - attn_a_b
    prod_a_f, prod_a_b = a_f32 * attn_a_f, a_b32 * attn_a_b
    diff_b_f, diff_b_b = b_f32 - attn_b_f, b_b32 - attn_b_b
    bias = bias_ref[...]

    # blocked dense: concat([x, attn, diff, prod], -1) @ W == sum_k x_k @ W_k
    out_a = jnp.maximum(
        mm(a_f, 0) + mm(a_b, 1) + mm(attn_a_f, 2) + mm(attn_a_b, 3)
        + mm(diff_a_f, 4) + mm(diff_a_b, 5) + mm(prod_a_f, 6) + mm(prod_a_b, 7)
        + bias, 0.0)
    # reference concatenates diff_b TWICE for the b-side (no prod_b) -- reproduced as-is
    out_b = jnp.maximum(
        mm(b_f, 0) + mm(b_b, 1) + mm(attn_b_f, 2) + mm(attn_b_b, 3)
        + mm(diff_b_f, 4) + mm(diff_b_b, 5) + mm(diff_b_f, 6) + mm(diff_b_b, 7)
        + bias, 0.0)

    out_ref[0, 0] = out_a
    out_ref[1, 0] = out_b


def cross_attention(enc_f, enc_b, lens2, w_blocks, bias):
    """enc_f/enc_b: (2, Bp, T, H) bf16; lens2: (2, Bp) int32 -> (2, Bp, T, Hc) f32."""
    _, Bp, T, H = enc_f.shape
    Hc = w_blocks.shape[-1]
    enc_spec = pl.BlockSpec((2, 1, T, H), lambda i: (0, i, 0, 0))
    return pl.pallas_call(
        cross_attn_kernel,
        out_shape=jax.ShapeDtypeStruct((2, Bp, T, Hc), jnp.float32),
        grid=(Bp,),
        in_specs=[pl.BlockSpec(memory_space=pltpu.MemorySpace.SMEM),   # lens (scalar use)
                  enc_spec, enc_spec,
                  _const_spec(w_blocks.shape), _const_spec(bias.shape)],
        out_specs=pl.BlockSpec((2, 1, T, Hc), lambda i: (0, i, 0, 0)),
        compiler_params=pltpu.CompilerParams(
            dimension_semantics=("parallel",),          # free 2x on v7x's two TCs
            vmem_limit_bytes=VMEM_LIMIT_BYTES),
    )(lens2, enc_f, enc_b, w_blocks, bias)


# ----------------------------- pool + classifier -----------------------------

def pool_classify_kernel(dec_f_ref, dec_b_ref, lens_ref,
                         w1_ref, b1_ref, w2_ref, b2_ref, o_ref):
    # decoder outputs are exactly zero at padded steps -> plain time-sum == masked sum
    inv = pl.reciprocal(jnp.maximum(lens_ref[...].astype(jnp.float32), 1.0),
                        approx=True)                                   # (2, Bp, 1)
    mean_f = jnp.sum(dec_f_ref[...], axis=0) * inv                     # (2, Bp, H)
    mean_b = jnp.sum(dec_b_ref[...], axis=0) * inv

    va_f, vb_f = mean_f[0], mean_f[1]                                  # (Bp, H)
    va_b, vb_b = mean_b[0], mean_b[1]

    def mm(x, w):
        return jnp.dot(x.astype(jnp.bfloat16), w, preferred_element_type=jnp.float32)

    # pooled = [vec_a_fwd, vec_a_bwd, vec_b_fwd, vec_b_bwd]  -> blocked dense1
    h1 = jnp.tanh(mm(va_f, w1_ref[0]) + mm(va_b, w1_ref[1])
                  + mm(vb_f, w1_ref[2]) + mm(vb_b, w1_ref[3]) + b1_ref[...])
    o_ref[...] = mm(h1, w2_ref[...]) + b2_ref[...]


def pool_and_classify(dec_f, dec_b, lens3, w1, b1, w2, b2):
    Bp = dec_f.shape[2]
    num_labels = w2.shape[-1]
    return pl.pallas_call(
        pool_classify_kernel,
        out_shape=jax.ShapeDtypeStruct((Bp, num_labels), jnp.float32),
        in_specs=[_vmem()] * 7,
        out_specs=_vmem(),
        compiler_params=pltpu.CompilerParams(vmem_limit_bytes=VMEM_LIMIT_BYTES),
    )(dec_f, dec_b, lens3, w1, b1, w2, b2)


# ----------------------------- parameters & forward -----------------------------

def init_params(key, vocab_size, in_feat, num_labels):
    H = in_feat
    ks = jax.random.split(key, 8)

    def normal(k, shape, scale=0.1):
        return jax.random.normal(k, shape, jnp.float32) * scale

    def lstm_dir(k, din, h):
        k1, k2, k3 = jax.random.split(k, 3)
        return dict(
            wih=normal(k1, (4, din, h)).astype(jnp.bfloat16),   # per-gate blocks of W_ih^T
            whh=normal(k2, (4, h, h)).astype(jnp.bfloat16),     # per-gate blocks of W_hh^T
            b=normal(k3, (4, 1, h)))                            # b_ih + b_hh (f32)

    emb = normal(ks[0], (vocab_size, H))
    emb = emb.at[0].set(0.0)                                     # padding_idx = 0

    params = dict(
        emb=emb,
        enc_f=lstm_dir(ks[1], H, H), enc_b=lstm_dir(ks[2], H, H),   # shared encoder BiLSTM
        dec_f=lstm_dir(ks[3], H, H), dec_b=lstm_dir(ks[4], H, H),   # shared decoder BiLSTM
    )
    kw, kb = jax.random.split(ks[5])
    # CrossAttention Linear(4*2H, H): 8 per-half row blocks [x_f,x_b,attn_f,attn_b,diff_f,diff_b,prod_f,prod_b]
    params["ca_w"] = normal(kw, (8, H, H)).astype(jnp.bfloat16)
    params["ca_b"] = normal(kb, (1, H))
    kw1, kb1 = jax.random.split(ks[6])
    # Classifier dense1 Linear(4H, 2H): blocks over [a_fwd, a_bwd, b_fwd, b_bwd]
    params["cls_w1"] = normal(kw1, (4, H, 2 * H)).astype(jnp.bfloat16)
    params["cls_b1"] = normal(kb1, (1, 2 * H))
    kw2, kb2 = jax.random.split(ks[7])
    params["cls_w2"] = normal(kw2, (2 * H, num_labels)).astype(jnp.bfloat16)
    params["cls_b2"] = normal(kb2, (1, num_labels))
    return params


def semattn_forward(params, ids_a, ids_b, mask_a, mask_b):
    B, T = ids_a.shape
    H = params["emb"].shape[-1]
    # pad the pair batch so the fused batch (2*Bp) is a multiple of 8 (sublane-dense slabs)
    Bp = ((B + 3) // 4) * 4
    pad = Bp - B

    lens_a = jnp.pad(jnp.sum(mask_a.astype(jnp.int32), axis=-1), (0, pad))   # (Bp,)
    lens_b = jnp.pad(jnp.sum(mask_b.astype(jnp.int32), axis=-1), (0, pad))
    ids_a_p = jnp.pad(ids_a, ((0, pad), (0, 0)))                              # pad rows -> token 0
    ids_b_p = jnp.pad(ids_b, ((0, pad), (0, 0)))

    lens = jnp.concatenate([lens_a, lens_b], 0).reshape(2 * Bp, 1)            # fused (2Bp, 1)
    lens2 = jnp.stack([lens_a, lens_b], 0)                                    # (2, Bp) for CA / pool

    # text_a / text_b share all weights -> fuse along the batch axis; build time-major bf16 input.
    ids = jnp.concatenate([ids_a_p, ids_b_p], axis=0)                         # (2Bp, T)
    x_tm = params["emb"][ids.T].astype(jnp.bfloat16)                          # (T, 2Bp, H)

    enc_f, enc_b = bilstm(x_tm, lens, params["enc_f"], params["enc_b"])       # (T, 2Bp, H) f32 x2

    def to_pairs(y):   # (T, 2Bp, H) -> (2, Bp, T, H) bf16  (wrapper-side layout plumbing)
        return jnp.transpose(y, (1, 0, 2)).reshape(2, Bp, T, H).astype(jnp.bfloat16)

    ca = cross_attention(to_pairs(enc_f), to_pairs(enc_b), lens2,
                         params["ca_w"], params["ca_b"])                      # (2, Bp, T, H) f32

    ca_tm = jnp.transpose(ca.reshape(2 * Bp, T, H), (1, 0, 2)).astype(jnp.bfloat16)
    dec_f, dec_b = bilstm(ca_tm, lens, params["dec_f"], params["dec_b"])      # (T, 2Bp, H) f32 x2

    logits = pool_and_classify(dec_f.reshape(T, 2, Bp, H),
                               dec_b.reshape(T, 2, Bp, H),
                               lens2.reshape(2, Bp, 1),
                               params["cls_w1"], params["cls_b1"],
                               params["cls_w2"], params["cls_b2"])            # (Bp, num_labels)
    return logits[:B]


# ----------------------------- main -----------------------------

if __name__ == "__main__":
    B, T, H, vocab, num_labels = 2, 8, 16, 50, 3

    key = jax.random.PRNGKey(0)
    pkey, ikey_a, ikey_b = jax.random.split(key, 3)
    params = init_params(pkey, vocab, H, num_labels)

    lens_a = jnp.array([T, 5], dtype=jnp.int32)
    lens_b = jnp.array([T, 6], dtype=jnp.int32)
    pos = jnp.arange(T)
    mask_a = (pos[None, :] < lens_a[:, None]).astype(jnp.float32)   # (B, T) prefix masks
    mask_b = (pos[None, :] < lens_b[:, None]).astype(jnp.float32)

    ids_a = jax.random.randint(ikey_a, (B, T), 1, vocab) * mask_a.astype(jnp.int32)
    ids_b = jax.random.randint(ikey_b, (B, T), 1, vocab) * mask_b.astype(jnp.int32)

    logits = jax.jit(semattn_forward)(params, ids_a, ids_b, mask_a, mask_b)
    jax.block_until_ready(logits)
    assert logits.shape == (B, num_labels)
    print("KERNEL_OK")
</pallas_src>

<mosaic_0001>
module attributes {stable_mosaic.version = 11 : i64} {
  func.func @bilstm_kernel(%arg0: memref<64x16xbf16, #tpu.memory_space<vmem>>, %arg1: memref<8x1xi32, #tpu.memory_space<vmem>>, %arg2: memref<4x16x16xbf16, #tpu.memory_space<vmem>>, %arg3: memref<4x16x16xbf16, #tpu.memory_space<vmem>>, %arg4: memref<4x1x16xf32, #tpu.memory_space<vmem>>, %arg5: memref<4x16x16xbf16, #tpu.memory_space<vmem>>, %arg6: memref<4x16x16xbf16, #tpu.memory_space<vmem>>, %arg7: memref<4x1x16xf32, #tpu.memory_space<vmem>>, %arg8: memref<8x8x16xf32, #tpu.memory_space<vmem>>, %arg9: memref<8x8x16xf32, #tpu.memory_space<vmem>>) attributes {dimension_semantics = [], scalar_prefetch = 0 : i64, scratch_operands = 0 : i64, tpu.core_type = #tpu.core_type<tc>} {
    %c0 = arith.constant 0 : index
    %c0_0 = arith.constant 0 : index
    %0 = vector.load %arg0[%c0, %c0_0] : memref<64x16xbf16, #tpu.memory_space<vmem>>, vector<64x16xbf16>
    %c0_1 = arith.constant 0 : index
    %c0_2 = arith.constant 0 : index
    %c0_3 = arith.constant 0 : index
    %1 = vector.load %arg2[%c0_1, %c0_2, %c0_3] : memref<4x16x16xbf16, #tpu.memory_space<vmem>>, vector<1x16x16xbf16>
    %2 = vector.shape_cast %1 : vector<1x16x16xbf16> to vector<16x16xbf16>
    %cst = arith.constant dense<0.000000e+00> : vector<64x16xf32>
    %3 = tpu.matmul %0, %2, %cst {dimension_numbers = #tpu.dot_dimension_numbers<[1], [0], [0], [1], [0, 0, 1, 1], [], []>} : vector<64x16xbf16>, vector<16x16xbf16>, vector<64x16xf32> -> vector<64x16xf32>
    %c0_4 = arith.constant 0 : index
    %c0_5 = arith.constant 0 : index
    %c0_6 = arith.constant 0 : index
    %4 = vector.load %arg4[%c0_4, %c0_5, %c0_6] : memref<4x1x16xf32, #tpu.memory_space<vmem>>, vector<1x1x16xf32>
    %5 = vector.shape_cast %4 : vector<1x1x16xf32> to vector<1x16xf32>
    %6 = vector.broadcast %5 : vector<1x16xf32> to vector<64x16xf32>
    %7 = arith.addf %3, %6 : vector<64x16xf32>
    %c1 = arith.constant 1 : index
    %c0_7 = arith.constant 0 : index
    %c0_8 = arith.constant 0 : index
    %8 = vector.load %arg2[%c1, %c0_7, %c0_8] : memref<4x16x16xbf16, #tpu.memory_space<vmem>>, vector<1x16x16xbf16>
    %9 = vector.shape_cast %8 : vector<1x16x16xbf16> to vector<16x16xbf16>
    %cst_9 = arith.constant dense<0.000000e+00> : vector<64x16xf32>
    %10 = tpu.matmul %0, %9, %cst_9 {dimension_numbers = #tpu.dot_dimension_numbers<[1], [0], [0], [1], [0, 0, 1, 1], [], []>} : vector<64x16xbf16>, vector<16x16xbf16>, vector<64x16xf32> -> vector<64x16xf32>
    %c1_10 = arith.constant 1 : index
    %c0_11 = arith.constant 0 : index
    %c0_12 = arith.constant 0 : index
    %11 = vector.load %arg4[%c1_10, %c0_11, %c0_12] : memref<4x1x16xf32, #tpu.memory_space<vmem>>, vector<1x1x16xf32>
    %12 = vector.shape_cast %11 : vector<1x1x16xf32> to vector<1x16xf32>
    %13 = vector.broadcast %12 : vector<1x16xf32> to vector<64x16xf32>
    %14 = arith.addf %10, %13 : vector<64x16xf32>
    %c2 = arith.constant 2 : index
    %c0_13 = arith.constant 0 : index
    %c0_14 = arith.constant 0 : index
    %15 = vector.load %arg2[%c2, %c0_13, %c0_14] : memref<4x16x16xbf16, #tpu.memory_space<vmem>>, vector<1x16x16xbf16>
    %16 = vector.shape_cast %15 : vector<1x16x16xbf16> to vector<16x16xbf16>
    %cst_15 = arith.constant dense<0.000000e+00> : vector<64x16xf32>
    %17 = tpu.matmul %0, %16, %cst_15 {dimension_numbers = #tpu.dot_dimension_numbers<[1], [0], [0], [1], [0, 0, 1, 1], [], []>} : vector<64x16xbf16>, vector<16x16xbf16>, vector<64x16xf32> -> vector<64x16xf32>
    %c2_16 = arith.constant 2 : index
    %c0_17 = arith.constant 0 : index
    %c0_18 = arith.constant 0 : index
    %18 = vector.load %arg4[%c2_16, %c0_17, %c0_18] : memref<4x1x16xf32, #tpu.memory_space<vmem>>, vector<1x1x16xf32>
    %19 = vector.shape_cast %18 : vector<1x1x16xf32> to vector<1x16xf32>
    %20 = vector.broadcast %19 : vector<1x16xf32> to vector<64x16xf32>
    %21 = arith.addf %17, %20 : vector<64x16xf32>
    %c3 = arith.constant 3 : index
    %c0_19 = arith.constant 0 : index
    %c0_20 = arith.constant 0 : index
    %22 = vector.load %arg2[%c3, %c0_19, %c0_20] : memref<4x16x16xbf16, #tpu.memory_space<vmem>>, vector<1x16x16xbf16>
    %23 = vector.shape_cast %22 : vector<1x16x16xbf16> to vector<16x16xbf16>
    %cst_21 = arith.constant dense<0.000000e+00> : vector<64x16xf32>
    %24 = tpu.matmul %0, %23, %cst_21 {dimension_numbers = #tpu.dot_dimension_numbers<[1], [0], [0], [1], [0, 0, 1, 1], [], []>} : vector<64x16xbf16>, vector<16x16xbf16>, vector<64x16xf32> -> vector<64x16xf32>
    %c3_22 = arith.constant 3 : index
    %c0_23 = arith.constant 0 : index
    %c0_24 = arith.constant 0 : index
    %25 = vector.load %arg4[%c3_22, %c0_23, %c0_24] : memref<4x1x16xf32, #tpu.memory_space<vmem>>, vector<1x1x16xf32>
    %26 = vector.shape_cast %25 : vector<1x1x16xf32> to vector<1x16xf32>
    %27 = vector.broadcast %26 : vector<1x16xf32> to vector<64x16xf32>
    %28 = arith.addf %24, %27 : vector<64x16xf32>
    %c0_25 = arith.constant 0 : index
    %c0_26 = arith.constant 0 : index
    %c0_27 = arith.constant 0 : index
    %29 = vector.load %arg5[%c0_25, %c0_26, %c0_27] : memref<4x16x16xbf16, #tpu.memory_space<vmem>>, vector<1x16x16xbf16>
    %30 = vector.shape_cast %29 : vector<1x16x16xbf16> to vector<16x16xbf16>
    %cst_28 = arith.constant dense<0.000000e+00> : vector<64x16xf32>
    %31 = tpu.matmul %0, %30, %cst_28 {dimension_numbers = #tpu.dot_dimension_numbers<[1], [0], [0], [1], [0, 0, 1, 1], [], []>} : vector<64x16xbf16>, vector<16x16xbf16>, vector<64x16xf32> -> vector<64x16xf32>
    %c0_29 = arith.constant 0 : index
    %c0_30 = arith.constant 0 : index
    %c0_31 = arith.constant 0 : index
    %32 = vector.load %arg7[%c0_29, %c0_30, %c0_31] : memref<4x1x16xf32, #tpu.memory_space<vmem>>, vector<1x1x16xf32>
    %33 = vector.shape_cast %32 : vector<1x1x16xf32> to vector<1x16xf32>
    %34 = vector.broadcast %33 : vector<1x16xf32> to vector<64x16xf32>
    %35 = arith.addf %31, %34 : vector<64x16xf32>
    %c1_32 = arith.constant 1 : index
    %c0_33 = arith.constant 0 : index
    %c0_34 = arith.constant 0 : index
    %36 = vector.load %arg5[%c1_32, %c0_33, %c0_34] : memref<4x16x16xbf16, #tpu.memory_space<vmem>>, vector<1x16x16xbf16>
    %37 = vector.shape_cast %36 : vector<1x16x16xbf16> to vector<16x16xbf16>
    %cst_35 = arith.constant dense<0.000000e+00> : vector<64x16xf32>
    %38 = tpu.matmul %0, %37, %cst_35 {dimension_numbers = #tpu.dot_dimension_numbers<[1], [0], [0], [1], [0, 0, 1, 1], [], []>} : vector<64x16xbf16>, vector<16x16xbf16>, vector<64x16xf32> -> vector<64x16xf32>
    %c1_36 = arith.constant 1 : index
    %c0_37 = arith.constant 0 : index
    %c0_38 = arith.constant 0 : index
    %39 = vector.load %arg7[%c1_36, %c0_37, %c0_38] : memref<4x1x16xf32, #tpu.memory_space<vmem>>, vector<1x1x16xf32>
    %40 = vector.shape_cast %39 : vector<1x1x16xf32> to vector<1x16xf32>
    %41 = vector.broadcast %40 : vector<1x16xf32> to vector<64x16xf32>
    %42 = arith.addf %38, %41 : vector<64x16xf32>
    %c2_39 = arith.constant 2 : index
    %c0_40 = arith.constant 0 : index
    %c0_41 = arith.constant 0 : index
    %43 = vector.load %arg5[%c2_39, %c0_40, %c0_41] : memref<4x16x16xbf16, #tpu.memory_space<vmem>>, vector<1x16x16xbf16>
    %44 = vector.shape_cast %43 : vector<1x16x16xbf16> to vector<16x16xbf16>
    %cst_42 = arith.constant dense<0.000000e+00> : vector<64x16xf32>
    %45 = tpu.matmul %0, %44, %cst_42 {dimension_numbers = #tpu.dot_dimension_numbers<[1], [0], [0], [1], [0, 0, 1, 1], [], []>} : vector<64x16xbf16>, vector<16x16xbf16>, vector<64x16xf32> -> vector<64x16xf32>
    %c2_43 = arith.constant 2 : index
    %c0_44 = arith.constant 0 : index
    %c0_45 = arith.constant 0 : index
    %46 = vector.load %arg7[%c2_43, %c0_44, %c0_45] : memref<4x1x16xf32, #tpu.memory_space<vmem>>, vector<1x1x16xf32>
    %47 = vector.shape_cast %46 : vector<1x1x16xf32> to vector<1x16xf32>
    %48 = vector.broadcast %47 : vector<1x16xf32> to vector<64x16xf32>
    %49 = arith.addf %45, %48 : vector<64x16xf32>
    %c3_46 = arith.constant 3 : index
    %c0_47 = arith.constant 0 : index
    %c0_48 = arith.constant 0 : index
    %50 = vector.load %arg5[%c3_46, %c0_47, %c0_48] : memref<4x16x16xbf16, #tpu.memory_space<vmem>>, vector<1x16x16xbf16>
    %51 = vector.shape_cast %50 : vector<1x16x16xbf16> to vector<16x16xbf16>
    %cst_49 = arith.constant dense<0.000000e+00> : vector<64x16xf32>
    %52 = tpu.matmul %0, %51, %cst_49 {dimension_numbers = #tpu.dot_dimension_numbers<[1], [0], [0], [1], [0, 0, 1, 1], [], []>} : vector<64x16xbf16>, vector<16x16xbf16>, vector<64x16xf32> -> vector<64x16xf32>
    %c3_50 = arith.constant 3 : index
    %c0_51 = arith.constant 0 : index
    %c0_52 = arith.constant 0 : index
    %53 = vector.load %arg7[%c3_50, %c0_51, %c0_52] : memref<4x1x16xf32, #tpu.memory_space<vmem>>, vector<1x1x16xf32>
    %54 = vector.shape_cast %53 : vector<1x1x16xf32> to vector<1x16xf32>
    %55 = vector.broadcast %54 : vector<1x16xf32> to vector<64x16xf32>
    %56 = arith.addf %52, %55 : vector<64x16xf32>
    %c0_53 = arith.constant 0 : index
    %c0_54 = arith.constant 0 : index
    %57 = vector.load %arg1[%c0_53, %c0_54] : memref<8x1xi32, #tpu.memory_space<vmem>>, vector<8x1xi32>
    %cst_55 = arith.constant 0.000000e+00 : f32
    %58 = vector.broadcast %cst_55 : f32 to vector<8x16xf32>
    %c0_i32 = arith.constant 0 : i32
    %59 = vector.broadcast %c0_i32 : i32 to vector<8x1xi32>
    %60 = arith.cmpi sgt, %57, %59 : vector<8x1xi32>
    %61 = arith.truncf %58 : vector<8x16xf32> to vector<8x16xbf16>
    %62 = vector.extract_strided_slice %7 {offsets = [0, 0], sizes = [8, 16], strides = [1, 1]} : vector<64x16xf32> to vector<8x16xf32>
    %c0_56 = arith.constant 0 : index
    %c0_57 = arith.constant 0 : index
    %c0_58 = arith.constant 0 : index
    %63 = vector.load %arg3[%c0_56, %c0_57, %c0_58] : memref<4x16x16xbf16, #tpu.memory_space<vmem>>, vector<1x16x16xbf16>
    %64 = vector.shape_cast %63 : vector<1x16x16xbf16> to vector<16x16xbf16>
    %cst_59 = arith.constant dense<0.000000e+00> : vector<8x16xf32>
    %65 = tpu.matmul %61, %64, %cst_59 {dimension_numbers = #tpu.dot_dimension_numbers<[1], [0], [0], [1], [0, 0, 1, 1], [], []>} : vector<8x16xbf16>, vector<16x16xbf16>, vector<8x16xf32> -> vector<8x16xf32>
    %66 = arith.addf %62, %65 : vector<8x16xf32>
    %67 = arith.negf %66 : vector<8x16xf32>
    %68 = math.exp %67 : vector<8x16xf32>
    %cst_60 = arith.constant 1.000000e+00 : f32
    %69 = vector.broadcast %cst_60 : f32 to vector<8x16xf32>
    %70 = arith.addf %69, %68 : vector<8x16xf32>
    %71 = arith.divf %69, %70 : vector<8x16xf32>
    %72 = vector.extract_strided_slice %14 {offsets = [0, 0], sizes = [8, 16], strides = [1, 1]} : vector<64x16xf32> to vector<8x16xf32>
    %c1_61 = arith.constant 1 : index
    %c0_62 = arith.constant 0 : index
    %c0_63 = arith.constant 0 : index
    %73 = vector.load %arg3[%c1_61, %c0_62, %c0_63] : memref<4x16x16xbf16, #tpu.memory_space<vmem>>, vector<1x16x16xbf16>
    %74 = vector.shape_cast %73 : vector<1x16x16xbf16> to vector<16x16xbf16>
    %cst_64 = arith.constant dense<0.000000e+00> : vector<8x16xf32>
    %75 = tpu.matmul %61, %74, %cst_64 {dimension_numbers = #tpu.dot_dimension_numbers<[1], [0], [0], [1], [0, 0, 1, 1], [], []>} : vector<8x16xbf16>, vector<16x16xbf16>, vector<8x16xf32> -> vector<8x16xf32>
    %76 = arith.addf %72, %75 : vector<8x16xf32>
    %77 = arith.negf %76 : vector<8x16xf32>
    %78 = math.exp %77 : vector<8x16xf32>
    %cst_65 = arith.constant 1.000000e+00 : f32
    %79 = vector.broadcast %cst_65 : f32 to vector<8x16xf32>
    %80 = arith.addf %79, %78 : vector<8x16xf32>
    %81 = arith.divf %79, %80 : vector<8x16xf32>
    %82 = vector.extract_strided_slice %21 {offsets = [0, 0], sizes = [8, 16], strides = [1, 1]} : vector<64x16xf32> to vector<8x16xf32>
    %c2_66 = arith.constant 2 : index
    %c0_67 = arith.constant 0 : index
    %c0_68 = arith.constant 0 : index
    %83 = vector.load %arg3[%c2_66, %c0_67, %c0_68] : memref<4x16x16xbf16, #tpu.memory_space<vmem>>, vector<1x16x16xbf16>
    %84 = vector.shape_cast %83 : vector<1x16x16xbf16> to vector<16x16xbf16>
    %cst_69 = arith.constant dense<0.000000e+00> : vector<8x16xf32>
    %85 = tpu.matmul %61, %84, %cst_69 {dimension_numbers = #tpu.dot_dimension_numbers<[1], [0], [0], [1], [0, 0, 1, 1], [], []>} : vector<8x16xbf16>, vector<16x16xbf16>, vector<8x16xf32> -> vector<8x16xf32>
    %86 = arith.addf %82, %85 : vector<8x16xf32>
    %87 = math.tanh %86 : vector<8x16xf32>
    %88 = vector.extract_strided_slice %28 {offsets = [0, 0], sizes = [8, 16], strides = [1, 1]} : vector<64x16xf32> to vector<8x16xf32>
    %c3_70 = arith.constant 3 : index
    %c0_71 = arith.constant 0 : index
    %c0_72 = arith.constant 0 : index
    %89 = vector.load %arg3[%c3_70, %c0_71, %c0_72] : memref<4x16x16xbf16, #tpu.memory_space<vmem>>, vector<1x16x16xbf16>
    %90 = vector.shape_cast %89 : vector<1x16x16xbf16> to vector<16x16xbf16>
    %cst_73 = arith.constant dense<0.000000e+00> : vector<8x16xf32>
    %91 = tpu.matmul %61, %90, %cst_73 {dimension_numbers = #tpu.dot_dimension_numbers<[1], [0], [0], [1], [0, 0, 1, 1], [], []>} : vector<8x16xbf16>, vector<16x16xbf16>, vector<8x16xf32> -> vector<8x16xf32>
    %92 = arith.addf %88, %91 : vector<8x16xf32>
    %93 = arith.negf %92 : vector<8x16xf32>
    %94 = math.exp %93 : vector<8x16xf32>
    %cst_74 = arith.constant 1.000000e+00 : f32
    %95 = vector.broadcast %cst_74 : f32 to vector<8x16xf32>
    %96 = arith.addf %95, %94 : vector<8x16xf32>
    %97 = arith.divf %95, %96 : vector<8x16xf32>
    %98 = arith.mulf %81, %58 : vector<8x16xf32>
    %99 = arith.mulf %71, %87 : vector<8x16xf32>
    %100 = arith.addf %98, %99 : vector<8x16xf32>
    %cst_75 = arith.constant 0.000000e+00 : f32
    %101 = vector.shape_cast %60 : vector<8x1xi1> to vector<8x1xi1>
    %102 = vector.broadcast %101 : vector<8x1xi1> to vector<8x16xi1>
    %103 = vector.broadcast %cst_75 : f32 to vector<8x16xf32>
    %104 = arith.select %102, %100, %103 : vector<8x16xi1>, vector<8x16xf32>
    %105 = math.tanh %104 : vector<8x16xf32>
    %106 = arith.mulf %97, %105 : vector<8x16xf32>
    %cst_76 = arith.constant 0.000000e+00 : f32
    %107 = vector.shape_cast %60 : vector<8x1xi1> to vector<8x1xi1>
    %108 = vector.broadcast %107 : vector<8x1xi1> to vector<8x16xi1>
    %109 = vector.broadcast %cst_76 : f32 to vector<8x16xf32>
    %110 = arith.select %108, %106, %109 : vector<8x16xi1>, vector<8x16xf32>
    %c7_i32 = arith.constant 7 : i32
    %111 = vector.broadcast %c7_i32 : i32 to vector<8x1xi32>
    %112 = arith.cmpi sgt, %57, %111 : vector<8x1xi32>
    %113 = arith.truncf %58 : vector<8x16xf32> to vector<8x16xbf16>
    %114 = vector.extract_strided_slice %35 {offsets = [56, 0], sizes = [8, 16], strides = [1, 1]} : vector<64x16xf32> to vector<8x16xf32>
    %c0_77 = arith.constant 0 : index
    %c0_78 = arith.constant 0 : index
    %c0_79 = arith.constant 0 : index
    %115 = vector.load %arg6[%c0_77, %c0_78, %c0_79] : memref<4x16x16xbf16, #tpu.memory_space<vmem>>, vector<1x16x16xbf16>
    %116 = vector.shape_cast %115 : vector<1x16x16xbf16> to vector<16x16xbf16>
    %cst_80 = arith.constant dense<0.000000e+00> : vector<8x16xf32>
    %117 = tpu.matmul %113, %116, %cst_80 {dimension_numbers = #tpu.dot_dimension_numbers<[1], [0], [0], [1], [0, 0, 1, 1], [], []>} : vector<8x16xbf16>, vector<16x16xbf16>, vector<8x16xf32> -> vector<8x16xf32>
    %118 = arith.addf %114, %117 : vector<8x16xf32>
    %119 = arith.negf %118 : vector<8x16xf32>
    %120 = math.exp %119 : vector<8x16xf32>
    %cst_81 = arith.constant 1.000000e+00 : f32
    %121 = vector.broadcast %cst_81 : f32 to vector<8x16xf32>
    %122 = arith.addf %121, %120 : vector<8x16xf32>
    %123 = arith.divf %121, %122 : vector<8x16xf32>
    %124 = vector.extract_strided_slice %42 {offsets = [56, 0], sizes = [8, 16], strides = [1, 1]} : vector<64x16xf32> to vector<8x16xf32>
    %c1_82 = arith.constant 1 : index
    %c0_83 = arith.constant 0 : index
    %c0_84 = arith.constant 0 : index
    %125 = vector.load %arg6[%c1_82, %c0_83, %c0_84] : memref<4x16x16xbf16, #tpu.memory_space<vmem>>, vector<1x16x16xbf16>
    %126 = vector.shape_cast %125 : vector<1x16x16xbf16> to vector<16x16xbf16>
    %cst_85 = arith.constant dense<0.000000e+00> : vector<8x16xf32>
    %127 = tpu.matmul %113, %126, %cst_85 {dimension_numbers = #tpu.dot_dimension_numbers<[1], [0], [0], [1], [0, 0, 1, 1], [], []>} : vector<8x16xbf16>, vector<16x16xbf16>, vector<8x16xf32> -> vector<8x16xf32>
    %128 = arith.addf %124, %127 : vector<8x16xf32>
    %129 = arith.negf %128 : vector<8x16xf32>
    %130 = math.exp %129 : vector<8x16xf32>
    %cst_86 = arith.constant 1.000000e+00 : f32
    %131 = vector.broadcast %cst_86 : f32 to vector<8x16xf32>
    %132 = arith.addf %131, %130 : vector<8x16xf32>
    %133 = arith.divf %131, %132 : vector<8x16xf32>
    %134 = vector.extract_strided_slice %49 {offsets = [56, 0], sizes = [8, 16], strides = [1, 1]} : vector<64x16xf32> to vector<8x16xf32>
    %c2_87 = arith.constant 2 : index
    %c0_88 = arith.constant 0 : index
    %c0_89 = arith.constant 0 : index
    %135 = vector.load %arg6[%c2_87, %c0_88, %c0_89] : memref<4x16x16xbf16, #tpu.memory_space<vmem>>, vector<1x16x16xbf16>
    %136 = vector.shape_cast %135 : vector<1x16x16xbf16> to vector<16x16xbf16>
    %cst_90 = arith.constant dense<0.000000e+00> : vector<8x16xf32>
    %137 = tpu.matmul %113, %136, %cst_90 {dimension_numbers = #tpu.dot_dimension_numbers<[1], [0], [0], [1], [0, 0, 1, 1], [], []>} : vector<8x16xbf16>, vector<16x16xbf16>, vector<8x16xf32> -> vector<8x16xf32>
    %138 = arith.addf %134, %137 : vector<8x16xf32>
    %139 = math.tanh %138 : vector<8x16xf32>
    %140 = vector.extract_strided_slice %56 {offsets = [56, 0], sizes = [8, 16], strides = [1, 1]} : vector<64x16xf32> to vector<8x16xf32>
    %c3_91 = arith.constant 3 : index
    %c0_92 = arith.constant 0 : index
    %c0_93 = arith.constant 0 : index
    %141 = vector.load %arg6[%c3_91, %c0_92, %c0_93] : memref<4x16x16xbf16, #tpu.memory_space<vmem>>, vector<1x16x16xbf16>
    %142 = vector.shape_cast %141 : vector<1x16x16xbf16> to vector<16x16xbf16>
    %cst_94 = arith.constant dense<0.000000e+00> : vector<8x16xf32>
    %143 = tpu.matmul %113, %142, %cst_94 {dimension_numbers = #tpu.dot_dimension_numbers<[1], [0], [0], [1], [0, 0, 1, 1], [], []>} : vector<8x16xbf16>, vector<16x16xbf16>, vector<8x16xf32> -> vector<8x16xf32>
    %144 = arith.addf %140, %143 : vector<8x16xf32>
    %145 = arith.negf %144 : vector<8x16xf32>
    %146 = math.exp %145 : vector<8x16xf32>
    %cst_95 = arith.constant 1.000000e+00 : f32
    %147 = vector.broadcast %cst_95 : f32 to vector<8x16xf32>
    %148 = arith.addf %147, %146 : vector<8x16xf32>
    %149 = arith.divf %147, %148 : vector<8x16xf32>
    %150 = arith.mulf %133, %58 : vector<8x16xf32>
    %151 = arith.mulf %123, %139 : vector<8x16xf32>
    %152 = arith.addf %150, %151 : vector<8x16xf32>
    %cst_96 = arith.constant 0.000000e+00 : f32
    %153 = vector.shape_cast %112 : vector<8x1xi1> to vector<8x1xi1>
    %154 = vector.broadcast %153 : vector<8x1xi1> to vector<8x16xi1>
    %155 = vector.broadcast %cst_96 : f32 to vector<8x16xf32>
    %156 = arith.select %154, %152, %155 : vector<8x16xi1>, vector<8x16xf32>
    %157 = math.tanh %156 : vector<8x16xf32>
    %158 = arith.mulf %149, %157 : vector<8x16xf32>
    %cst_97 = arith.constant 0.000000e+00 : f32
    %159 = vector.shape_cast %112 : vector<8x1xi1> to vector<8x1xi1>
    %160 = vector.broadcast %159 : vector<8x1xi1> to vector<8x16xi1>
    %161 = vector.broadcast %cst_97 : f32 to vector<8x16xf32>
    %162 = arith.select %160, %158, %161 : vector<8x16xi1>, vector<8x16xf32>
    %c0_98 = arith.constant 0 : index
    %c0_99 = arith.constant 0 : index
    %c0_100 = arith.constant 0 : index
    %163 = vector.load %arg8[%c0_98, %c0_99, %c0_100] : memref<8x8x16xf32, #tpu.memory_space<vmem>>, vector<1x8x16xf32>
    %164 = vector.shape_cast %163 : vector<1x8x16xf32> to vector<8x16xf32>
    %165 = vector.shape_cast %110 : vector<8x16xf32> to vector<1x8x16xf32>
    tpu.vector_store %arg8[%c0_98, %c0_99, %c0_100], %165 {strides = array<i32>} : memref<8x8x16xf32, #tpu.memory_space<vmem>>, vector<1x8x16xf32>,
    %c7 = arith.constant 7 : index
    %c0_101 = arith.constant 0 : index
    %c0_102 = arith.constant 0 : index
    %166 = vector.load %arg9[%c7, %c0_101, %c0_102] : memref<8x8x16xf32, #tpu.memory_space<vmem>>, vector<1x8x16xf32>
    %167 = vector.shape_cast %166 : vector<1x8x16xf32> to vector<8x16xf32>
    %168 = vector.shape_cast %162 : vector<8x16xf32> to vector<1x8x16xf32>
    tpu.vector_store %arg9[%c7, %c0_101, %c0_102], %168 {strides = array<i32>} : memref<8x8x16xf32, #tpu.memory_space<vmem>>, vector<1x8x16xf32>,
    %c1_i32 = arith.constant 1 : i32
    %169 = vector.broadcast %c1_i32 : i32 to vector<8x1xi32>
    %170 = arith.cmpi sgt, %57, %169 : vector<8x1xi32>
    %171 = arith.truncf %110 : vector<8x16xf32> to vector<8x16xbf16>
    %172 = vector.extract_strided_slice %7 {offsets = [8, 0], sizes = [8, 16], strides = [1, 1]} : vector<64x16xf32> to vector<8x16xf32>
    %c0_103 = arith.constant 0 : index
    %c0_104 = arith.constant 0 : index
    %c0_105 = arith.constant 0 : index
    %173 = vector.load %arg3[%c0_103, %c0_104, %c0_105] : memref<4x16x16xbf16, #tpu.memory_space<vmem>>, vector<1x16x16xbf16>
    %174 = vector.shape_cast %173 : vector<1x16x16xbf16> to vector<16x16xbf16>
    %cst_106 = arith.constant dense<0.000000e+00> : vector<8x16xf32>
    %175 = tpu.matmul %171, %174, %cst_106 {dimension_numbers = #tpu.dot_dimension_numbers<[1], [0], [0], [1], [0, 0, 1, 1], [], []>} : vector<8x16xbf16>, vector<16x16xbf16>, vector<8x16xf32> -> vector<8x16xf32>
    %176 = arith.addf %172, %175 : vector<8x16xf32>
    %177 = arith.negf %176 : vector<8x16xf32>
    %178 = math.exp %177 : vector<8x16xf32>
    %cst_107 = arith.constant 1.000000e+00 : f32
    %179 = vector.broadcast %cst_107 : f32 to vector<8x16xf32>
    %180 = arith.addf %179, %178 : vector<8x16xf32>
    %181 = arith.divf %179, %180 : vector<8x16xf32>
    %182 = vector.extract_strided_slice %14 {offsets = [8, 0], sizes = [8, 16], strides = [1, 1]} : vector<64x16xf32> to vector<8x16xf32>
    %c1_108 = arith.constant 1 : index
    %c0_109 = arith.constant 0 : index
    %c0_110 = arith.constant 0 : index
    %183 = vector.load %arg3[%c1_108, %c0_109, %c0_110] : memref<4x16x16xbf16, #tpu.memory_space<vmem>>, vector<1x16x16xbf16>
    %184 = vector.shape_cast %183 : vector<1x16x16xbf16> to vector<16x16xbf16>
    %cst_111 = arith.constant dense<0.000000e+00> : vector<8x16xf32>
    %185 = tpu.matmul %171, %184, %cst_111 {dimension_numbers = #tpu.dot_dimension_numbers<[1], [0], [0], [1], [0, 0, 1, 1], [], []>} : vector<8x16xbf16>, vector<16x16xbf16>, vector<8x16xf32> -> vector<8x16xf32>
    %186 = arith.addf %182, %185 : vector<8x16xf32>
    %187 = arith.negf %186 : vector<8x16xf32>
    %188 = math.exp %187 : vector<8x16xf32>
    %cst_112 = arith.constant 1.000000e+00 : f32
    %189 = vector.broadcast %cst_112 : f32 to vector<8x16xf32>
    %190 = arith.addf %189, %188 : vector<8x16xf32>
    %191 = arith.divf %189, %190 : vector<8x16xf32>
    %192 = vector.extract_strided_slice %21 {offsets = [8, 0], sizes = [8, 16], strides = [1, 1]} : vector<64x16xf32> to vector<8x16xf32>
    %c2_113 = arith.constant 2 : index
    %c0_114 = arith.constant 0 : index
    %c0_115 = arith.constant 0 : index
    %193 = vector.load %arg3[%c2_113, %c0_114, %c0_115] : memref<4x16x16xbf16, #tpu.memory_space<vmem>>, vector<1x16x16xbf16>
    %194 = vector.shape_cast %193 : vector<1x16x16xbf16> to vector<16x16xbf16>
    %cst_116 = arith.constant dense<0.000000e+00> : vector<8x16xf32>
    %195 = tpu.matmul %171, %194, %cst_116 {dimension_numbers = #tpu.dot_dimension_numbers<[1], [0], [0], [1], [0, 0, 1, 1], [], []>} : vector<8x16xbf16>, vector<16x16xbf16>, vector<8x16xf32> -> vector<8x16xf32>
    %196 = arith.addf %192, %195 : vector<8x16xf32>
    %197 = math.tanh %196 : vector<8x16xf32>
    %198 = vector.extract_strided_slice %28 {offsets = [8, 0], sizes = [8, 16], strides = [1, 1]} : vector<64x16xf32> to vector<8x16xf32>
    %c3_117 = arith.constant 3 : index
    %c0_118 = arith.constant 0 : index
    %c0_119 = arith.constant 0 : index
    %199 = vector.load %arg3[%c3_117, %c0_118, %c0_119] : memref<4x16x16xbf16, #tpu.memory_space<vmem>>, vector<1x16x16xbf16>
    %200 = vector.shape_cast %199 : vector<1x16x16xbf16> to vector<16x16xbf16>
    %cst_120 = arith.constant dense<0.000000e+00> : vector<8x16xf32>
    %201 = tpu.matmul %171, %200, %cst_120 {dimension_numbers = #tpu.dot_dimension_numbers<[1], [0], [0], [1], [0, 0, 1, 1], [], []>} : vector<8x16xbf16>, vector<16x16xbf16>, vector<8x16xf32> -> vector<8x16xf32>
    %202 = arith.addf %198, %201 : vector<8x16xf32>
    %203 = arith.negf %202 : vector<8x16xf32>
    %204 = math.exp %203 : vector<8x16xf32>
    %cst_121 = arith.constant 1.000000e+00 : f32
    %205 = vector.broadcast %cst_121 : f32 to vector<8x16xf32>
    %206 = arith.addf %205, %204 : vector<8x16xf32>
    %207 = arith.divf %205, %206 : vector<8x16xf32>
    %208 = arith.mulf %191, %104 : vector<8x16xf32>
    %209 = arith.mulf %181, %197 : vector<8x16xf32>
    %210 = arith.addf %208, %209 : vector<8x16xf32>
    %cst_122 = arith.constant 0.000000e+00 : f32
    %211 = vector.shape_cast %170 : vector<8x1xi1> to vector<8x1xi1>
    %212 = vector.broadcast %211 : vector<8x1xi1> to vector<8x16xi1>
    %213 = vector.broadcast %cst_122 : f32 to vector<8x16xf32>
    %214 = arith.select %212, %210, %213 : vector<8x16xi1>, vector<8x16xf32>
    %215 = math.tanh %214 : vector<8x16xf32>
    %216 = arith.mulf %207, %215 : vector<8x16xf32>
    %cst_123 = arith.constant 0.000000e+00 : f32
    %217 = vector.shape_cast %170 : vector<8x1xi1> to vector<8x1xi1>
    %218 = vector.broadcast %217 : vector<8x1xi1> to vector<8x16xi1>
    %219 = vector.broadcast %cst_123 : f32 to vector<8x16xf32>
    %220 = arith.select %218, %216, %219 : vector<8x16xi1>, vector<8x16xf32>
    %c6_i32 = arith.constant 6 : i32
    %221 = vector.broadcast %c6_i32 : i32 to vector<8x1xi32>
    %222 = arith.cmpi sgt, %57, %221 : vector<8x1xi32>
    %223 = arith.truncf %162 : vector<8x16xf32> to vector<8x16xbf16>
    %224 = vector.extract_strided_slice %35 {offsets = [48, 0], sizes = [8, 16], strides = [1, 1]} : vector<64x16xf32> to vector<8x16xf32>
    %c0_124 = arith.constant 0 : index
    %c0_125 = arith.constant 0 : index
    %c0_126 = arith.constant 0 : index
    %225 = vector.load %arg6[%c0_124, %c0_125, %c0_126] : memref<4x16x16xbf16, #tpu.memory_space<vmem>>, vector<1x16x16xbf16>
    %226 = vector.shape_cast %225 : vector<1x16x16xbf16> to vector<16x16xbf16>
    %cst_127 = arith.constant dense<0.000000e+00> : vector<8x16xf32>
    %227 = tpu.matmul %223, %226, %cst_127 {dimension_numbers = #tpu.dot_dimension_numbers<[1], [0], [0], [1], [0, 0, 1, 1], [], []>} : vector<8x16xbf16>, vector<16x16xbf16>, vector<8x16xf32> -> vector<8x16xf32>
    %228 = arith.addf %224, %227 : vector<8x16xf32>
    %229 = arith.negf %228 : vector<8x16xf32>
    %230 = math.exp %229 : vector<8x16xf32>
    %cst_128 = arith.constant 1.000000e+00 : f32
    %231 = vector.broadcast %cst_128 : f32 to vector<8x16xf32>
    %232 = arith.addf %231, %230 : vector<8x16xf32>
    %233 = arith.divf %231, %232 : vector<8x16xf32>
    %234 = vector.extract_strided_slice %42 {offsets = [48, 0], sizes = [8, 16], strides = [1, 1]} : vector<64x16xf32> to vector<8x16xf32>
    %c1_129 = arith.constant 1 : index
    %c0_130 = arith.constant 0 : index
    %c0_131 = arith.constant 0 : index
    %235 = vector.load %arg6[%c1_129, %c0_130, %c0_131] : memref<4x16x16xbf16, #tpu.memory_space<vmem>>, vector<1x16x16xbf16>
    %236 = vector.shape_cast %235 : vector<1x16x16xbf16> to vector<16x16xbf16>
    %cst_132 = arith.constant dense<0.000000e+00> : vector<8x16xf32>
    %237 = tpu.matmul %223, %236, %cst_132 {dimension_numbers = #tpu.dot_dimension_numbers<[1], [0], [0], [1], [0, 0, 1, 1], [], []>} : vector<8x16xbf16>, vector<16x16xbf16>, vector<8x16xf32> -> vector<8x16xf32>
    %238 = arith.addf %234, %237 : vector<8x16xf32>
    %239 = arith.negf %238 : vector<8x16xf32>
    %240 = math.exp %239 : vector<8x16xf32>
    %cst_133 = arith.constant 1.000000e+00 : f32
    %241 = vector.broadcast %cst_133 : f32 to vector<8x16xf32>
    %242 = arith.addf %241, %240 : vector<8x16xf32>
    %243 = arith.divf %241, %242 : vector<8x16xf32>
    %244 = vector.extract_strided_slice %49 {offsets = [48, 0], sizes = [8, 16], strides = [1, 1]} : vector<64x16xf32> to vector<8x16xf32>
    %c2_134 = arith.constant 2 : index
    %c0_135 = arith.constant 0 : index
    %c0_136 = arith.constant 0 : index
    %245 = vector.load %arg6[%c2_134, %c0_135, %c0_136] : memref<4x16x16xbf16, #tpu.memory_space<vmem>>, vector<1x16x16xbf16>
    %246 = vector.shape_cast %245 : vector<1x16x16xbf16> to vector<16x16xbf16>
    %cst_137 = arith.constant dense<0.000000e+00> : vector<8x16xf32>
    %247 = tpu.matmul %223, %246, %cst_137 {dimension_numbers = #tpu.dot_dimension_numbers<[1], [0], [0], [1], [0, 0, 1, 1], [], []>} : vector<8x16xbf16>, vector<16x16xbf16>, vector<8x16xf32> -> vector<8x16xf32>
    %248 = arith.addf %244, %247 : vector<8x16xf32>
    %249 = math.tanh %248 : vector<8x16xf32>
    %250 = vector.extract_strided_slice %56 {offsets = [48, 0], sizes = [8, 16], strides = [1, 1]} : vector<64x16xf32> to vector<8x16xf32>
    %c3_138 = arith.constant 3 : index
    %c0_139 = arith.constant 0 : index
    %c0_140 = arith.constant 0 : index
    %251 = vector.load %arg6[%c3_138, %c0_139, %c0_140] : memref<4x16x16xbf16, #tpu.memory_space<vmem>>, vector<1x16x16xbf16>
    %252 = vector.shape_cast %251 : vector<1x16x16xbf16> to vector<16x16xbf16>
    %cst_141 = arith.constant dense<0.000000e+00> : vector<8x16xf32>
    %253 = tpu.matmul %223, %252, %cst_141 {dimension_numbers = #tpu.dot_dimension_numbers<[1], [0], [0], [1], [0, 0, 1, 1], [], []>} : vector<8x16xbf16>, vector<16x16xbf16>, vector<8x16xf32> -> vector<8x16xf32>
    %254 = arith.addf %250, %253 : vector<8x16xf32>
    %255 = arith.negf %254 : vector<8x16xf32>
    %256 = math.exp %255 : vector<8x16xf32>
    %cst_142 = arith.constant 1.000000e+00 : f32
    %257 = vector.broadcast %cst_142 : f32 to vector<8x16xf32>
    %258 = arith.addf %257, %256 : vector<8x16xf32>
    %259 = arith.divf %257, %258 : vector<8x16xf32>
    %260 = arith.mulf %243, %156 : vector<8x16xf32>
    %261 = arith.mulf %233, %249 : vector<8x16xf32>
    %262 = arith.addf %260, %261 : vector<8x16xf32>
    %cst_143 = arith.constant 0.000000e+00 : f32
    %263 = vector.shape_cast %222 : vector<8x1xi1> to vector<8x1xi1>
    %264 = vector.broadcast %263 : vector<8x1xi1> to vector<8x16xi1>
    %265 = vector.broadcast %cst_143 : f32 to vector<8x16xf32>
    %266 = arith.select %264, %262, %265 : vector<8x16xi1>, vector<8x16xf32>
    %267 = math.tanh %266 : vector<8x16xf32>
    %268 = arith.mulf %259, %267 : vector<8x16xf32>
    %cst_144 = arith.constant 0.000000e+00 : f32
    %269 = vector.shape_cast %222 : vector<8x1xi1> to vector<8x1xi1>
    %270 = vector.broadcast %269 : vector<8x1xi1> to vector<8x16xi1>
    %271 = vector.broadcast %cst_144 : f32 to vector<8x16xf32>
    %272 = arith.select %270, %268, %271 : vector<8x16xi1>, vector<8x16xf32>
    %c1_145 = arith.constant 1 : index
    %c0_146 = arith.constant 0 : index
    %c0_147 = arith.constant 0 : index
    %273 = vector.load %arg8[%c1_145, %c0_146, %c0_147] : memref<8x8x16xf32, #tpu.memory_space<vmem>>, vector<1x8x16xf32>
    %274 = vector.shape_cast %273 : vector<1x8x16xf32> to vector<8x16xf32>
    %275 = vector.shape_cast %220 : vector<8x16xf32> to vector<1x8x16xf32>
    tpu.vector_store %arg8[%c1_145, %c0_146, %c0_147], %275 {strides = array<i32>} : memref<8x8x16xf32, #tpu.memory_space<vmem>>, vector<1x8x16xf32>,
    %c6 = arith.constant 6 : index
    %c0_148 = arith.constant 0 : index
    %c0_149 = arith.constant 0 : index
    %276 = vector.load %arg9[%c6, %c0_148, %c0_149] : memref<8x8x16xf32, #tpu.memory_space<vmem>>, vector<1x8x16xf32>
    %277 = vector.shape_cast %276 : vector<1x8x16xf32> to vector<8x16xf32>
    %278 = vector.shape_cast %272 : vector<8x16xf32> to vector<1x8x16xf32>
    tpu.vector_store %arg9[%c6, %c0_148, %c0_149], %278 {strides = array<i32>} : memref<8x8x16xf32, #tpu.memory_space<vmem>>, vector<1x8x16xf32>,
    %c2_i32 = arith.constant 2 : i32
    %279 = vector.broadcast %c2_i32 : i32 to vector<8x1xi32>
    %280 = arith.cmpi sgt, %57, %279 : vector<8x1xi32>
    %281 = arith.truncf %220 : vector<8x16xf32> to vector<8x16xbf16>
    %282 = vector.extract_strided_slice %7 {offsets = [16, 0], sizes = [8, 16], strides = [1, 1]} : vector<64x16xf32> to vector<8x16xf32>
    %c0_150 = arith.constant 0 : index
    %c0_151 = arith.constant 0 : index
    %c0_152 = arith.constant 0 : index
    %283 = vector.load %arg3[%c0_150, %c0_151, %c0_152] : memref<4x16x16xbf16, #tpu.memory_space<vmem>>, vector<1x16x16xbf16>
    %284 = vector.shape_cast %283 : vector<1x16x16xbf16> to vector<16x16xbf16>
    %cst_153 = arith.constant dense<0.000000e+00> : vector<8x16xf32>
    %285 = tpu.matmul %281, %284, %cst_153 {dimension_numbers = #tpu.dot_dimension_numbers<[1], [0], [0], [1], [0, 0, 1, 1], [], []>} : vector<8x16xbf16>, vector<16x16xbf16>, vector<8x16xf32> -> vector<8x16xf32>
    %286 = arith.addf %282, %285 : vector<8x16xf32>
    %287 = arith.negf %286 : vector<8x16xf32>
    %288 = math.exp %287 : vector<8x16xf32>
    %cst_154 = arith.constant 1.000000e+00 : f32
    %289 = vector.broadcast %cst_154 : f32 to vector<8x16xf32>
    %290 = arith.addf %289, %288 : vector<8x16xf32>
    %291 = arith.divf %289, %290 : vector<8x16xf32>
    %292 = vector.extract_strided_slice %14 {offsets = [16, 0], sizes = [8, 16], strides = [1, 1]} : vector<64x16xf32> to vector<8x16xf32>
    %c1_155 = arith.constant 1 : index
    %c0_156 = arith.constant 0 : index
    %c0_157 = arith.constant 0 : index
    %293 = vector.load %arg3[%c1_155, %c0_156, %c0_157] : memref<4x16x16xbf16, #tpu.memory_space<vmem>>, vector<1x16x16xbf16>
    %294 = vector.shape_cast %293 : vector<1x16x16xbf16> to vector<16x16xbf16>
    %cst_158 = arith.constant dense<0.000000e+00> : vector<8x16xf32>
    %295 = tpu.matmul %281, %294, %cst_158 {dimension_numbers = #tpu.dot_dimension_numbers<[1], [0], [0], [1], [0, 0, 1, 1], [], []>} : vector<8x16xbf16>, vector<16x16xbf16>, vector<8x16xf32> -> vector<8x16xf32>
    %296 = arith.addf %292, %295 : vector<8x16xf32>
    %297 = arith.negf %296 : vector<8x16xf32>
    %298 = math.exp %297 : vector<8x16xf32>
    %cst_159 = arith.constant 1.000000e+00 : f32
    %299 = vector.broadcast %cst_159 : f32 to vector<8x16xf32>
    %300 = arith.addf %299, %298 : vector<8x16xf32>
    %301 = arith.divf %299, %300 : vector<8x16xf32>
    %302 = vector.extract_strided_slice %21 {offsets = [16, 0], sizes = [8, 16], strides = [1, 1]} : vector<64x16xf32> to vector<8x16xf32>
    %c2_160 = arith.constant 2 : index
    %c0_161 = arith.constant 0 : index
    %c0_162 = arith.constant 0 : index
    %303 = vector.load %arg3[%c2_160, %c0_161, %c0_162] : memref<4x16x16xbf16, #tpu.memory_space<vmem>>, vector<1x16x16xbf16>
    %304 = vector.shape_cast %303 : vector<1x16x16xbf16> to vector<16x16xbf16>
    %cst_163 = arith.constant dense<0.000000e+00> : vector<8x16xf32>
    %305 = tpu.matmul %281, %304, %cst_163 {dimension_numbers = #tpu.dot_dimension_numbers<[1], [0], [0], [1], [0, 0, 1, 1], [], []>} : vector<8x16xbf16>, vector<16x16xbf16>, vector<8x16xf32> -> vector<8x16xf32>
    %306 = arith.addf %302, %305 : vector<8x16xf32>
    %307 = math.tanh %306 : vector<8x16xf32>
    %308 = vector.extract_strided_slice %28 {offsets = [16, 0], sizes = [8, 16], strides = [1, 1]} : vector<64x16xf32> to vector<8x16xf32>
    %c3_164 = arith.constant 3 : index
    %c0_165 = arith.constant 0 : index
    %c0_166 = arith.constant 0 : index
    %309 = vector.load %arg3[%c3_164, %c0_165, %c0_166] : memref<4x16x16xbf16, #tpu.memory_space<vmem>>, vector<1x16x16xbf16>
    %310 = vector.shape_cast %309 : vector<1x16x16xbf16> to vector<16x16xbf16>
    %cst_167 = arith.constant dense<0.000000e+00> : vector<8x16xf32>
    %311 = tpu.matmul %281, %310, %cst_167 {dimension_numbers = #tpu.dot_dimension_numbers<[1], [0], [0], [1], [0, 0, 1, 1], [], []>} : vector<8x16xbf16>, vector<16x16xbf16>, vector<8x16xf32> -> vector<8x16xf32>
    %312 = arith.addf %308, %311 : vector<8x16xf32>
    %313 = arith.negf %312 : vector<8x16xf32>
    %314 = math.exp %313 : vector<8x16xf32>
    %cst_168 = arith.constant 1.000000e+00 : f32
    %315 = vector.broadcast %cst_168 : f32 to vector<8x16xf32>
    %316 = arith.addf %315, %314 : vector<8x16xf32>
    %317 = arith.divf %315, %316 : vector<8x16xf32>
    %318 = arith.mulf %301, %214 : vector<8x16xf32>
    %319 = arith.mulf %291, %307 : vector<8x16xf32>
    %320 = arith.addf %318, %319 : vector<8x16xf32>
    %cst_169 = arith.constant 0.000000e+00 : f32
    %321 = vector.shape_cast %280 : vector<8x1xi1> to vector<8x1xi1>
    %322 = vector.broadcast %321 : vector<8x1xi1> to vector<8x16xi1>
    %323 = vector.broadcast %cst_169 : f32 to vector<8x16xf32>
    %324 = arith.select %322, %320, %323 : vector<8x16xi1>, vector<8x16xf32>
    %325 = math.tanh %324 : vector<8x16xf32>
    %326 = arith.mulf %317, %325 : vector<8x16xf32>
    %cst_170 = arith.constant 0.000000e+00 : f32
    %327 = vector.shape_cast %280 : vector<8x1xi1> to vector<8x1xi1>
    %328 = vector.broadcast %327 : vector<8x1xi1> to vector<8x16xi1>
    %329 = vector.broadcast %cst_170 : f32 to vector<8x16xf32>
    %330 = arith.select %328, %326, %329 : vector<8x16xi1>, vector<8x16xf32>
    %c5_i32 = arith.constant 5 : i32
    %331 = vector.broadcast %c5_i32 : i32 to vector<8x1xi32>
    %332 = arith.cmpi sgt, %57, %331 : vector<8x1xi32>
    %333 = arith.truncf %272 : vector<8x16xf32> to vector<8x16xbf16>
    %334 = vector.extract_strided_slice %35 {offsets = [40, 0], sizes = [8, 16], strides = [1, 1]} : vector<64x16xf32> to vector<8x16xf32>
    %c0_171 = arith.constant 0 : index
    %c0_172 = arith.constant 0 : index
    %c0_173 = arith.constant 0 : index
    %335 = vector.load %arg6[%c0_171, %c0_172, %c0_173] : memref<4x16x16xbf16, #tpu.memory_space<vmem>>, vector<1x16x16xbf16>
    %336 = vector.shape_cast %335 : vector<1x16x16xbf16> to vector<16x16xbf16>
    %cst_174 = arith.constant dense<0.000000e+00> : vector<8x16xf32>
    %337 = tpu.matmul %333, %336, %cst_174 {dimension_numbers = #tpu.dot_dimension_numbers<[1], [0], [0], [1], [0, 0, 1, 1], [], []>} : vector<8x16xbf16>, vector<16x16xbf16>, vector<8x16xf32> -> vector<8x16xf32>
    %338 = arith.addf %334, %337 : vector<8x16xf32>
    %339 = arith.negf %338 : vector<8x16xf32>
    %340 = math.exp %339 : vector<8x16xf32>
    %cst_175 = arith.constant 1.000000e+00 : f32
    %341 = vector.broadcast %cst_175 : f32 to vector<8x16xf32>
    %342 = arith.addf %341, %340 : vector<8x16xf32>
    %343 = arith.divf %341, %342 : vector<8x16xf32>
    %344 = vector.extract_strided_slice %42 {offsets = [40, 0], sizes = [8, 16], strides = [1, 1]} : vector<64x16xf32> to vector<8x16xf32>
    %c1_176 = arith.constant 1 : index
    %c0_177 = arith.constant 0 : index
    %c0_178 = arith.constant 0 : index
    %345 = vector.load %arg6[%c1_176, %c0_177, %c0_178] : memref<4x16x16xbf16, #tpu.memory_space<vmem>>, vector<1x16x16xbf16>
    %346 = vector.shape_cast %345 : vector<1x16x16xbf16> to vector<16x16xbf16>
    %cst_179 = arith.constant dense<0.000000e+00> : vector<8x16xf32>
    %347 = tpu.matmul %333, %346, %cst_179 {dimension_numbers = #tpu.dot_dimension_numbers<[1], [0], [0], [1], [0, 0, 1, 1], [], []>} : vector<8x16xbf16>, vector<16x16xbf16>, vector<8x16xf32> -> vector<8x16xf32>
    %348 = arith.addf %344, %347 : vector<8x16xf32>
    %349 = arith.negf %348 : vector<8x16xf32>
    %350 = math.exp %349 : vector<8x16xf32>
    %cst_180 = arith.constant 1.000000e+00 : f32
    %351 = vector.broadcast %cst_180 : f32 to vector<8x16xf32>
    %352 = arith.addf %351, %350 : vector<8x16xf32>
    %353 = arith.divf %351, %352 : vector<8x16xf32>
    %354 = vector.extract_strided_slice %49 {offsets = [40, 0], sizes = [8, 16], strides = [1, 1]} : vector<64x16xf32> to vector<8x16xf32>
    %c2_181 = arith.constant 2 : index
    %c0_182 = arith.constant 0 : index
    %c0_183 = arith.constant 0 : index
    %355 = vector.load %arg6[%c2_181, %c0_182, %c0_183] : memref<4x16x16xbf16, #tpu.memory_space<vmem>>, vector<1x16x16xbf16>
    %356 = vector.shape_cast %355 : vector<1x16x16xbf16> to vector<16x16xbf16>
    %cst_184 = arith.constant dense<0.000000e+00> : vector<8x16xf32>
    %357 = tpu.matmul %333, %356, %cst_184 {dimension_numbers = #tpu.dot_dimension_numbers<[1], [0], [0], [1], [0, 0, 1, 1], [], []>} : vector<8x16xbf16>, vector<16x16xbf16>, vector<8x16xf32> -> vector<8x16xf32>
    %358 = arith.addf %354, %357 : vector<8x16xf32>
    %359 = math.tanh %358 : vector<8x16xf32>
    %360 = vector.extract_strided_slice %56 {offsets = [40, 0], sizes = [8, 16], strides = [1, 1]} : vector<64x16xf32> to vector<8x16xf32>
    %c3_185 = arith.constant 3 : index
    %c0_186 = arith.constant 0 : index
    %c0_187 = arith.constant 0 : index
    %361 = vector.load %arg6[%c3_185, %c0_186, %c0_187] : memref<4x16x16xbf16, #tpu.memory_space<vmem>>, vector<1x16x16xbf16>
    %362 = vector.shape_cast %361 : vector<1x16x16xbf16> to vector<16x16xbf16>
    %cst_188 = arith.constant dense<0.000000e+00> : vector<8x16xf32>
    %363 = tpu.matmul %333, %362, %cst_188 {dimension_numbers = #tpu.dot_dimension_numbers<[1], [0], [0], [1], [0, 0, 1, 1], [], []>} : vector<8x16xbf16>, vector<16x16xbf16>, vector<8x16xf32> -> vector<8x16xf32>
    %364 = arith.addf %360, %363 : vector<8x16xf32>
    %365 = arith.negf %364 : vector<8x16xf32>
    %366 = math.exp %365 : vector<8x16xf32>
    %cst_189 = arith.constant 1.000000e+00 : f32
    %367 = vector.broadcast %cst_189 : f32 to vector<8x16xf32>
    %368 = arith.addf %367, %366 : vector<8x16xf32>
    %369 = arith.divf %367, %368 : vector<8x16xf32>
    %370 = arith.mulf %353, %266 : vector<8x16xf32>
    %371 = arith.mulf %343, %359 : vector<8x16xf32>
    %372 = arith.addf %370, %371 : vector<8x16xf32>
    %cst_190 = arith.constant 0.000000e+00 : f32
    %373 = vector.shape_cast %332 : vector<8x1xi1> to vector<8x1xi1>
    %374 = vector.broadcast %373 : vector<8x1xi1> to vector<8x16xi1>
    %375 = vector.broadcast %cst_190 : f32 to vector<8x16xf32>
    %376 = arith.select %374, %372, %375 : vector<8x16xi1>, vector<8x16xf32>
    %377 = math.tanh %376 : vector<8x16xf32>
    %378 = arith.mulf %369, %377 : vector<8x16xf32>
    %cst_191 = arith.constant 0.000000e+00 : f32
    %379 = vector.shape_cast %332 : vector<8x1xi1> to vector<8x1xi1>
    %380 = vector.broadcast %379 : vector<8x1xi1> to vector<8x16xi1>
    %381 = vector.broadcast %cst_191 : f32 to vector<8x16xf32>
    %382 = arith.select %380, %378, %381 : vector<8x16xi1>, vector<8x16xf32>
    %c2_192 = arith.constant 2 : index
    %c0_193 = arith.constant 0 : index
    %c0_194 = arith.constant 0 : index
    %383 = vector.load %arg8[%c2_192, %c0_193, %c0_194] : memref<8x8x16xf32, #tpu.memory_space<vmem>>, vector<1x8x16xf32>
    %384 = vector.shape_cast %383 : vector<1x8x16xf32> to vector<8x16xf32>
    %385 = vector.shape_cast %330 : vector<8x16xf32> to vector<1x8x16xf32>
    tpu.vector_store %arg8[%c2_192, %c0_193, %c0_194], %385 {strides = array<i32>} : memref<8x8x16xf32, #tpu.memory_space<vmem>>, vector<1x8x16xf32>,
    %c5 = arith.constant 5 : index
    %c0_195 = arith.constant 0 : index
    %c0_196 = arith.constant 0 : index
    %386 = vector.load %arg9[%c5, %c0_195, %c0_196] : memref<8x8x16xf32, #tpu.memory_space<vmem>>, vector<1x8x16xf32>
    %387 = vector.shape_cast %386 : vector<1x8x16xf32> to vector<8x16xf32>
    %388 = vector.shape_cast %382 : vector<8x16xf32> to vector<1x8x16xf32>
    tpu.vector_store %arg9[%c5, %c0_195, %c0_196], %388 {strides = array<i32>} : memref<8x8x16xf32, #tpu.memory_space<vmem>>, vector<1x8x16xf32>,
    %c3_i32 = arith.constant 3 : i32
    %389 = vector.broadcast %c3_i32 : i32 to vector<8x1xi32>
    %390 = arith.cmpi sgt, %57, %389 : vector<8x1xi32>
    %391 = arith.truncf %330 : vector<8x16xf32> to vector<8x16xbf16>
    %392 = vector.extract_strided_slice %7 {offsets = [24, 0], sizes = [8, 16], strides = [1, 1]} : vector<64x16xf32> to vector<8x16xf32>
    %c0_197 = arith.constant 0 : index
    %c0_198 = arith.constant 0 : index
    %c0_199 = arith.constant 0 : index
    %393 = vector.load %arg3[%c0_197, %c0_198, %c0_199] : memref<4x16x16xbf16, #tpu.memory_space<vmem>>, vector<1x16x16xbf16>
    %394 = vector.shape_cast %393 : vector<1x16x16xbf16> to vector<16x16xbf16>
    %cst_200 = arith.constant dense<0.000000e+00> : vector<8x16xf32>
    %395 = tpu.matmul %391, %394, %cst_200 {dimension_numbers = #tpu.dot_dimension_numbers<[1], [0], [0], [1], [0, 0, 1, 1], [], []>} : vector<8x16xbf16>, vector<16x16xbf16>, vector<8x16xf32> -> vector<8x16xf32>
    %396 = arith.addf %392, %395 : vector<8x16xf32>
    %397 = arith.negf %396 : vector<8x16xf32>
    %398 = math.exp %397 : vector<8x16xf32>
    %cst_201 = arith.constant 1.000000e+00 : f32
    %399 = vector.broadcast %cst_201 : f32 to vector<8x16xf32>
    %400 = arith.addf %399, %398 : vector<8x16xf32>
    %401 = arith.divf %399, %400 : vector<8x16xf32>
    %402 = vector.extract_strided_slice %14 {offsets = [24, 0], sizes = [8, 16], strides = [1, 1]} : vector<64x16xf32> to vector<8x16xf32>
    %c1_202 = arith.constant 1 : index
    %c0_203 = arith.constant 0 : index
    %c0_204 = arith.constant 0 : index
    %403 = vector.load %arg3[%c1_202, %c0_203, %c0_204] : memref<4x16x16xbf16, #tpu.memory_space<vmem>>, vector<1x16x16xbf16>
    %404 = vector.shape_cast %403 : vector<1x16x16xbf16> to vector<16x16xbf16>
    %cst_205 = arith.constant dense<0.000000e+00> : vector<8x16xf32>
    %405 = tpu.matmul %391, %404, %cst_205 {dimension_numbers = #tpu.dot_dimension_numbers<[1], [0], [0], [1], [0, 0, 1, 1], [], []>} : vector<8x16xbf16>, vector<16x16xbf16>, vector<8x16xf32> -> vector<8x16xf32>
    %406 = arith.addf %402, %405 : vector<8x16xf32>
    %407 = arith.negf %406 : vector<8x16xf32>
    %408 = math.exp %407 : vector<8x16xf32>
    %cst_206 = arith.constant 1.000000e+00 : f32
    %409 = vector.broadcast %cst_206 : f32 to vector<8x16xf32>
    %410 = arith.addf %409, %408 : vector<8x16xf32>
    %411 = arith.divf %409, %410 : vector<8x16xf32>
    %412 = vector.extract_strided_slice %21 {offsets = [24, 0], sizes = [8, 16], strides = [1, 1]} : vector<64x16xf32> to vector<8x16xf32>
    %c2_207 = arith.constant 2 : index
    %c0_208 = arith.constant 0 : index
    %c0_209 = arith.constant 0 : index
    %413 = vector.load %arg3[%c2_207, %c0_208, %c0_209] : memref<4x16x16xbf16, #tpu.memory_space<vmem>>, vector<1x16x16xbf16>
    %414 = vector.shape_cast %413 : vector<1x16x16xbf16> to vector<16x16xbf16>
    %cst_210 = arith.constant dense<0.000000e+00> : vector<8x16xf32>
    %415 = tpu.matmul %391, %414, %cst_210 {dimension_numbers = #tpu.dot_dimension_numbers<[1], [0], [0], [1], [0, 0, 1, 1], [], []>} : vector<8x16xbf16>, vector<16x16xbf16>, vector<8x16xf32> -> vector<8x16xf32>
    %416 = arith.addf %412, %415 : vector<8x16xf32>
    %417 = math.tanh %416 : vector<8x16xf32>
    %418 = vector.extract_strided_slice %28 {offsets = [24, 0], sizes = [8, 16], strides = [1, 1]} : vector<64x16xf32> to vector<8x16xf32>
    %c3_211 = arith.constant 3 : index
    %c0_212 = arith.constant 0 : index
    %c0_213 = arith.constant 0 : index
    %419 = vector.load %arg3[%c3_211, %c0_212, %c0_213] : memref<4x16x16xbf16, #tpu.memory_space<vmem>>, vector<1x16x16xbf16>
    %420 = vector.shape_cast %419 : vector<1x16x16xbf16> to vector<16x16xbf16>
    %cst_214 = arith.constant dense<0.000000e+00> : vector<8x16xf32>
    %421 = tpu.matmul %391, %420, %cst_214 {dimension_numbers = #tpu.dot_dimension_numbers<[1], [0], [0], [1], [0, 0, 1, 1], [], []>} : vector<8x16xbf16>, vector<16x16xbf16>, vector<8x16xf32> -> vector<8x16xf32>
    %422 = arith.addf %418, %421 : vector<8x16xf32>
    %423 = arith.negf %422 : vector<8x16xf32>
    %424 = math.exp %423 : vector<8x16xf32>
    %cst_215 = arith.constant 1.000000e+00 : f32
    %425 = vector.broadcast %cst_215 : f32 to vector<8x16xf32>
    %426 = arith.addf %425, %424 : vector<8x16xf32>
    %427 = arith.divf %425, %426 : vector<8x16xf32>
    %428 = arith.mulf %411, %324 : vector<8x16xf32>
    %429 = arith.mulf %401, %417 : vector<8x16xf32>
    %430 = arith.addf %428, %429 : vector<8x16xf32>
    %cst_216 = arith.constant 0.000000e+00 : f32
    %431 = vector.shape_cast %390 : vector<8x1xi1> to vector<8x1xi1>
    %432 = vector.broadcast %431 : vector<8x1xi1> to vector<8x16xi1>
    %433 = vector.broadcast %cst_216 : f32 to vector<8x16xf32>
    %434 = arith.select %432, %430, %433 : vector<8x16xi1>, vector<8x16xf32>
    %435 = math.tanh %434 : vector<8x16xf32>
    %436 = arith.mulf %427, %435 : vector<8x16xf32>
    %cst_217 = arith.constant 0.000000e+00 : f32
    %437 = vector.shape_cast %390 : vector<8x1xi1> to vector<8x1xi1>
    %438 = vector.broadcast %437 : vector<8x1xi1> to vector<8x16xi1>
    %439 = vector.broadcast %cst_217 : f32 to vector<8x16xf32>
    %440 = arith.select %438, %436, %439 : vector<8x16xi1>, vector<8x16xf32>
    %c4_i32 = arith.constant 4 : i32
    %441 = vector.broadcast %c4_i32 : i32 to vector<8x1xi32>
    %442 = arith.cmpi sgt, %57, %441 : vector<8x1xi32>
    %443 = arith.truncf %382 : vector<8x16xf32> to vector<8x16xbf16>
    %444 = vector.extract_strided_slice %35 {offsets = [32, 0], sizes = [8, 16], strides = [1, 1]} : vector<64x16xf32> to vector<8x16xf32>
    %c0_218 = arith.constant 0 : index
    %c0_219 = arith.constant 0 : index
    %c0_220 = arith.constant 0 : index
    %445 = vector.load %arg6[%c0_218, %c0_219, %c0_220] : memref<4x16x16xbf16, #tpu.memory_space<vmem>>, vector<1x16x16xbf16>
    %446 = vector.shape_cast %445 : vector<1x16x16xbf16> to vector<16x16xbf16>
    %cst_221 = arith.constant dense<0.000000e+00> : vector<8x16xf32>
    %447 = tpu.matmul %443, %446, %cst_221 {dimension_numbers = #tpu.dot_dimension_numbers<[1], [0], [0], [1], [0, 0, 1, 1], [], []>} : vector<8x16xbf16>, vector<16x16xbf16>, vector<8x16xf32> -> vector<8x16xf32>
    %448 = arith.addf %444, %447 : vector<8x16xf32>
    %449 = arith.negf %448 : vector<8x16xf32>
    %450 = math.exp %449 : vector<8x16xf32>
    %cst_222 = arith.constant 1.000000e+00 : f32
    %451 = vector.broadcast %cst_222 : f32 to vector<8x16xf32>
    %452 = arith.addf %451, %450 : vector<8x16xf32>
    %453 = arith.divf %451, %452 : vector<8x16xf32>
    %454 = vector.extract_strided_slice %42 {offsets = [32, 0], sizes = [8, 16], strides = [1, 1]} : vector<64x16xf32> to vector<8x16xf32>
    %c1_223 = arith.constant 1 : index
    %c0_224 = arith.constant 0 : index
    %c0_225 = arith.constant 0 : index
    %455 = vector.load %arg6[%c1_223, %c0_224, %c0_225] : memref<4x16x16xbf16, #tpu.memory_space<vmem>>, vector<1x16x16xbf16>
    %456 = vector.shape_cast %455 : vector<1x16x16xbf16> to vector<16x16xbf16>
    %cst_226 = arith.constant dense<0.000000e+00> : vector<8x16xf32>
    %457 = tpu.matmul %443, %456, %cst_226 {dimension_numbers = #tpu.dot_dimension_numbers<[1], [0], [0], [1], [0, 0, 1, 1], [], []>} : vector<8x16xbf16>, vector<16x16xbf16>, vector<8x16xf32> -> vector<8x16xf32>
    %458 = arith.addf %454, %457 : vector<8x16xf32>
    %459 = arith.negf %458 : vector<8x16xf32>
    %460 = math.exp %459 : vector<8x16xf32>
    %cst_227 = arith.constant 1.000000e+00 : f32
    %461 = vector.broadcast %cst_227 : f32 to vector<8x16xf32>
    %462 = arith.addf %461, %460 : vector<8x16xf32>
    %463 = arith.divf %461, %462 : vector<8x16xf32>
    %464 = vector.extract_strided_slice %49 {offsets = [32, 0], sizes = [8, 16], strides = [1, 1]} : vector<64x16xf32> to vector<8x16xf32>
    %c2_228 = arith.constant 2 : index
    %c0_229 = arith.constant 0 : index
    %c0_230 = arith.constant 0 : index
    %465 = vector.load %arg6[%c2_228, %c0_229, %c0_230] : memref<4x16x16xbf16, #tpu.memory_space<vmem>>, vector<1x16x16xbf16>
    %466 = vector.shape_cast %465 : vector<1x16x16xbf16> to vector<16x16xbf16>
    %cst_231 = arith.constant dense<0.000000e+00> : vector<8x16xf32>
    %467 = tpu.matmul %443, %466, %cst_231 {dimension_numbers = #tpu.dot_dimension_numbers<[1], [0], [0], [1], [0, 0, 1, 1], [], []>} : vector<8x16xbf16>, vector<16x16xbf16>, vector<8x16xf32> -> vector<8x16xf32>
    %468 = arith.addf %464, %467 : vector<8x16xf32>
    %469 = math.tanh %468 : vector<8x16xf32>
    %470 = vector.extract_strided_slice %56 {offsets = [32, 0], sizes = [8, 16], strides = [1, 1]} : vector<64x16xf32> to vector<8x16xf32>
    %c3_232 = arith.constant 3 : index
    %c0_233 = arith.constant 0 : index
    %c0_234 = arith.constant 0 : index
    %471 = vector.load %arg6[%c3_232, %c0_233, %c0_234] : memref<4x16x16xbf16, #tpu.memory_space<vmem>>, vector<1x16x16xbf16>
    %472 = vector.shape_cast %471 : vector<1x16x16xbf16> to vector<16x16xbf16>
    %cst_235 = arith.constant dense<0.000000e+00> : vector<8x16xf32>
    %473 = tpu.matmul %443, %472, %cst_235 {dimension_numbers = #tpu.dot_dimension_numbers<[1], [0], [0], [1], [0, 0, 1, 1], [], []>} : vector<8x16xbf16>, vector<16x16xbf16>, vector<8x16xf32> -> vector<8x16xf32>
    %474 = arith.addf %470, %473 : vector<8x16xf32>
    %475 = arith.negf %474 : vector<8x16xf32>
    %476 = math.exp %475 : vector<8x16xf32>
    %cst_236 = arith.constant 1.000000e+00 : f32
    %477 = vector.broadcast %cst_236 : f32 to vector<8x16xf32>
    %478 = arith.addf %477, %476 : vector<8x16xf32>
    %479 = arith.divf %477, %478 : vector<8x16xf32>
    %480 = arith.mulf %463, %376 : vector<8x16xf32>
    %481 = arith.mulf %453, %469 : vector<8x16xf32>
    %482 = arith.addf %480, %481 : vector<8x16xf32>
    %cst_237 = arith.constant 0.000000e+00 : f32
    %483 = vector.shape_cast %442 : vector<8x1xi1> to vector<8x1xi1>
    %484 = vector.broadcast %483 : vector<8x1xi1> to vector<8x16xi1>
    %485 = vector.broadcast %cst_237 : f32 to vector<8x16xf32>
    %486 = arith.select %484, %482, %485 : vector<8x16xi1>, vector<8x16xf32>
    %487 = math.tanh %486 : vector<8x16xf32>
    %488 = arith.mulf %479, %487 : vector<8x16xf32>
    %cst_238 = arith.constant 0.000000e+00 : f32
    %489 = vector.shape_cast %442 : vector<8x1xi1> to vector<8x1xi1>
    %490 = vector.broadcast %489 : vector<8x1xi1> to vector<8x16xi1>
    %491 = vector.broadcast %cst_238 : f32 to vector<8x16xf32>
    %492 = arith.select %490, %488, %491 : vector<8x16xi1>, vector<8x16xf32>
    %c3_239 = arith.constant 3 : index
    %c0_240 = arith.constant 0 : index
    %c0_241 = arith.constant 0 : index
    %493 = vector.load %arg8[%c3_239, %c0_240, %c0_241] : memref<8x8x16xf32, #tpu.memory_space<vmem>>, vector<1x8x16xf32>
    %494 = vector.shape_cast %493 : vector<1x8x16xf32> to vector<8x16xf32>
    %495 = vector.shape_cast %440 : vector<8x16xf32> to vector<1x8x16xf32>
    tpu.vector_store %arg8[%c3_239, %c0_240, %c0_241], %495 {strides = array<i32>} : memref<8x8x16xf32, #tpu.memory_space<vmem>>, vector<1x8x16xf32>,
    %c4 = arith.constant 4 : index
    %c0_242 = arith.constant 0 : index
    %c0_243 = arith.constant 0 : index
    %496 = vector.load %arg9[%c4, %c0_242, %c0_243] : memref<8x8x16xf32, #tpu.memory_space<vmem>>, vector<1x8x16xf32>
    %497 = vector.shape_cast %496 : vector<1x8x16xf32> to vector<8x16xf32>
    %498 = vector.shape_cast %492 : vector<8x16xf32> to vector<1x8x16xf32>
    tpu.vector_store %arg9[%c4, %c0_242, %c0_243], %498 {strides = array<i32>} : memref<8x8x16xf32, #tpu.memory_space<vmem>>, vector<1x8x16xf32>,
    %c4_i32_244 = arith.constant 4 : i32
    %499 = vector.broadcast %c4_i32_244 : i32 to vector<8x1xi32>
    %500 = arith.cmpi sgt, %57, %499 : vector<8x1xi32>
    %501 = arith.truncf %440 : vector<8x16xf32> to vector<8x16xbf16>
    %502 = vector.extract_strided_slice %7 {offsets = [32, 0], sizes = [8, 16], strides = [1, 1]} : vector<64x16xf32> to vector<8x16xf32>
    %c0_245 = arith.constant 0 : index
    %c0_246 = arith.constant 0 : index
    %c0_247 = arith.constant 0 : index
    %503 = vector.load %arg3[%c0_245, %c0_246, %c0_247] : memref<4x16x16xbf16, #tpu.memory_space<vmem>>, vector<1x16x16xbf16>
    %504 = vector.shape_cast %503 : vector<1x16x16xbf16> to vector<16x16xbf16>
    %cst_248 = arith.constant dense<0.000000e+00> : vector<8x16xf32>
    %505 = tpu.matmul %501, %504, %cst_248 {dimension_numbers = #tpu.dot_dimension_numbers<[1], [0], [0], [1], [0, 0, 1, 1], [], []>} : vector<8x16xbf16>, vector<16x16xbf16>, vector<8x16xf32> -> vector<8x16xf32>
    %506 = arith.addf %502, %505 : vector<8x16xf32>
    %507 = arith.negf %506 : vector<8x16xf32>
    %508 = math.exp %507 : vector<8x16xf32>
    %cst_249 = arith.constant 1.000000e+00 : f32
    %509 = vector.broadcast %cst_249 : f32 to vector<8x16xf32>
    %510 = arith.addf %509, %508 : vector<8x16xf32>
    %511 = arith.divf %509, %510 : vector<8x16xf32>
    %512 = vector.extract_strided_slice %14 {offsets = [32, 0], sizes = [8, 16], strides = [1, 1]} : vector<64x16xf32> to vector<8x16xf32>
    %c1_250 = arith.constant 1 : index
    %c0_251 = arith.constant 0 : index
    %c0_252 = arith.constant 0 : index
    %513 = vector.load %arg3[%c1_250, %c0_251, %c0_252] : memref<4x16x16xbf16, #tpu.memory_space<vmem>>, vector<1x16x16xbf16>
    %514 = vector.shape_cast %513 : vector<1x16x16xbf16> to vector<16x16xbf16>
    %cst_253 = arith.constant dense<0.000000e+00> : vector<8x16xf32>
    %515 = tpu.matmul %501, %514, %cst_253 {dimension_numbers = #tpu.dot_dimension_numbers<[1], [0], [0], [1], [0, 0, 1, 1], [], []>} : vector<8x16xbf16>, vector<16x16xbf16>, vector<8x16xf32> -> vector<8x16xf32>
    %516 = arith.addf %512, %515 : vector<8x16xf32>
    %517 = arith.negf %516 : vector<8x16xf32>
    %518 = math.exp %517 : vector<8x16xf32>
    %cst_254 = arith.constant 1.000000e+00 : f32
    %519 = vector.broadcast %cst_254 : f32 to vector<8x16xf32>
    %520 = arith.addf %519, %518 : vector<8x16xf32>
    %521 = arith.divf %519, %520 : vector<8x16xf32>
    %522 = vector.extract_strided_slice %21 {offsets = [32, 0], sizes = [8, 16], strides = [1, 1]} : vector<64x16xf32> to vector<8x16xf32>
    %c2_255 = arith.constant 2 : index
    %c0_256 = arith.constant 0 : index
    %c0_257 = arith.constant 0 : index
    %523 = vector.load %arg3[%c2_255, %c0_256, %c0_257] : memref<4x16x16xbf16, #tpu.memory_space<vmem>>, vector<1x16x16xbf16>
    %524 = vector.shape_cast %523 : vector<1x16x16xbf16> to vector<16x16xbf16>
    %cst_258 = arith.constant dense<0.000000e+00> : vector<8x16xf32>
    %525 = tpu.matmul %501, %524, %cst_258 {dimension_numbers = #tpu.dot_dimension_numbers<[1], [0], [0], [1], [0, 0, 1, 1], [], []>} : vector<8x16xbf16>, vector<16x16xbf16>, vector<8x16xf32> -> vector<8x16xf32>
    %526 = arith.addf %522, %525 : vector<8x16xf32>
    %527 = math.tanh %526 : vector<8x16xf32>
    %528 = vector.extract_strided_slice %28 {offsets = [32, 0], sizes = [8, 16], strides = [1, 1]} : vector<64x16xf32> to vector<8x16xf32>
    %c3_259 = arith.constant 3 : index
    %c0_260 = arith.constant 0 : index
    %c0_261 = arith.constant 0 : index
    %529 = vector.load %arg3[%c3_259, %c0_260, %c0_261] : memref<4x16x16xbf16, #tpu.memory_space<vmem>>, vector<1x16x16xbf16>
    %530 = vector.shape_cast %529 : vector<1x16x16xbf16> to vector<16x16xbf16>
    %cst_262 = arith.constant dense<0.000000e+00> : vector<8x16xf32>
    %531 = tpu.matmul %501, %530, %cst_262 {dimension_numbers = #tpu.dot_dimension_numbers<[1], [0], [0], [1], [0, 0, 1, 1], [], []>} : vector<8x16xbf16>, vector<16x16xbf16>, vector<8x16xf32> -> vector<8x16xf32>
    %532 = arith.addf %528, %531 : vector<8x16xf32>
    %533 = arith.negf %532 : vector<8x16xf32>
    %534 = math.exp %533 : vector<8x16xf32>
    %cst_263 = arith.constant 1.000000e+00 : f32
    %535 = vector.broadcast %cst_263 : f32 to vector<8x16xf32>
    %536 = arith.addf %535, %534 : vector<8x16xf32>
    %537 = arith.divf %535, %536 : vector<8x16xf32>
    %538 = arith.mulf %521, %434 : vector<8x16xf32>
    %539 = arith.mulf %511, %527 : vector<8x16xf32>
    %540 = arith.addf %538, %539 : vector<8x16xf32>
    %cst_264 = arith.constant 0.000000e+00 : f32
    %541 = vector.shape_cast %500 : vector<8x1xi1> to vector<8x1xi1>
    %542 = vector.broadcast %541 : vector<8x1xi1> to vector<8x16xi1>
    %543 = vector.broadcast %cst_264 : f32 to vector<8x16xf32>
    %544 = arith.select %542, %540, %543 : vector<8x16xi1>, vector<8x16xf32>
    %545 = math.tanh %544 : vector<8x16xf32>
    %546 = arith.mulf %537, %545 : vector<8x16xf32>
    %cst_265 = arith.constant 0.000000e+00 : f32
    %547 = vector.shape_cast %500 : vector<8x1xi1> to vector<8x1xi1>
    %548 = vector.broadcast %547 : vector<8x1xi1> to vector<8x16xi1>
    %549 = vector.broadcast %cst_265 : f32 to vector<8x16xf32>
    %550 = arith.select %548, %546, %549 : vector<8x16xi1>, vector<8x16xf32>
    %c3_i32_266 = arith.constant 3 : i32
    %551 = vector.broadcast %c3_i32_266 : i32 to vector<8x1xi32>
    %552 = arith.cmpi sgt, %57, %551 : vector<8x1xi32>
    %553 = arith.truncf %492 : vector<8x16xf32> to vector<8x16xbf16>
    %554 = vector.extract_strided_slice %35 {offsets = [24, 0], sizes = [8, 16], strides = [1, 1]} : vector<64x16xf32> to vector<8x16xf32>
    %c0_267 = arith.constant 0 : index
    %c0_268 = arith.constant 0 : index
    %c0_269 = arith.constant 0 : index
    %555 = vector.load %arg6[%c0_267, %c0_268, %c0_269] : memref<4x16x16xbf16, #tpu.memory_space<vmem>>, vector<1x16x16xbf16>
    %556 = vector.shape_cast %555 : vector<1x16x16xbf16> to vector<16x16xbf16>
    %cst_270 = arith.constant dense<0.000000e+00> : vector<8x16xf32>
    %557 = tpu.matmul %553, %556, %cst_270 {dimension_numbers = #tpu.dot_dimension_numbers<[1], [0], [0], [1], [0, 0, 1, 1], [], []>} : vector<8x16xbf16>, vector<16x16xbf16>, vector<8x16xf32> -> vector<8x16xf32>
    %558 = arith.addf %554, %557 : vector<8x16xf32>
    %559 = arith.negf %558 : vector<8x16xf32>
    %560 = math.exp %559 : vector<8x16xf32>
    %cst_271 = arith.constant 1.000000e+00 : f32
    %561 = vector.broadcast %cst_271 : f32 to vector<8x16xf32>
    %562 = arith.addf %561, %560 : vector<8x16xf32>
    %563 = arith.divf %561, %562 : vector<8x16xf32>
    %564 = vector.extract_strided_slice %42 {offsets = [24, 0], sizes = [8, 16], strides = [1, 1]} : vector<64x16xf32> to vector<8x16xf32>
    %c1_272 = arith.constant 1 : index
    %c0_273 = arith.constant 0 : index
    %c0_274 = arith.constant 0 : index
    %565 = vector.load %arg6[%c1_272, %c0_273, %c0_274] : memref<4x16x16xbf16, #tpu.memory_space<vmem>>, vector<1x16x16xbf16>
    %566 = vector.shape_cast %565 : vector<1x16x16xbf16> to vector<16x16xbf16>
    %cst_275 = arith.constant dense<0.000000e+00> : vector<8x16xf32>
    %567 = tpu.matmul %553, %566, %cst_275 {dimension_numbers = #tpu.dot_dimension_numbers<[1], [0], [0], [1], [0, 0, 1, 1], [], []>} : vector<8x16xbf16>, vector<16x16xbf16>, vector<8x16xf32> -> vector<8x16xf32>
    %568 = arith.addf %564, %567 : vector<8x16xf32>
    %569 = arith.negf %568 : vector<8x16xf32>
    %570 = math.exp %569 : vector<8x16xf32>
    %cst_276 = arith.constant 1.000000e+00 : f32
    %571 = vector.broadcast %cst_276 : f32 to vector<8x16xf32>
    %572 = arith.addf %571, %570 : vector<8x16xf32>
    %573 = arith.divf %571, %572 : vector<8x16xf32>
    %574 = vector.extract_strided_slice %49 {offsets = [24, 0], sizes = [8, 16], strides = [1, 1]} : vector<64x16xf32> to vector<8x16xf32>
    %c2_277 = arith.constant 2 : index
    %c0_278 = arith.constant 0 : index
    %c0_279 = arith.constant 0 : index
    %575 = vector.load %arg6[%c2_277, %c0_278, %c0_279] : memref<4x16x16xbf16, #tpu.memory_space<vmem>>, vector<1x16x16xbf16>
    %576 = vector.shape_cast %575 : vector<1x16x16xbf16> to vector<16x16xbf16>
    %cst_280 = arith.constant dense<0.000000e+00> : vector<8x16xf32>
    %577 = tpu.matmul %553, %576, %cst_280 {dimension_numbers = #tpu.dot_dimension_numbers<[1], [0], [0], [1], [0, 0, 1, 1], [], []>} : vector<8x16xbf16>, vector<16x16xbf16>, vector<8x16xf32> -> vector<8x16xf32>
    %578 = arith.addf %574, %577 : vector<8x16xf32>
    %579 = math.tanh %578 : vector<8x16xf32>
    %580 = vector.extract_strided_slice %56 {offsets = [24, 0], sizes = [8, 16], strides = [1, 1]} : vector<64x16xf32> to vector<8x16xf32>
    %c3_281 = arith.constant 3 : index
    %c0_282 = arith.constant 0 : index
    %c0_283 = arith.constant 0 : index
    %581 = vector.load %arg6[%c3_281, %c0_282, %c0_283] : memref<4x16x16xbf16, #tpu.memory_space<vmem>>, vector<1x16x16xbf16>
    %582 = vector.shape_cast %581 : vector<1x16x16xbf16> to vector<16x16xbf16>
    %cst_284 = arith.constant dense<0.000000e+00> : vector<8x16xf32>
    %583 = tpu.matmul %553, %582, %cst_284 {dimension_numbers = #tpu.dot_dimension_numbers<[1], [0], [0], [1], [0, 0, 1, 1], [], []>} : vector<8x16xbf16>, vector<16x16xbf16>, vector<8x16xf32> -> vector<8x16xf32>
    %584 = arith.addf %580, %583 : vector<8x16xf32>
    %585 = arith.negf %584 : vector<8x16xf32>
    %586 = math.exp %585 : vector<8x16xf32>
    %cst_285 = arith.constant 1.000000e+00 : f32
    %587 = vector.broadcast %cst_285 : f32 to vector<8x16xf32>
    %588 = arith.addf %587, %586 : vector<8x16xf32>
    %589 = arith.divf %587, %588 : vector<8x16xf32>
    %590 = arith.mulf %573, %486 : vector<8x16xf32>
    %591 = arith.mulf %563, %579 : vector<8x16xf32>
    %592 = arith.addf %590, %591 : vector<8x16xf32>
    %cst_286 = arith.constant 0.000000e+00 : f32
    %593 = vector.shape_cast %552 : vector<8x1xi1> to vector<8x1xi1>
    %594 = vector.broadcast %593 : vector<8x1xi1> to vector<8x16xi1>
    %595 = vector.broadcast %cst_286 : f32 to vector<8x16xf32>
    %596 = arith.select %594, %592, %595 : vector<8x16xi1>, vector<8x16xf32>
    %597 = math.tanh %596 : vector<8x16xf32>
    %598 = arith.mulf %589, %597 : vector<8x16xf32>
    %cst_287 = arith.constant 0.000000e+00 : f32
    %599 = vector.shape_cast %552 : vector<8x1xi1> to vector<8x1xi1>
    %600 = vector.broadcast %599 : vector<8x1xi1> to vector<8x16xi1>
    %601 = vector.broadcast %cst_287 : f32 to vector<8x16xf32>
    %602 = arith.select %600, %598, %601 : vector<8x16xi1>, vector<8x16xf32>
    %c4_288 = arith.constant 4 : index
    %c0_289 = arith.constant 0 : index
    %c0_290 = arith.constant 0 : index
    %603 = vector.load %arg8[%c4_288, %c0_289, %c0_290] : memref<8x8x16xf32, #tpu.memory_space<vmem>>, vector<1x8x16xf32>
    %604 = vector.shape_cast %603 : vector<1x8x16xf32> to vector<8x16xf32>
    %605 = vector.shape_cast %550 : vector<8x16xf32> to vector<1x8x16xf32>
    tpu.vector_store %arg8[%c4_288, %c0_289, %c0_290], %605 {strides = array<i32>} : memref<8x8x16xf32, #tpu.memory_space<vmem>>, vector<1x8x16xf32>,
    %c3_291 = arith.constant 3 : index
    %c0_292 = arith.constant 0 : index
    %c0_293 = arith.constant 0 : index
    %606 = vector.load %arg9[%c3_291, %c0_292, %c0_293] : memref<8x8x16xf32, #tpu.memory_space<vmem>>, vector<1x8x16xf32>
    %607 = vector.shape_cast %606 : vector<1x8x16xf32> to vector<8x16xf32>
    %608 = vector.shape_cast %602 : vector<8x16xf32> to vector<1x8x16xf32>
    tpu.vector_store %arg9[%c3_291, %c0_292, %c0_293], %608 {strides = array<i32>} : memref<8x8x16xf32, #tpu.memory_space<vmem>>, vector<1x8x16xf32>,
    %c5_i32_294 = arith.constant 5 : i32
    %609 = vector.broadcast %c5_i32_294 : i32 to vector<8x1xi32>
    %610 = arith.cmpi sgt, %57, %609 : vector<8x1xi32>
    %611 = arith.truncf %550 : vector<8x16xf32> to vector<8x16xbf16>
    %612 = vector.extract_strided_slice %7 {offsets = [40, 0], sizes = [8, 16], strides = [1, 1]} : vector<64x16xf32> to vector<8x16xf32>
    %c0_295 = arith.constant 0 : index
    %c0_296 = arith.constant 0 : index
    %c0_297 = arith.constant 0 : index
    %613 = vector.load %arg3[%c0_295, %c0_296, %c0_297] : memref<4x16x16xbf16, #tpu.memory_space<vmem>>, vector<1x16x16xbf16>
    %614 = vector.shape_cast %613 : vector<1x16x16xbf16> to vector<16x16xbf16>
    %cst_298 = arith.constant dense<0.000000e+00> : vector<8x16xf32>
    %615 = tpu.matmul %611, %614, %cst_298 {dimension_numbers = #tpu.dot_dimension_numbers<[1], [0], [0], [1], [0, 0, 1, 1], [], []>} : vector<8x16xbf16>, vector<16x16xbf16>, vector<8x16xf32> -> vector<8x16xf32>
    %616 = arith.addf %612, %615 : vector<8x16xf32>
    %617 = arith.negf %616 : vector<8x16xf32>
    %618 = math.exp %617 : vector<8x16xf32>
    %cst_299 = arith.constant 1.000000e+00 : f32
    %619 = vector.broadcast %cst_299 : f32 to vector<8x16xf32>
    %620 = arith.addf %619, %618 : vector<8x16xf32>
    %621 = arith.divf %619, %620 : vector<8x16xf32>
    %622 = vector.extract_strided_slice %14 {offsets = [40, 0], sizes = [8, 16], strides = [1, 1]} : vector<64x16xf32> to vector<8x16xf32>
    %c1_300 = arith.constant 1 : index
    %c0_301 = arith.constant 0 : index
    %c0_302 = arith.constant 0 : index
    %623 = vector.load %arg3[%c1_300, %c0_301, %c0_302] : memref<4x16x16xbf16, #tpu.memory_space<vmem>>, vector<1x16x16xbf16>
    %624 = vector.shape_cast %623 : vector<1x16x16xbf16> to vector<16x16xbf16>
    %cst_303 = arith.constant dense<0.000000e+00> : vector<8x16xf32>
    %625 = tpu.matmul %611, %624, %cst_303 {dimension_numbers = #tpu.dot_dimension_numbers<[1], [0], [0], [1], [0, 0, 1, 1], [], []>} : vector<8x16xbf16>, vector<16x16xbf16>, vector<8x16xf32> -> vector<8x16xf32>
    %626 = arith.addf %622, %625 : vector<8x16xf32>
    %627 = arith.negf %626 : vector<8x16xf32>
    %628 = math.exp %627 : vector<8x16xf32>
    %cst_304 = arith.constant 1.000000e+00 : f32
    %629 = vector.broadcast %cst_304 : f32 to vector<8x16xf32>
    %630 = arith.addf %629, %628 : vector<8x16xf32>
    %631 = arith.divf %629, %630 : vector<8x16xf32>
    %632 = vector.extract_strided_slice %21 {offsets = [40, 0], sizes = [8, 16], strides = [1, 1]} : vector<64x16xf32> to vector<8x16xf32>
    %c2_305 = arith.constant 2 : index
    %c0_306 = arith.constant 0 : index
    %c0_307 = arith.constant 0 : index
    %633 = vector.load %arg3[%c2_305, %c0_306, %c0_307] : memref<4x16x16xbf16, #tpu.memory_space<vmem>>, vector<1x16x16xbf16>
    %634 = vector.shape_cast %633 : vector<1x16x16xbf16> to vector<16x16xbf16>
    %cst_308 = arith.constant dense<0.000000e+00> : vector<8x16xf32>
    %635 = tpu.matmul %611, %634, %cst_308 {dimension_numbers = #tpu.dot_dimension_numbers<[1], [0], [0], [1], [0, 0, 1, 1], [], []>} : vector<8x16xbf16>, vector<16x16xbf16>, vector<8x16xf32> -> vector<8x16xf32>
    %636 = arith.addf %632, %635 : vector<8x16xf32>
    %637 = math.tanh %636 : vector<8x16xf32>
    %638 = vector.extract_strided_slice %28 {offsets = [40, 0], sizes = [8, 16], strides = [1, 1]} : vector<64x16xf32> to vector<8x16xf32>
    %c3_309 = arith.constant 3 : index
    %c0_310 = arith.constant 0 : index
    %c0_311 = arith.constant 0 : index
    %639 = vector.load %arg3[%c3_309, %c0_310, %c0_311] : memref<4x16x16xbf16, #tpu.memory_space<vmem>>, vector<1x16x16xbf16>
    %640 = vector.shape_cast %639 : vector<1x16x16xbf16> to vector<16x16xbf16>
    %cst_312 = arith.constant dense<0.000000e+00> : vector<8x16xf32>
    %641 = tpu.matmul %611, %640, %cst_312 {dimension_numbers = #tpu.dot_dimension_numbers<[1], [0], [0], [1], [0, 0, 1, 1], [], []>} : vector<8x16xbf16>, vector<16x16xbf16>, vector<8x16xf32> -> vector<8x16xf32>
    %642 = arith.addf %638, %641 : vector<8x16xf32>
    %643 = arith.negf %642 : vector<8x16xf32>
    %644 = math.exp %643 : vector<8x16xf32>
    %cst_313 = arith.constant 1.000000e+00 : f32
    %645 = vector.broadcast %cst_313 : f32 to vector<8x16xf32>
    %646 = arith.addf %645, %644 : vector<8x16xf32>
    %647 = arith.divf %645, %646 : vector<8x16xf32>
    %648 = arith.mulf %631, %544 : vector<8x16xf32>
    %649 = arith.mulf %621, %637 : vector<8x16xf32>
    %650 = arith.addf %648, %649 : vector<8x16xf32>
    %cst_314 = arith.constant 0.000000e+00 : f32
    %651 = vector.shape_cast %610 : vector<8x1xi1> to vector<8x1xi1>
    %652 = vector.broadcast %651 : vector<8x1xi1> to vector<8x16xi1>
    %653 = vector.broadcast %cst_314 : f32 to vector<8x16xf32>
    %654 = arith.select %652, %650, %653 : vector<8x16xi1>, vector<8x16xf32>
    %655 = math.tanh %654 : vector<8x16xf32>
    %656 = arith.mulf %647, %655 : vector<8x16xf32>
    %cst_315 = arith.constant 0.000000e+00 : f32
    %657 = vector.shape_cast %610 : vector<8x1xi1> to vector<8x1xi1>
    %658 = vector.broadcast %657 : vector<8x1xi1> to vector<8x16xi1>
    %659 = vector.broadcast %cst_315 : f32 to vector<8x16xf32>
    %660 = arith.select %658, %656, %659 : vector<8x16xi1>, vector<8x16xf32>
    %c2_i32_316 = arith.constant 2 : i32
    %661 = vector.broadcast %c2_i32_316 : i32 to vector<8x1xi32>
    %662 = arith.cmpi sgt, %57, %661 : vector<8x1xi32>
    %663 = arith.truncf %602 : vector<8x16xf32> to vector<8x16xbf16>
    %664 = vector.extract_strided_slice %35 {offsets = [16, 0], sizes = [8, 16], strides = [1, 1]} : vector<64x16xf32> to vector<8x16xf32>
    %c0_317 = arith.constant 0 : index
    %c0_318 = arith.constant 0 : index
    %c0_319 = arith.constant 0 : index
    %665 = vector.load %arg6[%c0_317, %c0_318, %c0_319] : memref<4x16x16xbf16, #tpu.memory_space<vmem>>, vector<1x16x16xbf16>
    %666 = vector.shape_cast %665 : vector<1x16x16xbf16> to vector<16x16xbf16>
    %cst_320 = arith.constant dense<0.000000e+00> : vector<8x16xf32>
    %667 = tpu.matmul %663, %666, %cst_320 {dimension_numbers = #tpu.dot_dimension_numbers<[1], [0], [0], [1], [0, 0, 1, 1], [], []>} : vector<8x16xbf16>, vector<16x16xbf16>, vector<8x16xf32> -> vector<8x16xf32>
    %668 = arith.addf %664, %667 : vector<8x16xf32>
    %669 = arith.negf %668 : vector<8x16xf32>
    %670 = math.exp %669 : vector<8x16xf32>
    %cst_321 = arith.constant 1.000000e+00 : f32
    %671 = vector.broadcast %cst_321 : f32 to vector<8x16xf32>
    %672 = arith.addf %671, %670 : vector<8x16xf32>
    %673 = arith.divf %671, %672 : vector<8x16xf32>
    %674 = vector.extract_strided_slice %42 {offsets = [16, 0], sizes = [8, 16], strides = [1, 1]} : vector<64x16xf32> to vector<8x16xf32>
    %c1_322 = arith.constant 1 : index
    %c0_323 = arith.constant 0 : index
    %c0_324 = arith.constant 0 : index
    %675 = vector.load %arg6[%c1_322, %c0_323, %c0_324] : memref<4x16x16xbf16, #tpu.memory_space<vmem>>, vector<1x16x16xbf16>
    %676 = vector.shape_cast %675 : vector<1x16x16xbf16> to vector<16x16xbf16>
    %cst_325 = arith.constant dense<0.000000e+00> : vector<8x16xf32>
    %677 = tpu.matmul %663, %676, %cst_325 {dimension_numbers = #tpu.dot_dimension_numbers<[1], [0], [0], [1], [0, 0, 1, 1], [], []>} : vector<8x16xbf16>, vector<16x16xbf16>, vector<8x16xf32> -> vector<8x16xf32>
    %678 = arith.addf %674, %677 : vector<8x16xf32>
    %679 = arith.negf %678 : vector<8x16xf32>
    %680 = math.exp %679 : vector<8x16xf32>
    %cst_326 = arith.constant 1.000000e+00 : f32
    %681 = vector.broadcast %cst_326 : f32 to vector<8x16xf32>
    %682 = arith.addf %681, %680 : vector<8x16xf32>
    %683 = arith.divf %681, %682 : vector<8x16xf32>
    %684 = vector.extract_strided_slice %49 {offsets = [16, 0], sizes = [8, 16], strides = [1, 1]} : vector<64x16xf32> to vector<8x16xf32>
    %c2_327 = arith.constant 2 : index
    %c0_328 = arith.constant 0 : index
    %c0_329 = arith.constant 0 : index
    %685 = vector.load %arg6[%c2_327, %c0_328, %c0_329] : memref<4x16x16xbf16, #tpu.memory_space<vmem>>, vector<1x16x16xbf16>
    %686 = vector.shape_cast %685 : vector<1x16x16xbf16> to vector<16x16xbf16>
    %cst_330 = arith.constant dense<0.000000e+00> : vector<8x16xf32>
    %687 = tpu.matmul %663, %686, %cst_330 {dimension_numbers = #tpu.dot_dimension_numbers<[1], [0], [0], [1], [0, 0, 1, 1], [], []>} : vector<8x16xbf16>, vector<16x16xbf16>, vector<8x16xf32> -> vector<8x16xf32>
    %688 = arith.addf %684, %687 : vector<8x16xf32>
    %689 = math.tanh %688 : vector<8x16xf32>
    %690 = vector.extract_strided_slice %56 {offsets = [16, 0], sizes = [8, 16], strides = [1, 1]} : vector<64x16xf32> to vector<8x16xf32>
    %c3_331 = arith.constant 3 : index
    %c0_332 = arith.constant 0 : index
    %c0_333 = arith.constant 0 : index
    %691 = vector.load %arg6[%c3_331, %c0_332, %c0_333] : memref<4x16x16xbf16, #tpu.memory_space<vmem>>, vector<1x16x16xbf16>
    %692 = vector.shape_cast %691 : vector<1x16x16xbf16> to vector<16x16xbf16>
    %cst_334 = arith.constant dense<0.000000e+00> : vector<8x16xf32>
    %693 = tpu.matmul %663, %692, %cst_334 {dimension_numbers = #tpu.dot_dimension_numbers<[1], [0], [0], [1], [0, 0, 1, 1], [], []>} : vector<8x16xbf16>, vector<16x16xbf16>, vector<8x16xf32> -> vector<8x16xf32>
    %694 = arith.addf %690, %693 : vector<8x16xf32>
    %695 = arith.negf %694 : vector<8x16xf32>
    %696 = math.exp %695 : vector<8x16xf32>
    %cst_335 = arith.constant 1.000000e+00 : f32
    %697 = vector.broadcast %cst_335 : f32 to vector<8x16xf32>
    %698 = arith.addf %697, %696 : vector<8x16xf32>
    %699 = arith.divf %697, %698 : vector<8x16xf32>
    %700 = arith.mulf %683, %596 : vector<8x16xf32>
    %701 = arith.mulf %673, %689 : vector<8x16xf32>
    %702 = arith.addf %700, %701 : vector<8x16xf32>
    %cst_336 = arith.constant 0.000000e+00 : f32
    %703 = vector.shape_cast %662 : vector<8x1xi1> to vector<8x1xi1>
    %704 = vector.broadcast %703 : vector<8x1xi1> to vector<8x16xi1>
    %705 = vector.broadcast %cst_336 : f32 to vector<8x16xf32>
    %706 = arith.select %704, %702, %705 : vector<8x16xi1>, vector<8x16xf32>
    %707 = math.tanh %706 : vector<8x16xf32>
    %708 = arith.mulf %699, %707 : vector<8x16xf32>
    %cst_337 = arith.constant 0.000000e+00 : f32
    %709 = vector.shape_cast %662 : vector<8x1xi1> to vector<8x1xi1>
    %710 = vector.broadcast %709 : vector<8x1xi1> to vector<8x16xi1>
    %711 = vector.broadcast %cst_337 : f32 to vector<8x16xf32>
    %712 = arith.select %710, %708, %711 : vector<8x16xi1>, vector<8x16xf32>
    %c5_338 = arith.constant 5 : index
    %c0_339 = arith.constant 0 : index
    %c0_340 = arith.constant 0 : index
    %713 = vector.load %arg8[%c5_338, %c0_339, %c0_340] : memref<8x8x16xf32, #tpu.memory_space<vmem>>, vector<1x8x16xf32>
    %714 = vector.shape_cast %713 : vector<1x8x16xf32> to vector<8x16xf32>
    %715 = vector.shape_cast %660 : vector<8x16xf32> to vector<1x8x16xf32>
    tpu.vector_store %arg8[%c5_338, %c0_339, %c0_340], %715 {strides = array<i32>} : memref<8x8x16xf32, #tpu.memory_space<vmem>>, vector<1x8x16xf32>,
    %c2_341 = arith.constant 2 : index
    %c0_342 = arith.constant 0 : index
    %c0_343 = arith.constant 0 : index
    %716 = vector.load %arg9[%c2_341, %c0_342, %c0_343] : memref<8x8x16xf32, #tpu.memory_space<vmem>>, vector<1x8x16xf32>
    %717 = vector.shape_cast %716 : vector<1x8x16xf32> to vector<8x16xf32>
    %718 = vector.shape_cast %712 : vector<8x16xf32> to vector<1x8x16xf32>
    tpu.vector_store %arg9[%c2_341, %c0_342, %c0_343], %718 {strides = array<i32>} : memref<8x8x16xf32, #tpu.memory_space<vmem>>, vector<1x8x16xf32>,
    %c6_i32_344 = arith.constant 6 : i32
    %719 = vector.broadcast %c6_i32_344 : i32 to vector<8x1xi32>
    %720 = arith.cmpi sgt, %57, %719 : vector<8x1xi32>
    %721 = arith.truncf %660 : vector<8x16xf32> to vector<8x16xbf16>
    %722 = vector.extract_strided_slice %7 {offsets = [48, 0], sizes = [8, 16], strides = [1, 1]} : vector<64x16xf32> to vector<8x16xf32>
    %c0_345 = arith.constant 0 : index
    %c0_346 = arith.constant 0 : index
    %c0_347 = arith.constant 0 : index
    %723 = vector.load %arg3[%c0_345, %c0_346, %c0_347] : memref<4x16x16xbf16, #tpu.memory_space<vmem>>, vector<1x16x16xbf16>
    %724 = vector.shape_cast %723 : vector<1x16x16xbf16> to vector<16x16xbf16>
    %cst_348 = arith.constant dense<0.000000e+00> : vector<8x16xf32>
    %725 = tpu.matmul %721, %724, %cst_348 {dimension_numbers = #tpu.dot_dimension_numbers<[1], [0], [0], [1], [0, 0, 1, 1], [], []>} : vector<8x16xbf16>, vector<16x16xbf16>, vector<8x16xf32> -> vector<8x16xf32>
    %726 = arith.addf %722, %725 : vector<8x16xf32>
    %727 = arith.negf %726 : vector<8x16xf32>
    %728 = math.exp %727 : vector<8x16xf32>
    %cst_349 = arith.constant 1.000000e+00 : f32
    %729 = vector.broadcast %cst_349 : f32 to vector<8x16xf32>
    %730 = arith.addf %729, %728 : vector<8x16xf32>
    %731 = arith.divf %729, %730 : vector<8x16xf32>
    %732 = vector.extract_strided_slice %14 {offsets = [48, 0], sizes = [8, 16], strides = [1, 1]} : vector<64x16xf32> to vector<8x16xf32>
    %c1_350 = arith.constant 1 : index
    %c0_351 = arith.constant 0 : index
    %c0_352 = arith.constant 0 : index
    %733 = vector.load %arg3[%c1_350, %c0_351, %c0_352] : memref<4x16x16xbf16, #tpu.memory_space<vmem>>, vector<1x16x16xbf16>
    %734 = vector.shape_cast %733 : vector<1x16x16xbf16> to vector<16x16xbf16>
    %cst_353 = arith.constant dense<0.000000e+00> : vector<8x16xf32>
    %735 = tpu.matmul %721, %734, %cst_353 {dimension_numbers = #tpu.dot_dimension_numbers<[1], [0], [0], [1], [0, 0, 1, 1], [], []>} : vector<8x16xbf16>, vector<16x16xbf16>, vector<8x16xf32> -> vector<8x16xf32>
    %736 = arith.addf %732, %735 : vector<8x16xf32>
    %737 = arith.negf %736 : vector<8x16xf32>
    %738 = math.exp %737 : vector<8x16xf32>
    %cst_354 = arith.constant 1.000000e+00 : f32
    %739 = vector.broadcast %cst_354 : f32 to vector<8x16xf32>
    %740 = arith.addf %739, %738 : vector<8x16xf32>
    %741 = arith.divf %739, %740 : vector<8x16xf32>
    %742 = vector.extract_strided_slice %21 {offsets = [48, 0], sizes = [8, 16], strides = [1, 1]} : vector<64x16xf32> to vector<8x16xf32>
    %c2_355 = arith.constant 2 : index
    %c0_356 = arith.constant 0 : index
    %c0_357 = arith.constant 0 : index
    %743 = vector.load %arg3[%c2_355, %c0_356, %c0_357] : memref<4x16x16xbf16, #tpu.memory_space<vmem>>, vector<1x16x16xbf16>
    %744 = vector.shape_cast %743 : vector<1x16x16xbf16> to vector<16x16xbf16>
    %cst_358 = arith.constant dense<0.000000e+00> : vector<8x16xf32>
    %745 = tpu.matmul %721, %744, %cst_358 {dimension_numbers = #tpu.dot_dimension_numbers<[1], [0], [0], [1], [0, 0, 1, 1], [], []>} : vector<8x16xbf16>, vector<16x16xbf16>, vector<8x16xf32> -> vector<8x16xf32>
    %746 = arith.addf %742, %745 : vector<8x16xf32>
    %747 = math.tanh %746 : vector<8x16xf32>
    %748 = vector.extract_strided_slice %28 {offsets = [48, 0], sizes = [8, 16], strides = [1, 1]} : vector<64x16xf32> to vector<8x16xf32>
    %c3_359 = arith.constant 3 : index
    %c0_360 = arith.constant 0 : index
    %c0_361 = arith.constant 0 : index
    %749 = vector.load %arg3[%c3_359, %c0_360, %c0_361] : memref<4x16x16xbf16, #tpu.memory_space<vmem>>, vector<1x16x16xbf16>
    %750 = vector.shape_cast %749 : vector<1x16x16xbf16> to vector<16x16xbf16>
    %cst_362 = arith.constant dense<0.000000e+00> : vector<8x16xf32>
    %751 = tpu.matmul %721, %750, %cst_362 {dimension_numbers = #tpu.dot_dimension_numbers<[1], [0], [0], [1], [0, 0, 1, 1], [], []>} : vector<8x16xbf16>, vector<16x16xbf16>, vector<8x16xf32> -> vector<8x16xf32>
    %752 = arith.addf %748, %751 : vector<8x16xf32>
    %753 = arith.negf %752 : vector<8x16xf32>
    %754 = math.exp %753 : vector<8x16xf32>
    %cst_363 = arith.constant 1.000000e+00 : f32
    %755 = vector.broadcast %cst_363 : f32 to vector<8x16xf32>
    %756 = arith.addf %755, %754 : vector<8x16xf32>
    %757 = arith.divf %755, %756 : vector<8x16xf32>
    %758 = arith.mulf %741, %654 : vector<8x16xf32>
    %759 = arith.mulf %731, %747 : vector<8x16xf32>
    %760 = arith.addf %758, %759 : vector<8x16xf32>
    %cst_364 = arith.constant 0.000000e+00 : f32
    %761 = vector.shape_cast %720 : vector<8x1xi1> to vector<8x1xi1>
    %762 = vector.broadcast %761 : vector<8x1xi1> to vector<8x16xi1>
    %763 = vector.broadcast %cst_364 : f32 to vector<8x16xf32>
    %764 = arith.select %762, %760, %763 : vector<8x16xi1>, vector<8x16xf32>
    %765 = math.tanh %764 : vector<8x16xf32>
    %766 = arith.mulf %757, %765 : vector<8x16xf32>
    %cst_365 = arith.constant 0.000000e+00 : f32
    %767 = vector.shape_cast %720 : vector<8x1xi1> to vector<8x1xi1>
    %768 = vector.broadcast %767 : vector<8x1xi1> to vector<8x16xi1>
    %769 = vector.broadcast %cst_365 : f32 to vector<8x16xf32>
    %770 = arith.select %768, %766, %769 : vector<8x16xi1>, vector<8x16xf32>
    %c1_i32_366 = arith.constant 1 : i32
    %771 = vector.broadcast %c1_i32_366 : i32 to vector<8x1xi32>
    %772 = arith.cmpi sgt, %57, %771 : vector<8x1xi32>
    %773 = arith.truncf %712 : vector<8x16xf32> to vector<8x16xbf16>
    %774 = vector.extract_strided_slice %35 {offsets = [8, 0], sizes = [8, 16], strides = [1, 1]} : vector<64x16xf32> to vector<8x16xf32>
    %c0_367 = arith.constant 0 : index
    %c0_368 = arith.constant 0 : index
    %c0_369 = arith.constant 0 : index
    %775 = vector.load %arg6[%c0_367, %c0_368, %c0_369] : memref<4x16x16xbf16, #tpu.memory_space<vmem>>, vector<1x16x16xbf16>
    %776 = vector.shape_cast %775 : vector<1x16x16xbf16> to vector<16x16xbf16>
    %cst_370 = arith.constant dense<0.000000e+00> : vector<8x16xf32>
    %777 = tpu.matmul %773, %776, %cst_370 {dimension_numbers = #tpu.dot_dimension_numbers<[1], [0], [0], [1], [0, 0, 1, 1], [], []>} : vector<8x16xbf16>, vector<16x16xbf16>, vector<8x16xf32> -> vector<8x16xf32>
    %778 = arith.addf %774, %777 : vector<8x16xf32>
    %779 = arith.negf %778 : vector<8x16xf32>
    %780 = math.exp %779 : vector<8x16xf32>
    %cst_371 = arith.constant 1.000000e+00 : f32
    %781 = vector.broadcast %cst_371 : f32 to vector<8x16xf32>
    %782 = arith.addf %781, %780 : vector<8x16xf32>
    %783 = arith.divf %781, %782 : vector<8x16xf32>
    %784 = vector.extract_strided_slice %42 {offsets = [8, 0], sizes = [8, 16], strides = [1, 1]} : vector<64x16xf32> to vector<8x16xf32>
    %c1_372 = arith.constant 1 : index
    %c0_373 = arith.constant 0 : index
    %c0_374 = arith.constant 0 : index
    %785 = vector.load %arg6[%c1_372, %c0_373, %c0_374] : memref<4x16x16xbf16, #tpu.memory_space<vmem>>, vector<1x16x16xbf16>
    %786 = vector.shape_cast %785 : vector<1x16x16xbf16> to vector<16x16xbf16>
    %cst_375 = arith.constant dense<0.000000e+00> : vector<8x16xf32>
    %787 = tpu.matmul %773, %786, %cst_375 {dimension_numbers = #tpu.dot_dimension_numbers<[1], [0], [0], [1], [0, 0, 1, 1], [], []>} : vector<8x16xbf16>, vector<16x16xbf16>, vector<8x16xf32> -> vector<8x16xf32>
    %788 = arith.addf %784, %787 : vector<8x16xf32>
    %789 = arith.negf %788 : vector<8x16xf32>
    %790 = math.exp %789 : vector<8x16xf32>
    %cst_376 = arith.constant 1.000000e+00 : f32
    %791 = vector.broadcast %cst_376 : f32 to vector<8x16xf32>
    %792 = arith.addf %791, %790 : vector<8x16xf32>
    %793 = arith.divf %791, %792 : vector<8x16xf32>
    %794 = vector.extract_strided_slice %49 {offsets = [8, 0], sizes = [8, 16], strides = [1, 1]} : vector<64x16xf32> to vector<8x16xf32>
    %c2_377 = arith.constant 2 : index
    %c0_378 = arith.constant 0 : index
    %c0_379 = arith.constant 0 : index
    %795 = vector.load %arg6[%c2_377, %c0_378, %c0_379] : memref<4x16x16xbf16, #tpu.memory_space<vmem>>, vector<1x16x16xbf16>
    %796 = vector.shape_cast %795 : vector<1x16x16xbf16> to vector<16x16xbf16>
    %cst_380 = arith.constant dense<0.000000e+00> : vector<8x16xf32>
    %797 = tpu.matmul %773, %796, %cst_380 {dimension_numbers = #tpu.dot_dimension_numbers<[1], [0], [0], [1], [0, 0, 1, 1], [], []>} : vector<8x16xbf16>, vector<16x16xbf16>, vector<8x16xf32> -> vector<8x16xf32>
    %798 = arith.addf %794, %797 : vector<8x16xf32>
    %799 = math.tanh %798 : vector<8x16xf32>
    %800 = vector.extract_strided_slice %56 {offsets = [8, 0], sizes = [8, 16], strides = [1, 1]} : vector<64x16xf32> to vector<8x16xf32>
    %c3_381 = arith.constant 3 : index
    %c0_382 = arith.constant 0 : index
    %c0_383 = arith.constant 0 : index
    %801 = vector.load %arg6[%c3_381, %c0_382, %c0_383] : memref<4x16x16xbf16, #tpu.memory_space<vmem>>, vector<1x16x16xbf16>
    %802 = vector.shape_cast %801 : vector<1x16x16xbf16> to vector<16x16xbf16>
    %cst_384 = arith.constant dense<0.000000e+00> : vector<8x16xf32>
    %803 = tpu.matmul %773, %802, %cst_384 {dimension_numbers = #tpu.dot_dimension_numbers<[1], [0], [0], [1], [0, 0, 1, 1], [], []>} : vector<8x16xbf16>, vector<16x16xbf16>, vector<8x16xf32> -> vector<8x16xf32>
    %804 = arith.addf %800, %803 : vector<8x16xf32>
    %805 = arith.negf %804 : vector<8x16xf32>
    %806 = math.exp %805 : vector<8x16xf32>
    %cst_385 = arith.constant 1.000000e+00 : f32
    %807 = vector.broadcast %cst_385 : f32 to vector<8x16xf32>
    %808 = arith.addf %807, %806 : vector<8x16xf32>
    %809 = arith.divf %807, %808 : vector<8x16xf32>
    %810 = arith.mulf %793, %706 : vector<8x16xf32>
    %811 = arith.mulf %783, %799 : vector<8x16xf32>
    %812 = arith.addf %810, %811 : vector<8x16xf32>
    %cst_386 = arith.constant 0.000000e+00 : f32
    %813 = vector.shape_cast %772 : vector<8x1xi1> to vector<8x1xi1>
    %814 = vector.broadcast %813 : vector<8x1xi1> to vector<8x16xi1>
    %815 = vector.broadcast %cst_386 : f32 to vector<8x16xf32>
    %816 = arith.select %814, %812, %815 : vector<8x16xi1>, vector<8x16xf32>
    %817 = math.tanh %816 : vector<8x16xf32>
    %818 = arith.mulf %809, %817 : vector<8x16xf32>
    %cst_387 = arith.constant 0.000000e+00 : f32
    %819 = vector.shape_cast %772 : vector<8x1xi1> to vector<8x1xi1>
    %820 = vector.broadcast %819 : vector<8x1xi1> to vector<8x16xi1>
    %821 = vector.broadcast %cst_387 : f32 to vector<8x16xf32>
    %822 = arith.select %820, %818, %821 : vector<8x16xi1>, vector<8x16xf32>
    %c6_388 = arith.constant 6 : index
    %c0_389 = arith.constant 0 : index
    %c0_390 = arith.constant 0 : index
    %823 = vector.load %arg8[%c6_388, %c0_389, %c0_390] : memref<8x8x16xf32, #tpu.memory_space<vmem>>, vector<1x8x16xf32>
    %824 = vector.shape_cast %823 : vector<1x8x16xf32> to vector<8x16xf32>
    %825 = vector.shape_cast %770 : vector<8x16xf32> to vector<1x8x16xf32>
    tpu.vector_store %arg8[%c6_388, %c0_389, %c0_390], %825 {strides = array<i32>} : memref<8x8x16xf32, #tpu.memory_space<vmem>>, vector<1x8x16xf32>,
    %c1_391 = arith.constant 1 : index
    %c0_392 = arith.constant 0 : index
    %c0_393 = arith.constant 0 : index
    %826 = vector.load %arg9[%c1_391, %c0_392, %c0_393] : memref<8x8x16xf32, #tpu.memory_space<vmem>>, vector<1x8x16xf32>
    %827 = vector.shape_cast %826 : vector<1x8x16xf32> to vector<8x16xf32>
    %828 = vector.shape_cast %822 : vector<8x16xf32> to vector<1x8x16xf32>
    tpu.vector_store %arg9[%c1_391, %c0_392, %c0_393], %828 {strides = array<i32>} : memref<8x8x16xf32, #tpu.memory_space<vmem>>, vector<1x8x16xf32>,
    %c7_i32_394 = arith.constant 7 : i32
    %829 = vector.broadcast %c7_i32_394 : i32 to vector<8x1xi32>
    %830 = arith.cmpi sgt, %57, %829 : vector<8x1xi32>
    %831 = arith.truncf %770 : vector<8x16xf32> to vector<8x16xbf16>
    %832 = vector.extract_strided_slice %7 {offsets = [56, 0], sizes = [8, 16], strides = [1, 1]} : vector<64x16xf32> to vector<8x16xf32>
    %c0_395 = arith.constant 0 : index
    %c0_396 = arith.constant 0 : index
    %c0_397 = arith.constant 0 : index
    %833 = vector.load %arg3[%c0_395, %c0_396, %c0_397] : memref<4x16x16xbf16, #tpu.memory_space<vmem>>, vector<1x16x16xbf16>
    %834 = vector.shape_cast %833 : vector<1x16x16xbf16> to vector<16x16xbf16>
    %cst_398 = arith.constant dense<0.000000e+00> : vector<8x16xf32>
    %835 = tpu.matmul %831, %834, %cst_398 {dimension_numbers = #tpu.dot_dimension_numbers<[1], [0], [0], [1], [0, 0, 1, 1], [], []>} : vector<8x16xbf16>, vector<16x16xbf16>, vector<8x16xf32> -> vector<8x16xf32>
    %836 = arith.addf %832, %835 : vector<8x16xf32>
    %837 = arith.negf %836 : vector<8x16xf32>
    %838 = math.exp %837 : vector<8x16xf32>
    %cst_399 = arith.constant 1.000000e+00 : f32
    %839 = vector.broadcast %cst_399 : f32 to vector<8x16xf32>
    %840 = arith.addf %839, %838 : vector<8x16xf32>
    %841 = arith.divf %839, %840 : vector<8x16xf32>
    %842 = vector.extract_strided_slice %14 {offsets = [56, 0], sizes = [8, 16], strides = [1, 1]} : vector<64x16xf32> to vector<8x16xf32>
    %c1_400 = arith.constant 1 : index
    %c0_401 = arith.constant 0 : index
    %c0_402 = arith.constant 0 : index
    %843 = vector.load %arg3[%c1_400, %c0_401, %c0_402] : memref<4x16x16xbf16, #tpu.memory_space<vmem>>, vector<1x16x16xbf16>
    %844 = vector.shape_cast %843 : vector<1x16x16xbf16> to vector<16x16xbf16>
    %cst_403 = arith.constant dense<0.000000e+00> : vector<8x16xf32>
    %845 = tpu.matmul %831, %844, %cst_403 {dimension_numbers = #tpu.dot_dimension_numbers<[1], [0], [0], [1], [0, 0, 1, 1], [], []>} : vector<8x16xbf16>, vector<16x16xbf16>, vector<8x16xf32> -> vector<8x16xf32>
    %846 = arith.addf %842, %845 : vector<8x16xf32>
    %847 = arith.negf %846 : vector<8x16xf32>
    %848 = math.exp %847 : vector<8x16xf32>
    %cst_404 = arith.constant 1.000000e+00 : f32
    %849 = vector.broadcast %cst_404 : f32 to vector<8x16xf32>
    %850 = arith.addf %849, %848 : vector<8x16xf32>
    %851 = arith.divf %849, %850 : vector<8x16xf32>
    %852 = vector.extract_strided_slice %21 {offsets = [56, 0], sizes = [8, 16], strides = [1, 1]} : vector<64x16xf32> to vector<8x16xf32>
    %c2_405 = arith.constant 2 : index
    %c0_406 = arith.constant 0 : index
    %c0_407 = arith.constant 0 : index
    %853 = vector.load %arg3[%c2_405, %c0_406, %c0_407] : memref<4x16x16xbf16, #tpu.memory_space<vmem>>, vector<1x16x16xbf16>
    %854 = vector.shape_cast %853 : vector<1x16x16xbf16> to vector<16x16xbf16>
    %cst_408 = arith.constant dense<0.000000e+00> : vector<8x16xf32>
    %855 = tpu.matmul %831, %854, %cst_408 {dimension_numbers = #tpu.dot_dimension_numbers<[1], [0], [0], [1], [0, 0, 1, 1], [], []>} : vector<8x16xbf16>, vector<16x16xbf16>, vector<8x16xf32> -> vector<8x16xf32>
    %856 = arith.addf %852, %855 : vector<8x16xf32>
    %857 = math.tanh %856 : vector<8x16xf32>
    %858 = vector.extract_strided_slice %28 {offsets = [56, 0], sizes = [8, 16], strides = [1, 1]} : vector<64x16xf32> to vector<8x16xf32>
    %c3_409 = arith.constant 3 : index
    %c0_410 = arith.constant 0 : index
    %c0_411 = arith.constant 0 : index
    %859 = vector.load %arg3[%c3_409, %c0_410, %c0_411] : memref<4x16x16xbf16, #tpu.memory_space<vmem>>, vector<1x16x16xbf16>
    %860 = vector.shape_cast %859 : vector<1x16x16xbf16> to vector<16x16xbf16>
    %cst_412 = arith.constant dense<0.000000e+00> : vector<8x16xf32>
    %861 = tpu.matmul %831, %860, %cst_412 {dimension_numbers = #tpu.dot_dimension_numbers<[1], [0], [0], [1], [0, 0, 1, 1], [], []>} : vector<8x16xbf16>, vector<16x16xbf16>, vector<8x16xf32> -> vector<8x16xf32>
    %862 = arith.addf %858, %861 : vector<8x16xf32>
    %863 = arith.negf %862 : vector<8x16xf32>
    %864 = math.exp %863 : vector<8x16xf32>
    %cst_413 = arith.constant 1.000000e+00 : f32
    %865 = vector.broadcast %cst_413 : f32 to vector<8x16xf32>
    %866 = arith.addf %865, %864 : vector<8x16xf32>
    %867 = arith.divf %865, %866 : vector<8x16xf32>
    %868 = arith.mulf %851, %764 : vector<8x16xf32>
    %869 = arith.mulf %841, %857 : vector<8x16xf32>
    %870 = arith.addf %868, %869 : vector<8x16xf32>
    %cst_414 = arith.constant 0.000000e+00 : f32
    %871 = vector.shape_cast %830 : vector<8x1xi1> to vector<8x1xi1>
    %872 = vector.broadcast %871 : vector<8x1xi1> to vector<8x16xi1>
    %873 = vector.broadcast %cst_414 : f32 to vector<8x16xf32>
    %874 = arith.select %872, %870, %873 : vector<8x16xi1>, vector<8x16xf32>
    %875 = math.tanh %874 : vector<8x16xf32>
    %876 = arith.mulf %867, %875 : vector<8x16xf32>
    %cst_415 = arith.constant 0.000000e+00 : f32
    %877 = vector.shape_cast %830 : vector<8x1xi1> to vector<8x1xi1>
    %878 = vector.broadcast %877 : vector<8x1xi1> to vector<8x16xi1>
    %879 = vector.broadcast %cst_415 : f32 to vector<8x16xf32>
    %880 = arith.select %878, %876, %879 : vector<8x16xi1>, vector<8x16xf32>
    %c0_i32_416 = arith.constant 0 : i32
    %881 = vector.broadcast %c0_i32_416 : i32 to vector<8x1xi32>
    %882 = arith.cmpi sgt, %57, %881 : vector<8x1xi32>
    %883 = arith.truncf %822 : vector<8x16xf32> to vector<8x16xbf16>
    %884 = vector.extract_strided_slice %35 {offsets = [0, 0], sizes = [8, 16], strides = [1, 1]} : vector<64x16xf32> to vector<8x16xf32>
    %c0_417 = arith.constant 0 : index
    %c0_418 = arith.constant 0 : index
    %c0_419 = arith.constant 0 : index
    %885 = vector.load %arg6[%c0_417, %c0_418, %c0_419] : memref<4x16x16xbf16, #tpu.memory_space<vmem>>, vector<1x16x16xbf16>
    %886 = vector.shape_cast %885 : vector<1x16x16xbf16> to vector<16x16xbf16>
    %cst_420 = arith.constant dense<0.000000e+00> : vector<8x16xf32>
    %887 = tpu.matmul %883, %886, %cst_420 {dimension_numbers = #tpu.dot_dimension_numbers<[1], [0], [0], [1], [0, 0, 1, 1], [], []>} : vector<8x16xbf16>, vector<16x16xbf16>, vector<8x16xf32> -> vector<8x16xf32>
    %888 = arith.addf %884, %887 : vector<8x16xf32>
    %889 = arith.negf %888 : vector<8x16xf32>
    %890 = math.exp %889 : vector<8x16xf32>
    %cst_421 = arith.constant 1.000000e+00 : f32
    %891 = vector.broadcast %cst_421 : f32 to vector<8x16xf32>
    %892 = arith.addf %891, %890 : vector<8x16xf32>
    %893 = arith.divf %891, %892 : vector<8x16xf32>
    %894 = vector.extract_strided_slice %42 {offsets = [0, 0], sizes = [8, 16], strides = [1, 1]} : vector<64x16xf32> to vector<8x16xf32>
    %c1_422 = arith.constant 1 : index
    %c0_423 = arith.constant 0 : index
    %c0_424 = arith.constant 0 : index
    %895 = vector.load %arg6[%c1_422, %c0_423, %c0_424] : memref<4x16x16xbf16, #tpu.memory_space<vmem>>, vector<1x16x16xbf16>
    %896 = vector.shape_cast %895 : vector<1x16x16xbf16> to vector<16x16xbf16>
    %cst_425 = arith.constant dense<0.000000e+00> : vector<8x16xf32>
    %897 = tpu.matmul %883, %896, %cst_425 {dimension_numbers = #tpu.dot_dimension_numbers<[1], [0], [0], [1], [0, 0, 1, 1], [], []>} : vector<8x16xbf16>, vector<16x16xbf16>, vector<8x16xf32> -> vector<8x16xf32>
    %898 = arith.addf %894, %897 : vector<8x16xf32>
    %899 = arith.negf %898 : vector<8x16xf32>
    %900 = math.exp %899 : vector<8x16xf32>
    %cst_426 = arith.constant 1.000000e+00 : f32
    %901 = vector.broadcast %cst_426 : f32 to vector<8x16xf32>
    %902 = arith.addf %901, %900 : vector<8x16xf32>
    %903 = arith.divf %901, %902 : vector<8x16xf32>
    %904 = vector.extract_strided_slice %49 {offsets = [0, 0], sizes = [8, 16], strides = [1, 1]} : vector<64x16xf32> to vector<8x16xf32>
    %c2_427 = arith.constant 2 : index
    %c0_428 = arith.constant 0 : index
    %c0_429 = arith.constant 0 : index
    %905 = vector.load %arg6[%c2_427, %c0_428, %c0_429] : memref<4x16x16xbf16, #tpu.memory_space<vmem>>, vector<1x16x16xbf16>
    %906 = vector.shape_cast %905 : vector<1x16x16xbf16> to vector<16x16xbf16>
    %cst_430 = arith.constant dense<0.000000e+00> : vector<8x16xf32>
    %907 = tpu.matmul %883, %906, %cst_430 {dimension_numbers = #tpu.dot_dimension_numbers<[1], [0], [0], [1], [0, 0, 1, 1], [], []>} : vector<8x16xbf16>, vector<16x16xbf16>, vector<8x16xf32> -> vector<8x16xf32>
    %908 = arith.addf %904, %907 : vector<8x16xf32>
    %909 = math.tanh %908 : vector<8x16xf32>
    %910 = vector.extract_strided_slice %56 {offsets = [0, 0], sizes = [8, 16], strides = [1, 1]} : vector<64x16xf32> to vector<8x16xf32>
    %c3_431 = arith.constant 3 : index
    %c0_432 = arith.constant 0 : index
    %c0_433 = arith.constant 0 : index
    %911 = vector.load %arg6[%c3_431, %c0_432, %c0_433] : memref<4x16x16xbf16, #tpu.memory_space<vmem>>, vector<1x16x16xbf16>
    %912 = vector.shape_cast %911 : vector<1x16x16xbf16> to vector<16x16xbf16>
    %cst_434 = arith.constant dense<0.000000e+00> : vector<8x16xf32>
    %913 = tpu.matmul %883, %912, %cst_434 {dimension_numbers = #tpu.dot_dimension_numbers<[1], [0], [0], [1], [0, 0, 1, 1], [], []>} : vector<8x16xbf16>, vector<16x16xbf16>, vector<8x16xf32> -> vector<8x16xf32>
    %914 = arith.addf %910, %913 : vector<8x16xf32>
    %915 = arith.negf %914 : vector<8x16xf32>
    %916 = math.exp %915 : vector<8x16xf32>
    %cst_435 = arith.constant 1.000000e+00 : f32
    %917 = vector.broadcast %cst_435 : f32 to vector<8x16xf32>
    %918 = arith.addf %917, %916 : vector<8x16xf32>
    %919 = arith.divf %917, %918 : vector<8x16xf32>
    %920 = arith.mulf %903, %816 : vector<8x16xf32>
    %921 = arith.mulf %893, %909 : vector<8x16xf32>
    %922 = arith.addf %920, %921 : vector<8x16xf32>
    %cst_436 = arith.constant 0.000000e+00 : f32
    %923 = vector.shape_cast %882 : vector<8x1xi1> to vector<8x1xi1>
    %924 = vector.broadcast %923 : vector<8x1xi1> to vector<8x16xi1>
    %925 = vector.broadcast %cst_436 : f32 to vector<8x16xf32>
    %926 = arith.select %924, %922, %925 : vector<8x16xi1>, vector<8x16xf32>
    %927 = math.tanh %926 : vector<8x16xf32>
    %928 = arith.mulf %919, %927 : vector<8x16xf32>
    %cst_437 = arith.constant 0.000000e+00 : f32
    %929 = vector.shape_cast %882 : vector<8x1xi1> to vector<8x1xi1>
    %930 = vector.broadcast %929 : vector<8x1xi1> to vector<8x16xi1>
    %931 = vector.broadcast %cst_437 : f32 to vector<8x16xf32>
    %932 = arith.select %930, %928, %931 : vector<8x16xi1>, vector<8x16xf32>
    %c7_438 = arith.constant 7 : index
    %c0_439 = arith.constant 0 : index
    %c0_440 = arith.constant 0 : index
    %933 = vector.load %arg8[%c7_438, %c0_439, %c0_440] : memref<8x8x16xf32, #tpu.memory_space<vmem>>, vector<1x8x16xf32>
    %934 = vector.shape_cast %933 : vector<1x8x16xf32> to vector<8x16xf32>
    %935 = vector.shape_cast %880 : vector<8x16xf32> to vector<1x8x16xf32>
    tpu.vector_store %arg8[%c7_438, %c0_439, %c0_440], %935 {strides = array<i32>} : memref<8x8x16xf32, #tpu.memory_space<vmem>>, vector<1x8x16xf32>,
    %c0_441 = arith.constant 0 : index
    %c0_442 = arith.constant 0 : index
    %c0_443 = arith.constant 0 : index
    %936 = vector.load %arg9[%c0_441, %c0_442, %c0_443] : memref<8x8x16xf32, #tpu.memory_space<vmem>>, vector<1x8x16xf32>
    %937 = vector.shape_cast %936 : vector<1x8x16xf32> to vector<8x16xf32>
    %938 = vector.shape_cast %932 : vector<8x16xf32> to vector<1x8x16xf32>
    tpu.vector_store %arg9[%c0_441, %c0_442, %c0_443], %938 {strides = array<i32>} : memref<8x8x16xf32, #tpu.memory_space<vmem>>, vector<1x8x16xf32>,
    return
  }
}

module attributes {stable_mosaic.version = 11 : i64} {
  func.func @cross_attn_kernel(%arg0: i32, %arg1: memref<2x4xi32, #tpu.memory_space<smem>>, %arg2: memref<2x1x8x16xbf16, #tpu.memory_space<vmem>>, %arg3: memref<2x1x8x16xbf16, #tpu.memory_space<vmem>>, %arg4: memref<8x16x16xbf16, #tpu.memory_space<vmem>>, %arg5: memref<1x16xf32, #tpu.memory_space<vmem>>, %arg6: memref<2x1x8x16xf32, #tpu.memory_space<vmem>>) attributes {dimension_semantics = [#tpu.dimension_semantics<parallel>], iteration_bounds = array<i64: 4>, scalar_prefetch = 0 : i64, scratch_operands = 0 : i64, tpu.core_type = #tpu.core_type<tc>, window_params = [{transform_indices = @transform_0, window_bounds = array<i64: 2, 4>}, {transform_indices = @transform_1, window_bounds = array<i64: 2, 1, 8, 16>}, {transform_indices = @transform_2, window_bounds = array<i64: 2, 1, 8, 16>}, {pipeline_mode = #tpu.pipeline_mode<synchronous>, transform_indices = @transform_3, window_bounds = array<i64: 8, 16, 16>}, {pipeline_mode = #tpu.pipeline_mode<synchronous>, transform_indices = @transform_4, window_bounds = array<i64: 1, 16>}, {transform_indices = @transform_5, window_bounds = array<i64: 2, 1, 8, 16>}]} {
    %c0 = arith.constant 0 : index
    %c0_0 = arith.constant 0 : index
    %c0_1 = arith.constant 0 : index
    %c0_2 = arith.constant 0 : index
    %0 = vector.load %arg2[%c0, %c0_0, %c0_1, %c0_2] : memref<2x1x8x16xbf16, #tpu.memory_space<vmem>>, vector<1x1x8x16xbf16>
    %1 = vector.shape_cast %0 : vector<1x1x8x16xbf16> to vector<8x16xbf16>
    %c0_3 = arith.constant 0 : index
    %c0_4 = arith.constant 0 : index
    %c0_5 = arith.constant 0 : index
    %c0_6 = arith.constant 0 : index
    %2 = vector.load %arg3[%c0_3, %c0_4, %c0_5, %c0_6] : memref<2x1x8x16xbf16, #tpu.memory_space<vmem>>, vector<1x1x8x16xbf16>
    %3 = vector.shape_cast %2 : vector<1x1x8x16xbf16> to vector<8x16xbf16>
    %c1 = arith.constant 1 : index
    %c0_7 = arith.constant 0 : index
    %c0_8 = arith.constant 0 : index
    %c0_9 = arith.constant 0 : index
    %4 = vector.load %arg2[%c1, %c0_7, %c0_8, %c0_9] : memref<2x1x8x16xbf16, #tpu.memory_space<vmem>>, vector<1x1x8x16xbf16>
    %5 = vector.shape_cast %4 : vector<1x1x8x16xbf16> to vector<8x16xbf16>
    %c1_10 = arith.constant 1 : index
    %c0_11 = arith.constant 0 : index
    %c0_12 = arith.constant 0 : index
    %c0_13 = arith.constant 0 : index
    %6 = vector.load %arg3[%c1_10, %c0_11, %c0_12, %c0_13] : memref<2x1x8x16xbf16, #tpu.memory_space<vmem>>, vector<1x1x8x16xbf16>
    %7 = vector.shape_cast %6 : vector<1x1x8x16xbf16> to vector<8x16xbf16>
    %c0_14 = arith.constant 0 : index
    %8 = arith.index_cast %arg0 : i32 to index
    %9 = memref.load %arg1[%c0_14, %8] : memref<2x4xi32, #tpu.memory_space<smem>>
    %c1_15 = arith.constant 1 : index
    %10 = arith.index_cast %arg0 : i32 to index
    %11 = memref.load %arg1[%c1_15, %10] : memref<2x4xi32, #tpu.memory_space<smem>>
    %cst = arith.constant dense<0.000000e+00> : vector<8x8xf32>
    %12 = tpu.matmul %1, %5, %cst {dimension_numbers = #tpu.dot_dimension_numbers<[1], [1], [0], [0], [0, 0, 1, 0], [], []>} : vector<8x16xbf16>, vector<8x16xbf16>, vector<8x8xf32> -> vector<8x8xf32>
    %cst_16 = arith.constant dense<0.000000e+00> : vector<8x8xf32>
    %13 = tpu.matmul %3, %7, %cst_16 {dimension_numbers = #tpu.dot_dimension_numbers<[1], [1], [0], [0], [0, 0, 1, 0], [], []>} : vector<8x16xbf16>, vector<8x16xbf16>, vector<8x8xf32> -> vector<8x8xf32>
    %14 = arith.addf %12, %13 : vector<8x8xf32>
    %cst_17 = arith.constant dense<0.000000e+00> : vector<8x8xf32>
    %15 = tpu.matmul %5, %1, %cst_17 {dimension_numbers = #tpu.dot_dimension_numbers<[1], [1], [0], [0], [0, 0, 1, 0], [], []>} : vector<8x16xbf16>, vector<8x16xbf16>, vector<8x8xf32> -> vector<8x8xf32>
    %cst_18 = arith.constant dense<0.000000e+00> : vector<8x8xf32>
    %16 = tpu.matmul %7, %3, %cst_18 {dimension_numbers = #tpu.dot_dimension_numbers<[1], [1], [0], [0], [0, 0, 1, 0], [], []>} : vector<8x16xbf16>, vector<8x16xbf16>, vector<8x8xf32> -> vector<8x8xf32>
    %17 = arith.addf %15, %16 : vector<8x8xf32>
    %18 = tpu.iota {dimensions = array<i32: 1>} : vector<1x8xi32>
    %19 = vector.broadcast %11 : i32 to vector<1x8xi32>
    %20 = arith.cmpi slt, %18, %19 : vector<1x8xi32>
    %cst_19 = arith.constant -1.000000e+09 : f32
    %21 = vector.shape_cast %20 : vector<1x8xi1> to vector<1x8xi1>
    %22 = vector.broadcast %21 : vector<1x8xi1> to vector<8x8xi1>
    %23 = vector.broadcast %cst_19 : f32 to vector<8x8xf32>
    %24 = arith.select %22, %14, %23 : vector<8x8xi1>, vector<8x8xf32>
    %cst_20 = arith.constant dense<0xFF800000> : vector<8xf32>
    %25 = vector.multi_reduction <maximumf>, %24, %cst_20 [1] : vector<8x8xf32> to vector<8xf32>
    %26 = vector.shape_cast %25 : vector<8xf32> to vector<8x1xf32>
    %27 = vector.broadcast %26 : vector<8x1xf32> to vector<8x8xf32>
    %28 = arith.subf %24, %27 : vector<8x8xf32>
    %29 = math.exp %28 : vector<8x8xf32>
    %cst_21 = arith.constant dense<0.000000e+00> : vector<8xf32>
    %30 = vector.multi_reduction <add>, %29, %cst_21 [1] : vector<8x8xf32> to vector<8xf32>
    %31 = vector.shape_cast %30 : vector<8xf32> to vector<8x1xf32>
    %32 = tpu.reciprocal %31 {approx = true} : vector<8x1xf32> -> vector<8x1xf32>
    %33 = vector.broadcast %32 : vector<8x1xf32> to vector<8x8xf32>
    %34 = arith.mulf %29, %33 : vector<8x8xf32>
    %35 = arith.truncf %34 : vector<8x8xf32> to vector<8x8xbf16>
    %36 = vector.broadcast %9 : i32 to vector<1x8xi32>
    %37 = arith.cmpi slt, %18, %36 : vector<1x8xi32>
    %cst_22 = arith.constant -1.000000e+09 : f32
    %38 = vector.shape_cast %37 : vector<1x8xi1> to vector<1x8xi1>
    %39 = vector.broadcast %38 : vector<1x8xi1> to vector<8x8xi1>
    %40 = vector.broadcast %cst_22 : f32 to vector<8x8xf32>
    %41 = arith.select %39, %17, %40 : vector<8x8xi1>, vector<8x8xf32>
    %cst_23 = arith.constant dense<0xFF800000> : vector<8xf32>
    %42 = vector.multi_reduction <maximumf>, %41, %cst_23 [1] : vector<8x8xf32> to vector<8xf32>
    %43 = vector.shape_cast %42 : vector<8xf32> to vector<8x1xf32>
    %44 = vector.broadcast %43 : vector<8x1xf32> to vector<8x8xf32>
    %45 = arith.subf %41, %44 : vector<8x8xf32>
    %46 = math.exp %45 : vector<8x8xf32>
    %cst_24 = arith.constant dense<0.000000e+00> : vector<8xf32>
    %47 = vector.multi_reduction <add>, %46, %cst_24 [1] : vector<8x8xf32> to vector<8xf32>
    %48 = vector.shape_cast %47 : vector<8xf32> to vector<8x1xf32>
    %49 = tpu.reciprocal %48 {approx = true} : vector<8x1xf32> -> vector<8x1xf32>
    %50 = vector.broadcast %49 : vector<8x1xf32> to vector<8x8xf32>
    %51 = arith.mulf %46, %50 : vector<8x8xf32>
    %52 = arith.truncf %51 : vector<8x8xf32> to vector<8x8xbf16>
    %cst_25 = arith.constant dense<0.000000e+00> : vector<8x16xf32>
    %53 = tpu.matmul %35, %5, %cst_25 {dimension_numbers = #tpu.dot_dimension_numbers<[1], [0], [0], [1], [0, 0, 1, 1], [], []>} : vector<8x8xbf16>, vector<8x16xbf16>, vector<8x16xf32> -> vector<8x16xf32>
    %cst_26 = arith.constant dense<0.000000e+00> : vector<8x16xf32>
    %54 = tpu.matmul %35, %7, %cst_26 {dimension_numbers = #tpu.dot_dimension_numbers<[1], [0], [0], [1], [0, 0, 1, 1], [], []>} : vector<8x8xbf16>, vector<8x16xbf16>, vector<8x16xf32> -> vector<8x16xf32>
    %cst_27 = arith.constant dense<0.000000e+00> : vector<8x16xf32>
    %55 = tpu.matmul %52, %1, %cst_27 {dimension_numbers = #tpu.dot_dimension_numbers<[1], [0], [0], [1], [0, 0, 1, 1], [], []>} : vector<8x8xbf16>, vector<8x16xbf16>, vector<8x16xf32> -> vector<8x16xf32>
    %cst_28 = arith.constant dense<0.000000e+00> : vector<8x16xf32>
    %56 = tpu.matmul %52, %3, %cst_28 {dimension_numbers = #tpu.dot_dimension_numbers<[1], [0], [0], [1], [0, 0, 1, 1], [], []>} : vector<8x8xbf16>, vector<8x16xbf16>, vector<8x16xf32> -> vector<8x16xf32>
    %57 = arith.extf %1 : vector<8x16xbf16> to vector<8x16xf32>
    %58 = arith.extf %3 : vector<8x16xbf16> to vector<8x16xf32>
    %59 = arith.extf %5 : vector<8x16xbf16> to vector<8x16xf32>
    %60 = arith.extf %7 : vector<8x16xbf16> to vector<8x16xf32>
    %61 = arith.subf %57, %53 : vector<8x16xf32>
    %62 = arith.subf %58, %54 : vector<8x16xf32>
    %63 = arith.mulf %57, %53 : vector<8x16xf32>
    %64 = arith.mulf %58, %54 : vector<8x16xf32>
    %65 = arith.subf %59, %55 : vector<8x16xf32>
    %66 = arith.subf %60, %56 : vector<8x16xf32>
    %c0_29 = arith.constant 0 : index
    %c0_30 = arith.constant 0 : index
    %67 = vector.load %arg5[%c0_29, %c0_30] : memref<1x16xf32, #tpu.memory_space<vmem>>, vector<1x16xf32>
    %c0_31 = arith.constant 0 : index
    %c0_32 = arith.constant 0 : index
    %c0_33 = arith.constant 0 : index
    %68 = vector.load %arg4[%c0_31, %c0_32, %c0_33] : memref<8x16x16xbf16, #tpu.memory_space<vmem>>, vector<1x16x16xbf16>
    %69 = vector.shape_cast %68 : vector<1x16x16xbf16> to vector<16x16xbf16>
    %cst_34 = arith.constant dense<0.000000e+00> : vector<8x16xf32>
    %70 = tpu.matmul %1, %69, %cst_34 {dimension_numbers = #tpu.dot_dimension_numbers<[1], [0], [0], [1], [0, 0, 1, 1], [], []>} : vector<8x16xbf16>, vector<16x16xbf16>, vector<8x16xf32> -> vector<8x16xf32>
    %c1_35 = arith.constant 1 : index
    %c0_36 = arith.constant 0 : index
    %c0_37 = arith.constant 0 : index
    %71 = vector.load %arg4[%c1_35, %c0_36, %c0_37] : memref<8x16x16xbf16, #tpu.memory_space<vmem>>, vector<1x16x16xbf16>
    %72 = vector.shape_cast %71 : vector<1x16x16xbf16> to vector<16x16xbf16>
    %cst_38 = arith.constant dense<0.000000e+00> : vector<8x16xf32>
    %73 = tpu.matmul %3, %72, %cst_38 {dimension_numbers = #tpu.dot_dimension_numbers<[1], [0], [0], [1], [0, 0, 1, 1], [], []>} : vector<8x16xbf16>, vector<16x16xbf16>, vector<8x16xf32> -> vector<8x16xf32>
    %74 = arith.addf %70, %73 : vector<8x16xf32>
    %75 = arith.truncf %53 : vector<8x16xf32> to vector<8x16xbf16>
    %c2 = arith.constant 2 : index
    %c0_39 = arith.constant 0 : index
    %c0_40 = arith.constant 0 : index
    %76 = vector.load %arg4[%c2, %c0_39, %c0_40] : memref<8x16x16xbf16, #tpu.memory_space<vmem>>, vector<1x16x16xbf16>
    %77 = vector.shape_cast %76 : vector<1x16x16xbf16> to vector<16x16xbf16>
    %cst_41 = arith.constant dense<0.000000e+00> : vector<8x16xf32>
    %78 = tpu.matmul %75, %77, %cst_41 {dimension_numbers = #tpu.dot_dimension_numbers<[1], [0], [0], [1], [0, 0, 1, 1], [], []>} : vector<8x16xbf16>, vector<16x16xbf16>, vector<8x16xf32> -> vector<8x16xf32>
    %79 = arith.addf %74, %78 : vector<8x16xf32>
    %80 = arith.truncf %54 : vector<8x16xf32> to vector<8x16xbf16>
    %c3 = arith.constant 3 : index
    %c0_42 = arith.constant 0 : index
    %c0_43 = arith.constant 0 : index
    %81 = vector.load %arg4[%c3, %c0_42, %c0_43] : memref<8x16x16xbf16, #tpu.memory_space<vmem>>, vector<1x16x16xbf16>
    %82 = vector.shape_cast %81 : vector<1x16x16xbf16> to vector<16x16xbf16>
    %cst_44 = arith.constant dense<0.000000e+00> : vector<8x16xf32>
    %83 = tpu.matmul %80, %82, %cst_44 {dimension_numbers = #tpu.dot_dimension_numbers<[1], [0], [0], [1], [0, 0, 1, 1], [], []>} : vector<8x16xbf16>, vector<16x16xbf16>, vector<8x16xf32> -> vector<8x16xf32>
    %84 = arith.addf %79, %83 : vector<8x16xf32>
    %85 = arith.truncf %61 : vector<8x16xf32> to vector<8x16xbf16>
    %c4 = arith.constant 4 : index
    %c0_45 = arith.constant 0 : index
    %c0_46 = arith.constant 0 : index
    %86 = vector.load %arg4[%c4, %c0_45, %c0_46] : memref<8x16x16xbf16, #tpu.memory_space<vmem>>, vector<1x16x16xbf16>
    %87 = vector.shape_cast %86 : vector<1x16x16xbf16> to vector<16x16xbf16>
    %cst_47 = arith.constant dense<0.000000e+00> : vector<8x16xf32>
    %88 = tpu.matmul %85, %87, %cst_47 {dimension_numbers = #tpu.dot_dimension_numbers<[1], [0], [0], [1], [0, 0, 1, 1], [], []>} : vector<8x16xbf16>, vector<16x16xbf16>, vector<8x16xf32> -> vector<8x16xf32>
    %89 = arith.addf %84, %88 : vector<8x16xf32>
    %90 = arith.truncf %62 : vector<8x16xf32> to vector<8x16xbf16>
    %c5 = arith.constant 5 : index
    %c0_48 = arith.constant 0 : index
    %c0_49 = arith.constant 0 : index
    %91 = vector.load %arg4[%c5, %c0_48, %c0_49] : memref<8x16x16xbf16, #tpu.memory_space<vmem>>, vector<1x16x16xbf16>
    %92 = vector.shape_cast %91 : vector<1x16x16xbf16> to vector<16x16xbf16>
    %cst_50 = arith.constant dense<0.000000e+00> : vector<8x16xf32>
    %93 = tpu.matmul %90, %92, %cst_50 {dimension_numbers = #tpu.dot_dimension_numbers<[1], [0], [0], [1], [0, 0, 1, 1], [], []>} : vector<8x16xbf16>, vector<16x16xbf16>, vector<8x16xf32> -> vector<8x16xf32>
    %94 = arith.addf %89, %93 : vector<8x16xf32>
    %95 = arith.truncf %63 : vector<8x16xf32> to vector<8x16xbf16>
    %c6 = arith.constant 6 : index
    %c0_51 = arith.constant 0 : index
    %c0_52 = arith.constant 0 : index
    %96 = vector.load %arg4[%c6, %c0_51, %c0_52] : memref<8x16x16xbf16, #tpu.memory_space<vmem>>, vector<1x16x16xbf16>
    %97 = vector.shape_cast %96 : vector<1x16x16xbf16> to vector<16x16xbf16>
    %cst_53 = arith.constant dense<0.000000e+00> : vector<8x16xf32>
    %98 = tpu.matmul %95, %97, %cst_53 {dimension_numbers = #tpu.dot_dimension_numbers<[1], [0], [0], [1], [0, 0, 1, 1], [], []>} : vector<8x16xbf16>, vector<16x16xbf16>, vector<8x16xf32> -> vector<8x16xf32>
    %99 = arith.addf %94, %98 : vector<8x16xf32>
    %100 = arith.truncf %64 : vector<8x16xf32> to vector<8x16xbf16>
    %c7 = arith.constant 7 : index
    %c0_54 = arith.constant 0 : index
    %c0_55 = arith.constant 0 : index
    %101 = vector.load %arg4[%c7, %c0_54, %c0_55] : memref<8x16x16xbf16, #tpu.memory_space<vmem>>, vector<1x16x16xbf16>
    %102 = vector.shape_cast %101 : vector<1x16x16xbf16> to vector<16x16xbf16>
    %cst_56 = arith.constant dense<0.000000e+00> : vector<8x16xf32>
    %103 = tpu.matmul %100, %102, %cst_56 {dimension_numbers = #tpu.dot_dimension_numbers<[1], [0], [0], [1], [0, 0, 1, 1], [], []>} : vector<8x16xbf16>, vector<16x16xbf16>, vector<8x16xf32> -> vector<8x16xf32>
    %104 = arith.addf %99, %103 : vector<8x16xf32>
    %105 = vector.broadcast %67 : vector<1x16xf32> to vector<8x16xf32>
    %106 = arith.addf %104, %105 : vector<8x16xf32>
    %cst_57 = arith.constant 0.000000e+00 : f32
    %107 = vector.broadcast %cst_57 : f32 to vector<8x16xf32>
    %108 = arith.maximumf %106, %107 : vector<8x16xf32>
    %c0_58 = arith.constant 0 : index
    %c0_59 = arith.constant 0 : index
    %c0_60 = arith.constant 0 : index
    %109 = vector.load %arg4[%c0_58, %c0_59, %c0_60] : memref<8x16x16xbf16, #tpu.memory_space<vmem>>, vector<1x16x16xbf16>
    %110 = vector.shape_cast %109 : vector<1x16x16xbf16> to vector<16x16xbf16>
    %cst_61 = arith.constant dense<0.000000e+00> : vector<8x16xf32>
    %111 = tpu.matmul %5, %110, %cst_61 {dimension_numbers = #tpu.dot_dimension_numbers<[1], [0], [0], [1], [0, 0, 1, 1], [], []>} : vector<8x16xbf16>, vector<16x16xbf16>, vector<8x16xf32> -> vector<8x16xf32>
    %c1_62 = arith.constant 1 : index
    %c0_63 = arith.constant 0 : index
    %c0_64 = arith.constant 0 : index
    %112 = vector.load %arg4[%c1_62, %c0_63, %c0_64] : memref<8x16x16xbf16, #tpu.memory_space<vmem>>, vector<1x16x16xbf16>
    %113 = vector.shape_cast %112 : vector<1x16x16xbf16> to vector<16x16xbf16>
    %cst_65 = arith.constant dense<0.000000e+00> : vector<8x16xf32>
    %114 = tpu.matmul %7, %113, %cst_65 {dimension_numbers = #tpu.dot_dimension_numbers<[1], [0], [0], [1], [0, 0, 1, 1], [], []>} : vector<8x16xbf16>, vector<16x16xbf16>, vector<8x16xf32> -> vector<8x16xf32>
    %115 = arith.addf %111, %114 : vector<8x16xf32>
    %116 = arith.truncf %55 : vector<8x16xf32> to vector<8x16xbf16>
    %c2_66 = arith.constant 2 : index
    %c0_67 = arith.constant 0 : index
    %c0_68 = arith.constant 0 : index
    %117 = vector.load %arg4[%c2_66, %c0_67, %c0_68] : memref<8x16x16xbf16, #tpu.memory_space<vmem>>, vector<1x16x16xbf16>
    %118 = vector.shape_cast %117 : vector<1x16x16xbf16> to vector<16x16xbf16>
    %cst_69 = arith.constant dense<0.000000e+00> : vector<8x16xf32>
    %119 = tpu.matmul %116, %118, %cst_69 {dimension_numbers = #tpu.dot_dimension_numbers<[1], [0], [0], [1], [0, 0, 1, 1], [], []>} : vector<8x16xbf16>, vector<16x16xbf16>, vector<8x16xf32> -> vector<8x16xf32>
    %120 = arith.addf %115, %119 : vector<8x16xf32>
    %121 = arith.truncf %56 : vector<8x16xf32> to vector<8x16xbf16>
    %c3_70 = arith.constant 3 : index
    %c0_71 = arith.constant 0 : index
    %c0_72 = arith.constant 0 : index
    %122 = vector.load %arg4[%c3_70, %c0_71, %c0_72] : memref<8x16x16xbf16, #tpu.memory_space<vmem>>, vector<1x16x16xbf16>
    %123 = vector.shape_cast %122 : vector<1x16x16xbf16> to vector<16x16xbf16>
    %cst_73 = arith.constant dense<0.000000e+00> : vector<8x16xf32>
    %124 = tpu.matmul %121, %123, %cst_73 {dimension_numbers = #tpu.dot_dimension_numbers<[1], [0], [0], [1], [0, 0, 1, 1], [], []>} : vector<8x16xbf16>, vector<16x16xbf16>, vector<8x16xf32> -> vector<8x16xf32>
    %125 = arith.addf %120, %124 : vector<8x16xf32>
    %126 = arith.truncf %65 : vector<8x16xf32> to vector<8x16xbf16>
    %c4_74 = arith.constant 4 : index
    %c0_75 = arith.constant 0 : index
    %c0_76 = arith.constant 0 : index
    %127 = vector.load %arg4[%c4_74, %c0_75, %c0_76] : memref<8x16x16xbf16, #tpu.memory_space<vmem>>, vector<1x16x16xbf16>
    %128 = vector.shape_cast %127 : vector<1x16x16xbf16> to vector<16x16xbf16>
    %cst_77 = arith.constant dense<0.000000e+00> : vector<8x16xf32>
    %129 = tpu.matmul %126, %128, %cst_77 {dimension_numbers = #tpu.dot_dimension_numbers<[1], [0], [0], [1], [0, 0, 1, 1], [], []>} : vector<8x16xbf16>, vector<16x16xbf16>, vector<8x16xf32> -> vector<8x16xf32>
    %130 = arith.addf %125, %129 : vector<8x16xf32>
    %131 = arith.truncf %66 : vector<8x16xf32> to vector<8x16xbf16>
    %c5_78 = arith.constant 5 : index
    %c0_79 = arith.constant 0 : index
    %c0_80 = arith.constant 0 : index
    %132 = vector.load %arg4[%c5_78, %c0_79, %c0_80] : memref<8x16x16xbf16, #tpu.memory_space<vmem>>, vector<1x16x16xbf16>
    %133 = vector.shape_cast %132 : vector<1x16x16xbf16> to vector<16x16xbf16>
    %cst_81 = arith.constant dense<0.000000e+00> : vector<8x16xf32>
    %134 = tpu.matmul %131, %133, %cst_81 {dimension_numbers = #tpu.dot_dimension_numbers<[1], [0], [0], [1], [0, 0, 1, 1], [], []>} : vector<8x16xbf16>, vector<16x16xbf16>, vector<8x16xf32> -> vector<8x16xf32>
    %135 = arith.addf %130, %134 : vector<8x16xf32>
    %136 = arith.truncf %65 : vector<8x16xf32> to vector<8x16xbf16>
    %c6_82 = arith.constant 6 : index
    %c0_83 = arith.constant 0 : index
    %c0_84 = arith.constant 0 : index
    %137 = vector.load %arg4[%c6_82, %c0_83, %c0_84] : memref<8x16x16xbf16, #tpu.memory_space<vmem>>, vector<1x16x16xbf16>
    %138 = vector.shape_cast %137 : vector<1x16x16xbf16> to vector<16x16xbf16>
    %cst_85 = arith.constant dense<0.000000e+00> : vector<8x16xf32>
    %139 = tpu.matmul %136, %138, %cst_85 {dimension_numbers = #tpu.dot_dimension_numbers<[1], [0], [0], [1], [0, 0, 1, 1], [], []>} : vector<8x16xbf16>, vector<16x16xbf16>, vector<8x16xf32> -> vector<8x16xf32>
    %140 = arith.addf %135, %139 : vector<8x16xf32>
    %141 = arith.truncf %66 : vector<8x16xf32> to vector<8x16xbf16>
    %c7_86 = arith.constant 7 : index
    %c0_87 = arith.constant 0 : index
    %c0_88 = arith.constant 0 : index
    %142 = vector.load %arg4[%c7_86, %c0_87, %c0_88] : memref<8x16x16xbf16, #tpu.memory_space<vmem>>, vector<1x16x16xbf16>
    %143 = vector.shape_cast %142 : vector<1x16x16xbf16> to vector<16x16xbf16>
    %cst_89 = arith.constant dense<0.000000e+00> : vector<8x16xf32>
    %144 = tpu.matmul %141, %143, %cst_89 {dimension_numbers = #tpu.dot_dimension_numbers<[1], [0], [0], [1], [0, 0, 1, 1], [], []>} : vector<8x16xbf16>, vector<16x16xbf16>, vector<8x16xf32> -> vector<8x16xf32>
    %145 = arith.addf %140, %144 : vector<8x16xf32>
    %146 = vector.broadcast %67 : vector<1x16xf32> to vector<8x16xf32>
    %147 = arith.addf %145, %146 : vector<8x16xf32>
    %cst_90 = arith.constant 0.000000e+00 : f32
    %148 = vector.broadcast %cst_90 : f32 to vector<8x16xf32>
    %149 = arith.maximumf %147, %148 : vector<8x16xf32>
    %c0_91 = arith.constant 0 : index
    %c0_92 = arith.constant 0 : index
    %c0_93 = arith.constant 0 : index
    %c0_94 = arith.constant 0 : index
    %150 = vector.load %arg6[%c0_91, %c0_92, %c0_93, %c0_94] : memref<2x1x8x16xf32, #tpu.memory_space<vmem>>, vector<1x1x8x16xf32>
    %151 = vector.shape_cast %150 : vector<1x1x8x16xf32> to vector<8x16xf32>
    %152 = vector.shape_cast %108 : vector<8x16xf32> to vector<1x1x8x16xf32>
    tpu.vector_store %arg6[%c0_91, %c0_92, %c0_93, %c0_94], %152 {strides = array<i32>} : memref<2x1x8x16xf32, #tpu.memory_space<vmem>>, vector<1x1x8x16xf32>,
    %c1_95 = arith.constant 1 : index
    %c0_96 = arith.constant 0 : index
    %c0_97 = arith.constant 0 : index
    %c0_98 = arith.constant 0 : index
    %153 = vector.load %arg6[%c1_95, %c0_96, %c0_97, %c0_98] : memref<2x1x8x16xf32, #tpu.memory_space<vmem>>, vector<1x1x8x16xf32>
    %154 = vector.shape_cast %153 : vector<1x1x8x16xf32> to vector<8x16xf32>
    %155 = vector.shape_cast %149 : vector<8x16xf32> to vector<1x1x8x16xf32>
    tpu.vector_store %arg6[%c1_95, %c0_96, %c0_97, %c0_98], %155 {strides = array<i32>} : memref<2x1x8x16xf32, #tpu.memory_space<vmem>>, vector<1x1x8x16xf32>,
    return
  }
  func.func @transform_0(%arg0: i32) -> (i32, i32) {
    %c0_i32 = arith.constant 0 : i32
    %c0_i32_0 = arith.constant 0 : i32
    %c0_i32_1 = arith.constant 0 : i32
    return %c0_i32, %c0_i32_0 : i32, i32
  }
  func.func @transform_1(%arg0: i32) -> (i32, i32, i32, i32) {
    %c0_i32 = arith.constant 0 : i32
    %c0_i32_0 = arith.constant 0 : i32
    %c0_i32_1 = arith.constant 0 : i32
    %c0_i32_2 = arith.constant 0 : i32
    return %c0_i32, %arg0, %c0_i32_0, %c0_i32_1 : i32, i32, i32, i32
  }
  func.func @transform_2(%arg0: i32) -> (i32, i32, i32, i32) {
    %c0_i32 = arith.constant 0 : i32
    %c0_i32_0 = arith.constant 0 : i32
    %c0_i32_1 = arith.constant 0 : i32
    %c0_i32_2 = arith.constant 0 : i32
    return %c0_i32, %arg0, %c0_i32_0, %c0_i32_1 : i32, i32, i32, i32
  }
  func.func @transform_3(%arg0: i32) -> (i32, i32, i32) {
    %c0_i32 = arith.constant 0 : i32
    %c0_i32_0 = arith.constant 0 : i32
    %c0_i32_1 = arith.constant 0 : i32
    %c0_i32_2 = arith.constant 0 : i32
    return %c0_i32, %c0_i32_0, %c0_i32_1 : i32, i32, i32
  }
  func.func @transform_4(%arg0: i32) -> (i32, i32) {
    %c0_i32 = arith.constant 0 : i32
    %c0_i32_0 = arith.constant 0 : i32
    %c0_i32_1 = arith.constant 0 : i32
    return %c0_i32, %c0_i32_0 : i32, i32
  }
  func.func @transform_5(%arg0: i32) -> (i32, i32, i32, i32) {
    %c0_i32 = arith.constant 0 : i32
    %c0_i32_0 = arith.constant 0 : i32
    %c0_i32_1 = arith.constant 0 : i32
    %c0_i32_2 = arith.constant 0 : i32
    return %c0_i32, %arg0, %c0_i32_0, %c0_i32_1 : i32, i32, i32, i32
  }
}

module attributes {stable_mosaic.version = 11 : i64} {
  func.func @pool_classify_kernel(%arg0: memref<8x2x4x16xf32, #tpu.memory_space<vmem>>, %arg1: memref<8x2x4x16xf32, #tpu.memory_space<vmem>>, %arg2: memref<2x4x1xi32, #tpu.memory_space<vmem>>, %arg3: memref<4x16x32xbf16, #tpu.memory_space<vmem>>, %arg4: memref<1x32xf32, #tpu.memory_space<vmem>>, %arg5: memref<32x3xbf16, #tpu.memory_space<vmem>>, %arg6: memref<1x3xf32, #tpu.memory_space<vmem>>, %arg7: memref<4x3xf32, #tpu.memory_space<vmem>>) attributes {dimension_semantics = [], scalar_prefetch = 0 : i64, scratch_operands = 0 : i64, tpu.core_type = #tpu.core_type<tc>} {
    %c0 = arith.constant 0 : index
    %c0_0 = arith.constant 0 : index
    %c0_1 = arith.constant 0 : index
    %0 = vector.load %arg2[%c0, %c0_0, %c0_1] : memref<2x4x1xi32, #tpu.memory_space<vmem>>, vector<2x4x1xi32>
    %1 = arith.sitofp %0 : vector<2x4x1xi32> to vector<2x4x1xf32>
    %cst = arith.constant 1.000000e+00 : f32
    %2 = vector.broadcast %cst : f32 to vector<2x4x1xf32>
    %3 = arith.maximumf %1, %2 : vector<2x4x1xf32>
    %4 = tpu.reciprocal %3 {approx = true} : vector<2x4x1xf32> -> vector<2x4x1xf32>
    %c0_2 = arith.constant 0 : index
    %c0_3 = arith.constant 0 : index
    %c0_4 = arith.constant 0 : index
    %c0_5 = arith.constant 0 : index
    %5 = vector.load %arg0[%c0_2, %c0_3, %c0_4, %c0_5] : memref<8x2x4x16xf32, #tpu.memory_space<vmem>>, vector<8x2x4x16xf32>
    %cst_6 = arith.constant dense<0.000000e+00> : vector<2x4x16xf32>
    %6 = vector.multi_reduction <add>, %5, %cst_6 [0] : vector<8x2x4x16xf32> to vector<2x4x16xf32>
    %7 = vector.broadcast %4 : vector<2x4x1xf32> to vector<2x4x16xf32>
    %8 = arith.mulf %6, %7 : vector<2x4x16xf32>
    %c0_7 = arith.constant 0 : index
    %c0_8 = arith.constant 0 : index
    %c0_9 = arith.constant 0 : index
    %c0_10 = arith.constant 0 : index
    %9 = vector.load %arg1[%c0_7, %c0_8, %c0_9, %c0_10] : memref<8x2x4x16xf32, #tpu.memory_space<vmem>>, vector<8x2x4x16xf32>
    %cst_11 = arith.constant dense<0.000000e+00> : vector<2x4x16xf32>
    %10 = vector.multi_reduction <add>, %9, %cst_11 [0] : vector<8x2x4x16xf32> to vector<2x4x16xf32>
    %11 = vector.broadcast %4 : vector<2x4x1xf32> to vector<2x4x16xf32>
    %12 = arith.mulf %10, %11 : vector<2x4x16xf32>
    %13 = vector.extract_strided_slice %8 {offsets = [0, 0, 0], sizes = [1, 4, 16], strides = [1, 1, 1]} : vector<2x4x16xf32> to vector<1x4x16xf32>
    %14 = vector.shape_cast %13 : vector<1x4x16xf32> to vector<4x16xf32>
    %15 = vector.extract_strided_slice %8 {offsets = [1, 0, 0], sizes = [1, 4, 16], strides = [1, 1, 1]} : vector<2x4x16xf32> to vector<1x4x16xf32>
    %16 = vector.shape_cast %15 : vector<1x4x16xf32> to vector<4x16xf32>
    %17 = vector.extract_strided_slice %12 {offsets = [0, 0, 0], sizes = [1, 4, 16], strides = [1, 1, 1]} : vector<2x4x16xf32> to vector<1x4x16xf32>
    %18 = vector.shape_cast %17 : vector<1x4x16xf32> to vector<4x16xf32>
    %19 = vector.extract_strided_slice %12 {offsets = [1, 0, 0], sizes = [1, 4, 16], strides = [1, 1, 1]} : vector<2x4x16xf32> to vector<1x4x16xf32>
    %20 = vector.shape_cast %19 : vector<1x4x16xf32> to vector<4x16xf32>
    %c0_12 = arith.constant 0 : index
    %c0_13 = arith.constant 0 : index
    %c0_14 = arith.constant 0 : index
    %21 = vector.load %arg3[%c0_12, %c0_13, %c0_14] : memref<4x16x32xbf16, #tpu.memory_space<vmem>>, vector<1x16x32xbf16>
    %22 = vector.shape_cast %21 : vector<1x16x32xbf16> to vector<16x32xbf16>
    %23 = arith.truncf %14 : vector<4x16xf32> to vector<4x16xbf16>
    %cst_15 = arith.constant dense<0.000000e+00> : vector<4x32xf32>
    %24 = tpu.matmul %23, %22, %cst_15 {dimension_numbers = #tpu.dot_dimension_numbers<[1], [0], [0], [1], [0, 0, 1, 1], [], []>} : vector<4x16xbf16>, vector<16x32xbf16>, vector<4x32xf32> -> vector<4x32xf32>
    %c1 = arith.constant 1 : index
    %c0_16 = arith.constant 0 : index
    %c0_17 = arith.constant 0 : index
    %25 = vector.load %arg3[%c1, %c0_16, %c0_17] : memref<4x16x32xbf16, #tpu.memory_space<vmem>>, vector<1x16x32xbf16>
    %26 = vector.shape_cast %25 : vector<1x16x32xbf16> to vector<16x32xbf16>
    %27 = arith.truncf %18 : vector<4x16xf32> to vector<4x16xbf16>
    %cst_18 = arith.constant dense<0.000000e+00> : vector<4x32xf32>
    %28 = tpu.matmul %27, %26, %cst_18 {dimension_numbers = #tpu.dot_dimension_numbers<[1], [0], [0], [1], [0, 0, 1, 1], [], []>} : vector<4x16xbf16>, vector<16x32xbf16>, vector<4x32xf32> -> vector<4x32xf32>
    %29 = arith.addf %24, %28 : vector<4x32xf32>
    %c2 = arith.constant 2 : index
    %c0_19 = arith.constant 0 : index
    %c0_20 = arith.constant 0 : index
    %30 = vector.load %arg3[%c2, %c0_19, %c0_20] : memref<4x16x32xbf16, #tpu.memory_space<vmem>>, vector<1x16x32xbf16>
    %31 = vector.shape_cast %30 : vector<1x16x32xbf16> to vector<16x32xbf16>
    %32 = arith.truncf %16 : vector<4x16xf32> to vector<4x16xbf16>
    %cst_21 = arith.constant dense<0.000000e+00> : vector<4x32xf32>
    %33 = tpu.matmul %32, %31, %cst_21 {dimension_numbers = #tpu.dot_dimension_numbers<[1], [0], [0], [1], [0, 0, 1, 1], [], []>} : vector<4x16xbf16>, vector<16x32xbf16>, vector<4x32xf32> -> vector<4x32xf32>
    %34 = arith.addf %29, %33 : vector<4x32xf32>
    %c3 = arith.constant 3 : index
    %c0_22 = arith.constant 0 : index
    %c0_23 = arith.constant 0 : index
    %35 = vector.load %arg3[%c3, %c0_22, %c0_23] : memref<4x16x32xbf16, #tpu.memory_space<vmem>>, vector<1x16x32xbf16>
    %36 = vector.shape_cast %35 : vector<1x16x32xbf16> to vector<16x32xbf16>
    %37 = arith.truncf %20 : vector<4x16xf32> to vector<4x16xbf16>
    %cst_24 = arith.constant dense<0.000000e+00> : vector<4x32xf32>
    %38 = tpu.matmul %37, %36, %cst_24 {dimension_numbers = #tpu.dot_dimension_numbers<[1], [0], [0], [1], [0, 0, 1, 1], [], []>} : vector<4x16xbf16>, vector<16x32xbf16>, vector<4x32xf32> -> vector<4x32xf32>
    %39 = arith.addf %34, %38 : vector<4x32xf32>
    %c0_25 = arith.constant 0 : index
    %c0_26 = arith.constant 0 : index
    %40 = vector.load %arg4[%c0_25, %c0_26] : memref<1x32xf32, #tpu.memory_space<vmem>>, vector<1x32xf32>
    %41 = vector.broadcast %40 : vector<1x32xf32> to vector<4x32xf32>
    %42 = arith.addf %39, %41 : vector<4x32xf32>
    %43 = math.tanh %42 : vector<4x32xf32>
    %c0_27 = arith.constant 0 : index
    %c0_28 = arith.constant 0 : index
    %44 = vector.load %arg5[%c0_27, %c0_28] : memref<32x3xbf16, #tpu.memory_space<vmem>>, vector<32x3xbf16>
    %45 = arith.truncf %43 : vector<4x32xf32> to vector<4x32xbf16>
    %cst_29 = arith.constant dense<0.000000e+00> : vector<4x3xf32>
    %46 = tpu.matmul %45, %44, %cst_29 {dimension_numbers = #tpu.dot_dimension_numbers<[1], [0], [0], [1], [0, 0, 1, 1], [], []>} : vector<4x32xbf16>, vector<32x3xbf16>, vector<4x3xf32> -> vector<4x3xf32>
    %c0_30 = arith.constant 0 : index
    %c0_31 = arith.constant 0 : index
    %47 = vector.load %arg6[%c0_30, %c0_31] : memref<1x3xf32, #tpu.memory_space<vmem>>, vector<1x3xf32>
    %48 = vector.broadcast %47 : vector<1x3xf32> to vector<4x3xf32>
    %49 = arith.addf %46, %48 : vector<4x3xf32>
    %c0_32 = arith.constant 0 : index
    %c0_33 = arith.constant 0 : index
    %50 = vector.load %arg7[%c0_32, %c0_33] : memref<4x3xf32, #tpu.memory_space<vmem>>, vector<4x3xf32>
    tpu.vector_store %arg7[%c0_32, %c0_33], %49 {strides = array<i32>} : memref<4x3xf32, #tpu.memory_space<vmem>>, vector<4x3xf32>,
    return
  }
}

</mosaic_0001>

<llo_original>
// kernel: semattn_forward.7
$region0: #{semattn_forward.7}
  #allocation0 [shape = 'u32[]', space=smem, size = 0x4, offset = 0x4, fixed_abs, tag = 'smem constant byte address 0x4 - core index']
  #allocation1 [shape = 'u32[144,128]{1,0:T(1,128)}', space=vmem, size = 0x12000, scoped, tag = 'internal scratch']
  %s0 = inlined_call_operand.vmem [shape: f32[8,2,4,16], index: 0, kind: input, shape index: {}]
  %s1 = inlined_call_operand.vmem [shape: f32[8,2,4,16], index: 1, kind: input, shape index: {}]
  %s2 = inlined_call_operand.vmem [shape: s32[2,4,1], index: 2, kind: input, shape index: {}]
  %s3 = inlined_call_operand.vmem [shape: bf16[4,16,32], index: 3, kind: input, shape index: {}]
  %s4 = inlined_call_operand.vmem [shape: f32[1,32], index: 4, kind: input, shape index: {}]
  %s5 = inlined_call_operand.vmem [shape: bf16[32,3], index: 5, kind: input, shape index: {}]
  %s6 = inlined_call_operand.vmem [shape: f32[1,3], index: 6, kind: input, shape index: {}]
  %s7 = inlined_call_operand.vmem [shape: f32[4,3], index: 7, kind: output, shape index: {}]
  %s8 = sld [smem:[#allocation0]]
  $region38: #{semattn_forward.7} parent=0
    _
  %s10 = ssub.s32 1, %s8
  %s11 = scalar_select 0, %s10, %s8
  // Predicated region
  $region2: #{semattn_forward.7} parent=0 // pred_check
    _
  $region3: #{semattn_forward.7} parent=0 // pred_check_branch
    %13 = sbr.rel (0) target = $region5
  $region4: #{semattn_forward.7} parent=0 // pred_region
    _
  $region5: #{semattn_forward.7} parent=0 // pred_fallthru
    _
  // Predicated region
  $region6: #{semattn_forward.7} parent=0 // pred_check
    _
  $region7: #{semattn_forward.7} parent=0 // pred_check_branch
    %15 = sbr.rel (0) target = $region9
  $region8: #{semattn_forward.7} parent=0 // pred_region
    _
  $region9: #{semattn_forward.7} parent=0 // pred_fallthru
    _
  // Predicated region
  $region10: #{semattn_forward.7} parent=0 // pred_check
    _
  $region11: #{semattn_forward.7} parent=0 // pred_check_branch
    %17 = sbr.rel (0) target = $region13
  $region12: #{semattn_forward.7} parent=0 // pred_region
    _
  $region13: #{semattn_forward.7} parent=0 // pred_fallthru
    _
  // Predicated region
  $region14: #{semattn_forward.7} parent=0 // pred_check
    _
  $region15: #{semattn_forward.7} parent=0 // pred_check_branch
    %19 = sbr.rel (0) target = $region17
  $region16: #{semattn_forward.7} parent=0 // pred_region
    _
  $region17: #{semattn_forward.7} parent=0 // pred_fallthru
    _
  // Predicated region
  $region18: #{semattn_forward.7} parent=0 // pred_check
    _
  $region19: #{semattn_forward.7} parent=0 // pred_check_branch
    %21 = sbr.rel (0) target = $region21
  $region20: #{semattn_forward.7} parent=0 // pred_region
    _
  $region21: #{semattn_forward.7} parent=0 // pred_fallthru
    _
  // Predicated region
  $region22: #{semattn_forward.7} parent=0 // pred_check
    _
  $region23: #{semattn_forward.7} parent=0 // pred_check_branch
    %23 = sbr.rel (0) target = $region25
  $region24: #{semattn_forward.7} parent=0 // pred_region
    _
  $region25: #{semattn_forward.7} parent=0 // pred_fallthru
    _
  // Predicated region
  $region26: #{semattn_forward.7} parent=0 // pred_check
    _
  $region27: #{semattn_forward.7} parent=0 // pred_check_branch
    %25 = sbr.rel (0) target = $region29
  $region28: #{semattn_forward.7} parent=0 // pred_region
    _
  $region29: #{semattn_forward.7} parent=0 // pred_fallthru
    _
  %v27 = vld [vmem:[%s2] sm:$0xf]
  %v28 = vld [vmem:[%s2 + $0x4] sm:$0xf]
  %v29 = vcvt.s32.f32 %v27
  %v30 = vcvt.s32.f32 %v28
  %v31 = vmax.f32 %v29, 1.0
  %v32 = vmax.f32 %v30, 1.0
  %v33 = vrcp.pop %v31
  %v34 = vrcp.pop %v32
  %v35 = vld [vmem:[%s0] sm:$0xf]
  %v36 = vld [vmem:[%s0 + $0x4] sm:$0xf]
  %v37 = vld [vmem:[%s0 + $0x8] sm:$0xf]
  %v38 = vld [vmem:[%s0 + $0xc] sm:$0xf]
  %v39 = vld [vmem:[%s0 + $0x10] sm:$0xf]
  %v40 = vld [vmem:[%s0 + $0x14] sm:$0xf]
  %v41 = vld [vmem:[%s0 + $0x18] sm:$0xf]
  %v42 = vld [vmem:[%s0 + $0x1c] sm:$0xf]
  %v43 = vld [vmem:[%s0 + $0x20] sm:$0xf]
  %v44 = vld [vmem:[%s0 + $0x24] sm:$0xf]
  %v45 = vld [vmem:[%s0 + $0x28] sm:$0xf]
  %v46 = vld [vmem:[%s0 + $0x2c] sm:$0xf]
  %v47 = vld [vmem:[%s0 + $0x30] sm:$0xf]
  %v48 = vld [vmem:[%s0 + $0x34] sm:$0xf]
  %v49 = vld [vmem:[%s0 + $0x38] sm:$0xf]
  %v50 = vld [vmem:[%s0 + $0x3c] sm:$0xf]
  %vm51 = vcmask 125952
  %v52 = vsel %vm51, %v35, 0.0
  %v53 = vsel %vm51, %v37, 0.0
  %v54 = vadd.f32 %v52, %v53
  %v55 = vsel %vm51, %v39, 0.0
  %v56 = vadd.f32 %v54, %v55
  %v57 = vsel %vm51, %v41, 0.0
  %v58 = vadd.f32 %v56, %v57
  %v59 = vsel %vm51, %v43, 0.0
  %v60 = vadd.f32 %v58, %v59
  %v61 = vsel %vm51, %v45, 0.0
  %v62 = vadd.f32 %v60, %v61
  %v63 = vsel %vm51, %v47, 0.0
  %v64 = vadd.f32 %v62, %v63
  %v65 = vsel %vm51, %v49, 0.0
  %v66 = vadd.f32 %v64, %v65
  %v67 = vsel %vm51, %v36, 0.0
  %v68 = vsel %vm51, %v38, 0.0
  %v69 = vadd.f32 %v67, %v68
  %v70 = vsel %vm51, %v40, 0.0
  %v71 = vadd.f32 %v69, %v70
  %v72 = vsel %vm51, %v42, 0.0
  %v73 = vadd.f32 %v71, %v72
  %v74 = vsel %vm51, %v44, 0.0
  %v75 = vadd.f32 %v73, %v74
  %v76 = vsel %vm51, %v46, 0.0
  %v77 = vadd.f32 %v75, %v76
  %v78 = vsel %vm51, %v48, 0.0
  %v79 = vadd.f32 %v77, %v78
  %v80 = vsel %vm51, %v50, 0.0
  %v81 = vadd.f32 %v79, %v80
  %83 = vset.pattern.permute.xlu0 0
  %84 = vperm.xlu0 %83, %v33
  %v85 = vpop.permute.xlu0 %84
  %88 = vset.pattern.permute.xlu0 0
  %89 = vperm.xlu0 %88, %v34
  %v90 = vpop.permute.xlu0 %89
  %v92 = vmul.f32 %v66, %v85
  %v93 = vmul.f32 %v81, %v90
  %v94 = vld [vmem:[%s1] sm:$0xf]
  %v95 = vld [vmem:[%s1 + $0x4] sm:$0xf]
  %v96 = vld [vmem:[%s1 + $0x8] sm:$0xf]
  %v97 = vld [vmem:[%s1 + $0xc] sm:$0xf]
  %v98 = vld [vmem:[%s1 + $0x10] sm:$0xf]
  %v99 = vld [vmem:[%s1 + $0x14] sm:$0xf]
  %v100 = vld [vmem:[%s1 + $0x18] sm:$0xf]
  %v101 = vld [vmem:[%s1 + $0x1c] sm:$0xf]
  %v102 = vld [vmem:[%s1 + $0x20] sm:$0xf]
  %v103 = vld [vmem:[%s1 + $0x24] sm:$0xf]
  %v104 = vld [vmem:[%s1 + $0x28] sm:$0xf]
  %v105 = vld [vmem:[%s1 + $0x2c] sm:$0xf]
  %v106 = vld [vmem:[%s1 + $0x30] sm:$0xf]
  %v107 = vld [vmem:[%s1 + $0x34] sm:$0xf]
  %v108 = vld [vmem:[%s1 + $0x38] sm:$0xf]
  %v109 = vld [vmem:[%s1 + $0x3c] sm:$0xf]
  %v110 = vsel %vm51, %v94, 0.0
  %v111 = vsel %vm51, %v96, 0.0
  %v112 = vadd.f32 %v110, %v111
  %v113 = vsel %vm51, %v98, 0.0
  %v114 = vadd.f32 %v112, %v113
  %v115 = vsel %vm51, %v100, 0.0
  %v116 = vadd.f32 %v114, %v115
  %v117 = vsel %vm51, %v102, 0.0
  %v118 = vadd.f32 %v116, %v117
  %v119 = vsel %vm51, %v104, 0.0
  %v120 = vadd.f32 %v118, %v119
  %v121 = vsel %vm51, %v106, 0.0
  %v122 = vadd.f32 %v120, %v121
  %v123 = vsel %vm51, %v108, 0.0
  %v124 = vadd.f32 %v122, %v123
  %v125 = vsel %vm51, %v95, 0.0
  %v126 = vsel %vm51, %v97, 0.0
  %v127 = vadd.f32 %v125, %v126
  %v128 = vsel %vm51, %v99, 0.0
  %v129 = vadd.f32 %v127, %v128
  %v130 = vsel %vm51, %v101, 0.0
  %v131 = vadd.f32 %v129, %v130
  %v132 = vsel %vm51, %v103, 0.0
  %v133 = vadd.f32 %v131, %v132
  %v134 = vsel %vm51, %v105, 0.0
  %v135 = vadd.f32 %v133, %v134
  %v136 = vsel %vm51, %v107, 0.0
  %v137 = vadd.f32 %v135, %v136
  %v138 = vsel %vm51, %v109, 0.0
  %v139 = vadd.f32 %v137, %v138
  %v140 = vmul.f32 %v124, %v85
  %v141 = vmul.f32 %v139, %v90
  %v142 = vld [vmem:[%s3] sm:$0xf]
  %v143 = vld [vmem:[%s3 + $0x4] sm:$0xf]
  %v144 = vpack.c.bf16 %v92, %v92
  %s145 = scalar_lea.vmem %s3, 8
  %v146 = vld [vmem:[%s145] sm:$0xf]
  %v147 = vld [vmem:[%s145 + $0x4] sm:$0xf]
  %v148 = vpack.c.bf16 %v140, %v140
  %v151 = vunpack.c.l.b16 %v146
  %v152 = vunpack.c.l.b16 %v147
  %v153 = vpack.c.b16 %v152, %v151
  %vm155 = vcmask 130048
  %v157 = vsel %vm155, %v148, 0
  %159 = vmatprep.subr.bf16.mxu0 0
  %160 = vmatpush1.bf16.msra.mxu0 %v153
  %161 = vmatprep.subr.bf16.mxu0 0
  %162 = vmatpush1.bf16.msra.mxu0 0
  %163 = vmatprep.subr.bf16.mxu0 0
  %164 = vmatpush1.bf16.msra.mxu0 0
  %165 = vmatprep.subr.bf16.mxu0 0
  %166 = vmatpush1.bf16.msra.mxu0 0
  %167 = vmatprep.subr.bf16.mxu0 0
  %168 = vmatpush1.bf16.msra.mxu0 0
  %169 = vmatprep.subr.bf16.mxu0 0
  %170 = vmatpush1.bf16.msra.mxu0 0
  %171 = vmatprep.subr.bf16.mxu0 0
  %172 = vmatpush1.bf16.msra.mxu0 0
  %173 = vmatprep.subr.bf16.mxu0 0
  %174 = vmatpush1.bf16.msra.mxu0 0
  %175 = vmatprep.subr.bf16.mxu0 0
  %176 = vmatpush1.bf16.msra.mxu0 0
  %177 = vmatprep.subr.bf16.mxu0 0
  %178 = vmatpush1.bf16.msra.mxu0 0
  %179 = vmatprep.subr.bf16.mxu0 0
  %180 = vmatpush1.bf16.msra.mxu0 0
  %181 = vmatprep.subr.bf16.mxu0 0
  %182 = vmatpush1.bf16.msra.mxu0 0
  %183 = vmatprep.subr.bf16.mxu0 0
  %184 = vmatpush1.bf16.msra.mxu0 0
  %185 = vmatprep.subr.bf16.mxu0 0
  %186 = vmatpush1.bf16.msra.mxu0 0
  %187 = vmatprep.subr.bf16.mxu0 0
  %188 = vmatpush1.bf16.msra.mxu0 0
  %189 = vmatprep.subr.bf16.mxu0 0
  %190 = vmatpush1.bf16.msra.mxu0 0
  %191 = vmatprep.mubr.bf16.mxu0 0
  %192 = vmatmul.mubr.bf16.gmra.mrb[0].mxu0 %v157
  %v193 = vpop.f32.mrb[0].mxu0
  %v194 = vadd.f32 0.0, %v193
  %v195 = vpop.f32.mrb[0].mxu0
  %v196 = vpop.f32.mrb[0].mxu0
  %v197 = vpop.f32.mrb[0].mxu0
  %198 = vdwg.mxu0
  %v201 = vunpack.c.l.b16 %v142
  %v202 = vunpack.c.l.b16 %v143
  %v203 = vpack.c.b16 %v202, %v201
  %v206 = vsel %vm155, %v144, 0
  %208 = vmatprep.subr.bf16.mxu0 0
  %209 = vmatpush1.bf16.msra.mxu0 %v203
  %210 = vmatprep.subr.bf16.mxu0 0
  %211 = vmatpush1.bf16.msra.mxu0 0
  %212 = vmatprep.subr.bf16.mxu0 0
  %213 = vmatpush1.bf16.msra.mxu0 0
  %214 = vmatprep.subr.bf16.mxu0 0
  %215 = vmatpush1.bf16.msra.mxu0 0
  %216 = vmatprep.subr.bf16.mxu0 0
  %217 = vmatpush1.bf16.msra.mxu0 0
  %218 = vmatprep.subr.bf16.mxu0 0
  %219 = vmatpush1.bf16.msra.mxu0 0
  %220 = vmatprep.subr.bf16.mxu0 0
  %221 = vmatpush1.bf16.msra.mxu0 0
  %222 = vmatprep.subr.bf16.mxu0 0
  %223 = vmatpush1.bf16.msra.mxu0 0
  %224 = vmatprep.subr.bf16.mxu0 0
  %225 = vmatpush1.bf16.msra.mxu0 0
  %226 = vmatprep.subr.bf16.mxu0 0
  %227 = vmatpush1.bf16.msra.mxu0 0
  %228 = vmatprep.subr.bf16.mxu0 0
  %229 = vmatpush1.bf16.msra.mxu0 0
  %230 = vmatprep.subr.bf16.mxu0 0
  %231 = vmatpush1.bf16.msra.mxu0 0
  %232 = vmatprep.subr.bf16.mxu0 0
  %233 = vmatpush1.bf16.msra.mxu0 0
  %234 = vmatprep.subr.bf16.mxu0 0
  %235 = vmatpush1.bf16.msra.mxu0 0
  %236 = vmatprep.subr.bf16.mxu0 0
  %237 = vmatpush1.bf16.msra.mxu0 0
  %238 = vmatprep.subr.bf16.mxu0 0
  %239 = vmatpush1.bf16.msra.mxu0 0
  %240 = vmatprep.mubr.bf16.mxu0 0
  %241 = vmatmul.mubr.bf16.gmra.mrb[0].mxu0 %v206
  %v242 = vpop.f32.mrb[0].mxu0
  %v243 = vadd.f32 %v194, %v242
  %v244 = vpop.f32.mrb[0].mxu0
  %v245 = vpop.f32.mrb[0].mxu0
  %v246 = vpop.f32.mrb[0].mxu0
  %247 = vdwg.mxu0
  %s248 = scalar_lea.vmem %s3, 16
  %v249 = vld [vmem:[%s248] sm:$0xf]
  %v250 = vld [vmem:[%s248 + $0x4] sm:$0xf]
  %v251 = vpack.c.bf16 %v93, %v93
  %v254 = vunpack.c.l.b16 %v249
  %v255 = vunpack.c.l.b16 %v250
  %v256 = vpack.c.b16 %v255, %v254
  %v259 = vsel %vm155, %v251, 0
  %261 = vmatprep.subr.bf16.mxu0 0
  %262 = vmatpush1.bf16.msra.mxu0 %v256
  %263 = vmatprep.subr.bf16.mxu0 0
  %264 = vmatpush1.bf16.msra.mxu0 0
  %265 = vmatprep.subr.bf16.mxu0 0
  %266 = vmatpush1.bf16.msra.mxu0 0
  %267 = vmatprep.subr.bf16.mxu0 0
  %268 = vmatpush1.bf16.msra.mxu0 0
  %269 = vmatprep.subr.bf16.mxu0 0
  %270 = vmatpush1.bf16.msra.mxu0 0
  %271 = vmatprep.subr.bf16.mxu0 0
  %272 = vmatpush1.bf16.msra.mxu0 0
  %273 = vmatprep.subr.bf16.mxu0 0
  %274 = vmatpush1.bf16.msra.mxu0 0
  %275 = vmatprep.subr.bf16.mxu0 0
  %276 = vmatpush1.bf16.msra.mxu0 0
  %277 = vmatprep.subr.bf16.mxu0 0
  %278 = vmatpush1.bf16.msra.mxu0 0
  %279 = vmatprep.subr.bf16.mxu0 0
  %280 = vmatpush1.bf16.msra.mxu0 0
  %281 = vmatprep.subr.bf16.mxu0 0
  %282 = vmatpush1.bf16.msra.mxu0 0
  %283 = vmatprep.subr.bf16.mxu0 0
  %284 = vmatpush1.bf16.msra.mxu0 0
  %285 = vmatprep.subr.bf16.mxu0 0
  %286 = vmatpush1.bf16.msra.mxu0 0
  %287 = vmatprep.subr.bf16.mxu0 0
  %288 = vmatpush1.bf16.msra.mxu0 0
  %289 = vmatprep.subr.bf16.mxu0 0
  %290 = vmatpush1.bf16.msra.mxu0 0
  %291 = vmatprep.subr.bf16.mxu0 0
  %292 = vmatpush1.bf16.msra.mxu0 0
  %293 = vmatprep.mubr.bf16.mxu0 0
  %294 = vmatmul.mubr.bf16.gmra.mrb[0].mxu0 %v259
  %v295 = vpop.f32.mrb[0].mxu0
  %v296 = vadd.f32 0.0, %v295
  %v297 = vpop.f32.mrb[0].mxu0
  %v298 = vpop.f32.mrb[0].mxu0
  %v299 = vpop.f32.mrb[0].mxu0
  %300 = vdwg.mxu0
  %v301 = vadd.f32 %v243, %v296
  %s302 = scalar_lea.vmem %s3, 24
  %v303 = vld [vmem:[%s302] sm:$0xf]
  %v304 = vld [vmem:[%s302 + $0x4] sm:$0xf]
  %v305 = vpack.c.bf16 %v141, %v141
  %v308 = vunpack.c.l.b16 %v303
  %v309 = vunpack.c.l.b16 %v304
  %v310 = vpack.c.b16 %v309, %v308
  %v313 = vsel %vm155, %v305, 0
  %315 = vmatprep.subr.bf16.mxu0 0
  %316 = vmatpush1.bf16.msra.mxu0 %v310
  %317 = vmatprep.subr.bf16.mxu0 0
  %318 = vmatpush1.bf16.msra.mxu0 0
  %319 = vmatprep.subr.bf16.mxu0 0
  %320 = vmatpush1.bf16.msra.mxu0 0
  %321 = vmatprep.subr.bf16.mxu0 0
  %322 = vmatpush1.bf16.msra.mxu0 0
  %323 = vmatprep.subr.bf16.mxu0 0
  %324 = vmatpush1.bf16.msra.mxu0 0
  %325 = vmatprep.subr.bf16.mxu0 0
  %326 = vmatpush1.bf16.msra.mxu0 0
  %327 = vmatprep.subr.bf16.mxu0 0
  %328 = vmatpush1.bf16.msra.mxu0 0
  %329 = vmatprep.subr.bf16.mxu0 0
  %330 = vmatpush1.bf16.msra.mxu0 0
  %331 = vmatprep.subr.bf16.mxu0 0
  %332 = vmatpush1.bf16.msra.mxu0 0
  %333 = vmatprep.subr.bf16.mxu0 0
  %334 = vmatpush1.bf16.msra.mxu0 0
  %335 = vmatprep.subr.bf16.mxu0 0
  %336 = vmatpush1.bf16.msra.mxu0 0
  %337 = vmatprep.subr.bf16.mxu0 0
  %338 = vmatpush1.bf16.msra.mxu0 0
  %339 = vmatprep.subr.bf16.mxu0 0
  %340 = vmatpush1.bf16.msra.mxu0 0
  %341 = vmatprep.subr.bf16.mxu0 0
  %342 = vmatpush1.bf16.msra.mxu0 0
  %343 = vmatprep.subr.bf16.mxu0 0
  %344 = vmatpush1.bf16.msra.mxu0 0
  %345 = vmatprep.subr.bf16.mxu0 0
  %346 = vmatpush1.bf16.msra.mxu0 0
  %347 = vmatprep.mubr.bf16.mxu0 0
  %348 = vmatmul.mubr.bf16.gmra.mrb[0].mxu0 %v313
  %v349 = vpop.f32.mrb[0].mxu0
  %v350 = vadd.f32 0.0, %v349
  %v351 = vpop.f32.mrb[0].mxu0
  %v352 = vpop.f32.mrb[0].mxu0
  %v353 = vpop.f32.mrb[0].mxu0
  %354 = vdwg.mxu0
  %v355 = vadd.f32 %v301, %v350
  %v356 = vld [vmem:[%s4] sm:$0x1]
  %v358 = vlaneseq
  %v359 = vshrl.u32 %v358, 7
  %v360 = vsub.s32 0, %v359
  %v361 = vrot.slane %v356, %v360
  %v363 = vadd.f32 %v355, %v361
  %v364 = vtanh.pop %v363
  %v365 = vld [vmem:[%s5] sm:$0xf]
  %v366 = vld [vmem:[%s5 + $0x4] sm:$0xf]
  %v367 = vld [vmem:[%s5 + $0x8] sm:$0xf]
  %v368 = vld [vmem:[%s5 + $0xc] sm:$0xf]
  %v369 = vpack.c.bf16 %v364, %v364
  %v370 = vld [vmem:[%s6] sm:$0x1]
  %v372 = vlaneseq
  %v373 = vshrl.u32 %v372, 7
  %v374 = vsub.s32 0, %v373
  %v375 = vrot.slane %v370, %v374
  %v381 = vunpack.c.l.b16 %v365
  %v382 = vunpack.c.l.b16 %v366
  %v383 = vunpack.c.l.b16 %v367
  %v384 = vunpack.c.l.b16 %v368
  %v385 = vpack.c.b16 %v382, %v381
  %v386 = vpack.c.b16 %v384, %v383
  %vm389 = vcmask 261120
  %v391 = vsel %vm389, %v369, 0
  %393 = vmatprep.subr.bf16.mxu0 0
  %394 = vmatpush1.bf16.msra.mxu0 %v385
  %395 = vmatprep.subr.bf16.mxu0 0
  %396 = vmatpush1.bf16.msra.mxu0 %v386
  %397 = vmatprep.subr.bf16.mxu0 0
  %398 = vmatpush1.bf16.msra.mxu0 0
  %399 = vmatprep.subr.bf16.mxu0 0
  %400 = vmatpush1.bf16.msra.mxu0 0
  %401 = vmatprep.subr.bf16.mxu0 0
  %402 = vmatpush1.bf16.msra.mxu0 0
  %403 = vmatprep.subr.bf16.mxu0 0
  %404 = vmatpush1.bf16.msra.mxu0 0
  %405 = vmatprep.subr.bf16.mxu0 0
  %406 = vmatpush1.bf16.msra.mxu0 0
  %407 = vmatprep.subr.bf16.mxu0 0
  %408 = vmatpush1.bf16.msra.mxu0 0
  %409 = vmatprep.subr.bf16.mxu0 0
  %410 = vmatpush1.bf16.msra.mxu0 0
  %411 = vmatprep.subr.bf16.mxu0 0
  %412 = vmatpush1.bf16.msra.mxu0 0
  %413 = vmatprep.subr.bf16.mxu0 0
  %414 = vmatpush1.bf16.msra.mxu0 0
  %415 = vmatprep.subr.bf16.mxu0 0
  %416 = vmatpush1.bf16.msra.mxu0 0
  %417 = vmatprep.subr.bf16.mxu0 0
  %418 = vmatpush1.bf16.msra.mxu0 0
  %419 = vmatprep.subr.bf16.mxu0 0
  %420 = vmatpush1.bf16.msra.mxu0 0
  %421 = vmatprep.subr.bf16.mxu0 0
  %422 = vmatpush1.bf16.msra.mxu0 0
  %423 = vmatprep.subr.bf16.mxu0 0
  %424 = vmatpush1.bf16.msra.mxu0 0
  %425 = vmatprep.mubr.bf16.mxu0 0
  %426 = vmatmul.mubr.bf16.gmra.mrb[0].mxu0 %v391
  %v427 = vpop.f32.mrb[0].mxu0
  %v428 = vadd.f32 %v375, %v427
  %v429 = vpop.f32.mrb[0].mxu0
  %v430 = vpop.f32.mrb[0].mxu0
  %v431 = vpop.f32.mrb[0].mxu0
  %432 = vdwg.mxu0
  %vm433 = vcmask 19456
  %434 = vst.msk [vmem:[%s7] sm:$0xf] %vm433, %v428
  // Predicated region
  $region30: #{semattn_forward.7} parent=0 // pred_check
    _
  $region31: #{semattn_forward.7} parent=0 // pred_check_branch
    %436 = sbr.rel (0) target = $region33
  $region32: #{semattn_forward.7} parent=0 // pred_region
    _
  $region33: #{semattn_forward.7} parent=0 // pred_fallthru
    _
  // Predicated region
  $region34: #{semattn_forward.7} parent=0 // pred_check
    _
  $region35: #{semattn_forward.7} parent=0 // pred_check_branch
    %438 = sbr.rel (0) target = $region37
  $region36: #{semattn_forward.7} parent=0 // pred_region
    _
  $region37: #{semattn_forward.7} parent=0 // pred_fallthru
    _

// kernel: semattn_forward.5
$region0: #{semattn_forward.5}
  #allocation0 [shape = 'u32[]', space=smem, size = 0x4, offset = 0x4, fixed_abs, tag = 'smem constant byte address 0x4 - core index']
  #allocation1 [shape = 'u32[144,128]{1,0:T(1,128)}', space=vmem, size = 0x12000, scoped, tag = 'internal scratch']
  %s0 = inlined_call_operand.vmem [shape: s32[2,4], index: 0, kind: input, shape index: {}]
  %s1 = inlined_call_operand.vmem [shape: bf16[2,4,8,16], index: 1, kind: input, shape index: {}]
  %s2 = inlined_call_operand.vmem [shape: bf16[2,4,8,16], index: 2, kind: input, shape index: {}]
  %s3 = inlined_call_operand.vmem [shape: bf16[8,16,16], index: 3, kind: input, shape index: {}]
  %s4 = inlined_call_operand.vmem [shape: f32[1,16], index: 4, kind: input, shape index: {}]
  %s5 = inlined_call_operand.vmem [shape: f32[2,4,8,16], index: 5, kind: output, shape index: {}]
  %s6 = sld [smem:[#allocation0]]
  $region173: #{semattn_forward.5} parent=0
    _
  %s8 = ssub.s32 1, %s6
  %s9 = scalar_select 0, %s8, %s6
  $region1: #{semattn_forward.5} parent=0
    #allocation2 [shape = 'u8[1024]{0}', space=smem, size = 0x400, scoped, tag = 'input window, operand 0, single buffered']
    #allocation3 [shape = 's32[2]{0}', space=sflag, size = 0x8, scoped, tag = 'scoped memory for semattn_forward.5']
    #allocation4 [shape = 'u8[8192]{0}', space=vmem, size = 0x2000, scoped, tag = 'input window, operand 1']
    #allocation5 [shape = 'u8[8192]{0}', space=vmem, size = 0x2000, scoped, tag = 'input window, operand 2']
    #allocation6 [shape = 'u8[16384]{0}', space=vmem, size = 0x4000, scoped, tag = 'output window, operand 0']
    %10 = vsyncpa [#allocation3], 0
    loop: start=0, step=1, limit=6
    $region2: #{semattn_forward.5} parent=1 // loop_pre_header
      _
    $region3: #{semattn_forward.5} parent=1 // loop_header
      %s12 = sphi 0, %s16
      %p13 = scmp.ge.s32.totalorder %s12, 6
      %s20 = sphi 0, %s20
      %s22 = sphi 0, %s20
      %s23 = sphi 0, %s22
      %s37 = sphi 0, %s23
      %s43 = sphi 0, %s45
      %s46 = sphi 0, %s43
      %s47 = sphi 0, %s46
      %s63 = sphi 0, %s47
      %s69 = sphi 0, %s71
      %s72 = sphi 0, %s69
      %s73 = sphi 0, %s72
      %s89 = sphi 0, %s73
      %s93 = sphi 0, %s93
      %s95 = sphi 0, %s93
      %s96 = sphi 0, %s95
      %s110 = sphi 0, %s96
      %s114 = sphi 0, %s114
      %s116 = sphi 0, %s114
      %s117 = sphi 0, %s116
      %s131 = sphi 0, %s117
      %s137 = sphi 0, %s139
      %s140 = sphi 0, %s137
      %s141 = sphi 0, %s140
      %s157 = sphi 0, %s141
    $region4: #{semattn_forward.5} parent=1 // loop_header_branch
      %15 = sbr.rel (%p13) target = $region8
    $region5: #{semattn_forward.5} parent=1 // loop_body
      %s17 = ssub.s32 %s12, 1
      %s18 = ssub.s32 %s12, 2
      %s19 = sadd.s32 %s12, 1
      %s21 = sadd.s32 %s20, 1
      %p24 = scmp.eq.s32.totalorder %s12, 3
      %p25 = scmp.ne.s32.totalorder %s20, %s22
      %p26 = scmp.eq.s32.totalorder %s12, 0
      %p27 = por %p25, %p26
      %p28 = scmp.ne.s32.totalorder %s20, %s22
      %p29 = scmp.eq.s32.totalorder %s17, 3
      %p30 = por %p28, %p29
      %p31 = scmp.ne.s32.totalorder %s22, %s23
      %p32 = scmp.eq.s32.totalorder %s17, 0
      %p33 = por %p31, %p32
      %p34 = scmp.ne.s32.totalorder %s22, %s23
      %p35 = scmp.eq.s32.totalorder %s18, 3
      %p36 = por %p34, %p35
      %p38 = scmp.ne.s32.totalorder %s23, %s37
      %p39 = scmp.eq.s32.totalorder %s18, 0
      %p40 = por %p38, %p39
      %s41 = ssub.s32 %s12, %s19
      %p42 = scmp.eq.s32.totalorder %s41, 0
      %s44 = sadd.s32 %s43, 1
      %s45 = scalar_select %p42, %s43, %s44
      %p48 = pneg %p42
      %p49 = scmp.eq.s32.totalorder %s12, 3
      %p50 = por %p48, %p49
      %p51 = scmp.ne.s32.totalorder %s43, %s46
      %p52 = scmp.eq.s32.totalorder %s12, 0
      %p53 = por %p51, %p52
      %p54 = scmp.ne.s32.totalorder %s43, %s46
      %p55 = scmp.eq.s32.totalorder %s17, 3
      %p56 = por %p54, %p55
      %p57 = scmp.ne.s32.totalorder %s46, %s47
      %p58 = scmp.eq.s32.totalorder %s17, 0
      %p59 = por %p57, %p58
      %p60 = scmp.ne.s32.totalorder %s46, %s47
      %p61 = scmp.eq.s32.totalorder %s18, 3
      %p62 = por %p60, %p61
      %p64 = scmp.ne.s32.totalorder %s47, %s63
      %p65 = scmp.eq.s32.totalorder %s18, 0
      %p66 = por %p64, %p65
      %s67 = ssub.s32 %s12, %s19
      %p68 = scmp.eq.s32.totalorder %s67, 0
      %s70 = sadd.s32 %s69, 1
      %s71 = scalar_select %p68, %s69, %s70
      %p74 = pneg %p68
      %p75 = scmp.eq.s32.totalorder %s12, 3
      %p76 = por %p74, %p75
      %p77 = scmp.ne.s32.totalorder %s69, %s72
      %p78 = scmp.eq.s32.totalorder %s12, 0
      %p79 = por %p77, %p78
      %p80 = scmp.ne.s32.totalorder %s69, %s72
      %p81 = scmp.eq.s32.totalorder %s17, 3
      %p82 = por %p80, %p81
      %p83 = scmp.ne.s32.totalorder %s72, %s73
      %p84 = scmp.eq.s32.totalorder %s17, 0
      %p85 = por %p83, %p84
      %p86 = scmp.ne.s32.totalorder %s72, %s73
      %p87 = scmp.eq.s32.totalorder %s18, 3
      %p88 = por %p86, %p87
      %p90 = scmp.ne.s32.totalorder %s73, %s89
      %p91 = scmp.eq.s32.totalorder %s18, 0
      %p92 = por %p90, %p91
      %s94 = sadd.s32 %s93, 1
      %p97 = scmp.eq.s32.totalorder %s12, 3
      %p98 = scmp.ne.s32.totalorder %s93, %s95
      %p99 = scmp.eq.s32.totalorder %s12, 0
      %p100 = por %p98, %p99
      %p101 = scmp.ne.s32.totalorder %s93, %s95
      %p102 = scmp.eq.s32.totalorder %s17, 3
      %p103 = por %p101, %p102
      %p104 = scmp.ne.s32.totalorder %s95, %s96
      %p105 = scmp.eq.s32.totalorder %s17, 0
      %p106 = por %p104, %p105
      %p107 = scmp.ne.s32.totalorder %s95, %s96
      %p108 = scmp.eq.s32.totalorder %s18, 3
      %p109 = por %p107, %p108
      %p111 = scmp.ne.s32.totalorder %s96, %s110
      %p112 = scmp.eq.s32.totalorder %s18, 0
      %p113 = por %p111, %p112
      %s115 = sadd.s32 %s114, 1
      %p118 = scmp.eq.s32.totalorder %s12, 3
      %p119 = scmp.ne.s32.totalorder %s114, %s116
      %p120 = scmp.eq.s32.totalorder %s12, 0
      %p121 = por %p119, %p120
      %p122 = scmp.ne.s32.totalorder %s114, %s116
      %p123 = scmp.eq.s32.totalorder %s17, 3
      %p124 = por %p122, %p123
      %p125 = scmp.ne.s32.totalorder %s116, %s117
      %p126 = scmp.eq.s32.totalorder %s17, 0
      %p127 = por %p125, %p126
      %p128 = scmp.ne.s32.totalorder %s116, %s117
      %p129 = scmp.eq.s32.totalorder %s18, 3
      %p130 = por %p128, %p129
      %p132 = scmp.ne.s32.totalorder %s117, %s131
      %p133 = scmp.eq.s32.totalorder %s18, 0
      %p134 = por %p132, %p133
      %s135 = ssub.s32 %s12, %s19
      %p136 = scmp.eq.s32.totalorder %s135, 0
      %s138 = sadd.s32 %s137, 1
      %s139 = scalar_select %p136, %s137, %s138
      %p142 = pneg %p136
      %p143 = scmp.eq.s32.totalorder %s12, 3
      %p144 = por %p142, %p143
      %p145 = scmp.ne.s32.totalorder %s137, %s140
      %p146 = scmp.eq.s32.totalorder %s12, 0
      %p147 = por %p145, %p146
      %p148 = scmp.ne.s32.totalorder %s137, %s140
      %p149 = scmp.eq.s32.totalorder %s17, 3
      %p150 = por %p148, %p149
      %p151 = scmp.ne.s32.totalorder %s140, %s141
      %p152 = scmp.eq.s32.totalorder %s17, 0
      %p153 = por %p151, %p152
      %p154 = scmp.ne.s32.totalorder %s140, %s141
      %p155 = scmp.eq.s32.totalorder %s18, 3
      %p156 = por %p154, %p155
      %p158 = scmp.ne.s32.totalorder %s141, %s157
      %p159 = scmp.eq.s32.totalorder %s18, 0
      %p160 = por %p158, %p159
      %p161 = scmp.le.s32.totalorder 1, %s12
      %p162 = scmp.lt.s32.totalorder %s12, 5
      %p163 = pnand %p161, %p162
      %p164 = pneg %p163
      // Predicated region
      $region9: #{semattn_forward.5} parent=5 // pred_check
        _
      $region10: #{semattn_forward.5} parent=5 // pred_check_branch
        %166 = sbr.rel (%p163) target = $region12
      $region11: #{semattn_forward.5} parent=5 // pred_region
        %s167 = ssub.s32 %s12, 1
        // Predicated region
        $region13: #{semattn_forward.5} parent=11 // pred_check
          %p168 = pneg %p33
        $region14: #{semattn_forward.5} parent=11 // pred_check_branch
          %170 = sbr.rel (%p168) target = $region16
        $region15: #{semattn_forward.5} parent=11 // pred_region
          %s172 = ssub.s32 32, 32
          %173 = vsyncadd [#allocation3], %s172
          %s175 = sshll.u32 %s0, 4
          %s176 = int_to_ptr.vmem [resolvable:$true] %s175
          %178 = dma.vmem_to_smem %s176, 32, [#allocation2], [#allocation3]
        $region16: #{semattn_forward.5} parent=11 // pred_fallthru
          _
        // Predicated region
        $region17: #{semattn_forward.5} parent=11 // pred_check
          %p179 = pneg %p106
        $region18: #{semattn_forward.5} parent=11 // pred_check_branch
          %181 = sbr.rel (%p179) target = $region20
        $region19: #{semattn_forward.5} parent=11 // pred_region
          _
        $region20: #{semattn_forward.5} parent=11 // pred_fallthru
          _
        // Predicated region
        $region21: #{semattn_forward.5} parent=11 // pred_check
          %p182 = pneg %p127
        $region22: #{semattn_forward.5} parent=11 // pred_check_branch
          %184 = sbr.rel (%p182) target = $region24
        $region23: #{semattn_forward.5} parent=11 // pred_region
          _
        $region24: #{semattn_forward.5} parent=11 // pred_fallthru
          _
      $region12: #{semattn_forward.5} parent=5 // pred_fallthru
        _
      %p185 = scmp.lt.s32.totalorder %s12, 4
      // Predicated region
      $region25: #{semattn_forward.5} parent=5 // pred_check
        %p186 = pneg %p185
      $region26: #{semattn_forward.5} parent=5 // pred_check_branch
        %188 = sbr.rel (%p186) target = $region28
      $region27: #{semattn_forward.5} parent=5 // pred_region
        // Predicated region
        $region29: #{semattn_forward.5} parent=27 // pred_check
          %p189 = pneg %p53
        $region30: #{semattn_forward.5} parent=27 // pred_check_branch
          %191 = sbr.rel (%p189) target = $region32
        $region31: #{semattn_forward.5} parent=27 // pred_region
          %s192 = sand.u32 %s43, 1
          %s193 = sand.u32 %s43, 1
          %s194 = smul.addr %s193, 8
          %s195 = scalar_lea.vmem [#allocation4], %s194
          %s196 = smul.addr %s12, 4
          %s197 = scalar_lea.vmem %s1, %s196
          // Predicated region
          $region33: #{semattn_forward.5} parent=31 // pred_check
            _
          $region34: #{semattn_forward.5} parent=31 // pred_check_branch
            %199 = sbr.rel (0) target = $region36
          $region35: #{semattn_forward.5} parent=31 // pred_region
            // Predicated region
            $region37: #{semattn_forward.5} parent=35 // pred_check
              _
            $region38: #{semattn_forward.5} parent=35 // pred_check_branch
              %201 = sbr.rel target = $region40
            $region39: #{semattn_forward.5} parent=35 // pred_region
              // Predicated region
              $region52: #{semattn_forward.5} parent=39 // pred_check
                _
              $region53: #{semattn_forward.5} parent=39 // pred_check_branch
                %218 = sbr.rel (0) target = $region55
              $region54: #{semattn_forward.5} parent=39 // pred_region
                loop: start=0, step=1, limit=1
                $region56: #{semattn_forward.5} parent=54 // loop_pre_header
                  _
                $region57: #{semattn_forward.5} parent=54 // loop_header
                  %s220 = sphi 0, %s224
                  %p221 = scmp.ge.s32.totalorder %s220, 1
                  %s225 = sphi %s197, %s197
                  %s226 = sphi %s195, %s195
                $region58: #{semattn_forward.5} parent=54 // loop_header_branch
                  %223 = sbr.rel (%p221) target = $region62
                $region59: #{semattn_forward.5} parent=54 // loop_body
                  _
                $region60: #{semattn_forward.5} parent=54 // loop_footer
                  %s224 = sadd.s32 1, %s220
                $region61: #{semattn_forward.5} parent=54 // loop_footer_branch
                  %219 = sbr.rel target = $region57
                $region62: #{semattn_forward.5} parent=54 // loop_exit
                  _
                loop: start=0, step=1, limit=1
                $region63: #{semattn_forward.5} parent=54 // loop_pre_header
                  _
                $region64: #{semattn_forward.5} parent=54 // loop_header
                  %s229 = sphi 0, %s233
                  %p230 = scmp.ge.s32.totalorder %s229, 1
                  %s234 = sphi %s197, %s197
                  %s235 = sphi %s195, %s195
                $region65: #{semattn_forward.5} parent=54 // loop_header_branch
                  %232 = sbr.rel (%p230) target = $region69
                $region66: #{semattn_forward.5} parent=54 // loop_body
                  %v236 = vld [vmem:[%s234] sm:$0xf]
                  %237 = vst [vmem:[%s235] sm:$0xf] %v236
                  %v238 = vld [vmem:[%s234 + $0x10] sm:$0xf]
                  %239 = vst [vmem:[%s235 + $0x4] sm:$0xf] %v238
                $region67: #{semattn_forward.5} parent=54 // loop_footer
                  %s233 = sadd.s32 1, %s229
                $region68: #{semattn_forward.5} parent=54 // loop_footer_branch
                  %228 = sbr.rel target = $region64
                $region69: #{semattn_forward.5} parent=54 // loop_exit
                  _
              $region55: #{semattn_forward.5} parent=39 // pred_fallthru
                _
            $region40: #{semattn_forward.5} parent=35 // pred_fallthru
              _
            // Predicated region
            $region41: #{semattn_forward.5} parent=35 // pred_check
              _
            $region42: #{semattn_forward.5} parent=35 // pred_check_branch
              %203 = sbr.rel (0) target = $region44
            $region43: #{semattn_forward.5} parent=35 // pred_region
              loop: start=0, step=1, limit=1
              $region45: #{semattn_forward.5} parent=43 // loop_pre_header
                _
              $region46: #{semattn_forward.5} parent=43 // loop_header
                %s206 = sphi 0, %s210
                %p207 = scmp.ge.s32.totalorder %s206, 1
                %s211 = sphi %s197, %s197
                %s212 = sphi %s195, %s195
              $region47: #{semattn_forward.5} parent=43 // loop_header_branch
                %209 = sbr.rel (%p207) target = $region51
              $region48: #{semattn_forward.5} parent=43 // loop_body
                %v213 = vld [vmem:[%s211] sm:$0xf]
                %214 = vst [vmem:[%s212] sm:$0xf] %v213
                %v215 = vld [vmem:[%s211 + $0x10] sm:$0xf]
                %216 = vst [vmem:[%s212 + $0x4] sm:$0xf] %v215
              $region49: #{semattn_forward.5} parent=43 // loop_footer
                %s210 = sadd.s32 1, %s206
              $region50: #{semattn_forward.5} parent=43 // loop_footer_branch
                %205 = sbr.rel target = $region46
              $region51: #{semattn_forward.5} parent=43 // loop_exit
                _
            $region44: #{semattn_forward.5} parent=35 // pred_fallthru
              _
          $region36: #{semattn_forward.5} parent=31 // pred_fallthru
            _
          %240 = vnop
        $region32: #{semattn_forward.5} parent=27 // pred_fallthru
          _
        // Predicated region
        $region70: #{semattn_forward.5} parent=27 // pred_check
          %p241 = pneg %p79
        $region71: #{semattn_forward.5} parent=27 // pred_check_branch
          %243 = sbr.rel (%p241) target = $region73
        $region72: #{semattn_forward.5} parent=27 // pred_region
          %s244 = sand.u32 %s69, 1
          %s245 = sand.u32 %s69, 1
          %s246 = smul.addr %s245, 8
          %s247 = scalar_lea.vmem [#allocation5], %s246
          %s248 = smul.addr %s12, 4
          %s249 = scalar_lea.vmem %s2, %s248
          // Predicated region
          $region74: #{semattn_forward.5} parent=72 // pred_check
            _
          $region75: #{semattn_forward.5} parent=72 // pred_check_branch
            %251 = sbr.rel (0) target = $region77
          $region76: #{semattn_forward.5} parent=72 // pred_region
            // Predicated region
            $region78: #{semattn_forward.5} parent=76 // pred_check
              _
            $region79: #{semattn_forward.5} parent=76 // pred_check_branch
              %253 = sbr.rel target = $region81
            $region80: #{semattn_forward.5} parent=76 // pred_region
              // Predicated region
              $region93: #{semattn_forward.5} parent=80 // pred_check
                _
              $region94: #{semattn_forward.5} parent=80 // pred_check_branch
                %270 = sbr.rel (0) target = $region96
              $region95: #{semattn_forward.5} parent=80 // pred_region
                loop: start=0, step=1, limit=1
                $region97: #{semattn_forward.5} parent=95 // loop_pre_header
                  _
                $region98: #{semattn_forward.5} parent=95 // loop_header
                  %s272 = sphi 0, %s276
                  %p273 = scmp.ge.s32.totalorder %s272, 1
                  %s277 = sphi %s249, %s249
                  %s278 = sphi %s247, %s247
                $region99: #{semattn_forward.5} parent=95 // loop_header_branch
                  %275 = sbr.rel (%p273) target = $region103
                $region100: #{semattn_forward.5} parent=95 // loop_body
                  _
                $region101: #{semattn_forward.5} parent=95 // loop_footer
                  %s276 = sadd.s32 1, %s272
                $region102: #{semattn_forward.5} parent=95 // loop_footer_branch
                  %271 = sbr.rel target = $region98
                $region103: #{semattn_forward.5} parent=95 // loop_exit
                  _
                loop: start=0, step=1, limit=1
                $region104: #{semattn_forward.5} parent=95 // loop_pre_header
                  _
                $region105: #{semattn_forward.5} parent=95 // loop_header
                  %s281 = sphi 0, %s285
                  %p282 = scmp.ge.s32.totalorder %s281, 1
                  %s286 = sphi %s249, %s249
                  %s287 = sphi %s247, %s247
                $region106: #{semattn_forward.5} parent=95 // loop_header_branch
                  %284 = sbr.rel (%p282) target = $region110
                $region107: #{semattn_forward.5} parent=95 // loop_body
                  %v288 = vld [vmem:[%s286] sm:$0xf]
                  %289 = vst [vmem:[%s287] sm:$0xf] %v288
                  %v290 = vld [vmem:[%s286 + $0x10] sm:$0xf]
                  %291 = vst [vmem:[%s287 + $0x4] sm:$0xf] %v290
                $region108: #{semattn_forward.5} parent=95 // loop_footer
                  %s285 = sadd.s32 1, %s281
                $region109: #{semattn_forward.5} parent=95 // loop_footer_branch
                  %280 = sbr.rel target = $region105
                $region110: #{semattn_forward.5} parent=95 // loop_exit
                  _
              $region96: #{semattn_forward.5} parent=80 // pred_fallthru
                _
            $region81: #{semattn_forward.5} parent=76 // pred_fallthru
              _
            // Predicated region
            $region82: #{semattn_forward.5} parent=76 // pred_check
              _
            $region83: #{semattn_forward.5} parent=76 // pred_check_branch
              %255 = sbr.rel (0) target = $region85
            $region84: #{semattn_forward.5} parent=76 // pred_region
              loop: start=0, step=1, limit=1
              $region86: #{semattn_forward.5} parent=84 // loop_pre_header
                _
              $region87: #{semattn_forward.5} parent=84 // loop_header
                %s258 = sphi 0, %s262
                %p259 = scmp.ge.s32.totalorder %s258, 1
                %s263 = sphi %s249, %s249
                %s264 = sphi %s247, %s247
              $region88: #{semattn_forward.5} parent=84 // loop_header_branch
                %261 = sbr.rel (%p259) target = $region92
              $region89: #{semattn_forward.5} parent=84 // loop_body
                %v265 = vld [vmem:[%s263] sm:$0xf]
                %266 = vst [vmem:[%s264] sm:$0xf] %v265
                %v267 = vld [vmem:[%s263 + $0x10] sm:$0xf]
                %268 = vst [vmem:[%s264 + $0x4] sm:$0xf] %v267
              $region90: #{semattn_forward.5} parent=84 // loop_footer
                %s262 = sadd.s32 1, %s258
              $region91: #{semattn_forward.5} parent=84 // loop_footer_branch
                %257 = sbr.rel target = $region87
              $region92: #{semattn_forward.5} parent=84 // loop_exit
                _
            $region85: #{semattn_forward.5} parent=76 // pred_fallthru
              _
          $region77: #{semattn_forward.5} parent=72 // pred_fallthru
            _
          %292 = vnop
        $region73: #{semattn_forward.5} parent=27 // pred_fallthru
          _
      $region28: #{semattn_forward.5} parent=5 // pred_fallthru
        _
      %p293 = scmp.le.s32.totalorder 1, %s12
      %p294 = scmp.lt.s32.totalorder %s12, 5
      %p295 = pnand %p293, %p294
      %p296 = pneg %p295
      // Predicated region
      $region111: #{semattn_forward.5} parent=5 // pred_check
        _
      $region112: #{semattn_forward.5} parent=5 // pred_check_branch
        %298 = sbr.rel (%p295) target = $region114
      $region113: #{semattn_forward.5} parent=5 // pred_region
        %s299 = ssub.s32 %s12, 1
        // Predicated region
        $region115: #{semattn_forward.5} parent=113 // pred_check
          %p300 = pneg %p33
        $region116: #{semattn_forward.5} parent=113 // pred_check_branch
          %302 = sbr.rel (%p300) target = $region118
        $region117: #{semattn_forward.5} parent=113 // pred_region
          %303 = dma.done [#allocation3], 32
        $region118: #{semattn_forward.5} parent=113 // pred_fallthru
          _
        %s304 = sand.u32 %s46, 1
        %s305 = sand.u32 %s46, 1
        %s306 = smul.addr %s305, 8
        %s307 = scalar_lea.vmem [#allocation4], %s306
        // Predicated region
        $region119: #{semattn_forward.5} parent=113 // pred_check
          %p308 = pneg %p59
        $region120: #{semattn_forward.5} parent=113 // pred_check_branch
          %310 = sbr.rel (%p308) target = $region122
        $region121: #{semattn_forward.5} parent=113 // pred_region
          _
        $region122: #{semattn_forward.5} parent=113 // pred_fallthru
          _
        %s311 = sand.u32 %s72, 1
        %s312 = sand.u32 %s72, 1
        %s313 = smul.addr %s312, 8
        %s314 = scalar_lea.vmem [#allocation5], %s313
        // Predicated region
        $region123: #{semattn_forward.5} parent=113 // pred_check
          %p315 = pneg %p85
        $region124: #{semattn_forward.5} parent=113 // pred_check_branch
          %317 = sbr.rel (%p315) target = $region126
        $region125: #{semattn_forward.5} parent=113 // pred_region
          _
        $region126: #{semattn_forward.5} parent=113 // pred_fallthru
          _
        %318 = sfence
        %p319 = pneg %p33
        %p320 = pneg %p30
        %s321 = sand.u32 %s46, 1
        %s322 = sand.u32 %s46, 1
        %s323 = smul.addr %s322, 8
        %s324 = scalar_lea.vmem [#allocation4], %s323
        %p325 = pneg %p59
        %p326 = pneg %p56
        %s327 = sand.u32 %s72, 1
        %s328 = sand.u32 %s72, 1
        %s329 = smul.addr %s328, 8
        %s330 = scalar_lea.vmem [#allocation5], %s329
        %p331 = pneg %p85
        %p332 = pneg %p82
        %p333 = pneg %p106
        %p334 = pneg %p103
        %p335 = pneg %p127
        %p336 = pneg %p124
        %p337 = pneg %p153
        %p338 = pneg %p150
        %s339 = sand.u32 %s140, 1
        %s340 = sand.u32 %s140, 1
        %s341 = smul.addr %s340, 16
        %s342 = scalar_lea.vmem [#allocation6], %s341
        %v344 = vld [vmem:[%s307] sm:$0xf]
        %v345 = vld [vmem:[%s314] sm:$0xf]
        %s346 = scalar_lea.vmem %s307, 4 [#allocation4]
        %v347 = vld [vmem:[%s346] sm:$0xf]
        %s348 = scalar_lea.vmem %s314, 4 [#allocation5]
        %v349 = vld [vmem:[%s348] sm:$0xf]
        %s350 = sld [smem:[#allocation2 + %s17]]
        %s351 = sshra.s32 %s17, 7
        %s352 = sand.u32 %s17, 127
        %s353 = sadd.s32 %s351, 1
        %s354 = smul.u32 %s353, 128
        %s355 = sshra.s32 %s17, 7
        %s356 = sand.u32 %s17, 127
        %s357 = sadd.s32 %s354, %s356
        %s358 = sld [smem:[#allocation2 + %s357]]
        %vm359 = vcmask 130048
        %v361 = vsel %vm359, %v345, 0
        %v364 = vsel %vm359, %v349, 0
        %366 = vmatprep.subr.bf16.mxu0 0
        %367 = vmatpush1.bf16.xpose.msra.mxu0 %v364
        %368 = vmatprep.subr.bf16.mxu0 0
        %369 = vmatpush1.bf16.xpose.msra.mxu0 0
        %370 = vmatprep.subr.bf16.mxu0 0
        %371 = vmatpush1.bf16.xpose.msra.mxu0 0
        %372 = vmatprep.subr.bf16.mxu0 0
        %373 = vmatpush1.bf16.xpose.msra.mxu0 0
        %374 = vmatprep.subr.bf16.mxu0 0
        %375 = vmatpush1.bf16.xpose.msra.mxu0 0
        %376 = vmatprep.subr.bf16.mxu0 0
        %377 = vmatpush1.bf16.xpose.msra.mxu0 0
        %378 = vmatprep.subr.bf16.mxu0 0
        %379 = vmatpush1.bf16.xpose.msra.mxu0 0
        %380 = vmatprep.subr.bf16.mxu0 0
        %381 = vmatpush1.bf16.xpose.msra.mxu0 0
        %382 = vmatprep.subr.bf16.mxu0 0
        %383 = vmatpush1.bf16.xpose.msra.mxu0 0
        %384 = vmatprep.subr.bf16.mxu0 0
        %385 = vmatpush1.bf16.xpose.msra.mxu0 0
        %386 = vmatprep.subr.bf16.mxu0 0
        %387 = vmatpush1.bf16.xpose.msra.mxu0 0
        %388 = vmatprep.subr.bf16.mxu0 0
        %389 = vmatpush1.bf16.xpose.msra.mxu0 0
        %390 = vmatprep.subr.bf16.mxu0 0
        %391 = vmatpush1.bf16.xpose.msra.mxu0 0
        %392 = vmatprep.subr.bf16.mxu0 0
        %393 = vmatpush1.bf16.xpose.msra.mxu0 0
        %394 = vmatprep.subr.bf16.mxu0 0
        %395 = vmatpush1.bf16.xpose.msra.mxu0 0
        %396 = vmatprep.subr.bf16.mxu0 0
        %397 = vmatpush1.bf16.xpose.msra.mxu0 0
        %398 = vmatprep.mubr.bf16.mxu0 0
        %399 = vmatmul.mubr.bf16.gmra.mrb[0].mxu0 %v361
        %v400 = vpop.f32.mrb[0].mxu0
        %v401 = vadd.f32 0.0, %v400
        %v402 = vpop.f32.mrb[0].mxu0
        %v403 = vpop.f32.mrb[0].mxu0
        %v404 = vpop.f32.mrb[0].mxu0
        %405 = vdwg.mxu0
        %v407 = vsel %vm359, %v344, 0
        %v410 = vsel %vm359, %v347, 0
        %412 = vmatprep.subr.bf16.mxu0 0
        %413 = vmatpush1.bf16.xpose.msra.mxu0 %v410
        %414 = vmatprep.subr.bf16.mxu0 0
        %415 = vmatpush1.bf16.xpose.msra.mxu0 0
        %416 = vmatprep.subr.bf16.mxu0 0
        %417 = vmatpush1.bf16.xpose.msra.mxu0 0
        %418 = vmatprep.subr.bf16.mxu0 0
        %419 = vmatpush1.bf16.xpose.msra.mxu0 0
        %420 = vmatprep.subr.bf16.mxu0 0
        %421 = vmatpush1.bf16.xpose.msra.mxu0 0
        %422 = vmatprep.subr.bf16.mxu0 0
        %423 = vmatpush1.bf16.xpose.msra.mxu0 0
        %424 = vmatprep.subr.bf16.mxu0 0
        %425 = vmatpush1.bf16.xpose.msra.mxu0 0
        %426 = vmatprep.subr.bf16.mxu0 0
        %427 = vmatpush1.bf16.xpose.msra.mxu0 0
        %428 = vmatprep.subr.bf16.mxu0 0
        %429 = vmatpush1.bf16.xpose.msra.mxu0 0
        %430 = vmatprep.subr.bf16.mxu0 0
        %431 = vmatpush1.bf16.xpose.msra.mxu0 0
        %432 = vmatprep.subr.bf16.mxu0 0
        %433 = vmatpush1.bf16.xpose.msra.mxu0 0
        %434 = vmatprep.subr.bf16.mxu0 0
        %435 = vmatpush1.bf16.xpose.msra.mxu0 0
        %436 = vmatprep.subr.bf16.mxu0 0
        %437 = vmatpush1.bf16.xpose.msra.mxu0 0
        %438 = vmatprep.subr.bf16.mxu0 0
        %439 = vmatpush1.bf16.xpose.msra.mxu0 0
        %440 = vmatprep.subr.bf16.mxu0 0
        %441 = vmatpush1.bf16.xpose.msra.mxu0 0
        %442 = vmatprep.subr.bf16.mxu0 0
        %443 = vmatpush1.bf16.xpose.msra.mxu0 0
        %444 = vmatprep.mubr.bf16.mxu0 0
        %445 = vmatmul.mubr.bf16.gmra.mrb[0].mxu0 %v407
        %v446 = vpop.f32.mrb[0].mxu0
        %v447 = vadd.f32 %v401, %v446
        %v448 = vpop.f32.mrb[0].mxu0
        %v449 = vpop.f32.mrb[0].mxu0
        %v450 = vpop.f32.mrb[0].mxu0
        %451 = vdwg.mxu0
        %452 = vmatprep.subr.bf16.mxu0 0
        %453 = vmatpush1.bf16.xpose.msra.mxu0 %v361
        %454 = vmatprep.subr.bf16.mxu0 0
        %455 = vmatpush1.bf16.xpose.msra.mxu0 0
        %456 = vmatprep.subr.bf16.mxu0 0
        %457 = vmatpush1.bf16.xpose.msra.mxu0 0
        %458 = vmatprep.subr.bf16.mxu0 0
        %459 = vmatpush1.bf16.xpose.msra.mxu0 0
        %460 = vmatprep.subr.bf16.mxu0 0
        %461 = vmatpush1.bf16.xpose.msra.mxu0 0
        %462 = vmatprep.subr.bf16.mxu0 0
        %463 = vmatpush1.bf16.xpose.msra.mxu0 0
        %464 = vmatprep.subr.bf16.mxu0 0
        %465 = vmatpush1.bf16.xpose.msra.mxu0 0
        %466 = vmatprep.subr.bf16.mxu0 0
        %467 = vmatpush1.bf16.xpose.msra.mxu0 0
        %468 = vmatprep.subr.bf16.mxu0 0
        %469 = vmatpush1.bf16.xpose.msra.mxu0 0
        %470 = vmatprep.subr.bf16.mxu0 0
        %471 = vmatpush1.bf16.xpose.msra.mxu0 0
        %472 = vmatprep.subr.bf16.mxu0 0
        %473 = vmatpush1.bf16.xpose.msra.mxu0 0
        %474 = vmatprep.subr.bf16.mxu0 0
        %475 = vmatpush1.bf16.xpose.msra.mxu0 0
        %476 = vmatprep.subr.bf16.mxu0 0
        %477 = vmatpush1.bf16.xpose.msra.mxu0 0
        %478 = vmatprep.subr.bf16.mxu0 0
        %479 = vmatpush1.bf16.xpose.msra.mxu0 0
        %480 = vmatprep.subr.bf16.mxu0 0
        %481 = vmatpush1.bf16.xpose.msra.mxu0 0
        %482 = vmatprep.subr.bf16.mxu0 0
        %483 = vmatpush1.bf16.xpose.msra.mxu0 0
        %484 = vmatprep.mubr.bf16.mxu0 0
        %485 = vmatmul.mubr.bf16.gmra.mrb[0].mxu0 %v364
        %v486 = vpop.f32.mrb[0].mxu0
        %v487 = vadd.f32 0.0, %v486
        %v488 = vpop.f32.mrb[0].mxu0
        %v489 = vpop.f32.mrb[0].mxu0
        %v490 = vpop.f32.mrb[0].mxu0
        %491 = vdwg.mxu0
        %492 = vmatprep.subr.bf16.mxu0 0
        %493 = vmatpush1.bf16.xpose.msra.mxu0 %v407
        %494 = vmatprep.subr.bf16.mxu0 0
        %495 = vmatpush1.bf16.xpose.msra.mxu0 0
        %496 = vmatprep.subr.bf16.mxu0 0
        %497 = vmatpush1.bf16.xpose.msra.mxu0 0
        %498 = vmatprep.subr.bf16.mxu0 0
        %499 = vmatpush1.bf16.xpose.msra.mxu0 0
        %500 = vmatprep.subr.bf16.mxu0 0
        %501 = vmatpush1.bf16.xpose.msra.mxu0 0
        %502 = vmatprep.subr.bf16.mxu0 0
        %503 = vmatpush1.bf16.xpose.msra.mxu0 0
        %504 = vmatprep.subr.bf16.mxu0 0
        %505 = vmatpush1.bf16.xpose.msra.mxu0 0
        %506 = vmatprep.subr.bf16.mxu0 0
        %507 = vmatpush1.bf16.xpose.msra.mxu0 0
        %508 = vmatprep.subr.bf16.mxu0 0
        %509 = vmatpush1.bf16.xpose.msra.mxu0 0
        %510 = vmatprep.subr.bf16.mxu0 0
        %511 = vmatpush1.bf16.xpose.msra.mxu0 0
        %512 = vmatprep.subr.bf16.mxu0 0
        %513 = vmatpush1.bf16.xpose.msra.mxu0 0
        %514 = vmatprep.subr.bf16.mxu0 0
        %515 = vmatpush1.bf16.xpose.msra.mxu0 0
        %516 = vmatprep.subr.bf16.mxu0 0
        %517 = vmatpush1.bf16.xpose.msra.mxu0 0
        %518 = vmatprep.subr.bf16.mxu0 0
        %519 = vmatpush1.bf16.xpose.msra.mxu0 0
        %520 = vmatprep.subr.bf16.mxu0 0
        %521 = vmatpush1.bf16.xpose.msra.mxu0 0
        %522 = vmatprep.subr.bf16.mxu0 0
        %523 = vmatpush1.bf16.xpose.msra.mxu0 0
        %524 = vmatprep.mubr.bf16.mxu0 0
        %525 = vmatmul.mubr.bf16.gmra.mrb[0].mxu0 %v410
        %v526 = vpop.f32.mrb[0].mxu0
        %v527 = vadd.f32 %v487, %v526
        %v528 = vpop.f32.mrb[0].mxu0
        %v529 = vpop.f32.mrb[0].mxu0
        %v530 = vpop.f32.mrb[0].mxu0
        %531 = vdwg.mxu0
        %v532 = vlaneseq
        %v533 = vand.u32 %v532, 127
        %v534 = vstv %s358
        %vm535 = vcmp.lt.s32.totalorder %v533, %v534
        %v536 = vsel %vm535, 1, 0
        %vm537 = vcmp.eq.s32.totalorder %v536, 1
        %v538 = vsel %vm537, %v447, -1e+09
        %vm539 = vcmask 64512
        %v540 = vsel %vm539, %v538, -inf
        %541 = vmax.xlane.f32.xlu0 %v540
        %v542 = vpop.xlane.xlu0 %541
        %v543 = vsub.f32 %v538, %v542
        %v544 = vmul.f32 %v543, 1.442695
        %v545 = vpow.pop %v544
        %v546 = vsel %vm539, %v545, 0.0
        %547 = vadd.xlane.f32.xlu0 %v546
        %v548 = vpop.xlane.xlu0 %547
        %v549 = vrcp.pop %v548
        %v550 = vmul.f32 %v545, %v549
        %v551 = vpack.c.bf16 %v550, %v550
        %v552 = vstv %s350
        %vm553 = vcmp.lt.s32.totalorder %v533, %v552
        %v554 = vsel %vm553, 1, 0
        %vm555 = vcmp.eq.s32.totalorder %v554, 1
        %v556 = vsel %vm555, %v527, -1e+09
        %v557 = vsel %vm539, %v556, -inf
        %558 = vmax.xlane.f32.xlu0 %v557
        %v559 = vpop.xlane.xlu0 %558
        %v560 = vsub.f32 %v556, %v559
        %v561 = vmul.f32 %v560, 1.442695
        %v562 = vpow.pop %v561
        %v563 = vsel %vm539, %v562, 0.0
        %564 = vadd.xlane.f32.xlu0 %v563
        %v565 = vpop.xlane.xlu0 %564
        %v566 = vrcp.pop %v565
        %v567 = vmul.f32 %v562, %v566
        %v568 = vpack.c.bf16 %v567, %v567
        %v570 = vsel %vm539, %v551, 0
        %vm572 = vcmask 1043456
        %v573 = vsel %vm572, %v347, 0
        %575 = vmatprep.subr.bf16.mxu0 0
        %576 = vmatpush1.bf16.msra.mxu0 %v573
        %577 = vmatprep.subr.bf16.mxu0 0
        %578 = vmatpush1.bf16.msra.mxu0 0
        %579 = vmatprep.subr.bf16.mxu0 0
        %580 = vmatpush1.bf16.msra.mxu0 0
        %581 = vmatprep.subr.bf16.mxu0 0
        %582 = vmatpush1.bf16.msra.mxu0 0
        %583 = vmatprep.subr.bf16.mxu0 0
        %584 = vmatpush1.bf16.msra.mxu0 0
        %585 = vmatprep.subr.bf16.mxu0 0
        %586 = vmatpush1.bf16.msra.mxu0 0
        %587 = vmatprep.subr.bf16.mxu0 0
        %588 = vmatpush1.bf16.msra.mxu0 0
        %589 = vmatprep.subr.bf16.mxu0 0
        %590 = vmatpush1.bf16.msra.mxu0 0
        %591 = vmatprep.subr.bf16.mxu0 0
        %592 = vmatpush1.bf16.msra.mxu0 0
        %593 = vmatprep.subr.bf16.mxu0 0
        %594 = vmatpush1.bf16.msra.mxu0 0
        %595 = vmatprep.subr.bf16.mxu0 0
        %596 = vmatpush1.bf16.msra.mxu0 0
        %597 = vmatprep.subr.bf16.mxu0 0
        %598 = vmatpush1.bf16.msra.mxu0 0
        %599 = vmatprep.subr.bf16.mxu0 0
        %600 = vmatpush1.bf16.msra.mxu0 0
        %601 = vmatprep.subr.bf16.mxu0 0
        %602 = vmatpush1.bf16.msra.mxu0 0
        %603 = vmatprep.subr.bf16.mxu0 0
        %604 = vmatpush1.bf16.msra.mxu0 0
        %605 = vmatprep.subr.bf16.mxu0 0
        %606 = vmatpush1.bf16.msra.mxu0 0
        %607 = vmatprep.mubr.bf16.mxu0 0
        %608 = vmatmul.mubr.bf16.gmra.mrb[0].mxu0 %v570
        %v609 = vpop.f32.mrb[0].mxu0
        %v610 = vadd.f32 0.0, %v609
        %v611 = vpop.f32.mrb[0].mxu0
        %v612 = vpop.f32.mrb[0].mxu0
        %v613 = vpop.f32.mrb[0].mxu0
        %614 = vdwg.mxu0
        %v615 = vsel %vm572, %v349, 0
        %617 = vmatprep.subr.bf16.mxu0 0
        %618 = vmatpush1.bf16.msra.mxu0 %v615
        %619 = vmatprep.subr.bf16.mxu0 0
        %620 = vmatpush1.bf16.msra.mxu0 0
        %621 = vmatprep.subr.bf16.mxu0 0
        %622 = vmatpush1.bf16.msra.mxu0 0
        %623 = vmatprep.subr.bf16.mxu0 0
        %624 = vmatpush1.bf16.msra.mxu0 0
        %625 = vmatprep.subr.bf16.mxu0 0
        %626 = vmatpush1.bf16.msra.mxu0 0
        %627 = vmatprep.subr.bf16.mxu0 0
        %628 = vmatpush1.bf16.msra.mxu0 0
        %629 = vmatprep.subr.bf16.mxu0 0
        %630 = vmatpush1.bf16.msra.mxu0 0
        %631 = vmatprep.subr.bf16.mxu0 0
        %632 = vmatpush1.bf16.msra.mxu0 0
        %633 = vmatprep.subr.bf16.mxu0 0
        %634 = vmatpush1.bf16.msra.mxu0 0
        %635 = vmatprep.subr.bf16.mxu0 0
        %636 = vmatpush1.bf16.msra.mxu0 0
        %637 = vmatprep.subr.bf16.mxu0 0
        %638 = vmatpush1.bf16.msra.mxu0 0
        %639 = vmatprep.subr.bf16.mxu0 0
        %640 = vmatpush1.bf16.msra.mxu0 0
        %641 = vmatprep.subr.bf16.mxu0 0
        %642 = vmatpush1.bf16.msra.mxu0 0
        %643 = vmatprep.subr.bf16.mxu0 0
        %644 = vmatpush1.bf16.msra.mxu0 0
        %645 = vmatprep.subr.bf16.mxu0 0
        %646 = vmatpush1.bf16.msra.mxu0 0
        %647 = vmatprep.subr.bf16.mxu0 0
        %648 = vmatpush1.bf16.msra.mxu0 0
        %649 = vmatprep.mubr.bf16.mxu0 0
        %650 = vmatmul.mubr.bf16.gmra.mrb[0].mxu0 %v570
        %v651 = vpop.f32.mrb[0].mxu0
        %v652 = vadd.f32 0.0, %v651
        %v653 = vpop.f32.mrb[0].mxu0
        %v654 = vpop.f32.mrb[0].mxu0
        %v655 = vpop.f32.mrb[0].mxu0
        %656 = vdwg.mxu0
        %v658 = vsel %vm539, %v568, 0
        %v660 = vsel %vm572, %v344, 0
        %662 = vmatprep.subr.bf16.mxu0 0
        %663 = vmatpush1.bf16.msra.mxu0 %v660
        %664 = vmatprep.subr.bf16.mxu0 0
        %665 = vmatpush1.bf16.msra.mxu0 0
        %666 = vmatprep.subr.bf16.mxu0 0
        %667 = vmatpush1.bf16.msra.mxu0 0
        %668 = vmatprep.subr.bf16.mxu0 0
        %669 = vmatpush1.bf16.msra.mxu0 0
        %670 = vmatprep.subr.bf16.mxu0 0
        %671 = vmatpush1.bf16.msra.mxu0 0
        %672 = vmatprep.subr.bf16.mxu0 0
        %673 = vmatpush1.bf16.msra.mxu0 0
        %674 = vmatprep.subr.bf16.mxu0 0
        %675 = vmatpush1.bf16.msra.mxu0 0
        %676 = vmatprep.subr.bf16.mxu0 0
        %677 = vmatpush1.bf16.msra.mxu0 0
        %678 = vmatprep.subr.bf16.mxu0 0
        %679 = vmatpush1.bf16.msra.mxu0 0
        %680 = vmatprep.subr.bf16.mxu0 0
        %681 = vmatpush1.bf16.msra.mxu0 0
        %682 = vmatprep.subr.bf16.mxu0 0
        %683 = vmatpush1.bf16.msra.mxu0 0
        %684 = vmatprep.subr.bf16.mxu0 0
        %685 = vmatpush1.bf16.msra.mxu0 0
        %686 = vmatprep.subr.bf16.mxu0 0
        %687 = vmatpush1.bf16.msra.mxu0 0
        %688 = vmatprep.subr.bf16.mxu0 0
        %689 = vmatpush1.bf16.msra.mxu0 0
        %690 = vmatprep.subr.bf16.mxu0 0
        %691 = vmatpush1.bf16.msra.mxu0 0
        %692 = vmatprep.subr.bf16.mxu0 0
        %693 = vmatpush1.bf16.msra.mxu0 0
        %694 = vmatprep.mubr.bf16.mxu0 0
        %695 = vmatmul.mubr.bf16.gmra.mrb[0].mxu0 %v658
        %v696 = vpop.f32.mrb[0].mxu0
        %v697 = vadd.f32 0.0, %v696
        %v698 = vpop.f32.mrb[0].mxu0
        %v699 = vpop.f32.mrb[0].mxu0
        %v700 = vpop.f32.mrb[0].mxu0
        %701 = vdwg.mxu0
        %v702 = vsel %vm572, %v345, 0
        %704 = vmatprep.subr.bf16.mxu0 0
        %705 = vmatpush1.bf16.msra.mxu0 %v702
        %706 = vmatprep.subr.bf16.mxu0 0
        %707 = vmatpush1.bf16.msra.mxu0 0
        %708 = vmatprep.subr.bf16.mxu0 0
        %709 = vmatpush1.bf16.msra.mxu0 0
        %710 = vmatprep.subr.bf16.mxu0 0
        %711 = vmatpush1.bf16.msra.mxu0 0
        %712 = vmatprep.subr.bf16.mxu0 0
        %713 = vmatpush1.bf16.msra.mxu0 0
        %714 = vmatprep.subr.bf16.mxu0 0
        %715 = vmatpush1.bf16.msra.mxu0 0
        %716 = vmatprep.subr.bf16.mxu0 0
        %717 = vmatpush1.bf16.msra.mxu0 0
        %718 = vmatprep.subr.bf16.mxu0 0
        %719 = vmatpush1.bf16.msra.mxu0 0
        %720 = vmatprep.subr.bf16.mxu0 0
        %721 = vmatpush1.bf16.msra.mxu0 0
        %722 = vmatprep.subr.bf16.mxu0 0
        %723 = vmatpush1.bf16.msra.mxu0 0
        %724 = vmatprep.subr.bf16.mxu0 0
        %725 = vmatpush1.bf16.msra.mxu0 0
        %726 = vmatprep.subr.bf16.mxu0 0
        %727 = vmatpush1.bf16.msra.mxu0 0
        %728 = vmatprep.subr.bf16.mxu0 0
        %729 = vmatpush1.bf16.msra.mxu0 0
        %730 = vmatprep.subr.bf16.mxu0 0
        %731 = vmatpush1.bf16.msra.mxu0 0
        %732 = vmatprep.subr.bf16.mxu0 0
        %733 = vmatpush1.bf16.msra.mxu0 0
        %734 = vmatprep.subr.bf16.mxu0 0
        %735 = vmatpush1.bf16.msra.mxu0 0
        %736 = vmatprep.mubr.bf16.mxu0 0
        %737 = vmatmul.mubr.bf16.gmra.mrb[0].mxu0 %v658
        %v738 = vpop.f32.mrb[0].mxu0
        %v739 = vadd.f32 0.0, %v738
        %v740 = vpop.f32.mrb[0].mxu0
        %v741 = vpop.f32.mrb[0].mxu0
        %v742 = vpop.f32.mrb[0].mxu0
        %743 = vdwg.mxu0
        %v744 = vunpack.c.l.bf16 %v344
        %v745 = vunpack.c.l.bf16 %v345
        %v746 = vunpack.c.l.bf16 %v347
        %v747 = vunpack.c.l.bf16 %v349
        %v748 = vsub.f32 %v744, %v610
        %v749 = vsub.f32 %v745, %v652
        %v750 = vmul.f32 %v744, %v610
        %v751 = vmul.f32 %v745, %v652
        %v752 = vsub.f32 %v746, %v697
        %v753 = vsub.f32 %v747, %v739
        %v754 = vld [vmem:[%s4] sm:$0x1]
        %v755 = vld [vmem:[%s3] sm:$0xf]
        %v756 = vld [vmem:[%s3 + $0x4] sm:$0xf]
        %s757 = scalar_lea.vmem %s3, 8
        %v758 = vld [vmem:[%s757] sm:$0xf]
        %v759 = vld [vmem:[%s757 + $0x4] sm:$0xf]
        %v762 = vunpack.c.l.b16 %v758
        %v763 = vunpack.c.l.b16 %v759
        %v764 = vpack.c.b16 %v763, %v762
        %766 = vmatprep.subr.bf16.mxu0 0
        %767 = vmatpush1.bf16.msra.mxu0 %v764
        %768 = vmatprep.subr.bf16.mxu0 0
        %769 = vmatpush1.bf16.msra.mxu0 0
        %770 = vmatprep.subr.bf16.mxu0 0
        %771 = vmatpush1.bf16.msra.mxu0 0
        %772 = vmatprep.subr.bf16.mxu0 0
        %773 = vmatpush1.bf16.msra.mxu0 0
        %774 = vmatprep.subr.bf16.mxu0 0
        %775 = vmatpush1.bf16.msra.mxu0 0
        %776 = vmatprep.subr.bf16.mxu0 0
        %777 = vmatpush1.bf16.msra.mxu0 0
        %778 = vmatprep.subr.bf16.mxu0 0
        %779 = vmatpush1.bf16.msra.mxu0 0
        %780 = vmatprep.subr.bf16.mxu0 0
        %781 = vmatpush1.bf16.msra.mxu0 0
        %782 = vmatprep.subr.bf16.mxu0 0
        %783 = vmatpush1.bf16.msra.mxu0 0
        %784 = vmatprep.subr.bf16.mxu0 0
        %785 = vmatpush1.bf16.msra.mxu0 0
        %786 = vmatprep.subr.bf16.mxu0 0
        %787 = vmatpush1.bf16.msra.mxu0 0
        %788 = vmatprep.subr.bf16.mxu0 0
        %789 = vmatpush1.bf16.msra.mxu0 0
        %790 = vmatprep.subr.bf16.mxu0 0
        %791 = vmatpush1.bf16.msra.mxu0 0
        %792 = vmatprep.subr.bf16.mxu0 0
        %793 = vmatpush1.bf16.msra.mxu0 0
        %794 = vmatprep.subr.bf16.mxu0 0
        %795 = vmatpush1.bf16.msra.mxu0 0
        %796 = vmatprep.subr.bf16.mxu0 0
        %797 = vmatpush1.bf16.msra.mxu0 0
        %798 = vmatprep.mubr.bf16.mxu0 0
        %799 = vmatmul.mubr.bf16.gmra.mrb[0].mxu0 %v361
        %v800 = vpop.f32.mrb[0].mxu0
        %v801 = vadd.f32 0.0, %v800
        %v802 = vpop.f32.mrb[0].mxu0
        %v803 = vpop.f32.mrb[0].mxu0
        %v804 = vpop.f32.mrb[0].mxu0
        %805 = vdwg.mxu0
        %v808 = vunpack.c.l.b16 %v755
        %v809 = vunpack.c.l.b16 %v756
        %v810 = vpack.c.b16 %v809, %v808
        %812 = vmatprep.subr.bf16.mxu0 0
        %813 = vmatpush1.bf16.msra.mxu0 %v810
        %814 = vmatprep.subr.bf16.mxu0 0
        %815 = vmatpush1.bf16.msra.mxu0 0
        %816 = vmatprep.subr.bf16.mxu0 0
        %817 = vmatpush1.bf16.msra.mxu0 0
        %818 = vmatprep.subr.bf16.mxu0 0
        %819 = vmatpush1.bf16.msra.mxu0 0
        %820 = vmatprep.subr.bf16.mxu0 0
        %821 = vmatpush1.bf16.msra.mxu0 0
        %822 = vmatprep.subr.bf16.mxu0 0
        %823 = vmatpush1.bf16.msra.mxu0 0
        %824 = vmatprep.subr.bf16.mxu0 0
        %825 = vmatpush1.bf16.msra.mxu0 0
        %826 = vmatprep.subr.bf16.mxu0 0
        %827 = vmatpush1.bf16.msra.mxu0 0
        %828 = vmatprep.subr.bf16.mxu0 0
        %829 = vmatpush1.bf16.msra.mxu0 0
        %830 = vmatprep.subr.bf16.mxu0 0
        %831 = vmatpush1.bf16.msra.mxu0 0
        %832 = vmatprep.subr.bf16.mxu0 0
        %833 = vmatpush1.bf16.msra.mxu0 0
        %834 = vmatprep.subr.bf16.mxu0 0
        %835 = vmatpush1.bf16.msra.mxu0 0
        %836 = vmatprep.subr.bf16.mxu0 0
        %837 = vmatpush1.bf16.msra.mxu0 0
        %838 = vmatprep.subr.bf16.mxu0 0
        %839 = vmatpush1.bf16.msra.mxu0 0
        %840 = vmatprep.subr.bf16.mxu0 0
        %841 = vmatpush1.bf16.msra.mxu0 0
        %842 = vmatprep.subr.bf16.mxu0 0
        %843 = vmatpush1.bf16.msra.mxu0 0
        %844 = vmatprep.mubr.bf16.mxu0 0
        %845 = vmatmul.mubr.bf16.gmra.mrb[0].mxu0 %v407
        %v846 = vpop.f32.mrb[0].mxu0
        %v847 = vadd.f32 %v801, %v846
        %v848 = vpop.f32.mrb[0].mxu0
        %v849 = vpop.f32.mrb[0].mxu0
        %v850 = vpop.f32.mrb[0].mxu0
        %851 = vdwg.mxu0
        %v852 = vpack.c.bf16 %v610, %v610
        %s853 = scalar_lea.vmem %s3, 16
        %v854 = vld [vmem:[%s853] sm:$0xf]
        %v855 = vld [vmem:[%s853 + $0x4] sm:$0xf]
        %v858 = vunpack.c.l.b16 %v854
        %v859 = vunpack.c.l.b16 %v855
        %v860 = vpack.c.b16 %v859, %v858
        %v863 = vsel %vm359, %v852, 0
        %865 = vmatprep.subr.bf16.mxu0 0
        %866 = vmatpush1.bf16.msra.mxu0 %v860
        %867 = vmatprep.subr.bf16.mxu0 0
        %868 = vmatpush1.bf16.msra.mxu0 0
        %869 = vmatprep.subr.bf16.mxu0 0
        %870 = vmatpush1.bf16.msra.mxu0 0
        %871 = vmatprep.subr.bf16.mxu0 0
        %872 = vmatpush1.bf16.msra.mxu0 0
        %873 = vmatprep.subr.bf16.mxu0 0
        %874 = vmatpush1.bf16.msra.mxu0 0
        %875 = vmatprep.subr.bf16.mxu0 0
        %876 = vmatpush1.bf16.msra.mxu0 0
        %877 = vmatprep.subr.bf16.mxu0 0
        %878 = vmatpush1.bf16.msra.mxu0 0
        %879 = vmatprep.subr.bf16.mxu0 0
        %880 = vmatpush1.bf16.msra.mxu0 0
        %881 = vmatprep.subr.bf16.mxu0 0
        %882 = vmatpush1.bf16.msra.mxu0 0
        %883 = vmatprep.subr.bf16.mxu0 0
        %884 = vmatpush1.bf16.msra.mxu0 0
        %885 = vmatprep.subr.bf16.mxu0 0
        %886 = vmatpush1.bf16.msra.mxu0 0
        %887 = vmatprep.subr.bf16.mxu0 0
        %888 = vmatpush1.bf16.msra.mxu0 0
        %889 = vmatprep.subr.bf16.mxu0 0
        %890 = vmatpush1.bf16.msra.mxu0 0
        %891 = vmatprep.subr.bf16.mxu0 0
        %892 = vmatpush1.bf16.msra.mxu0 0
        %893 = vmatprep.subr.bf16.mxu0 0
        %894 = vmatpush1.bf16.msra.mxu0 0
        %895 = vmatprep.subr.bf16.mxu0 0
        %896 = vmatpush1.bf16.msra.mxu0 0
        %897 = vmatprep.mubr.bf16.mxu0 0
        %898 = vmatmul.mubr.bf16.gmra.mrb[0].mxu0 %v863
        %v899 = vpop.f32.mrb[0].mxu0
        %v900 = vadd.f32 0.0, %v899
        %v901 = vpop.f32.mrb[0].mxu0
        %v902 = vpop.f32.mrb[0].mxu0
        %v903 = vpop.f32.mrb[0].mxu0
        %904 = vdwg.mxu0
        %v905 = vadd.f32 %v847, %v900
        %v906 = vpack.c.bf16 %v652, %v652
        %s907 = scalar_lea.vmem %s3, 24
        %v908 = vld [vmem:[%s907] sm:$0xf]
        %v909 = vld [vmem:[%s907 + $0x4] sm:$0xf]
        %v912 = vunpack.c.l.b16 %v908
        %v913 = vunpack.c.l.b16 %v909
        %v914 = vpack.c.b16 %v913, %v912
        %v917 = vsel %vm359, %v906, 0
        %919 = vmatprep.subr.bf16.mxu0 0
        %920 = vmatpush1.bf16.msra.mxu0 %v914
        %921 = vmatprep.subr.bf16.mxu0 0
        %922 = vmatpush1.bf16.msra.mxu0 0
        %923 = vmatprep.subr.bf16.mxu0 0
        %924 = vmatpush1.bf16.msra.mxu0 0
        %925 = vmatprep.subr.bf16.mxu0 0
        %926 = vmatpush1.bf16.msra.mxu0 0
        %927 = vmatprep.subr.bf16.mxu0 0
        %928 = vmatpush1.bf16.msra.mxu0 0
        %929 = vmatprep.subr.bf16.mxu0 0
        %930 = vmatpush1.bf16.msra.mxu0 0
        %931 = vmatprep.subr.bf16.mxu0 0
        %932 = vmatpush1.bf16.msra.mxu0 0
        %933 = vmatprep.subr.bf16.mxu0 0
        %934 = vmatpush1.bf16.msra.mxu0 0
        %935 = vmatprep.subr.bf16.mxu0 0
        %936 = vmatpush1.bf16.msra.mxu0 0
        %937 = vmatprep.subr.bf16.mxu0 0
        %938 = vmatpush1.bf16.msra.mxu0 0
        %939 = vmatprep.subr.bf16.mxu0 0
        %940 = vmatpush1.bf16.msra.mxu0 0
        %941 = vmatprep.subr.bf16.mxu0 0
        %942 = vmatpush1.bf16.msra.mxu0 0
        %943 = vmatprep.subr.bf16.mxu0 0
        %944 = vmatpush1.bf16.msra.mxu0 0
        %945 = vmatprep.subr.bf16.mxu0 0
        %946 = vmatpush1.bf16.msra.mxu0 0
        %947 = vmatprep.subr.bf16.mxu0 0
        %948 = vmatpush1.bf16.msra.mxu0 0
        %949 = vmatprep.subr.bf16.mxu0 0
        %950 = vmatpush1.bf16.msra.mxu0 0
        %951 = vmatprep.mubr.bf16.mxu0 0
        %952 = vmatmul.mubr.bf16.gmra.mrb[0].mxu0 %v917
        %v953 = vpop.f32.mrb[0].mxu0
        %v954 = vadd.f32 0.0, %v953
        %v955 = vpop.f32.mrb[0].mxu0
        %v956 = vpop.f32.mrb[0].mxu0
        %v957 = vpop.f32.mrb[0].mxu0
        %958 = vdwg.mxu0
        %v959 = vadd.f32 %v905, %v954
        %v960 = vpack.c.bf16 %v748, %v748
        %s961 = scalar_lea.vmem %s3, 32
        %v962 = vld [vmem:[%s961] sm:$0xf]
        %v963 = vld [vmem:[%s961 + $0x4] sm:$0xf]
        %v966 = vunpack.c.l.b16 %v962
        %v967 = vunpack.c.l.b16 %v963
        %v968 = vpack.c.b16 %v967, %v966
        %v971 = vsel %vm359, %v960, 0
        %973 = vmatprep.subr.bf16.mxu0 0
        %974 = vmatpush1.bf16.msra.mxu0 %v968
        %975 = vmatprep.subr.bf16.mxu0 0
        %976 = vmatpush1.bf16.msra.mxu0 0
        %977 = vmatprep.subr.bf16.mxu0 0
        %978 = vmatpush1.bf16.msra.mxu0 0
        %979 = vmatprep.subr.bf16.mxu0 0
        %980 = vmatpush1.bf16.msra.mxu0 0
        %981 = vmatprep.subr.bf16.mxu0 0
        %982 = vmatpush1.bf16.msra.mxu0 0
        %983 = vmatprep.subr.bf16.mxu0 0
        %984 = vmatpush1.bf16.msra.mxu0 0
        %985 = vmatprep.subr.bf16.mxu0 0
        %986 = vmatpush1.bf16.msra.mxu0 0
        %987 = vmatprep.subr.bf16.mxu0 0
        %988 = vmatpush1.bf16.msra.mxu0 0
        %989 = vmatprep.subr.bf16.mxu0 0
        %990 = vmatpush1.bf16.msra.mxu0 0
        %991 = vmatprep.subr.bf16.mxu0 0
        %992 = vmatpush1.bf16.msra.mxu0 0
        %993 = vmatprep.subr.bf16.mxu0 0
        %994 = vmatpush1.bf16.msra.mxu0 0
        %995 = vmatprep.subr.bf16.mxu0 0
        %996 = vmatpush1.bf16.msra.mxu0 0
        %997 = vmatprep.subr.bf16.mxu0 0
        %998 = vmatpush1.bf16.msra.mxu0 0
        %999 = vmatprep.subr.bf16.mxu0 0
        %1000 = vmatpush1.bf16.msra.mxu0 0
        %1001 = vmatprep.subr.bf16.mxu0 0
        %1002 = vmatpush1.bf16.msra.mxu0 0
        %1003 = vmatprep.subr.bf16.mxu0 0
        %1004 = vmatpush1.bf16.msra.mxu0 0
        %1005 = vmatprep.mubr.bf16.mxu0 0
        %1006 = vmatmul.mubr.bf16.gmra.mrb[0].mxu0 %v971
        %v1007 = vpop.f32.mrb[0].mxu0
        %v1008 = vadd.f32 0.0, %v1007
        %v1009 = vpop.f32.mrb[0].mxu0
        %v1010 = vpop.f32.mrb[0].mxu0
        %v1011 = vpop.f32.mrb[0].mxu0
        %1012 = vdwg.mxu0
        %v1013 = vadd.f32 %v959, %v1008
        %v1014 = vpack.c.bf16 %v749, %v749
        %s1015 = scalar_lea.vmem %s3, 40
        %v1016 = vld [vmem:[%s1015] sm:$0xf]
        %v1017 = vld [vmem:[%s1015 + $0x4] sm:$0xf]
        %v1020 = vunpack.c.l.b16 %v1016
        %v1021 = vunpack.c.l.b16 %v1017
        %v1022 = vpack.c.b16 %v1021, %v1020
        %v1025 = vsel %vm359, %v1014, 0
        %1027 = vmatprep.subr.bf16.mxu0 0
        %1028 = vmatpush1.bf16.msra.mxu0 %v1022
        %1029 = vmatprep.subr.bf16.mxu0 0
        %1030 = vmatpush1.bf16.msra.mxu0 0
        %1031 = vmatprep.subr.bf16.mxu0 0
        %1032 = vmatpush1.bf16.msra.mxu0 0
        %1033 = vmatprep.subr.bf16.mxu0 0
        %1034 = vmatpush1.bf16.msra.mxu0 0
        %1035 = vmatprep.subr.bf16.mxu0 0
        %1036 = vmatpush1.bf16.msra.mxu0 0
        %1037 = vmatprep.subr.bf16.mxu0 0
        %1038 = vmatpush1.bf16.msra.mxu0 0
        %1039 = vmatprep.subr.bf16.mxu0 0
        %1040 = vmatpush1.bf16.msra.mxu0 0
        %1041 = vmatprep.subr.bf16.mxu0 0
        %1042 = vmatpush1.bf16.msra.mxu0 0
        %1043 = vmatprep.subr.bf16.mxu0 0
        %1044 = vmatpush1.bf16.msra.mxu0 0
        %1045 = vmatprep.subr.bf16.mxu0 0
        %1046 = vmatpush1.bf16.msra.mxu0 0
        %1047 = vmatprep.subr.bf16.mxu0 0
        %1048 = vmatpush1.bf16.msra.mxu0 0
        %1049 = vmatprep.subr.bf16.mxu0 0
        %1050 = vmatpush1.bf16.msra.mxu0 0
        %1051 = vmatprep.subr.bf16.mxu0 0
        %1052 = vmatpush1.bf16.msra.mxu0 0
        %1053 = vmatprep.subr.bf16.mxu0 0
        %1054 = vmatpush1.bf16.msra.mxu0 0
        %1055 = vmatprep.subr.bf16.mxu0 0
        %1056 = vmatpush1.bf16.msra.mxu0 0
        %1057 = vmatprep.subr.bf16.mxu0 0
        %1058 = vmatpush1.bf16.msra.mxu0 0
        %1059 = vmatprep.mubr.bf16.mxu0 0
        %1060 = vmatmul.mubr.bf16.gmra.mrb[0].mxu0 %v1025
        %v1061 = vpop.f32.mrb[0].mxu0
        %v1062 = vadd.f32 0.0, %v1061
        %v1063 = vpop.f32.mrb[0].mxu0
        %v1064 = vpop.f32.mrb[0].mxu0
        %v1065 = vpop.f32.mrb[0].mxu0
        %1066 = vdwg.mxu0
        %v1067 = vadd.f32 %v1013, %v1062
        %v1068 = vpack.c.bf16 %v750, %v750
        %s1069 = scalar_lea.vmem %s3, 48
        %v1070 = vld [vmem:[%s1069] sm:$0xf]
        %v1071 = vld [vmem:[%s1069 + $0x4] sm:$0xf]
        %v1074 = vunpack.c.l.b16 %v1070
        %v1075 = vunpack.c.l.b16 %v1071
        %v1076 = vpack.c.b16 %v1075, %v1074
        %v1079 = vsel %vm359, %v1068, 0
        %1081 = vmatprep.subr.bf16.mxu0 0
        %1082 = vmatpush1.bf16.msra.mxu0 %v1076
        %1083 = vmatprep.subr.bf16.mxu0 0
        %1084 = vmatpush1.bf16.msra.mxu0 0
        %1085 = vmatprep.subr.bf16.mxu0 0
        %1086 = vmatpush1.bf16.msra.mxu0 0
        %1087 = vmatprep.subr.bf16.mxu0 0
        %1088 = vmatpush1.bf16.msra.mxu0 0
        %1089 = vmatprep.subr.bf16.mxu0 0
        %1090 = vmatpush1.bf16.msra.mxu0 0
        %1091 = vmatprep.subr.bf16.mxu0 0
        %1092 = vmatpush1.bf16.msra.mxu0 0
        %1093 = vmatprep.subr.bf16.mxu0 0
        %1094 = vmatpush1.bf16.msra.mxu0 0
        %1095 = vmatprep.subr.bf16.mxu0 0
        %1096 = vmatpush1.bf16.msra.mxu0 0
        %1097 = vmatprep.subr.bf16.mxu0 0
        %1098 = vmatpush1.bf16.msra.mxu0 0
        %1099 = vmatprep.subr.bf16.mxu0 0
        %1100 = vmatpush1.bf16.msra.mxu0 0
        %1101 = vmatprep.subr.bf16.mxu0 0
        %1102 = vmatpush1.bf16.msra.mxu0 0
        %1103 = vmatprep.subr.bf16.mxu0 0
        %1104 = vmatpush1.bf16.msra.mxu0 0
        %1105 = vmatprep.subr.bf16.mxu0 0
        %1106 = vmatpush1.bf16.msra.mxu0 0
        %1107 = vmatprep.subr.bf16.mxu0 0
        %1108 = vmatpush1.bf16.msra.mxu0 0
        %1109 = vmatprep.subr.bf16.mxu0 0
        %1110 = vmatpush1.bf16.msra.mxu0 0
        %1111 = vmatprep.subr.bf16.mxu0 0
        %1112 = vmatpush1.bf16.msra.mxu0 0
        %1113 = vmatprep.mubr.bf16.mxu0 0
        %1114 = vmatmul.mubr.bf16.gmra.mrb[0].mxu0 %v1079
        %v1115 = vpop.f32.mrb[0].mxu0
        %v1116 = vadd.f32 0.0, %v1115
        %v1117 = vpop.f32.mrb[0].mxu0
        %v1118 = vpop.f32.mrb[0].mxu0
        %v1119 = vpop.f32.mrb[0].mxu0
        %1120 = vdwg.mxu0
        %v1121 = vadd.f32 %v1067, %v1116
        %v1122 = vpack.c.bf16 %v751, %v751
        %s1123 = scalar_lea.vmem %s3, 56
        %v1124 = vld [vmem:[%s1123] sm:$0xf]
        %v1125 = vld [vmem:[%s1123 + $0x4] sm:$0xf]
        %v1128 = vunpack.c.l.b16 %v1124
        %v1129 = vunpack.c.l.b16 %v1125
        %v1130 = vpack.c.b16 %v1129, %v1128
        %v1133 = vsel %vm359, %v1122, 0
        %1135 = vmatprep.subr.bf16.mxu0 0
        %1136 = vmatpush1.bf16.msra.mxu0 %v1130
        %1137 = vmatprep.subr.bf16.mxu0 0
        %1138 = vmatpush1.bf16.msra.mxu0 0
        %1139 = vmatprep.subr.bf16.mxu0 0
        %1140 = vmatpush1.bf16.msra.mxu0 0
        %1141 = vmatprep.subr.bf16.mxu0 0
        %1142 = vmatpush1.bf16.msra.mxu0 0
        %1143 = vmatprep.subr.bf16.mxu0 0
        %1144 = vmatpush1.bf16.msra.mxu0 0
        %1145 = vmatprep.subr.bf16.mxu0 0
        %1146 = vmatpush1.bf16.msra.mxu0 0
        %1147 = vmatprep.subr.bf16.mxu0 0
        %1148 = vmatpush1.bf16.msra.mxu0 0
        %1149 = vmatprep.subr.bf16.mxu0 0
        %1150 = vmatpush1.bf16.msra.mxu0 0
        %1151 = vmatprep.subr.bf16.mxu0 0
        %1152 = vmatpush1.bf16.msra.mxu0 0
        %1153 = vmatprep.subr.bf16.mxu0 0
        %1154 = vmatpush1.bf16.msra.mxu0 0
        %1155 = vmatprep.subr.bf16.mxu0 0
        %1156 = vmatpush1.bf16.msra.mxu0 0
        %1157 = vmatprep.subr.bf16.mxu0 0
        %1158 = vmatpush1.bf16.msra.mxu0 0
        %1159 = vmatprep.subr.bf16.mxu0 0
        %1160 = vmatpush1.bf16.msra.mxu0 0
        %1161 = vmatprep.subr.bf16.mxu0 0
        %1162 = vmatpush1.bf16.msra.mxu0 0
        %1163 = vmatprep.subr.bf16.mxu0 0
        %1164 = vmatpush1.bf16.msra.mxu0 0
        %1165 = vmatprep.subr.bf16.mxu0 0
        %1166 = vmatpush1.bf16.msra.mxu0 0
        %1167 = vmatprep.mubr.bf16.mxu0 0
        %1168 = vmatmul.mubr.bf16.gmra.mrb[0].mxu0 %v1133
        %v1169 = vpop.f32.mrb[0].mxu0
        %v1170 = vadd.f32 0.0, %v1169
        %v1171 = vpop.f32.mrb[0].mxu0
        %v1172 = vpop.f32.mrb[0].mxu0
        %v1173 = vpop.f32.mrb[0].mxu0
        %1174 = vdwg.mxu0
        %v1175 = vadd.f32 %v1121, %v1170
        %v1177 = vlaneseq
        %v1178 = vshrl.u32 %v1177, 7
        %v1179 = vsub.s32 0, %v1178
        %v1180 = vrot.slane %v754, %v1179
        %v1182 = vadd.f32 %v1175, %v1180
        %v1183 = vmax.f32 %v1182, 0.0
        %1184 = vmatprep.subr.bf16.mxu0 0
        %1185 = vmatpush1.bf16.msra.mxu0 %v764
        %1186 = vmatprep.subr.bf16.mxu0 0
        %1187 = vmatpush1.bf16.msra.mxu0 0
        %1188 = vmatprep.subr.bf16.mxu0 0
        %1189 = vmatpush1.bf16.msra.mxu0 0
        %1190 = vmatprep.subr.bf16.mxu0 0
        %1191 = vmatpush1.bf16.msra.mxu0 0
        %1192 = vmatprep.subr.bf16.mxu0 0
        %1193 = vmatpush1.bf16.msra.mxu0 0
        %1194 = vmatprep.subr.bf16.mxu0 0
        %1195 = vmatpush1.bf16.msra.mxu0 0
        %1196 = vmatprep.subr.bf16.mxu0 0
        %1197 = vmatpush1.bf16.msra.mxu0 0
        %1198 = vmatprep.subr.bf16.mxu0 0
        %1199 = vmatpush1.bf16.msra.mxu0 0
        %1200 = vmatprep.subr.bf16.mxu0 0
        %1201 = vmatpush1.bf16.msra.mxu0 0
        %1202 = vmatprep.subr.bf16.mxu0 0
        %1203 = vmatpush1.bf16.msra.mxu0 0
        %1204 = vmatprep.subr.bf16.mxu0 0
        %1205 = vmatpush1.bf16.msra.mxu0 0
        %1206 = vmatprep.subr.bf16.mxu0 0
        %1207 = vmatpush1.bf16.msra.mxu0 0
        %1208 = vmatprep.subr.bf16.mxu0 0
        %1209 = vmatpush1.bf16.msra.mxu0 0
        %1210 = vmatprep.subr.bf16.mxu0 0
        %1211 = vmatpush1.bf16.msra.mxu0 0
        %1212 = vmatprep.subr.bf16.mxu0 0
        %1213 = vmatpush1.bf16.msra.mxu0 0
        %1214 = vmatprep.subr.bf16.mxu0 0
        %1215 = vmatpush1.bf16.msra.mxu0 0
        %1216 = vmatprep.mubr.bf16.mxu0 0
        %1217 = vmatmul.mubr.bf16.gmra.mrb[0].mxu0 %v364
        %v1218 = vpop.f32.mrb[0].mxu0
        %v1219 = vadd.f32 0.0, %v1218
        %v1220 = vpop.f32.mrb[0].mxu0
        %v1221 = vpop.f32.mrb[0].mxu0
        %v1222 = vpop.f32.mrb[0].mxu0
        %1223 = vdwg.mxu0
        %1224 = vmatprep.subr.bf16.mxu0 0
        %1225 = vmatpush1.bf16.msra.mxu0 %v810
        %1226 = vmatprep.subr.bf16.mxu0 0
        %1227 = vmatpush1.bf16.msra.mxu0 0
        %1228 = vmatprep.subr.bf16.mxu0 0
        %1229 = vmatpush1.bf16.msra.mxu0 0
        %1230 = vmatprep.subr.bf16.mxu0 0
        %1231 = vmatpush1.bf16.msra.mxu0 0
        %1232 = vmatprep.subr.bf16.mxu0 0
        %1233 = vmatpush1.bf16.msra.mxu0 0
        %1234 = vmatprep.subr.bf16.mxu0 0
        %1235 = vmatpush1.bf16.msra.mxu0 0
        %1236 = vmatprep.subr.bf16.mxu0 0
        %1237 = vmatpush1.bf16.msra.mxu0 0
        %1238 = vmatprep.subr.bf16.mxu0 0
        %1239 = vmatpush1.bf16.msra.mxu0 0
        %1240 = vmatprep.subr.bf16.mxu0 0
        %1241 = vmatpush1.bf16.msra.mxu0 0
        %1242 = vmatprep.subr.bf16.mxu0 0
        %1243 = vmatpush1.bf16.msra.mxu0 0
        %1244 = vmatprep.subr.bf16.mxu0 0
        %1245 = vmatpush1.bf16.msra.mxu0 0
        %1246 = vmatprep.subr.bf16.mxu0 0
        %1247 = vmatpush1.bf16.msra.mxu0 0
        %1248 = vmatprep.subr.bf16.mxu0 0
        %1249 = vmatpush1.bf16.msra.mxu0 0
        %1250 = vmatprep.subr.bf16.mxu0 0
        %1251 = vmatpush1.bf16.msra.mxu0 0
        %1252 = vmatprep.subr.bf16.mxu0 0
        %1253 = vmatpush1.bf16.msra.mxu0 0
        %1254 = vmatprep.subr.bf16.mxu0 0
        %1255 = vmatpush1.bf16.msra.mxu0 0
        %1256 = vmatprep.mubr.bf16.mxu0 0
        %1257 = vmatmul.mubr.bf16.gmra.mrb[0].mxu0 %v410
        %v1258 = vpop.f32.mrb[0].mxu0
        %v1259 = vadd.f32 %v1219, %v1258
        %v1260 = vpop.f32.mrb[0].mxu0
        %v1261 = vpop.f32.mrb[0].mxu0
        %v1262 = vpop.f32.mrb[0].mxu0
        %1263 = vdwg.mxu0
        %v1264 = vpack.c.bf16 %v697, %v697
        %v1266 = vsel %vm359, %v1264, 0
        %1268 = vmatprep.subr.bf16.mxu0 0
        %1269 = vmatpush1.bf16.msra.mxu0 %v860
        %1270 = vmatprep.subr.bf16.mxu0 0
        %1271 = vmatpush1.bf16.msra.mxu0 0
        %1272 = vmatprep.subr.bf16.mxu0 0
        %1273 = vmatpush1.bf16.msra.mxu0 0
        %1274 = vmatprep.subr.bf16.mxu0 0
        %1275 = vmatpush1.bf16.msra.mxu0 0
        %1276 = vmatprep.subr.bf16.mxu0 0
        %1277 = vmatpush1.bf16.msra.mxu0 0
        %1278 = vmatprep.subr.bf16.mxu0 0
        %1279 = vmatpush1.bf16.msra.mxu0 0
        %1280 = vmatprep.subr.bf16.mxu0 0
        %1281 = vmatpush1.bf16.msra.mxu0 0
        %1282 = vmatprep.subr.bf16.mxu0 0
        %1283 = vmatpush1.bf16.msra.mxu0 0
        %1284 = vmatprep.subr.bf16.mxu0 0
        %1285 = vmatpush1.bf16.msra.mxu0 0
        %1286 = vmatprep.subr.bf16.mxu0 0
        %1287 = vmatpush1.bf16.msra.mxu0 0
        %1288 = vmatprep.subr.bf16.mxu0 0
        %1289 = vmatpush1.bf16.msra.mxu0 0
        %1290 = vmatprep.subr.bf16.mxu0 0
        %1291 = vmatpush1.bf16.msra.mxu0 0
        %1292 = vmatprep.subr.bf16.mxu0 0
        %1293 = vmatpush1.bf16.msra.mxu0 0
        %1294 = vmatprep.subr.bf16.mxu0 0
        %1295 = vmatpush1.bf16.msra.mxu0 0
        %1296 = vmatprep.subr.bf16.mxu0 0
        %1297 = vmatpush1.bf16.msra.mxu0 0
        %1298 = vmatprep.subr.bf16.mxu0 0
        %1299 = vmatpush1.bf16.msra.mxu0 0
        %1300 = vmatprep.mubr.bf16.mxu0 0
        %1301 = vmatmul.mubr.bf16.gmra.mrb[0].mxu0 %v1266
        %v1302 = vpop.f32.mrb[0].mxu0
        %v1303 = vadd.f32 0.0, %v1302
        %v1304 = vpop.f32.mrb[0].mxu0
        %v1305 = vpop.f32.mrb[0].mxu0
        %v1306 = vpop.f32.mrb[0].mxu0
        %1307 = vdwg.mxu0
        %v1308 = vadd.f32 %v1259, %v1303
        %v1309 = vpack.c.bf16 %v739, %v739
        %v1311 = vsel %vm359, %v1309, 0
        %1313 = vmatprep.subr.bf16.mxu0 0
        %1314 = vmatpush1.bf16.msra.mxu0 %v914
        %1315 = vmatprep.subr.bf16.mxu0 0
        %1316 = vmatpush1.bf16.msra.mxu0 0
        %1317 = vmatprep.subr.bf16.mxu0 0
        %1318 = vmatpush1.bf16.msra.mxu0 0
        %1319 = vmatprep.subr.bf16.mxu0 0
        %1320 = vmatpush1.bf16.msra.mxu0 0
        %1321 = vmatprep.subr.bf16.mxu0 0
        %1322 = vmatpush1.bf16.msra.mxu0 0
        %1323 = vmatprep.subr.bf16.mxu0 0
        %1324 = vmatpush1.bf16.msra.mxu0 0
        %1325 = vmatprep.subr.bf16.mxu0 0
        %1326 = vmatpush1.bf16.msra.mxu0 0
        %1327 = vmatprep.subr.bf16.mxu0 0
        %1328 = vmatpush1.bf16.msra.mxu0 0
        %1329 = vmatprep.subr.bf16.mxu0 0
        %1330 = vmatpush1.bf16.msra.mxu0 0
        %1331 = vmatprep.subr.bf16.mxu0 0
        %1332 = vmatpush1.bf16.msra.mxu0 0
        %1333 = vmatprep.subr.bf16.mxu0 0
        %1334 = vmatpush1.bf16.msra.mxu0 0
        %1335 = vmatprep.subr.bf16.mxu0 0
        %1336 = vmatpush1.bf16.msra.mxu0 0
        %1337 = vmatprep.subr.bf16.mxu0 0
        %1338 = vmatpush1.bf16.msra.mxu0 0
        %1339 = vmatprep.subr.bf16.mxu0 0
        %1340 = vmatpush1.bf16.msra.mxu0 0
        %1341 = vmatprep.subr.bf16.mxu0 0
        %1342 = vmatpush1.bf16.msra.mxu0 0
        %1343 = vmatprep.subr.bf16.mxu0 0
        %1344 = vmatpush1.bf16.msra.mxu0 0
        %1345 = vmatprep.mubr.bf16.mxu0 0
        %1346 = vmatmul.mubr.bf16.gmra.mrb[0].mxu0 %v1311
        %v1347 = vpop.f32.mrb[0].mxu0
        %v1348 = vadd.f32 0.0, %v1347
        %v1349 = vpop.f32.mrb[0].mxu0
        %v1350 = vpop.f32.mrb[0].mxu0
        %v1351 = vpop.f32.mrb[0].mxu0
        %1352 = vdwg.mxu0
        %v1353 = vadd.f32 %v1308, %v1348
        %v1354 = vpack.c.bf16 %v752, %v752
        %v1356 = vsel %vm359, %v1354, 0
        %1358 = vmatprep.subr.bf16.mxu0 0
        %1359 = vmatpush1.bf16.msra.mxu0 %v968
        %1360 = vmatprep.subr.bf16.mxu0 0
        %1361 = vmatpush1.bf16.msra.mxu0 0
        %1362 = vmatprep.subr.bf16.mxu0 0
        %1363 = vmatpush1.bf16.msra.mxu0 0
        %1364 = vmatprep.subr.bf16.mxu0 0
        %1365 = vmatpush1.bf16.msra.mxu0 0
        %1366 = vmatprep.subr.bf16.mxu0 0
        %1367 = vmatpush1.bf16.msra.mxu0 0
        %1368 = vmatprep.subr.bf16.mxu0 0
        %1369 = vmatpush1.bf16.msra.mxu0 0
        %1370 = vmatprep.subr.bf16.mxu0 0
        %1371 = vmatpush1.bf16.msra.mxu0 0
        %1372 = vmatprep.subr.bf16.mxu0 0
        %1373 = vmatpush1.bf16.msra.mxu0 0
        %1374 = vmatprep.subr.bf16.mxu0 0
        %1375 = vmatpush1.bf16.msra.mxu0 0
        %1376 = vmatprep.subr.bf16.mxu0 0
        %1377 = vmatpush1.bf16.msra.mxu0 0
        %1378 = vmatprep.subr.bf16.mxu0 0
        %1379 = vmatpush1.bf16.msra.mxu0 0
        %1380 = vmatprep.subr.bf16.mxu0 0
        %1381 = vmatpush1.bf16.msra.mxu0 0
        %1382 = vmatprep.subr.bf16.mxu0 0
        %1383 = vmatpush1.bf16.msra.mxu0 0
        %1384 = vmatprep.subr.bf16.mxu0 0
        %1385 = vmatpush1.bf16.msra.mxu0 0
        %1386 = vmatprep.subr.bf16.mxu0 0
        %1387 = vmatpush1.bf16.msra.mxu0 0
        %1388 = vmatprep.subr.bf16.mxu0 0
        %1389 = vmatpush1.bf16.msra.mxu0 0
        %1390 = vmatprep.mubr.bf16.mxu0 0
        %1391 = vmatmul.mubr.bf16.gmra.mrb[0].mxu0 %v1356
        %v1392 = vpop.f32.mrb[0].mxu0
        %v1393 = vadd.f32 0.0, %v1392
        %v1394 = vpop.f32.mrb[0].mxu0
        %v1395 = vpop.f32.mrb[0].mxu0
        %v1396 = vpop.f32.mrb[0].mxu0
        %1397 = vdwg.mxu0
        %v1398 = vadd.f32 %v1353, %v1393
        %v1399 = vpack.c.bf16 %v753, %v753
        %v1401 = vsel %vm359, %v1399, 0
        %1403 = vmatprep.subr.bf16.mxu0 0
        %1404 = vmatpush1.bf16.msra.mxu0 %v1022
        %1405 = vmatprep.subr.bf16.mxu0 0
        %1406 = vmatpush1.bf16.msra.mxu0 0
        %1407 = vmatprep.subr.bf16.mxu0 0
        %1408 = vmatpush1.bf16.msra.mxu0 0
        %1409 = vmatprep.subr.bf16.mxu0 0
        %1410 = vmatpush1.bf16.msra.mxu0 0
        %1411 = vmatprep.subr.bf16.mxu0 0
        %1412 = vmatpush1.bf16.msra.mxu0 0
        %1413 = vmatprep.subr.bf16.mxu0 0
        %1414 = vmatpush1.bf16.msra.mxu0 0
        %1415 = vmatprep.subr.bf16.mxu0 0
        %1416 = vmatpush1.bf16.msra.mxu0 0
        %1417 = vmatprep.subr.bf16.mxu0 0
        %1418 = vmatpush1.bf16.msra.mxu0 0
        %1419 = vmatprep.subr.bf16.mxu0 0
        %1420 = vmatpush1.bf16.msra.mxu0 0
        %1421 = vmatprep.subr.bf16.mxu0 0
        %1422 = vmatpush1.bf16.msra.mxu0 0
        %1423 = vmatprep.subr.bf16.mxu0 0
        %1424 = vmatpush1.bf16.msra.mxu0 0
        %1425 = vmatprep.subr.bf16.mxu0 0
        %1426 = vmatpush1.bf16.msra.mxu0 0
        %1427 = vmatprep.subr.bf16.mxu0 0
        %1428 = vmatpush1.bf16.msra.mxu0 0
        %1429 = vmatprep.subr.bf16.mxu0 0
        %1430 = vmatpush1.bf16.msra.mxu0 0
        %1431 = vmatprep.subr.bf16.mxu0 0
        %1432 = vmatpush1.bf16.msra.mxu0 0
        %1433 = vmatprep.subr.bf16.mxu0 0
        %1434 = vmatpush1.bf16.msra.mxu0 0
        %1435 = vmatprep.mubr.bf16.mxu0 0
        %1436 = vmatmul.mubr.bf16.gmra.mrb[0].mxu0 %v1401
        %v1437 = vpop.f32.mrb[0].mxu0
        %v1438 = vadd.f32 0.0, %v1437
        %v1439 = vpop.f32.mrb[0].mxu0
        %v1440 = vpop.f32.mrb[0].mxu0
        %v1441 = vpop.f32.mrb[0].mxu0
        %1442 = vdwg.mxu0
        %v1443 = vadd.f32 %v1398, %v1438
        %1444 = vmatprep.subr.bf16.mxu0 0
        %1445 = vmatpush1.bf16.msra.mxu0 %v1076
        %1446 = vmatprep.subr.bf16.mxu0 0
        %1447 = vmatpush1.bf16.msra.mxu0 0
        %1448 = vmatprep.subr.bf16.mxu0 0
        %1449 = vmatpush1.bf16.msra.mxu0 0
        %1450 = vmatprep.subr.bf16.mxu0 0
        %1451 = vmatpush1.bf16.msra.mxu0 0
        %1452 = vmatprep.subr.bf16.mxu0 0
        %1453 = vmatpush1.bf16.msra.mxu0 0
        %1454 = vmatprep.subr.bf16.mxu0 0
        %1455 = vmatpush1.bf16.msra.mxu0 0
        %1456 = vmatprep.subr.bf16.mxu0 0
        %1457 = vmatpush1.bf16.msra.mxu0 0
        %1458 = vmatprep.subr.bf16.mxu0 0
        %1459 = vmatpush1.bf16.msra.mxu0 0
        %1460 = vmatprep.subr.bf16.mxu0 0
        %1461 = vmatpush1.bf16.msra.mxu0 0
        %1462 = vmatprep.subr.bf16.mxu0 0
        %1463 = vmatpush1.bf16.msra.mxu0 0
        %1464 = vmatprep.subr.bf16.mxu0 0
        %1465 = vmatpush1.bf16.msra.mxu0 0
        %1466 = vmatprep.subr.bf16.mxu0 0
        %1467 = vmatpush1.bf16.msra.mxu0 0
        %1468 = vmatprep.subr.bf16.mxu0 0
        %1469 = vmatpush1.bf16.msra.mxu0 0
        %1470 = vmatprep.subr.bf16.mxu0 0
        %1471 = vmatpush1.bf16.msra.mxu0 0
        %1472 = vmatprep.subr.bf16.mxu0 0
        %1473 = vmatpush1.bf16.msra.mxu0 0
        %1474 = vmatprep.subr.bf16.mxu0 0
        %1475 = vmatpush1.bf16.msra.mxu0 0
        %1476 = vmatprep.mubr.bf16.mxu0 0
        %1477 = vmatmul.mubr.bf16.gmra.mrb[0].mxu0 %v1356
        %v1478 = vpop.f32.mrb[0].mxu0
        %v1479 = vadd.f32 0.0, %v1478
        %v1480 = vpop.f32.mrb[0].mxu0
        %v1481 = vpop.f32.mrb[0].mxu0
        %v1482 = vpop.f32.mrb[0].mxu0
        %1483 = vdwg.mxu0
        %v1484 = vadd.f32 %v1443, %v1479
        %1485 = vmatprep.subr.bf16.mxu0 0
        %1486 = vmatpush1.bf16.msra.mxu0 %v1130
        %1487 = vmatprep.subr.bf16.mxu0 0
        %1488 = vmatpush1.bf16.msra.mxu0 0
        %1489 = vmatprep.subr.bf16.mxu0 0
        %1490 = vmatpush1.bf16.msra.mxu0 0
        %1491 = vmatprep.subr.bf16.mxu0 0
        %1492 = vmatpush1.bf16.msra.mxu0 0
        %1493 = vmatprep.subr.bf16.mxu0 0
        %1494 = vmatpush1.bf16.msra.mxu0 0
        %1495 = vmatprep.subr.bf16.mxu0 0
        %1496 = vmatpush1.bf16.msra.mxu0 0
        %1497 = vmatprep.subr.bf16.mxu0 0
        %1498 = vmatpush1.bf16.msra.mxu0 0
        %1499 = vmatprep.subr.bf16.mxu0 0
        %1500 = vmatpush1.bf16.msra.mxu0 0
        %1501 = vmatprep.subr.bf16.mxu0 0
        %1502 = vmatpush1.bf16.msra.mxu0 0
        %1503 = vmatprep.subr.bf16.mxu0 0
        %1504 = vmatpush1.bf16.msra.mxu0 0
        %1505 = vmatprep.subr.bf16.mxu0 0
        %1506 = vmatpush1.bf16.msra.mxu0 0
        %1507 = vmatprep.subr.bf16.mxu0 0
        %1508 = vmatpush1.bf16.msra.mxu0 0
        %1509 = vmatprep.subr.bf16.mxu0 0
        %1510 = vmatpush1.bf16.msra.mxu0 0
        %1511 = vmatprep.subr.bf16.mxu0 0
        %1512 = vmatpush1.bf16.msra.mxu0 0
        %1513 = vmatprep.subr.bf16.mxu0 0
        %1514 = vmatpush1.bf16.msra.mxu0 0
        %1515 = vmatprep.subr.bf16.mxu0 0
        %1516 = vmatpush1.bf16.msra.mxu0 0
        %1517 = vmatprep.mubr.bf16.mxu0 0
        %1518 = vmatmul.mubr.bf16.gmra.mrb[0].mxu0 %v1401
        %v1519 = vpop.f32.mrb[0].mxu0
        %v1520 = vadd.f32 0.0, %v1519
        %v1521 = vpop.f32.mrb[0].mxu0
        %v1522 = vpop.f32.mrb[0].mxu0
        %v1523 = vpop.f32.mrb[0].mxu0
        %1524 = vdwg.mxu0
        %v1525 = vadd.f32 %v1484, %v1520
        %v1526 = vadd.f32 %v1525, %v1180
        %v1527 = vmax.f32 %v1526, 0.0
        %1528 = vst.msk [vmem:[%s342] sm:$0xff] %vm359, %v1183
        %s1529 = scalar_lea.vmem %s342, 8 [#allocation6]
        %1530 = vst.msk [vmem:[%s1529] sm:$0xff] %vm359, %v1527
        %s1531 = sand.u32 %s140, 1
        %s1532 = sand.u32 %s140, 1
        %s1533 = smul.addr %s1532, 16
        %s1534 = scalar_lea.vmem [#allocation6], %s1533
        // Predicated region
        $region127: #{semattn_forward.5} parent=113 // pred_check
          %p1535 = pneg %p150
        $region128: #{semattn_forward.5} parent=113 // pred_check_branch
          %1537 = sbr.rel (%p1535) target = $region130
        $region129: #{semattn_forward.5} parent=113 // pred_region
          %s1538 = smul.addr %s17, 8
          %s1539 = scalar_lea.vmem %s5, %s1538
          // Predicated region
          $region131: #{semattn_forward.5} parent=129 // pred_check
            _
          $region132: #{semattn_forward.5} parent=129 // pred_check_branch
            %1541 = sbr.rel (0) target = $region134
          $region133: #{semattn_forward.5} parent=129 // pred_region
            // Predicated region
            $region135: #{semattn_forward.5} parent=133 // pred_check
              _
            $region136: #{semattn_forward.5} parent=133 // pred_check_branch
              %1543 = sbr.rel (0) target = $region138
            $region137: #{semattn_forward.5} parent=133 // pred_region
              // Predicated region
              $region150: #{semattn_forward.5} parent=137 // pred_check
                _
              $region151: #{semattn_forward.5} parent=137 // pred_check_branch
                %1560 = sbr.rel (0) target = $region153
              $region152: #{semattn_forward.5} parent=137 // pred_region
                loop: start=0, step=1, limit=1
                $region154: #{semattn_forward.5} parent=152 // loop_pre_header
                  _
                $region155: #{semattn_forward.5} parent=152 // loop_header
                  %s1562 = sphi 0, %s1566
                  %p1563 = scmp.ge.s32.totalorder %s1562, 1
                  %s1567 = sphi %s1534, %s1534
                  %s1568 = sphi %s1539, %s1539
                $region156: #{semattn_forward.5} parent=152 // loop_header_branch
                  %1565 = sbr.rel (%p1563) target = $region160
                $region157: #{semattn_forward.5} parent=152 // loop_body
                  %v1569 = vld [vmem:[%s1567] sm:$0xff]
                  %1570 = vst [vmem:[%s1568] sm:$0xff] %v1569
                  %v1571 = vld [vmem:[%s1567 + $0x8] sm:$0xff]
                  %1572 = vst [vmem:[%s1568 + $0x20] sm:$0xff] %v1571
                $region158: #{semattn_forward.5} parent=152 // loop_footer
                  %s1566 = sadd.s32 1, %s1562
                $region159: #{semattn_forward.5} parent=152 // loop_footer_branch
                  %1561 = sbr.rel target = $region155
                $region160: #{semattn_forward.5} parent=152 // loop_exit
                  _
              $region153: #{semattn_forward.5} parent=137 // pred_fallthru
                _
              // Predicated region
              $region161: #{semattn_forward.5} parent=137 // pred_check
                _
              $region162: #{semattn_forward.5} parent=137 // pred_check_branch
                %1574 = sbr.rel target = $region164
              $region163: #{semattn_forward.5} parent=137 // pred_region
                _
              $region164: #{semattn_forward.5} parent=137 // pred_fallthru
                _
            $region138: #{semattn_forward.5} parent=133 // pred_fallthru
              _
            // Predicated region
            $region139: #{semattn_forward.5} parent=133 // pred_check
              _
            $region140: #{semattn_forward.5} parent=133 // pred_check_branch
              %1545 = sbr.rel target = $region142
            $region141: #{semattn_forward.5} parent=133 // pred_region
              loop: start=0, step=1, limit=1
              $region143: #{semattn_forward.5} parent=141 // loop_pre_header
                _
              $region144: #{semattn_forward.5} parent=141 // loop_header
                %s1548 = sphi 0, %s1552
                %p1549 = scmp.ge.s32.totalorder %s1548, 1
                %s1553 = sphi %s1534, %s1534
                %s1554 = sphi %s1539, %s1539
              $region145: #{semattn_forward.5} parent=141 // loop_header_branch
                %1551 = sbr.rel (%p1549) target = $region149
              $region146: #{semattn_forward.5} parent=141 // loop_body
                %v1555 = vld [vmem:[%s1553] sm:$0xff]
                %1556 = vst [vmem:[%s1554] sm:$0xff] %v1555
                %v1557 = vld [vmem:[%s1553 + $0x8] sm:$0xff]
                %1558 = vst [vmem:[%s1554 + $0x20] sm:$0xff] %v1557
              $region147: #{semattn_forward.5} parent=141 // loop_footer
                %s1552 = sadd.s32 1, %s1548
              $region148: #{semattn_forward.5} parent=141 // loop_footer_branch
                %1547 = sbr.rel target = $region144
              $region149: #{semattn_forward.5} parent=141 // loop_exit
                _
            $region142: #{semattn_forward.5} parent=133 // pred_fallthru
              _
          $region134: #{semattn_forward.5} parent=129 // pred_fallthru
            _
          %1575 = vnop
        $region130: #{semattn_forward.5} parent=113 // pred_fallthru
          _
      $region114: #{semattn_forward.5} parent=5 // pred_fallthru
        _
      %p1576 = scmp.le.s32.totalorder 2, %s12
      // Predicated region
      $region165: #{semattn_forward.5} parent=5 // pred_check
        %p1577 = pneg %p1576
      $region166: #{semattn_forward.5} parent=5 // pred_check_branch
        %1579 = sbr.rel (%p1577) target = $region168
      $region167: #{semattn_forward.5} parent=5 // pred_region
        %s1580 = ssub.s32 %s12, 2
        // Predicated region
        $region169: #{semattn_forward.5} parent=167 // pred_check
          %p1581 = pneg %p156
        $region170: #{semattn_forward.5} parent=167 // pred_check_branch
          %1583 = sbr.rel (%p1581) target = $region172
        $region171: #{semattn_forward.5} parent=167 // pred_region
          %s1584 = sand.u32 %s141, 1
          %s1585 = sand.u32 %s141, 1
          %s1586 = smul.addr %s1585, 16
          %s1587 = scalar_lea.vmem [#allocation6], %s1586
        $region172: #{semattn_forward.5} parent=167 // pred_fallthru
          _
      $region168: #{semattn_forward.5} parent=5 // pred_fallthru
        _
    $region6: #{semattn_forward.5} parent=1 // loop_footer
      %s16 = sadd.s32 1, %s12
    $region7: #{semattn_forward.5} parent=1 // loop_footer_branch
      %11 = sbr.rel target = $region3
    $region8: #{semattn_forward.5} parent=1 // loop_exit
      _
    %1588 = vsyncpa [#allocation3], 1
    %s1589 = scalar_lea.sflag [#allocation3], 1
    %1590 = vsyncpa %s1589, 1

// kernel: semattn_forward.4
$region0: #{semattn_forward.4}
  #allocation0 [shape = 'u32[]', space=smem, size = 0x4, offset = 0x4, fixed_abs, tag = 'smem constant byte address 0x4 - core index']
  #allocation1 [shape = 'u32[144,128]{1,0:T(1,128)}', space=vmem, size = 0x12000, scoped, tag = 'internal scratch']
  %s0 = inlined_call_operand.vmem [shape: bf16[64,16], index: 0, kind: input, shape index: {}]
  %s1 = inlined_call_operand.vmem [shape: s32[8,1], index: 1, kind: input, shape index: {}]
  %s2 = inlined_call_operand.vmem [shape: bf16[4,16,16], index: 2, kind: input, shape index: {}]
  %s3 = inlined_call_operand.vmem [shape: bf16[4,16,16], index: 3, kind: input, shape index: {}]
  %s4 = inlined_call_operand.vmem [shape: f32[4,1,16], index: 4, kind: input, shape index: {}]
  %s5 = inlined_call_operand.vmem [shape: bf16[4,16,16], index: 5, kind: input, shape index: {}]
  %s6 = inlined_call_operand.vmem [shape: bf16[4,16,16], index: 6, kind: input, shape index: {}]
  %s7 = inlined_call_operand.vmem [shape: f32[4,1,16], index: 7, kind: input, shape index: {}]
  %s8 = inlined_call_operand.vmem [shape: f32[8,8,16], index: 8, kind: output, shape index: {0}]
  %s9 = inlined_call_operand.vmem [shape: f32[8,8,16], index: 9, kind: output, shape index: {1}]
  %10 = xla_tuple %s8, %s9
  %s11 = sld [smem:[#allocation0]]
  $region50: #{semattn_forward.4} parent=0
    _
  %s13 = ssub.s32 1, %s11
  %s14 = scalar_select 0, %s13, %s11
  // Predicated region
  $region2: #{semattn_forward.4} parent=0 // pred_check
    _
  $region3: #{semattn_forward.4} parent=0 // pred_check_branch
    %16 = sbr.rel (0) target = $region5
  $region4: #{semattn_forward.4} parent=0 // pred_region
    _
  $region5: #{semattn_forward.4} parent=0 // pred_fallthru
    _
  // Predicated region
  $region6: #{semattn_forward.4} parent=0 // pred_check
    _
  $region7: #{semattn_forward.4} parent=0 // pred_check_branch
    %18 = sbr.rel (0) target = $region9
  $region8: #{semattn_forward.4} parent=0 // pred_region
    _
  $region9: #{semattn_forward.4} parent=0 // pred_fallthru
    _
  // Predicated region
  $region10: #{semattn_forward.4} parent=0 // pred_check
    _
  $region11: #{semattn_forward.4} parent=0 // pred_check_branch
    %20 = sbr.rel (0) target = $region13
  $region12: #{semattn_forward.4} parent=0 // pred_region
    _
  $region13: #{semattn_forward.4} parent=0 // pred_fallthru
    _
  // Predicated region
  $region14: #{semattn_forward.4} parent=0 // pred_check
    _
  $region15: #{semattn_forward.4} parent=0 // pred_check_branch
    %22 = sbr.rel (0) target = $region17
  $region16: #{semattn_forward.4} parent=0 // pred_region
    _
  $region17: #{semattn_forward.4} parent=0 // pred_fallthru
    _
  // Predicated region
  $region18: #{semattn_forward.4} parent=0 // pred_check
    _
  $region19: #{semattn_forward.4} parent=0 // pred_check_branch
    %24 = sbr.rel (0) target = $region21
  $region20: #{semattn_forward.4} parent=0 // pred_region
    _
  $region21: #{semattn_forward.4} parent=0 // pred_fallthru
    _
  // Predicated region
  $region22: #{semattn_forward.4} parent=0 // pred_check
    _
  $region23: #{semattn_forward.4} parent=0 // pred_check_branch
    %26 = sbr.rel (0) target = $region25
  $region24: #{semattn_forward.4} parent=0 // pred_region
    _
  $region25: #{semattn_forward.4} parent=0 // pred_fallthru
    _
  // Predicated region
  $region26: #{semattn_forward.4} parent=0 // pred_check
    _
  $region27: #{semattn_forward.4} parent=0 // pred_check_branch
    %28 = sbr.rel (0) target = $region29
  $region28: #{semattn_forward.4} parent=0 // pred_region
    _
  $region29: #{semattn_forward.4} parent=0 // pred_fallthru
    _
  // Predicated region
  $region30: #{semattn_forward.4} parent=0 // pred_check
    _
  $region31: #{semattn_forward.4} parent=0 // pred_check_branch
    %30 = sbr.rel (0) target = $region33
  $region32: #{semattn_forward.4} parent=0 // pred_region
    _
  $region33: #{semattn_forward.4} parent=0 // pred_fallthru
    _
  %v32 = vld [vmem:[%s0] sm:$0xf]
  %v33 = vld [vmem:[%s0 + $0x4] sm:$0xf]
  %v34 = vld [vmem:[%s0 + $0x8] sm:$0xf]
  %v35 = vld [vmem:[%s0 + $0xc] sm:$0xf]
  %v36 = vld [vmem:[%s0 + $0x10] sm:$0xf]
  %v37 = vld [vmem:[%s0 + $0x14] sm:$0xf]
  %v38 = vld [vmem:[%s0 + $0x18] sm:$0xf]
  %v39 = vld [vmem:[%s0 + $0x1c] sm:$0xf]
  %v40 = vld [vmem:[%s2] sm:$0xf]
  %v41 = vld [vmem:[%s2 + $0x4] sm:$0xf]
  %v42 = vld [vmem:[%s4] sm:$0x1]
  %v44 = vlaneseq
  %v45 = vshrl.u32 %v44, 7
  %v46 = vsub.s32 0, %v45
  %v47 = vrot.slane %v42, %v46
  %v57 = vunpack.c.l.b16 %v32
  %v58 = vunpack.c.l.b16 %v33
  %v59 = vunpack.c.l.b16 %v34
  %v60 = vunpack.c.l.b16 %v35
  %v61 = vunpack.c.l.b16 %v36
  %v62 = vunpack.c.l.b16 %v37
  %v63 = vunpack.c.l.b16 %v38
  %v64 = vunpack.c.l.b16 %v39
  %v65 = vpack.c.b16 %v58, %v57
  %v66 = vpack.c.b16 %v60, %v59
  %v67 = vpack.c.b16 %v62, %v61
  %v68 = vpack.c.b16 %v64, %v63
  %v71 = vunpack.c.l.b16 %v40
  %v72 = vunpack.c.l.b16 %v41
  %v73 = vpack.c.b16 %v72, %v71
  %vm75 = vcmask 130048
  %v77 = vsel %vm75, %v65, 0
  %v80 = vsel %vm75, %v66, 0
  %v83 = vsel %vm75, %v67, 0
  %v86 = vsel %vm75, %v68, 0
  %88 = vmatprep.subr.bf16.mxu0 0
  %89 = vmatpush1.bf16.msra.mxu0 %v73
  %90 = vmatprep.subr.bf16.mxu0 0
  %91 = vmatpush1.bf16.msra.mxu0 0
  %92 = vmatprep.subr.bf16.mxu0 0
  %93 = vmatpush1.bf16.msra.mxu0 0
  %94 = vmatprep.subr.bf16.mxu0 0
  %95 = vmatpush1.bf16.msra.mxu0 0
  %96 = vmatprep.subr.bf16.mxu0 0
  %97 = vmatpush1.bf16.msra.mxu0 0
  %98 = vmatprep.subr.bf16.mxu0 0
  %99 = vmatpush1.bf16.msra.mxu0 0
  %100 = vmatprep.subr.bf16.mxu0 0
  %101 = vmatpush1.bf16.msra.mxu0 0
  %102 = vmatprep.subr.bf16.mxu0 0
  %103 = vmatpush1.bf16.msra.mxu0 0
  %104 = vmatprep.subr.bf16.mxu0 0
  %105 = vmatpush1.bf16.msra.mxu0 0
  %106 = vmatprep.subr.bf16.mxu0 0
  %107 = vmatpush1.bf16.msra.mxu0 0
  %108 = vmatprep.subr.bf16.mxu0 0
  %109 = vmatpush1.bf16.msra.mxu0 0
  %110 = vmatprep.subr.bf16.mxu0 0
  %111 = vmatpush1.bf16.msra.mxu0 0
  %112 = vmatprep.subr.bf16.mxu0 0
  %113 = vmatpush1.bf16.msra.mxu0 0
  %114 = vmatprep.subr.bf16.mxu0 0
  %115 = vmatpush1.bf16.msra.mxu0 0
  %116 = vmatprep.subr.bf16.mxu0 0
  %117 = vmatpush1.bf16.msra.mxu0 0
  %118 = vmatprep.subr.bf16.mxu0 0
  %119 = vmatpush1.bf16.msra.mxu0 0
  %120 = vmatprep.mubr.bf16.mxu0 0
  %121 = vmatmul.mubr.bf16.gmra.mrb[0].mxu0 %v77
  %v122 = vpop.f32.mrb[0].mxu0
  %v123 = vadd.f32 %v47, %v122
  %v124 = vpop.f32.mrb[0].mxu0
  %v125 = vpop.f32.mrb[0].mxu0
  %v126 = vadd.f32 %v47, %v125
  %v127 = vpop.f32.mrb[0].mxu0
  %128 = vmatprep.mubr.bf16.mxu0 0
  %129 = vmatmul.mubr.bf16.gmra.mrb[0].mxu0 %v80
  %v130 = vpop.f32.mrb[0].mxu0
  %v131 = vadd.f32 %v47, %v130
  %v132 = vpop.f32.mrb[0].mxu0
  %v133 = vpop.f32.mrb[0].mxu0
  %v134 = vadd.f32 %v47, %v133
  %v135 = vpop.f32.mrb[0].mxu0
  %136 = vmatprep.mubr.bf16.mxu0 0
  %137 = vmatmul.mubr.bf16.gmra.mrb[0].mxu0 %v83
  %v138 = vpop.f32.mrb[0].mxu0
  %v139 = vadd.f32 %v47, %v138
  %v140 = vpop.f32.mrb[0].mxu0
  %v141 = vpop.f32.mrb[0].mxu0
  %v142 = vadd.f32 %v47, %v141
  %v143 = vpop.f32.mrb[0].mxu0
  %144 = vmatprep.mubr.bf16.mxu0 0
  %145 = vmatmul.mubr.bf16.gmra.mrb[0].mxu0 %v86
  %v146 = vpop.f32.mrb[0].mxu0
  %v147 = vadd.f32 %v47, %v146
  %v148 = vpop.f32.mrb[0].mxu0
  %v149 = vpop.f32.mrb[0].mxu0
  %v150 = vadd.f32 %v47, %v149
  %v151 = vpop.f32.mrb[0].mxu0
  %152 = vdwg.mxu0
  %s153 = scalar_lea.vmem %s2, 8
  %v154 = vld [vmem:[%s153] sm:$0xf]
  %v155 = vld [vmem:[%s153 + $0x4] sm:$0xf]
  %s156 = scalar_lea.vmem %s4, 1
  %v157 = vld [vmem:[%s156] sm:$0x1]
  %v159 = vlaneseq
  %v160 = vshrl.u32 %v159, 7
  %v161 = vsub.s32 0, %v160
  %v162 = vrot.slane %v157, %v161
  %v166 = vunpack.c.l.b16 %v154
  %v167 = vunpack.c.l.b16 %v155
  %v168 = vpack.c.b16 %v167, %v166
  %170 = vmatprep.subr.bf16.mxu0 0
  %171 = vmatpush1.bf16.msra.mxu0 %v168
  %172 = vmatprep.subr.bf16.mxu0 0
  %173 = vmatpush1.bf16.msra.mxu0 0
  %174 = vmatprep.subr.bf16.mxu0 0
  %175 = vmatpush1.bf16.msra.mxu0 0
  %176 = vmatprep.subr.bf16.mxu0 0
  %177 = vmatpush1.bf16.msra.mxu0 0
  %178 = vmatprep.subr.bf16.mxu0 0
  %179 = vmatpush1.bf16.msra.mxu0 0
  %180 = vmatprep.subr.bf16.mxu0 0
  %181 = vmatpush1.bf16.msra.mxu0 0
  %182 = vmatprep.subr.bf16.mxu0 0
  %183 = vmatpush1.bf16.msra.mxu0 0
  %184 = vmatprep.subr.bf16.mxu0 0
  %185 = vmatpush1.bf16.msra.mxu0 0
  %186 = vmatprep.subr.bf16.mxu0 0
  %187 = vmatpush1.bf16.msra.mxu0 0
  %188 = vmatprep.subr.bf16.mxu0 0
  %189 = vmatpush1.bf16.msra.mxu0 0
  %190 = vmatprep.subr.bf16.mxu0 0
  %191 = vmatpush1.bf16.msra.mxu0 0
  %192 = vmatprep.subr.bf16.mxu0 0
  %193 = vmatpush1.bf16.msra.mxu0 0
  %194 = vmatprep.subr.bf16.mxu0 0
  %195 = vmatpush1.bf16.msra.mxu0 0
  %196 = vmatprep.subr.bf16.mxu0 0
  %197 = vmatpush1.bf16.msra.mxu0 0
  %198 = vmatprep.subr.bf16.mxu0 0
  %199 = vmatpush1.bf16.msra.mxu0 0
  %200 = vmatprep.subr.bf16.mxu0 0
  %201 = vmatpush1.bf16.msra.mxu0 0
  %202 = vmatprep.mubr.bf16.mxu0 0
  %203 = vmatmul.mubr.bf16.gmra.mrb[0].mxu0 %v77
  %v204 = vpop.f32.mrb[0].mxu0
  %v205 = vadd.f32 %v162, %v204
  %v206 = vpop.f32.mrb[0].mxu0
  %v207 = vpop.f32.mrb[0].mxu0
  %v208 = vadd.f32 %v162, %v207
  %v209 = vpop.f32.mrb[0].mxu0
  %210 = vmatprep.mubr.bf16.mxu0 0
  %211 = vmatmul.mubr.bf16.gmra.mrb[0].mxu0 %v80
  %v212 = vpop.f32.mrb[0].mxu0
  %v213 = vadd.f32 %v162, %v212
  %v214 = vpop.f32.mrb[0].mxu0
  %v215 = vpop.f32.mrb[0].mxu0
  %v216 = vadd.f32 %v162, %v215
  %v217 = vpop.f32.mrb[0].mxu0
  %218 = vmatprep.mubr.bf16.mxu0 0
  %219 = vmatmul.mubr.bf16.gmra.mrb[0].mxu0 %v83
  %v220 = vpop.f32.mrb[0].mxu0
  %v221 = vadd.f32 %v162, %v220
  %v222 = vpop.f32.mrb[0].mxu0
  %v223 = vpop.f32.mrb[0].mxu0
  %v224 = vadd.f32 %v162, %v223
  %v225 = vpop.f32.mrb[0].mxu0
  %226 = vmatprep.mubr.bf16.mxu0 0
  %227 = vmatmul.mubr.bf16.gmra.mrb[0].mxu0 %v86
  %v228 = vpop.f32.mrb[0].mxu0
  %v229 = vadd.f32 %v162, %v228
  %v230 = vpop.f32.mrb[0].mxu0
  %v231 = vpop.f32.mrb[0].mxu0
  %v232 = vadd.f32 %v162, %v231
  %v233 = vpop.f32.mrb[0].mxu0
  %234 = vdwg.mxu0
  %s235 = scalar_lea.vmem %s2, 16
  %v236 = vld [vmem:[%s235] sm:$0xf]
  %v237 = vld [vmem:[%s235 + $0x4] sm:$0xf]
  %s238 = scalar_lea.vmem %s4, 2
  %v239 = vld [vmem:[%s238] sm:$0x1]
  %v241 = vlaneseq
  %v242 = vshrl.u32 %v241, 7
  %v243 = vsub.s32 0, %v242
  %v244 = vrot.slane %v239, %v243
  %v248 = vunpack.c.l.b16 %v236
  %v249 = vunpack.c.l.b16 %v237
  %v250 = vpack.c.b16 %v249, %v248
  %252 = vmatprep.subr.bf16.mxu0 0
  %253 = vmatpush1.bf16.msra.mxu0 %v250
  %254 = vmatprep.subr.bf16.mxu0 0
  %255 = vmatpush1.bf16.msra.mxu0 0
  %256 = vmatprep.subr.bf16.mxu0 0
  %257 = vmatpush1.bf16.msra.mxu0 0
  %258 = vmatprep.subr.bf16.mxu0 0
  %259 = vmatpush1.bf16.msra.mxu0 0
  %260 = vmatprep.subr.bf16.mxu0 0
  %261 = vmatpush1.bf16.msra.mxu0 0
  %262 = vmatprep.subr.bf16.mxu0 0
  %263 = vmatpush1.bf16.msra.mxu0 0
  %264 = vmatprep.subr.bf16.mxu0 0
  %265 = vmatpush1.bf16.msra.mxu0 0
  %266 = vmatprep.subr.bf16.mxu0 0
  %267 = vmatpush1.bf16.msra.mxu0 0
  %268 = vmatprep.subr.bf16.mxu0 0
  %269 = vmatpush1.bf16.msra.mxu0 0
  %270 = vmatprep.subr.bf16.mxu0 0
  %271 = vmatpush1.bf16.msra.mxu0 0
  %272 = vmatprep.subr.bf16.mxu0 0
  %273 = vmatpush1.bf16.msra.mxu0 0
  %274 = vmatprep.subr.bf16.mxu0 0
  %275 = vmatpush1.bf16.msra.mxu0 0
  %276 = vmatprep.subr.bf16.mxu0 0
  %277 = vmatpush1.bf16.msra.mxu0 0
  %278 = vmatprep.subr.bf16.mxu0 0
  %279 = vmatpush1.bf16.msra.mxu0 0
  %280 = vmatprep.subr.bf16.mxu0 0
  %281 = vmatpush1.bf16.msra.mxu0 0
  %282 = vmatprep.subr.bf16.mxu0 0
  %283 = vmatpush1.bf16.msra.mxu0 0
  %284 = vmatprep.mubr.bf16.mxu0 0
  %285 = vmatmul.mubr.bf16.gmra.mrb[0].mxu0 %v77
  %v286 = vpop.f32.mrb[0].mxu0
  %v287 = vadd.f32 %v244, %v286
  %v288 = vpop.f32.mrb[0].mxu0
  %v289 = vpop.f32.mrb[0].mxu0
  %v290 = vadd.f32 %v244, %v289
  %v291 = vpop.f32.mrb[0].mxu0
  %292 = vmatprep.mubr.bf16.mxu0 0
  %293 = vmatmul.mubr.bf16.gmra.mrb[0].mxu0 %v80
  %v294 = vpop.f32.mrb[0].mxu0
  %v295 = vadd.f32 %v244, %v294
  %v296 = vpop.f32.mrb[0].mxu0
  %v297 = vpop.f32.mrb[0].mxu0
  %v298 = vadd.f32 %v244, %v297
  %v299 = vpop.f32.mrb[0].mxu0
  %300 = vmatprep.mubr.bf16.mxu0 0
  %301 = vmatmul.mubr.bf16.gmra.mrb[0].mxu0 %v83
  %v302 = vpop.f32.mrb[0].mxu0
  %v303 = vadd.f32 %v244, %v302
  %v304 = vpop.f32.mrb[0].mxu0
  %v305 = vpop.f32.mrb[0].mxu0
  %v306 = vadd.f32 %v244, %v305
  %v307 = vpop.f32.mrb[0].mxu0
  %308 = vmatprep.mubr.bf16.mxu0 0
  %309 = vmatmul.mubr.bf16.gmra.mrb[0].mxu0 %v86
  %v310 = vpop.f32.mrb[0].mxu0
  %v311 = vadd.f32 %v244, %v310
  %v312 = vpop.f32.mrb[0].mxu0
  %v313 = vpop.f32.mrb[0].mxu0
  %v314 = vadd.f32 %v244, %v313
  %v315 = vpop.f32.mrb[0].mxu0
  %316 = vdwg.mxu0
  %s317 = scalar_lea.vmem %s2, 24
  %v318 = vld [vmem:[%s317] sm:$0xf]
  %v319 = vld [vmem:[%s317 + $0x4] sm:$0xf]
  %s320 = scalar_lea.vmem %s4, 3
  %v321 = vld [vmem:[%s320] sm:$0x1]
  %v323 = vlaneseq
  %v324 = vshrl.u32 %v323, 7
  %v325 = vsub.s32 0, %v324
  %v326 = vrot.slane %v321, %v325
  %v330 = vunpack.c.l.b16 %v318
  %v331 = vunpack.c.l.b16 %v319
  %v332 = vpack.c.b16 %v331, %v330
  %334 = vmatprep.subr.bf16.mxu0 0
  %335 = vmatpush1.bf16.msra.mxu0 %v332
  %336 = vmatprep.subr.bf16.mxu0 0
  %337 = vmatpush1.bf16.msra.mxu0 0
  %338 = vmatprep.subr.bf16.mxu0 0
  %339 = vmatpush1.bf16.msra.mxu0 0
  %340 = vmatprep.subr.bf16.mxu0 0
  %341 = vmatpush1.bf16.msra.mxu0 0
  %342 = vmatprep.subr.bf16.mxu0 0
  %343 = vmatpush1.bf16.msra.mxu0 0
  %344 = vmatprep.subr.bf16.mxu0 0
  %345 = vmatpush1.bf16.msra.mxu0 0
  %346 = vmatprep.subr.bf16.mxu0 0
  %347 = vmatpush1.bf16.msra.mxu0 0
  %348 = vmatprep.subr.bf16.mxu0 0
  %349 = vmatpush1.bf16.msra.mxu0 0
  %350 = vmatprep.subr.bf16.mxu0 0
  %351 = vmatpush1.bf16.msra.mxu0 0
  %352 = vmatprep.subr.bf16.mxu0 0
  %353 = vmatpush1.bf16.msra.mxu0 0
  %354 = vmatprep.subr.bf16.mxu0 0
  %355 = vmatpush1.bf16.msra.mxu0 0
  %356 = vmatprep.subr.bf16.mxu0 0
  %357 = vmatpush1.bf16.msra.mxu0 0
  %358 = vmatprep.subr.bf16.mxu0 0
  %359 = vmatpush1.bf16.msra.mxu0 0
  %360 = vmatprep.subr.bf16.mxu0 0
  %361 = vmatpush1.bf16.msra.mxu0 0
  %362 = vmatprep.subr.bf16.mxu0 0
  %363 = vmatpush1.bf16.msra.mxu0 0
  %364 = vmatprep.subr.bf16.mxu0 0
  %365 = vmatpush1.bf16.msra.mxu0 0
  %366 = vmatprep.mubr.bf16.mxu0 0
  %367 = vmatmul.mubr.bf16.gmra.mrb[0].mxu0 %v77
  %v368 = vpop.f32.mrb[0].mxu0
  %v369 = vadd.f32 %v326, %v368
  %v370 = vpop.f32.mrb[0].mxu0
  %v371 = vpop.f32.mrb[0].mxu0
  %v372 = vadd.f32 %v326, %v371
  %v373 = vpop.f32.mrb[0].mxu0
  %374 = vmatprep.mubr.bf16.mxu0 0
  %375 = vmatmul.mubr.bf16.gmra.mrb[0].mxu0 %v80
  %v376 = vpop.f32.mrb[0].mxu0
  %v377 = vadd.f32 %v326, %v376
  %v378 = vpop.f32.mrb[0].mxu0
  %v379 = vpop.f32.mrb[0].mxu0
  %v380 = vadd.f32 %v326, %v379
  %v381 = vpop.f32.mrb[0].mxu0
  %382 = vmatprep.mubr.bf16.mxu0 0
  %383 = vmatmul.mubr.bf16.gmra.mrb[0].mxu0 %v83
  %v384 = vpop.f32.mrb[0].mxu0
  %v385 = vadd.f32 %v326, %v384
  %v386 = vpop.f32.mrb[0].mxu0
  %v387 = vpop.f32.mrb[0].mxu0
  %v388 = vadd.f32 %v326, %v387
  %v389 = vpop.f32.mrb[0].mxu0
  %390 = vmatprep.mubr.bf16.mxu0 0
  %391 = vmatmul.mubr.bf16.gmra.mrb[0].mxu0 %v86
  %v392 = vpop.f32.mrb[0].mxu0
  %v393 = vadd.f32 %v326, %v392
  %v394 = vpop.f32.mrb[0].mxu0
  %v395 = vpop.f32.mrb[0].mxu0
  %v396 = vadd.f32 %v326, %v395
  %v397 = vpop.f32.mrb[0].mxu0
  %398 = vdwg.mxu0
  %v399 = vld [vmem:[%s5] sm:$0xf]
  %v400 = vld [vmem:[%s5 + $0x4] sm:$0xf]
  %v401 = vld [vmem:[%s7] sm:$0x1]
  %v403 = vlaneseq
  %v404 = vshrl.u32 %v403, 7
  %v405 = vsub.s32 0, %v404
  %v406 = vrot.slane %v401, %v405
  %v410 = vunpack.c.l.b16 %v399
  %v411 = vunpack.c.l.b16 %v400
  %v412 = vpack.c.b16 %v411, %v410
  %414 = vmatprep.subr.bf16.mxu0 0
  %415 = vmatpush1.bf16.msra.mxu0 %v412
  %416 = vmatprep.subr.bf16.mxu0 0
  %417 = vmatpush1.bf16.msra.mxu0 0
  %418 = vmatprep.subr.bf16.mxu0 0
  %419 = vmatpush1.bf16.msra.mxu0 0
  %420 = vmatprep.subr.bf16.mxu0 0
  %421 = vmatpush1.bf16.msra.mxu0 0
  %422 = vmatprep.subr.bf16.mxu0 0
  %423 = vmatpush1.bf16.msra.mxu0 0
  %424 = vmatprep.subr.bf16.mxu0 0
  %425 = vmatpush1.bf16.msra.mxu0 0
  %426 = vmatprep.subr.bf16.mxu0 0
  %427 = vmatpush1.bf16.msra.mxu0 0
  %428 = vmatprep.subr.bf16.mxu0 0
  %429 = vmatpush1.bf16.msra.mxu0 0
  %430 = vmatprep.subr.bf16.mxu0 0
  %431 = vmatpush1.bf16.msra.mxu0 0
  %432 = vmatprep.subr.bf16.mxu0 0
  %433 = vmatpush1.bf16.msra.mxu0 0
  %434 = vmatprep.subr.bf16.mxu0 0
  %435 = vmatpush1.bf16.msra.mxu0 0
  %436 = vmatprep.subr.bf16.mxu0 0
  %437 = vmatpush1.bf16.msra.mxu0 0
  %438 = vmatprep.subr.bf16.mxu0 0
  %439 = vmatpush1.bf16.msra.mxu0 0
  %440 = vmatprep.subr.bf16.mxu0 0
  %441 = vmatpush1.bf16.msra.mxu0 0
  %442 = vmatprep.subr.bf16.mxu0 0
  %443 = vmatpush1.bf16.msra.mxu0 0
  %444 = vmatprep.subr.bf16.mxu0 0
  %445 = vmatpush1.bf16.msra.mxu0 0
  %446 = vmatprep.mubr.bf16.mxu0 0
  %447 = vmatmul.mubr.bf16.gmra.mrb[0].mxu0 %v77
  %v448 = vpop.f32.mrb[0].mxu0
  %v449 = vadd.f32 %v406, %v448
  %v450 = vpop.f32.mrb[0].mxu0
  %v451 = vpop.f32.mrb[0].mxu0
  %v452 = vadd.f32 %v406, %v451
  %v453 = vpop.f32.mrb[0].mxu0
  %454 = vmatprep.mubr.bf16.mxu0 0
  %455 = vmatmul.mubr.bf16.gmra.mrb[0].mxu0 %v80
  %v456 = vpop.f32.mrb[0].mxu0
  %v457 = vadd.f32 %v406, %v456
  %v458 = vpop.f32.mrb[0].mxu0
  %v459 = vpop.f32.mrb[0].mxu0
  %v460 = vadd.f32 %v406, %v459
  %v461 = vpop.f32.mrb[0].mxu0
  %462 = vmatprep.mubr.bf16.mxu0 0
  %463 = vmatmul.mubr.bf16.gmra.mrb[0].mxu0 %v83
  %v464 = vpop.f32.mrb[0].mxu0
  %v465 = vadd.f32 %v406, %v464
  %v466 = vpop.f32.mrb[0].mxu0
  %v467 = vpop.f32.mrb[0].mxu0
  %v468 = vadd.f32 %v406, %v467
  %v469 = vpop.f32.mrb[0].mxu0
  %470 = vmatprep.mubr.bf16.mxu0 0
  %471 = vmatmul.mubr.bf16.gmra.mrb[0].mxu0 %v86
  %v472 = vpop.f32.mrb[0].mxu0
  %v473 = vadd.f32 %v406, %v472
  %v474 = vpop.f32.mrb[0].mxu0
  %v475 = vpop.f32.mrb[0].mxu0
  %v476 = vadd.f32 %v406, %v475
  %v477 = vpop.f32.mrb[0].mxu0
  %478 = vdwg.mxu0
  %s479 = scalar_lea.vmem %s5, 8
  %v480 = vld [vmem:[%s479] sm:$0xf]
  %v481 = vld [vmem:[%s479 + $0x4] sm:$0xf]
  %s482 = scalar_lea.vmem %s7, 1
  %v483 = vld [vmem:[%s482] sm:$0x1]
  %v485 = vlaneseq
  %v486 = vshrl.u32 %v485, 7
  %v487 = vsub.s32 0, %v486
  %v488 = vrot.slane %v483, %v487
  %v492 = vunpack.c.l.b16 %v480
  %v493 = vunpack.c.l.b16 %v481
  %v494 = vpack.c.b16 %v493, %v492
  %496 = vmatprep.subr.bf16.mxu0 0
  %497 = vmatpush1.bf16.msra.mxu0 %v494
  %498 = vmatprep.subr.bf16.mxu0 0
  %499 = vmatpush1.bf16.msra.mxu0 0
  %500 = vmatprep.subr.bf16.mxu0 0
  %501 = vmatpush1.bf16.msra.mxu0 0
  %502 = vmatprep.subr.bf16.mxu0 0
  %503 = vmatpush1.bf16.msra.mxu0 0
  %504 = vmatprep.subr.bf16.mxu0 0
  %505 = vmatpush1.bf16.msra.mxu0 0
  %506 = vmatprep.subr.bf16.mxu0 0
  %507 = vmatpush1.bf16.msra.mxu0 0
  %508 = vmatprep.subr.bf16.mxu0 0
  %509 = vmatpush1.bf16.msra.mxu0 0
  %510 = vmatprep.subr.bf16.mxu0 0
  %511 = vmatpush1.bf16.msra.mxu0 0
  %512 = vmatprep.subr.bf16.mxu0 0
  %513 = vmatpush1.bf16.msra.mxu0 0
  %514 = vmatprep.subr.bf16.mxu0 0
  %515 = vmatpush1.bf16.msra.mxu0 0
  %516 = vmatprep.subr.bf16.mxu0 0
  %517 = vmatpush1.bf16.msra.mxu0 0
  %518 = vmatprep.subr.bf16.mxu0 0
  %519 = vmatpush1.bf16.msra.mxu0 0
  %520 = vmatprep.subr.bf16.mxu0 0
  %521 = vmatpush1.bf16.msra.mxu0 0
  %522 = vmatprep.subr.bf16.mxu0 0
  %523 = vmatpush1.bf16.msra.mxu0 0
  %524 = vmatprep.subr.bf16.mxu0 0
  %525 = vmatpush1.bf16.msra.mxu0 0
  %526 = vmatprep.subr.bf16.mxu0 0
  %527 = vmatpush1.bf16.msra.mxu0 0
  %528 = vmatprep.mubr.bf16.mxu0 0
  %529 = vmatmul.mubr.bf16.gmra.mrb[0].mxu0 %v77
  %v530 = vpop.f32.mrb[0].mxu0
  %v531 = vadd.f32 %v488, %v530
  %v532 = vpop.f32.mrb[0].mxu0
  %v533 = vpop.f32.mrb[0].mxu0
  %v534 = vadd.f32 %v488, %v533
  %v535 = vpop.f32.mrb[0].mxu0
  %536 = vmatprep.mubr.bf16.mxu0 0
  %537 = vmatmul.mubr.bf16.gmra.mrb[0].mxu0 %v80
  %v538 = vpop.f32.mrb[0].mxu0
  %v539 = vadd.f32 %v488, %v538
  %v540 = vpop.f32.mrb[0].mxu0
  %v541 = vpop.f32.mrb[0].mxu0
  %v542 = vadd.f32 %v488, %v541
  %v543 = vpop.f32.mrb[0].mxu0
  %544 = vmatprep.mubr.bf16.mxu0 0
  %545 = vmatmul.mubr.bf16.gmra.mrb[0].mxu0 %v83
  %v546 = vpop.f32.mrb[0].mxu0
  %v547 = vadd.f32 %v488, %v546
  %v548 = vpop.f32.mrb[0].mxu0
  %v549 = vpop.f32.mrb[0].mxu0
  %v550 = vadd.f32 %v488, %v549
  %v551 = vpop.f32.mrb[0].mxu0
  %552 = vmatprep.mubr.bf16.mxu0 0
  %553 = vmatmul.mubr.bf16.gmra.mrb[0].mxu0 %v86
  %v554 = vpop.f32.mrb[0].mxu0
  %v555 = vadd.f32 %v488, %v554
  %v556 = vpop.f32.mrb[0].mxu0
  %v557 = vpop.f32.mrb[0].mxu0
  %v558 = vadd.f32 %v488, %v557
  %v559 = vpop.f32.mrb[0].mxu0
  %560 = vdwg.mxu0
  %s561 = scalar_lea.vmem %s5, 16
  %v562 = vld [vmem:[%s561] sm:$0xf]
  %v563 = vld [vmem:[%s561 + $0x4] sm:$0xf]
  %s564 = scalar_lea.vmem %s7, 2
  %v565 = vld [vmem:[%s564] sm:$0x1]
  %v567 = vlaneseq
  %v568 = vshrl.u32 %v567, 7
  %v569 = vsub.s32 0, %v568
  %v570 = vrot.slane %v565, %v569
  %v574 = vunpack.c.l.b16 %v562
  %v575 = vunpack.c.l.b16 %v563
  %v576 = vpack.c.b16 %v575, %v574
  %578 = vmatprep.subr.bf16.mxu0 0
  %579 = vmatpush1.bf16.msra.mxu0 %v576
  %580 = vmatprep.subr.bf16.mxu0 0
  %581 = vmatpush1.bf16.msra.mxu0 0
  %582 = vmatprep.subr.bf16.mxu0 0
  %583 = vmatpush1.bf16.msra.mxu0 0
  %584 = vmatprep.subr.bf16.mxu0 0
  %585 = vmatpush1.bf16.msra.mxu0 0
  %586 = vmatprep.subr.bf16.mxu0 0
  %587 = vmatpush1.bf16.msra.mxu0 0
  %588 = vmatprep.subr.bf16.mxu0 0
  %589 = vmatpush1.bf16.msra.mxu0 0
  %590 = vmatprep.subr.bf16.mxu0 0
  %591 = vmatpush1.bf16.msra.mxu0 0
  %592 = vmatprep.subr.bf16.mxu0 0
  %593 = vmatpush1.bf16.msra.mxu0 0
  %594 = vmatprep.subr.bf16.mxu0 0
  %595 = vmatpush1.bf16.msra.mxu0 0
  %596 = vmatprep.subr.bf16.mxu0 0
  %597 = vmatpush1.bf16.msra.mxu0 0
  %598 = vmatprep.subr.bf16.mxu0 0
  %599 = vmatpush1.bf16.msra.mxu0 0
  %600 = vmatprep.subr.bf16.mxu0 0
  %601 = vmatpush1.bf16.msra.mxu0 0
  %602 = vmatprep.subr.bf16.mxu0 0
  %603 = vmatpush1.bf16.msra.mxu0 0
  %604 = vmatprep.subr.bf16.mxu0 0
  %605 = vmatpush1.bf16.msra.mxu0 0
  %606 = vmatprep.subr.bf16.mxu0 0
  %607 = vmatpush1.bf16.msra.mxu0 0
  %608 = vmatprep.subr.bf16.mxu0 0
  %609 = vmatpush1.bf16.msra.mxu0 0
  %610 = vmatprep.mubr.bf16.mxu0 0
  %611 = vmatmul.mubr.bf16.gmra.mrb[0].mxu0 %v77
  %v612 = vpop.f32.mrb[0].mxu0
  %v613 = vadd.f32 %v570, %v612
  %v614 = vpop.f32.mrb[0].mxu0
  %v615 = vpop.f32.mrb[0].mxu0
  %v616 = vadd.f32 %v570, %v615
  %v617 = vpop.f32.mrb[0].mxu0
  %618 = vmatprep.mubr.bf16.mxu0 0
  %619 = vmatmul.mubr.bf16.gmra.mrb[0].mxu0 %v80
  %v620 = vpop.f32.mrb[0].mxu0
  %v621 = vadd.f32 %v570, %v620
  %v622 = vpop.f32.mrb[0].mxu0
  %v623 = vpop.f32.mrb[0].mxu0
  %v624 = vadd.f32 %v570, %v623
  %v625 = vpop.f32.mrb[0].mxu0
  %626 = vmatprep.mubr.bf16.mxu0 0
  %627 = vmatmul.mubr.bf16.gmra.mrb[0].mxu0 %v83
  %v628 = vpop.f32.mrb[0].mxu0
  %v629 = vadd.f32 %v570, %v628
  %v630 = vpop.f32.mrb[0].mxu0
  %v631 = vpop.f32.mrb[0].mxu0
  %v632 = vadd.f32 %v570, %v631
  %v633 = vpop.f32.mrb[0].mxu0
  %634 = vmatprep.mubr.bf16.mxu0 0
  %635 = vmatmul.mubr.bf16.gmra.mrb[0].mxu0 %v86
  %v636 = vpop.f32.mrb[0].mxu0
  %v637 = vadd.f32 %v570, %v636
  %v638 = vpop.f32.mrb[0].mxu0
  %v639 = vpop.f32.mrb[0].mxu0
  %v640 = vadd.f32 %v570, %v639
  %v641 = vpop.f32.mrb[0].mxu0
  %642 = vdwg.mxu0
  %s643 = scalar_lea.vmem %s5, 24
  %v644 = vld [vmem:[%s643] sm:$0xf]
  %v645 = vld [vmem:[%s643 + $0x4] sm:$0xf]
  %s646 = scalar_lea.vmem %s7, 3
  %v647 = vld [vmem:[%s646] sm:$0x1]
  %v649 = vlaneseq
  %v650 = vshrl.u32 %v649, 7
  %v651 = vsub.s32 0, %v650
  %v652 = vrot.slane %v647, %v651
  %v656 = vunpack.c.l.b16 %v644
  %v657 = vunpack.c.l.b16 %v645
  %v658 = vpack.c.b16 %v657, %v656
  %660 = vmatprep.subr.bf16.mxu0 0
  %661 = vmatpush1.bf16.msra.mxu0 %v658
  %662 = vmatprep.subr.bf16.mxu0 0
  %663 = vmatpush1.bf16.msra.mxu0 0
  %664 = vmatprep.subr.bf16.mxu0 0
  %665 = vmatpush1.bf16.msra.mxu0 0
  %666 = vmatprep.subr.bf16.mxu0 0
  %667 = vmatpush1.bf16.msra.mxu0 0
  %668 = vmatprep.subr.bf16.mxu0 0
  %669 = vmatpush1.bf16.msra.mxu0 0
  %670 = vmatprep.subr.bf16.mxu0 0
  %671 = vmatpush1.bf16.msra.mxu0 0
  %672 = vmatprep.subr.bf16.mxu0 0
  %673 = vmatpush1.bf16.msra.mxu0 0
  %674 = vmatprep.subr.bf16.mxu0 0
  %675 = vmatpush1.bf16.msra.mxu0 0
  %676 = vmatprep.subr.bf16.mxu0 0
  %677 = vmatpush1.bf16.msra.mxu0 0
  %678 = vmatprep.subr.bf16.mxu0 0
  %679 = vmatpush1.bf16.msra.mxu0 0
  %680 = vmatprep.subr.bf16.mxu0 0
  %681 = vmatpush1.bf16.msra.mxu0 0
  %682 = vmatprep.subr.bf16.mxu0 0
  %683 = vmatpush1.bf16.msra.mxu0 0
  %684 = vmatprep.subr.bf16.mxu0 0
  %685 = vmatpush1.bf16.msra.mxu0 0
  %686 = vmatprep.subr.bf16.mxu0 0
  %687 = vmatpush1.bf16.msra.mxu0 0
  %688 = vmatprep.subr.bf16.mxu0 0
  %689 = vmatpush1.bf16.msra.mxu0 0
  %690 = vmatprep.subr.bf16.mxu0 0
  %691 = vmatpush1.bf16.msra.mxu0 0
  %692 = vmatprep.mubr.bf16.mxu0 0
  %693 = vmatmul.mubr.bf16.gmra.mrb[0].mxu0 %v77
  %v694 = vpop.f32.mrb[0].mxu0
  %v695 = vadd.f32 %v652, %v694
  %v696 = vpop.f32.mrb[0].mxu0
  %v697 = vpop.f32.mrb[0].mxu0
  %v698 = vadd.f32 %v652, %v697
  %v699 = vpop.f32.mrb[0].mxu0
  %700 = vmatprep.mubr.bf16.mxu0 0
  %701 = vmatmul.mubr.bf16.gmra.mrb[0].mxu0 %v80
  %v702 = vpop.f32.mrb[0].mxu0
  %v703 = vadd.f32 %v652, %v702
  %v704 = vpop.f32.mrb[0].mxu0
  %v705 = vpop.f32.mrb[0].mxu0
  %v706 = vadd.f32 %v652, %v705
  %v707 = vpop.f32.mrb[0].mxu0
  %708 = vmatprep.mubr.bf16.mxu0 0
  %709 = vmatmul.mubr.bf16.gmra.mrb[0].mxu0 %v83
  %v710 = vpop.f32.mrb[0].mxu0
  %v711 = vadd.f32 %v652, %v710
  %v712 = vpop.f32.mrb[0].mxu0
  %v713 = vpop.f32.mrb[0].mxu0
  %v714 = vadd.f32 %v652, %v713
  %v715 = vpop.f32.mrb[0].mxu0
  %716 = vmatprep.mubr.bf16.mxu0 0
  %717 = vmatmul.mubr.bf16.gmra.mrb[0].mxu0 %v86
  %v718 = vpop.f32.mrb[0].mxu0
  %v719 = vadd.f32 %v652, %v718
  %v720 = vpop.f32.mrb[0].mxu0
  %v721 = vpop.f32.mrb[0].mxu0
  %v722 = vadd.f32 %v652, %v721
  %v723 = vpop.f32.mrb[0].mxu0
  %724 = vdwg.mxu0
  %v725 = vld [vmem:[%s1] sm:$0xff]
  %vm726 = vcmp.gt.s32.totalorder %v725, 0
  %v727 = vld [vmem:[%s3] sm:$0xf]
  %v728 = vld [vmem:[%s3 + $0x4] sm:$0xf]
  %v731 = vunpack.c.l.b16 %v727
  %v732 = vunpack.c.l.b16 %v728
  %v733 = vpack.c.b16 %v732, %v731
  %v736 = vsel %vm75, 0, 0
  %738 = vmatprep.subr.bf16.mxu0 0
  %739 = vmatpush1.bf16.msra.mxu0 %v733
  %740 = vmatprep.subr.bf16.mxu0 0
  %741 = vmatpush1.bf16.msra.mxu0 0
  %742 = vmatprep.subr.bf16.mxu0 0
  %743 = vmatpush1.bf16.msra.mxu0 0
  %744 = vmatprep.subr.bf16.mxu0 0
  %745 = vmatpush1.bf16.msra.mxu0 0
  %746 = vmatprep.subr.bf16.mxu0 0
  %747 = vmatpush1.bf16.msra.mxu0 0
  %748 = vmatprep.subr.bf16.mxu0 0
  %749 = vmatpush1.bf16.msra.mxu0 0
  %750 = vmatprep.subr.bf16.mxu0 0
  %751 = vmatpush1.bf16.msra.mxu0 0
  %752 = vmatprep.subr.bf16.mxu0 0
  %753 = vmatpush1.bf16.msra.mxu0 0
  %754 = vmatprep.subr.bf16.mxu0 0
  %755 = vmatpush1.bf16.msra.mxu0 0
  %756 = vmatprep.subr.bf16.mxu0 0
  %757 = vmatpush1.bf16.msra.mxu0 0
  %758 = vmatprep.subr.bf16.mxu0 0
  %759 = vmatpush1.bf16.msra.mxu0 0
  %760 = vmatprep.subr.bf16.mxu0 0
  %761 = vmatpush1.bf16.msra.mxu0 0
  %762 = vmatprep.subr.bf16.mxu0 0
  %763 = vmatpush1.bf16.msra.mxu0 0
  %764 = vmatprep.subr.bf16.mxu0 0
  %765 = vmatpush1.bf16.msra.mxu0 0
  %766 = vmatprep.subr.bf16.mxu0 0
  %767 = vmatpush1.bf16.msra.mxu0 0
  %768 = vmatprep.subr.bf16.mxu0 0
  %769 = vmatpush1.bf16.msra.mxu0 0
  %770 = vmatprep.mubr.bf16.mxu0 0
  %771 = vmatmul.mubr.bf16.gmra.mrb[0].mxu0 %v736
  %v772 = vpop.f32.mrb[0].mxu0
  %v773 = vadd.f32 0.0, %v772
  %v774 = vpop.f32.mrb[0].mxu0
  %v775 = vpop.f32.mrb[0].mxu0
  %v776 = vpop.f32.mrb[0].mxu0
  %777 = vdwg.mxu0
  %v778 = vadd.f32 %v123, %v773
  %v779 = vxor.u32 %v778, 2147483648
  %v780 = vmul.f32 %v779, 1.442695
  %v781 = vpow.pop %v780
  %v782 = vadd.f32 %v781, 1.0
  %v783 = vrcp.pop %v782
  %v784 = vmul.f32 1.0, %v783
  %s785 = scalar_lea.vmem %s3, 8
  %v786 = vld [vmem:[%s785] sm:$0xf]
  %v787 = vld [vmem:[%s785 + $0x4] sm:$0xf]
  %v790 = vunpack.c.l.b16 %v786
  %v791 = vunpack.c.l.b16 %v787
  %v792 = vpack.c.b16 %v791, %v790
  %794 = vmatprep.subr.bf16.mxu0 0
  %795 = vmatpush1.bf16.msra.mxu0 %v792
  %796 = vmatprep.subr.bf16.mxu0 0
  %797 = vmatpush1.bf16.msra.mxu0 0
  %798 = vmatprep.subr.bf16.mxu0 0
  %799 = vmatpush1.bf16.msra.mxu0 0
  %800 = vmatprep.subr.bf16.mxu0 0
  %801 = vmatpush1.bf16.msra.mxu0 0
  %802 = vmatprep.subr.bf16.mxu0 0
  %803 = vmatpush1.bf16.msra.mxu0 0
  %804 = vmatprep.subr.bf16.mxu0 0
  %805 = vmatpush1.bf16.msra.mxu0 0
  %806 = vmatprep.subr.bf16.mxu0 0
  %807 = vmatpush1.bf16.msra.mxu0 0
  %808 = vmatprep.subr.bf16.mxu0 0
  %809 = vmatpush1.bf16.msra.mxu0 0
  %810 = vmatprep.subr.bf16.mxu0 0
  %811 = vmatpush1.bf16.msra.mxu0 0
  %812 = vmatprep.subr.bf16.mxu0 0
  %813 = vmatpush1.bf16.msra.mxu0 0
  %814 = vmatprep.subr.bf16.mxu0 0
  %815 = vmatpush1.bf16.msra.mxu0 0
  %816 = vmatprep.subr.bf16.mxu0 0
  %817 = vmatpush1.bf16.msra.mxu0 0
  %818 = vmatprep.subr.bf16.mxu0 0
  %819 = vmatpush1.bf16.msra.mxu0 0
  %820 = vmatprep.subr.bf16.mxu0 0
  %821 = vmatpush1.bf16.msra.mxu0 0
  %822 = vmatprep.subr.bf16.mxu0 0
  %823 = vmatpush1.bf16.msra.mxu0 0
  %824 = vmatprep.subr.bf16.mxu0 0
  %825 = vmatpush1.bf16.msra.mxu0 0
  %826 = vmatprep.mubr.bf16.mxu0 0
  %827 = vmatmul.mubr.bf16.gmra.mrb[0].mxu0 %v736
  %v828 = vpop.f32.mrb[0].mxu0
  %v829 = vadd.f32 0.0, %v828
  %v830 = vpop.f32.mrb[0].mxu0
  %v831 = vpop.f32.mrb[0].mxu0
  %v832 = vpop.f32.mrb[0].mxu0
  %833 = vdwg.mxu0
  %v834 = vadd.f32 %v205, %v829
  %v835 = vxor.u32 %v834, 2147483648
  %v836 = vmul.f32 %v835, 1.442695
  %v837 = vpow.pop %v836
  %v838 = vadd.f32 %v837, 1.0
  %v839 = vrcp.pop %v838
  %v840 = vmul.f32 1.0, %v839
  %s841 = scalar_lea.vmem %s3, 16
  %v842 = vld [vmem:[%s841] sm:$0xf]
  %v843 = vld [vmem:[%s841 + $0x4] sm:$0xf]
  %v846 = vunpack.c.l.b16 %v842
  %v847 = vunpack.c.l.b16 %v843
  %v848 = vpack.c.b16 %v847, %v846
  %850 = vmatprep.subr.bf16.mxu0 0
  %851 = vmatpush1.bf16.msra.mxu0 %v848
  %852 = vmatprep.subr.bf16.mxu0 0
  %853 = vmatpush1.bf16.msra.mxu0 0
  %854 = vmatprep.subr.bf16.mxu0 0
  %855 = vmatpush1.bf16.msra.mxu0 0
  %856 = vmatprep.subr.bf16.mxu0 0
  %857 = vmatpush1.bf16.msra.mxu0 0
  %858 = vmatprep.subr.bf16.mxu0 0
  %859 = vmatpush1.bf16.msra.mxu0 0
  %860 = vmatprep.subr.bf16.mxu0 0
  %861 = vmatpush1.bf16.msra.mxu0 0
  %862 = vmatprep.subr.bf16.mxu0 0
  %863 = vmatpush1.bf16.msra.mxu0 0
  %864 = vmatprep.subr.bf16.mxu0 0
  %865 = vmatpush1.bf16.msra.mxu0 0
  %866 = vmatprep.subr.bf16.mxu0 0
  %867 = vmatpush1.bf16.msra.mxu0 0
  %868 = vmatprep.subr.bf16.mxu0 0
  %869 = vmatpush1.bf16.msra.mxu0 0
  %870 = vmatprep.subr.bf16.mxu0 0
  %871 = vmatpush1.bf16.msra.mxu0 0
  %872 = vmatprep.subr.bf16.mxu0 0
  %873 = vmatpush1.bf16.msra.mxu0 0
  %874 = vmatprep.subr.bf16.mxu0 0
  %875 = vmatpush1.bf16.msra.mxu0 0
  %876 = vmatprep.subr.bf16.mxu0 0
  %877 = vmatpush1.bf16.msra.mxu0 0
  %878 = vmatprep.subr.bf16.mxu0 0
  %879 = vmatpush1.bf16.msra.mxu0 0
  %880 = vmatprep.subr.bf16.mxu0 0
  %881 = vmatpush1.bf16.msra.mxu0 0
  %882 = vmatprep.mubr.bf16.mxu0 0
  %883 = vmatmul.mubr.bf16.gmra.mrb[0].mxu0 %v736
  %v884 = vpop.f32.mrb[0].mxu0
  %v885 = vadd.f32 0.0, %v884
  %v886 = vpop.f32.mrb[0].mxu0
  %v887 = vpop.f32.mrb[0].mxu0
  %v888 = vpop.f32.mrb[0].mxu0
  %889 = vdwg.mxu0
  %v890 = vadd.f32 %v287, %v885
  %v891 = vtanh.pop %v890
  %s892 = scalar_lea.vmem %s3, 24
  %v893 = vld [vmem:[%s892] sm:$0xf]
  %v894 = vld [vmem:[%s892 + $0x4] sm:$0xf]
  %v897 = vunpack.c.l.b16 %v893
  %v898 = vunpack.c.l.b16 %v894
  %v899 = vpack.c.b16 %v898, %v897
  %901 = vmatprep.subr.bf16.mxu0 0
  %902 = vmatpush1.bf16.msra.mxu0 %v899
  %903 = vmatprep.subr.bf16.mxu0 0
  %904 = vmatpush1.bf16.msra.mxu0 0
  %905 = vmatprep.subr.bf16.mxu0 0
  %906 = vmatpush1.bf16.msra.mxu0 0
  %907 = vmatprep.subr.bf16.mxu0 0
  %908 = vmatpush1.bf16.msra.mxu0 0
  %909 = vmatprep.subr.bf16.mxu0 0
  %910 = vmatpush1.bf16.msra.mxu0 0
  %911 = vmatprep.subr.bf16.mxu0 0
  %912 = vmatpush1.bf16.msra.mxu0 0
  %913 = vmatprep.subr.bf16.mxu0 0
  %914 = vmatpush1.bf16.msra.mxu0 0
  %915 = vmatprep.subr.bf16.mxu0 0
  %916 = vmatpush1.bf16.msra.mxu0 0
  %917 = vmatprep.subr.bf16.mxu0 0
  %918 = vmatpush1.bf16.msra.mxu0 0
  %919 = vmatprep.subr.bf16.mxu0 0
  %920 = vmatpush1.bf16.msra.mxu0 0
  %921 = vmatprep.subr.bf16.mxu0 0
  %922 = vmatpush1.bf16.msra.mxu0 0
  %923 = vmatprep.subr.bf16.mxu0 0
  %924 = vmatpush1.bf16.msra.mxu0 0
  %925 = vmatprep.subr.bf16.mxu0 0
  %926 = vmatpush1.bf16.msra.mxu0 0
  %927 = vmatprep.subr.bf16.mxu0 0
  %928 = vmatpush1.bf16.msra.mxu0 0
  %929 = vmatprep.subr.bf16.mxu0 0
  %930 = vmatpush1.bf16.msra.mxu0 0
  %931 = vmatprep.subr.bf16.mxu0 0
  %932 = vmatpush1.bf16.msra.mxu0 0
  %933 = vmatprep.mubr.bf16.mxu0 0
  %934 = vmatmul.mubr.bf16.gmra.mrb[0].mxu0 %v736
  %v935 = vpop.f32.mrb[0].mxu0
  %v936 = vadd.f32 0.0, %v935
  %v937 = vpop.f32.mrb[0].mxu0
  %v938 = vpop.f32.mrb[0].mxu0
  %v939 = vpop.f32.mrb[0].mxu0
  %940 = vdwg.mxu0
  %v941 = vadd.f32 %v369, %v936
  %v942 = vxor.u32 %v941, 2147483648
  %v943 = vmul.f32 %v942, 1.442695
  %v944 = vpow.pop %v943
  %v945 = vadd.f32 %v944, 1.0
  %v946 = vrcp.pop %v945
  %v947 = vmul.f32 1.0, %v946
  %v948 = vmul.f32 %v840, 0.0
  %v949 = vmul.f32 %v784, %v891
  %v950 = vadd.f32 %v948, %v949
  %v951 = vsel %vm726, 1, 0
  %952 = vset.pattern.permute.xlu0 0
  %953 = vperm.xlu0 %952, %v951
  %v954 = vpop.permute.xlu0 %953
  %vm955 = vcmp.eq.s32.totalorder %v954, 1
  %v956 = vsel %vm955, %v950, 0.0
  %v957 = vtanh.pop %v956
  %v958 = vmul.f32 %v947, %v957
  %v959 = vsel %vm955, %v958, 0.0
  %vm960 = vcmp.gt.s32.totalorder %v725, 7
  %v961 = vld [vmem:[%s6] sm:$0xf]
  %v962 = vld [vmem:[%s6 + $0x4] sm:$0xf]
  %v965 = vunpack.c.l.b16 %v961
  %v966 = vunpack.c.l.b16 %v962
  %v967 = vpack.c.b16 %v966, %v965
  %969 = vmatprep.subr.bf16.mxu0 0
  %970 = vmatpush1.bf16.msra.mxu0 %v967
  %971 = vmatprep.subr.bf16.mxu0 0
  %972 = vmatpush1.bf16.msra.mxu0 0
  %973 = vmatprep.subr.bf16.mxu0 0
  %974 = vmatpush1.bf16.msra.mxu0 0
  %975 = vmatprep.subr.bf16.mxu0 0
  %976 = vmatpush1.bf16.msra.mxu0 0
  %977 = vmatprep.subr.bf16.mxu0 0
  %978 = vmatpush1.bf16.msra.mxu0 0
  %979 = vmatprep.subr.bf16.mxu0 0
  %980 = vmatpush1.bf16.msra.mxu0 0
  %981 = vmatprep.subr.bf16.mxu0 0
  %982 = vmatpush1.bf16.msra.mxu0 0
  %983 = vmatprep.subr.bf16.mxu0 0
  %984 = vmatpush1.bf16.msra.mxu0 0
  %985 = vmatprep.subr.bf16.mxu0 0
  %986 = vmatpush1.bf16.msra.mxu0 0
  %987 = vmatprep.subr.bf16.mxu0 0
  %988 = vmatpush1.bf16.msra.mxu0 0
  %989 = vmatprep.subr.bf16.mxu0 0
  %990 = vmatpush1.bf16.msra.mxu0 0
  %991 = vmatprep.subr.bf16.mxu0 0
  %992 = vmatpush1.bf16.msra.mxu0 0
  %993 = vmatprep.subr.bf16.mxu0 0
  %994 = vmatpush1.bf16.msra.mxu0 0
  %995 = vmatprep.subr.bf16.mxu0 0
  %996 = vmatpush1.bf16.msra.mxu0 0
  %997 = vmatprep.subr.bf16.mxu0 0
  %998 = vmatpush1.bf16.msra.mxu0 0
  %999 = vmatprep.subr.bf16.mxu0 0
  %1000 = vmatpush1.bf16.msra.mxu0 0
  %1001 = vmatprep.mubr.bf16.mxu0 0
  %1002 = vmatmul.mubr.bf16.gmra.mrb[0].mxu0 %v736
  %v1003 = vpop.f32.mrb[0].mxu0
  %v1004 = vadd.f32 0.0, %v1003
  %v1005 = vpop.f32.mrb[0].mxu0
  %v1006 = vpop.f32.mrb[0].mxu0
  %v1007 = vpop.f32.mrb[0].mxu0
  %1008 = vdwg.mxu0
  %v1009 = vadd.f32 %v476, %v1004
  %v1010 = vxor.u32 %v1009, 2147483648
  %v1011 = vmul.f32 %v1010, 1.442695
  %v1012 = vpow.pop %v1011
  %v1013 = vadd.f32 %v1012, 1.0
  %v1014 = vrcp.pop %v1013
  %v1015 = vmul.f32 1.0, %v1014
  %s1016 = scalar_lea.vmem %s6, 8
  %v1017 = vld [vmem:[%s1016] sm:$0xf]
  %v1018 = vld [vmem:[%s1016 + $0x4] sm:$0xf]
  %v1021 = vunpack.c.l.b16 %v1017
  %v1022 = vunpack.c.l.b16 %v1018
  %v1023 = vpack.c.b16 %v1022, %v1021
  %1025 = vmatprep.subr.bf16.mxu0 0
  %1026 = vmatpush1.bf16.msra.mxu0 %v1023
  %1027 = vmatprep.subr.bf16.mxu0 0
  %1028 = vmatpush1.bf16.msra.mxu0 0
  %1029 = vmatprep.subr.bf16.mxu0 0
  %1030 = vmatpush1.bf16.msra.mxu0 0
  %1031 = vmatprep.subr.bf16.mxu0 0
  %1032 = vmatpush1.bf16.msra.mxu0 0
  %1033 = vmatprep.subr.bf16.mxu0 0
  %1034 = vmatpush1.bf16.msra.mxu0 0
  %1035 = vmatprep.subr.bf16.mxu0 0
  %1036 = vmatpush1.bf16.msra.mxu0 0
  %1037 = vmatprep.subr.bf16.mxu0 0
  %1038 = vmatpush1.bf16.msra.mxu0 0
  %1039 = vmatprep.subr.bf16.mxu0 0
  %1040 = vmatpush1.bf16.msra.mxu0 0
  %1041 = vmatprep.subr.bf16.mxu0 0
  %1042 = vmatpush1.bf16.msra.mxu0 0
  %1043 = vmatprep.subr.bf16.mxu0 0
  %1044 = vmatpush1.bf16.msra.mxu0 0
  %1045 = vmatprep.subr.bf16.mxu0 0
  %1046 = vmatpush1.bf16.msra.mxu0 0
  %1047 = vmatprep.subr.bf16.mxu0 0
  %1048 = vmatpush1.bf16.msra.mxu0 0
  %1049 = vmatprep.subr.bf16.mxu0 0
  %1050 = vmatpush1.bf16.msra.mxu0 0
  %1051 = vmatprep.subr.bf16.mxu0 0
  %1052 = vmatpush1.bf16.msra.mxu0 0
  %1053 = vmatprep.subr.bf16.mxu0 0
  %1054 = vmatpush1.bf16.msra.mxu0 0
  %1055 = vmatprep.subr.bf16.mxu0 0
  %1056 = vmatpush1.bf16.msra.mxu0 0
  %1057 = vmatprep.mubr.bf16.mxu0 0
  %1058 = vmatmul.mubr.bf16.gmra.mrb[0].mxu0 %v736
  %v1059 = vpop.f32.mrb[0].mxu0
  %v1060 = vadd.f32 0.0, %v1059
  %v1061 = vpop.f32.mrb[0].mxu0
  %v1062 = vpop.f32.mrb[0].mxu0
  %v1063 = vpop.f32.mrb[0].mxu0
  %1064 = vdwg.mxu0
  %v1065 = vadd.f32 %v558, %v1060
  %v1066 = vxor.u32 %v1065, 2147483648
  %v1067 = vmul.f32 %v1066, 1.442695
  %v1068 = vpow.pop %v1067
  %v1069 = vadd.f32 %v1068, 1.0
  %v1070 = vrcp.pop %v1069
  %v1071 = vmul.f32 1.0, %v1070
  %s1072 = scalar_lea.vmem %s6, 16
  %v1073 = vld [vmem:[%s1072] sm:$0xf]
  %v1074 = vld [vmem:[%s1072 + $0x4] sm:$0xf]
  %v1077 = vunpack.c.l.b16 %v1073
  %v1078 = vunpack.c.l.b16 %v1074
  %v1079 = vpack.c.b16 %v1078, %v1077
  %1081 = vmatprep.subr.bf16.mxu0 0
  %1082 = vmatpush1.bf16.msra.mxu0 %v1079
  %1083 = vmatprep.subr.bf16.mxu0 0
  %1084 = vmatpush1.bf16.msra.mxu0 0
  %1085 = vmatprep.subr.bf16.mxu0 0
  %1086 = vmatpush1.bf16.msra.mxu0 0
  %1087 = vmatprep.subr.bf16.mxu0 0
  %1088 = vmatpush1.bf16.msra.mxu0 0
  %1089 = vmatprep.subr.bf16.mxu0 0
  %1090 = vmatpush1.bf16.msra.mxu0 0
  %1091 = vmatprep.subr.bf16.mxu0 0
  %1092 = vmatpush1.bf16.msra.mxu0 0
  %1093 = vmatprep.subr.bf16.mxu0 0
  %1094 = vmatpush1.bf16.msra.mxu0 0
  %1095 = vmatprep.subr.bf16.mxu0 0
  %1096 = vmatpush1.bf16.msra.mxu0 0
  %1097 = vmatprep.subr.bf16.mxu0 0
  %1098 = vmatpush1.bf16.msra.mxu0 0
  %1099 = vmatprep.subr.bf16.mxu0 0
  %1100 = vmatpush1.bf16.msra.mxu0 0
  %1101 = vmatprep.subr.bf16.mxu0 0
  %1102 = vmatpush1.bf16.msra.mxu0 0
  %1103 = vmatprep.subr.bf16.mxu0 0
  %1104 = vmatpush1.bf16.msra.mxu0 0
  %1105 = vmatprep.subr.bf16.mxu0 0
  %1106 = vmatpush1.bf16.msra.mxu0 0
  %1107 = vmatprep.subr.bf16.mxu0 0
  %1108 = vmatpush1.bf16.msra.mxu0 0
  %1109 = vmatprep.subr.bf16.mxu0 0
  %1110 = vmatpush1.bf16.msra.mxu0 0
  %1111 = vmatprep.subr.bf16.mxu0 0
  %1112 = vmatpush1.bf16.msra.mxu0 0
  %1113 = vmatprep.mubr.bf16.mxu0 0
  %1114 = vmatmul.mubr.bf16.gmra.mrb[0].mxu0 %v736
  %v1115 = vpop.f32.mrb[0].mxu0
  %v1116 = vadd.f32 0.0, %v1115
  %v1117 = vpop.f32.mrb[0].mxu0
  %v1118 = vpop.f32.mrb[0].mxu0
  %v1119 = vpop.f32.mrb[0].mxu0
  %1120 = vdwg.mxu0
  %v1121 = vadd.f32 %v640, %v1116
  %v1122 = vtanh.pop %v1121
  %s1123 = scalar_lea.vmem %s6, 24
  %v1124 = vld [vmem:[%s1123] sm:$0xf]
  %v1125 = vld [vmem:[%s1123 + $0x4] sm:$0xf]
  %v1128 = vunpack.c.l.b16 %v1124
  %v1129 = vunpack.c.l.b16 %v1125
  %v1130 = vpack.c.b16 %v1129, %v1128
  %1132 = vmatprep.subr.bf16.mxu0 0
  %1133 = vmatpush1.bf16.msra.mxu0 %v1130
  %1134 = vmatprep.subr.bf16.mxu0 0
  %1135 = vmatpush1.bf16.msra.mxu0 0
  %1136 = vmatprep.subr.bf16.mxu0 0
  %1137 = vmatpush1.bf16.msra.mxu0 0
  %1138 = vmatprep.subr.bf16.mxu0 0
  %1139 = vmatpush1.bf16.msra.mxu0 0
  %1140 = vmatprep.subr.bf16.mxu0 0
  %1141 = vmatpush1.bf16.msra.mxu0 0
  %1142 = vmatprep.subr.bf16.mxu0 0
  %1143 = vmatpush1.bf16.msra.mxu0 0
  %1144 = vmatprep.subr.bf16.mxu0 0
  %1145 = vmatpush1.bf16.msra.mxu0 0
  %1146 = vmatprep.subr.bf16.mxu0 0
  %1147 = vmatpush1.bf16.msra.mxu0 0
  %1148 = vmatprep.subr.bf16.mxu0 0
  %1149 = vmatpush1.bf16.msra.mxu0 0
  %1150 = vmatprep.subr.bf16.mxu0 0
  %1151 = vmatpush1.bf16.msra.mxu0 0
  %1152 = vmatprep.subr.bf16.mxu0 0
  %1153 = vmatpush1.bf16.msra.mxu0 0
  %1154 = vmatprep.subr.bf16.mxu0 0
  %1155 = vmatpush1.bf16.msra.mxu0 0
  %1156 = vmatprep.subr.bf16.mxu0 0
  %1157 = vmatpush1.bf16.msra.mxu0 0
  %1158 = vmatprep.subr.bf16.mxu0 0
  %1159 = vmatpush1.bf16.msra.mxu0 0
  %1160 = vmatprep.subr.bf16.mxu0 0
  %1161 = vmatpush1.bf16.msra.mxu0 0
  %1162 = vmatprep.subr.bf16.mxu0 0
  %1163 = vmatpush1.bf16.msra.mxu0 0
  %1164 = vmatprep.mubr.bf16.mxu0 0
  %1165 = vmatmul.mubr.bf16.gmra.mrb[0].mxu0 %v736
  %v1166 = vpop.f32.mrb[0].mxu0
  %v1167 = vadd.f32 0.0, %v1166
  %v1168 = vpop.f32.mrb[0].mxu0
  %v1169 = vpop.f32.mrb[0].mxu0
  %v1170 = vpop.f32.mrb[0].mxu0
  %1171 = vdwg.mxu0
  %v1172 = vadd.f32 %v722, %v1167
  %v1173 = vxor.u32 %v1172, 2147483648
  %v1174 = vmul.f32 %v1173, 1.442695
  %v1175 = vpow.pop %v1174
  %v1176 = vadd.f32 %v1175, 1.0
  %v1177 = vrcp.pop %v1176
  %v1178 = vmul.f32 1.0, %v1177
  %v1179 = vmul.f32 %v1071, 0.0
  %v1180 = vmul.f32 %v1015, %v1122
  %v1181 = vadd.f32 %v1179, %v1180
  %v1182 = vsel %vm960, 1, 0
  %1183 = vset.pattern.permute.xlu0 0
  %1184 = vperm.xlu0 %1183, %v1182
  %v1185 = vpop.permute.xlu0 %1184
  %vm1186 = vcmp.eq.s32.totalorder %v1185, 1
  %v1187 = vsel %vm1186, %v1181, 0.0
  %v1188 = vtanh.pop %v1187
  %v1189 = vmul.f32 %v1178, %v1188
  %v1190 = vsel %vm1186, %v1189, 0.0
  %1191 = vst.msk [vmem:[%s8] sm:$0xff] %vm75, %v959
  %s1192 = scalar_lea.vmem %s9, 56
  %1193 = vst.msk [vmem:[%s1192] sm:$0xff] %vm75, %v1190
  %vm1194 = vcmp.gt.s32.totalorder %v725, 1
  %v1195 = vpack.c.bf16 %v959, %v959
  %v1196 = vld [vmem:[%s3] sm:$0xf]
  %v1197 = vld [vmem:[%s3 + $0x4] sm:$0xf]
  %v1200 = vunpack.c.l.b16 %v1196
  %v1201 = vunpack.c.l.b16 %v1197
  %v1202 = vpack.c.b16 %v1201, %v1200
  %v1205 = vsel %vm75, %v1195, 0
  %1207 = vmatprep.subr.bf16.mxu0 0
  %1208 = vmatpush1.bf16.msra.mxu0 %v1202
  %1209 = vmatprep.subr.bf16.mxu0 0
  %1210 = vmatpush1.bf16.msra.mxu0 0
  %1211 = vmatprep.subr.bf16.mxu0 0
  %1212 = vmatpush1.bf16.msra.mxu0 0
  %1213 = vmatprep.subr.bf16.mxu0 0
  %1214 = vmatpush1.bf16.msra.mxu0 0
  %1215 = vmatprep.subr.bf16.mxu0 0
  %1216 = vmatpush1.bf16.msra.mxu0 0
  %1217 = vmatprep.subr.bf16.mxu0 0
  %1218 = vmatpush1.bf16.msra.mxu0 0
  %1219 = vmatprep.subr.bf16.mxu0 0
  %1220 = vmatpush1.bf16.msra.mxu0 0
  %1221 = vmatprep.subr.bf16.mxu0 0
  %1222 = vmatpush1.bf16.msra.mxu0 0
  %1223 = vmatprep.subr.bf16.mxu0 0
  %1224 = vmatpush1.bf16.msra.mxu0 0
  %1225 = vmatprep.subr.bf16.mxu0 0
  %1226 = vmatpush1.bf16.msra.mxu0 0
  %1227 = vmatprep.subr.bf16.mxu0 0
  %1228 = vmatpush1.bf16.msra.mxu0 0
  %1229 = vmatprep.subr.bf16.mxu0 0
  %1230 = vmatpush1.bf16.msra.mxu0 0
  %1231 = vmatprep.subr.bf16.mxu0 0
  %1232 = vmatpush1.bf16.msra.mxu0 0
  %1233 = vmatprep.subr.bf16.mxu0 0
  %1234 = vmatpush1.bf16.msra.mxu0 0
  %1235 = vmatprep.subr.bf16.mxu0 0
  %1236 = vmatpush1.bf16.msra.mxu0 0
  %1237 = vmatprep.subr.bf16.mxu0 0
  %1238 = vmatpush1.bf16.msra.mxu0 0
  %1239 = vmatprep.mubr.bf16.mxu0 0
  %1240 = vmatmul.mubr.bf16.gmra.mrb[0].mxu0 %v1205
  %v1241 = vpop.f32.mrb[0].mxu0
  %v1242 = vadd.f32 0.0, %v1241
  %v1243 = vpop.f32.mrb[0].mxu0
  %v1244 = vpop.f32.mrb[0].mxu0
  %v1245 = vpop.f32.mrb[0].mxu0
  %1246 = vdwg.mxu0
  %v1247 = vadd.f32 %v126, %v1242
  %v1248 = vxor.u32 %v1247, 2147483648
  %v1249 = vmul.f32 %v1248, 1.442695
  %v1250 = vpow.pop %v1249
  %v1251 = vadd.f32 %v1250, 1.0
  %v1252 = vrcp.pop %v1251
  %v1253 = vmul.f32 1.0, %v1252
  %v1254 = vld [vmem:[%s785] sm:$0xf]
  %v1255 = vld [vmem:[%s785 + $0x4] sm:$0xf]
  %v1258 = vunpack.c.l.b16 %v1254
  %v1259 = vunpack.c.l.b16 %v1255
  %v1260 = vpack.c.b16 %v1259, %v1258
  %1262 = vmatprep.subr.bf16.mxu0 0
  %1263 = vmatpush1.bf16.msra.mxu0 %v1260
  %1264 = vmatprep.subr.bf16.mxu0 0
  %1265 = vmatpush1.bf16.msra.mxu0 0
  %1266 = vmatprep.subr.bf16.mxu0 0
  %1267 = vmatpush1.bf16.msra.mxu0 0
  %1268 = vmatprep.subr.bf16.mxu0 0
  %1269 = vmatpush1.bf16.msra.mxu0 0
  %1270 = vmatprep.subr.bf16.mxu0 0
  %1271 = vmatpush1.bf16.msra.mxu0 0
  %1272 = vmatprep.subr.bf16.mxu0 0
  %1273 = vmatpush1.bf16.msra.mxu0 0
  %1274 = vmatprep.subr.bf16.mxu0 0
  %1275 = vmatpush1.bf16.msra.mxu0 0
  %1276 = vmatprep.subr.bf16.mxu0 0
  %1277 = vmatpush1.bf16.msra.mxu0 0
  %1278 = vmatprep.subr.bf16.mxu0 0
  %1279 = vmatpush1.bf16.msra.mxu0 0
  %1280 = vmatprep.subr.bf16.mxu0 0
  %1281 = vmatpush1.bf16.msra.mxu0 0
  %1282 = vmatprep.subr.bf16.mxu0 0
  %1283 = vmatpush1.bf16.msra.mxu0 0
  %1284 = vmatprep.subr.bf16.mxu0 0
  %1285 = vmatpush1.bf16.msra.mxu0 0
  %1286 = vmatprep.subr.bf16.mxu0 0
  %1287 = vmatpush1.bf16.msra.mxu0 0
  %1288 = vmatprep.subr.bf16.mxu0 0
  %1289 = vmatpush1.bf16.msra.mxu0 0
  %1290 = vmatprep.subr.bf16.mxu0 0
  %1291 = vmatpush1.bf16.msra.mxu0 0
  %1292 = vmatprep.subr.bf16.mxu0 0
  %1293 = vmatpush1.bf16.msra.mxu0 0
  %1294 = vmatprep.mubr.bf16.mxu0 0
  %1295 = vmatmul.mubr.bf16.gmra.mrb[0].mxu0 %v1205
  %v1296 = vpop.f32.mrb[0].mxu0
  %v1297 = vadd.f32 0.0, %v1296
  %v1298 = vpop.f32.mrb[0].mxu0
  %v1299 = vpop.f32.mrb[0].mxu0
  %v1300 = vpop.f32.mrb[0].mxu0
  %1301 = vdwg.mxu0
  %v1302 = vadd.f32 %v208, %v1297
  %v1303 = vxor.u32 %v1302, 2147483648
  %v1304 = vmul.f32 %v1303, 1.442695
  %v1305 = vpow.pop %v1304
  %v1306 = vadd.f32 %v1305, 1.0
  %v1307 = vrcp.pop %v1306
  %v1308 = vmul.f32 1.0, %v1307
  %v1309 = vld [vmem:[%s841] sm:$0xf]
  %v1310 = vld [vmem:[%s841 + $0x4] sm:$0xf]
  %v1313 = vunpack.c.l.b16 %v1309
  %v1314 = vunpack.c.l.b16 %v1310
  %v1315 = vpack.c.b16 %v1314, %v1313
  %1317 = vmatprep.subr.bf16.mxu0 0
  %1318 = vmatpush1.bf16.msra.mxu0 %v1315
  %1319 = vmatprep.subr.bf16.mxu0 0
  %1320 = vmatpush1.bf16.msra.mxu0 0
  %1321 = vmatprep.subr.bf16.mxu0 0
  %1322 = vmatpush1.bf16.msra.mxu0 0
  %1323 = vmatprep.subr.bf16.mxu0 0
  %1324 = vmatpush1.bf16.msra.mxu0 0
  %1325 = vmatprep.subr.bf16.mxu0 0
  %1326 = vmatpush1.bf16.msra.mxu0 0
  %1327 = vmatprep.subr.bf16.mxu0 0
  %1328 = vmatpush1.bf16.msra.mxu0 0
  %1329 = vmatprep.subr.bf16.mxu0 0
  %1330 = vmatpush1.bf16.msra.mxu0 0
  %1331 = vmatprep.subr.bf16.mxu0 0
  %1332 = vmatpush1.bf16.msra.mxu0 0
  %1333 = vmatprep.subr.bf16.mxu0 0
  %1334 = vmatpush1.bf16.msra.mxu0 0
  %1335 = vmatprep.subr.bf16.mxu0 0
  %1336 = vmatpush1.bf16.msra.mxu0 0
  %1337 = vmatprep.subr.bf16.mxu0 0
  %1338 = vmatpush1.bf16.msra.mxu0 0
  %1339 = vmatprep.subr.bf16.mxu0 0
  %1340 = vmatpush1.bf16.msra.mxu0 0
  %1341 = vmatprep.subr.bf16.mxu0 0
  %1342 = vmatpush1.bf16.msra.mxu0 0
  %1343 = vmatprep.subr.bf16.mxu0 0
  %1344 = vmatpush1.bf16.msra.mxu0 0
  %1345 = vmatprep.subr.bf16.mxu0 0
  %1346 = vmatpush1.bf16.msra.mxu0 0
  %1347 = vmatprep.subr.bf16.mxu0 0
  %1348 = vmatpush1.bf16.msra.mxu0 0
  %1349 = vmatprep.mubr.bf16.mxu0 0
  %1350 = vmatmul.mubr.bf16.gmra.mrb[0].mxu0 %v1205
  %v1351 = vpop.f32.mrb[0].mxu0
  %v1352 = vadd.f32 0.0, %v1351
  %v1353 = vpop.f32.mrb[0].mxu0
  %v1354 = vpop.f32.mrb[0].mxu0
  %v1355 = vpop.f32.mrb[0].mxu0
  %1356 = vdwg.mxu0
  %v1357 = vadd.f32 %v290, %v1352
  %v1358 = vtanh.pop %v1357
  %v1359 = vld [vmem:[%s892] sm:$0xf]
  %v1360 = vld [vmem:[%s892 + $0x4] sm:$0xf]
  %v1363 = vunpack.c.l.b16 %v1359
  %v1364 = vunpack.c.l.b16 %v1360
  %v1365 = vpack.c.b16 %v1364, %v1363
  %1367 = vmatprep.subr.bf16.mxu0 0
  %1368 = vmatpush1.bf16.msra.mxu0 %v1365
  %1369 = vmatprep.subr.bf16.mxu0 0
  %1370 = vmatpush1.bf16.msra.mxu0 0
  %1371 = vmatprep.subr.bf16.mxu0 0
  %1372 = vmatpush1.bf16.msra.mxu0 0
  %1373 = vmatprep.subr.bf16.mxu0 0
  %1374 = vmatpush1.bf16.msra.mxu0 0
  %1375 = vmatprep.subr.bf16.mxu0 0
  %1376 = vmatpush1.bf16.msra.mxu0 0
  %1377 = vmatprep.subr.bf16.mxu0 0
  %1378 = vmatpush1.bf16.msra.mxu0 0
  %1379 = vmatprep.subr.bf16.mxu0 0
  %1380 = vmatpush1.bf16.msra.mxu0 0
  %1381 = vmatprep.subr.bf16.mxu0 0
  %1382 = vmatpush1.bf16.msra.mxu0 0
  %1383 = vmatprep.subr.bf16.mxu0 0
  %1384 = vmatpush1.bf16.msra.mxu0 0
  %1385 = vmatprep.subr.bf16.mxu0 0
  %1386 = vmatpush1.bf16.msra.mxu0 0
  %1387 = vmatprep.subr.bf16.mxu0 0
  %1388 = vmatpush1.bf16.msra.mxu0 0
  %1389 = vmatprep.subr.bf16.mxu0 0
  %1390 = vmatpush1.bf16.msra.mxu0 0
  %1391 = vmatprep.subr.bf16.mxu0 0
  %1392 = vmatpush1.bf16.msra.mxu0 0
  %1393 = vmatprep.subr.bf16.mxu0 0
  %1394 = vmatpush1.bf16.msra.mxu0 0
  %1395 = vmatprep.subr.bf16.mxu0 0
  %1396 = vmatpush1.bf16.msra.mxu0 0
  %1397 = vmatprep.subr.bf16.mxu0 0
  %1398 = vmatpush1.bf16.msra.mxu0 0
  %1399 = vmatprep.mubr.bf16.mxu0 0
  %1400 = vmatmul.mubr.bf16.gmra.mrb[0].mxu0 %v1205
  %v1401 = vpop.f32.mrb[0].mxu0
  %v1402 = vadd.f32 0.0, %v1401
  %v1403 = vpop.f32.mrb[0].mxu0
  %v1404 = vpop.f32.mrb[0].mxu0
  %v1405 = vpop.f32.mrb[0].mxu0
  %1406 = vdwg.mxu0
  %v1407 = vadd.f32 %v372, %v1402
  %v1408 = vxor.u32 %v1407, 2147483648
  %v1409 = vmul.f32 %v1408, 1.442695
  %v1410 = vpow.pop %v1409
  %v1411 = vadd.f32 %v1410, 1.0
  %v1412 = vrcp.pop %v1411
  %v1413 = vmul.f32 1.0, %v1412
  %v1414 = vmul.f32 %v1308, %v956
  %v1415 = vmul.f32 %v1253, %v1358
  %v1416 = vadd.f32 %v1414, %v1415
  %v1417 = vsel %vm1194, 1, 0
  %1418 = vset.pattern.permute.xlu0 0
  %1419 = vperm.xlu0 %1418, %v1417
  %v1420 = vpop.permute.xlu0 %1419
  %vm1421 = vcmp.eq.s32.totalorder %v1420, 1
  %v1422 = vsel %vm1421, %v1416, 0.0
  %v1423 = vtanh.pop %v1422
  %v1424 = vmul.f32 %v1413, %v1423
  %v1425 = vsel %vm1421, %v1424, 0.0
  %vm1426 = vcmp.gt.s32.totalorder %v725, 6
  %v1427 = vpack.c.bf16 %v1190, %v1190
  %v1428 = vld [vmem:[%s6] sm:$0xf]
  %v1429 = vld [vmem:[%s6 + $0x4] sm:$0xf]
  %v1432 = vunpack.c.l.b16 %v1428
  %v1433 = vunpack.c.l.b16 %v1429
  %v1434 = vpack.c.b16 %v1433, %v1432
  %v1437 = vsel %vm75, %v1427, 0
  %1439 = vmatprep.subr.bf16.mxu0 0
  %1440 = vmatpush1.bf16.msra.mxu0 %v1434
  %1441 = vmatprep.subr.bf16.mxu0 0
  %1442 = vmatpush1.bf16.msra.mxu0 0
  %1443 = vmatprep.subr.bf16.mxu0 0
  %1444 = vmatpush1.bf16.msra.mxu0 0
  %1445 = vmatprep.subr.bf16.mxu0 0
  %1446 = vmatpush1.bf16.msra.mxu0 0
  %1447 = vmatprep.subr.bf16.mxu0 0
  %1448 = vmatpush1.bf16.msra.mxu0 0
  %1449 = vmatprep.subr.bf16.mxu0 0
  %1450 = vmatpush1.bf16.msra.mxu0 0
  %1451 = vmatprep.subr.bf16.mxu0 0
  %1452 = vmatpush1.bf16.msra.mxu0 0
  %1453 = vmatprep.subr.bf16.mxu0 0
  %1454 = vmatpush1.bf16.msra.mxu0 0
  %1455 = vmatprep.subr.bf16.mxu0 0
  %1456 = vmatpush1.bf16.msra.mxu0 0
  %1457 = vmatprep.subr.bf16.mxu0 0
  %1458 = vmatpush1.bf16.msra.mxu0 0
  %1459 = vmatprep.subr.bf16.mxu0 0
  %1460 = vmatpush1.bf16.msra.mxu0 0
  %1461 = vmatprep.subr.bf16.mxu0 0
  %1462 = vmatpush1.bf16.msra.mxu0 0
  %1463 = vmatprep.subr.bf16.mxu0 0
  %1464 = vmatpush1.bf16.msra.mxu0 0
  %1465 = vmatprep.subr.bf16.mxu0 0
  %1466 = vmatpush1.bf16.msra.mxu0 0
  %1467 = vmatprep.subr.bf16.mxu0 0
  %1468 = vmatpush1.bf16.msra.mxu0 0
  %1469 = vmatprep.subr.bf16.mxu0 0
  %1470 = vmatpush1.bf16.msra.mxu0 0
  %1471 = vmatprep.mubr.bf16.mxu0 0
  %1472 = vmatmul.mubr.bf16.gmra.mrb[0].mxu0 %v1437
  %v1473 = vpop.f32.mrb[0].mxu0
  %v1474 = vadd.f32 0.0, %v1473
  %v1475 = vpop.f32.mrb[0].mxu0
  %v1476 = vpop.f32.mrb[0].mxu0
  %v1477 = vpop.f32.mrb[0].mxu0
  %1478 = vdwg.mxu0
  %v1479 = vadd.f32 %v473, %v1474
  %v1480 = vxor.u32 %v1479, 2147483648
  %v1481 = vmul.f32 %v1480, 1.442695
  %v1482 = vpow.pop %v1481
  %v1483 = vadd.f32 %v1482, 1.0
  %v1484 = vrcp.pop %v1483
  %v1485 = vmul.f32 1.0, %v1484
  %v1486 = vld [vmem:[%s1016] sm:$0xf]
  %v1487 = vld [vmem:[%s1016 + $0x4] sm:$0xf]
  %v1490 = vunpack.c.l.b16 %v1486
  %v1491 = vunpack.c.l.b16 %v1487
  %v1492 = vpack.c.b16 %v1491, %v1490
  %1494 = vmatprep.subr.bf16.mxu0 0
  %1495 = vmatpush1.bf16.msra.mxu0 %v1492
  %1496 = vmatprep.subr.bf16.mxu0 0
  %1497 = vmatpush1.bf16.msra.mxu0 0
  %1498 = vmatprep.subr.bf16.mxu0 0
  %1499 = vmatpush1.bf16.msra.mxu0 0
  %1500 = vmatprep.subr.bf16.mxu0 0
  %1501 = vmatpush1.bf16.msra.mxu0 0
  %1502 = vmatprep.subr.bf16.mxu0 0
  %1503 = vmatpush1.bf16.msra.mxu0 0
  %1504 = vmatprep.subr.bf16.mxu0 0
  %1505 = vmatpush1.bf16.msra.mxu0 0
  %1506 = vmatprep.subr.bf16.mxu0 0
  %1507 = vmatpush1.bf16.msra.mxu0 0
  %1508 = vmatprep.subr.bf16.mxu0 0
  %1509 = vmatpush1.bf16.msra.mxu0 0
  %1510 = vmatprep.subr.bf16.mxu0 0
  %1511 = vmatpush1.bf16.msra.mxu0 0
  %1512 = vmatprep.subr.bf16.mxu0 0
  %1513 = vmatpush1.bf16.msra.mxu0 0
  %1514 = vmatprep.subr.bf16.mxu0 0
  %1515 = vmatpush1.bf16.msra.mxu0 0
  %1516 = vmatprep.subr.bf16.mxu0 0
  %1517 = vmatpush1.bf16.msra.mxu0 0
  %1518 = vmatprep.subr.bf16.mxu0 0
  %1519 = vmatpush1.bf16.msra.mxu0 0
  %1520 = vmatprep.subr.bf16.mxu0 0
  %1521 = vmatpush1.bf16.msra.mxu0 0
  %1522 = vmatprep.subr.bf16.mxu0 0
  %1523 = vmatpush1.bf16.msra.mxu0 0
  %1524 = vmatprep.subr.bf16.mxu0 0
  %1525 = vmatpush1.bf16.msra.mxu0 0
  %1526 = vmatprep.mubr.bf16.mxu0 0
  %1527 = vmatmul.mubr.bf16.gmra.mrb[0].mxu0 %v1437
  %v1528 = vpop.f32.mrb[0].mxu0
  %v1529 = vadd.f32 0.0, %v1528
  %v1530 = vpop.f32.mrb[0].mxu0
  %v1531 = vpop.f32.mrb[0].mxu0
  %v1532 = vpop.f32.mrb[0].mxu0
  %1533 = vdwg.mxu0
  %v1534 = vadd.f32 %v555, %v1529
  %v1535 = vxor.u32 %v1534, 2147483648
  %v1536 = vmul.f32 %v1535, 1.442695
  %v1537 = vpow.pop %v1536
  %v1538 = vadd.f32 %v1537, 1.0
  %v1539 = vrcp.pop %v1538
  %v1540 = vmul.f32 1.0, %v1539
  %v1541 = vld [vmem:[%s1072] sm:$0xf]
  %v1542 = vld [vmem:[%s1072 + $0x4] sm:$0xf]
  %v1545 = vunpack.c.l.b16 %v1541
  %v1546 = vunpack.c.l.b16 %v1542
  %v1547 = vpack.c.b16 %v1546, %v1545
  %1549 = vmatprep.subr.bf16.mxu0 0
  %1550 = vmatpush1.bf16.msra.mxu0 %v1547
  %1551 = vmatprep.subr.bf16.mxu0 0
  %1552 = vmatpush1.bf16.msra.mxu0 0
  %1553 = vmatprep.subr.bf16.mxu0 0
  %1554 = vmatpush1.bf16.msra.mxu0 0
  %1555 = vmatprep.subr.bf16.mxu0 0
  %1556 = vmatpush1.bf16.msra.mxu0 0
  %1557 = vmatprep.subr.bf16.mxu0 0
  %1558 = vmatpush1.bf16.msra.mxu0 0
  %1559 = vmatprep.subr.bf16.mxu0 0
  %1560 = vmatpush1.bf16.msra.mxu0 0
  %1561 = vmatprep.subr.bf16.mxu0 0
  %1562 = vmatpush1.bf16.msra.mxu0 0
  %1563 = vmatprep.subr.bf16.mxu0 0
  %1564 = vmatpush1.bf16.msra.mxu0 0
  %1565 = vmatprep.subr.bf16.mxu0 0
  %1566 = vmatpush1.bf16.msra.mxu0 0
  %1567 = vmatprep.subr.bf16.mxu0 0
  %1568 = vmatpush1.bf16.msra.mxu0 0
  %1569 = vmatprep.subr.bf16.mxu0 0
  %1570 = vmatpush1.bf16.msra.mxu0 0
  %1571 = vmatprep.subr.bf16.mxu0 0
  %1572 = vmatpush1.bf16.msra.mxu0 0
  %1573 = vmatprep.subr.bf16.mxu0 0
  %1574 = vmatpush1.bf16.msra.mxu0 0
  %1575 = vmatprep.subr.bf16.mxu0 0
  %1576 = vmatpush1.bf16.msra.mxu0 0
  %1577 = vmatprep.subr.bf16.mxu0 0
  %1578 = vmatpush1.bf16.msra.mxu0 0
  %1579 = vmatprep.subr.bf16.mxu0 0
  %1580 = vmatpush1.bf16.msra.mxu0 0
  %1581 = vmatprep.mubr.bf16.mxu0 0
  %1582 = vmatmul.mubr.bf16.gmra.mrb[0].mxu0 %v1437
  %v1583 = vpop.f32.mrb[0].mxu0
  %v1584 = vadd.f32 0.0, %v1583
  %v1585 = vpop.f32.mrb[0].mxu0
  %v1586 = vpop.f32.mrb[0].mxu0
  %v1587 = vpop.f32.mrb[0].mxu0
  %1588 = vdwg.mxu0
  %v1589 = vadd.f32 %v637, %v1584
  %v1590 = vtanh.pop %v1589
  %v1591 = vld [vmem:[%s1123] sm:$0xf]
  %v1592 = vld [vmem:[%s1123 + $0x4] sm:$0xf]
  %v1595 = vunpack.c.l.b16 %v1591
  %v1596 = vunpack.c.l.b16 %v1592
  %v1597 = vpack.c.b16 %v1596, %v1595
  %1599 = vmatprep.subr.bf16.mxu0 0
  %1600 = vmatpush1.bf16.msra.mxu0 %v1597
  %1601 = vmatprep.subr.bf16.mxu0 0
  %1602 = vmatpush1.bf16.msra.mxu0 0
  %1603 = vmatprep.subr.bf16.mxu0 0
  %1604 = vmatpush1.bf16.msra.mxu0 0
  %1605 = vmatprep.subr.bf16.mxu0 0
  %1606 = vmatpush1.bf16.msra.mxu0 0
  %1607 = vmatprep.subr.bf16.mxu0 0
  %1608 = vmatpush1.bf16.msra.mxu0 0
  %1609 = vmatprep.subr.bf16.mxu0 0
  %1610 = vmatpush1.bf16.msra.mxu0 0
  %1611 = vmatprep.subr.bf16.mxu0 0
  %1612 = vmatpush1.bf16.msra.mxu0 0
  %1613 = vmatprep.subr.bf16.mxu0 0
  %1614 = vmatpush1.bf16.msra.mxu0 0
  %1615 = vmatprep.subr.bf16.mxu0 0
  %1616 = vmatpush1.bf16.msra.mxu0 0
  %1617 = vmatprep.subr.bf16.mxu0 0
  %1618 = vmatpush1.bf16.msra.mxu0 0
  %1619 = vmatprep.subr.bf16.mxu0 0
  %1620 = vmatpush1.bf16.msra.mxu0 0
  %1621 = vmatprep.subr.bf16.mxu0 0
  %1622 = vmatpush1.bf16.msra.mxu0 0
  %1623 = vmatprep.subr.bf16.mxu0 0
  %1624 = vmatpush1.bf16.msra.mxu0 0
  %1625 = vmatprep.subr.bf16.mxu0 0
  %1626 = vmatpush1.bf16.msra.mxu0 0
  %1627 = vmatprep.subr.bf16.mxu0 0
  %1628 = vmatpush1.bf16.msra.mxu0 0
  %1629 = vmatprep.subr.bf16.mxu0 0
  %1630 = vmatpush1.bf16.msra.mxu0 0
  %1631 = vmatprep.mubr.bf16.mxu0 0
  %1632 = vmatmul.mubr.bf16.gmra.mrb[0].mxu0 %v1437
  %v1633 = vpop.f32.mrb[0].mxu0
  %v1634 = vadd.f32 0.0, %v1633
  %v1635 = vpop.f32.mrb[0].mxu0
  %v1636 = vpop.f32.mrb[0].mxu0
  %v1637 = vpop.f32.mrb[0].mxu0
  %1638 = vdwg.mxu0
  %v1639 = vadd.f32 %v719, %v1634
  %v1640 = vxor.u32 %v1639, 2147483648
  %v1641 = vmul.f32 %v1640, 1.442695
  %v1642 = vpow.pop %v1641
  %v1643 = vadd.f32 %v1642, 1.0
  %v1644 = vrcp.pop %v1643
  %v1645 = vmul.f32 1.0, %v1644
  %v1646 = vmul.f32 %v1540, %v1187
  %v1647 = vmul.f32 %v1485, %v1590
  %v1648 = vadd.f32 %v1646, %v1647
  %v1649 = vsel %vm1426, 1, 0
  %1650 = vset.pattern.permute.xlu0 0
  %1651 = vperm.xlu0 %1650, %v1649
  %v1652 = vpop.permute.xlu0 %1651
  %vm1653 = vcmp.eq.s32.totalorder %v1652, 1
  %v1654 = vsel %vm1653, %v1648, 0.0
  %v1655 = vtanh.pop %v1654
  %v1656 = vmul.f32 %v1645, %v1655
  %v1657 = vsel %vm1653, %v1656, 0.0
  %s1658 = scalar_lea.vmem %s8, 8
  %1659 = vst.msk [vmem:[%s1658] sm:$0xff] %vm75, %v1425
  %s1660 = scalar_lea.vmem %s9, 48
  %1661 = vst.msk [vmem:[%s1660] sm:$0xff] %vm75, %v1657
  %vm1662 = vcmp.gt.s32.totalorder %v725, 2
  %v1663 = vpack.c.bf16 %v1425, %v1425
  %v1664 = vld [vmem:[%s3] sm:$0xf]
  %v1665 = vld [vmem:[%s3 + $0x4] sm:$0xf]
  %v1668 = vunpack.c.l.b16 %v1664
  %v1669 = vunpack.c.l.b16 %v1665
  %v1670 = vpack.c.b16 %v1669, %v1668
  %v1673 = vsel %vm75, %v1663, 0
  %1675 = vmatprep.subr.bf16.mxu0 0
  %1676 = vmatpush1.bf16.msra.mxu0 %v1670
  %1677 = vmatprep.subr.bf16.mxu0 0
  %1678 = vmatpush1.bf16.msra.mxu0 0
  %1679 = vmatprep.subr.bf16.mxu0 0
  %1680 = vmatpush1.bf16.msra.mxu0 0
  %1681 = vmatprep.subr.bf16.mxu0 0
  %1682 = vmatpush1.bf16.msra.mxu0 0
  %1683 = vmatprep.subr.bf16.mxu0 0
  %1684 = vmatpush1.bf16.msra.mxu0 0
  %1685 = vmatprep.subr.bf16.mxu0 0
  %1686 = vmatpush1.bf16.msra.mxu0 0
  %1687 = vmatprep.subr.bf16.mxu0 0
  %1688 = vmatpush1.bf16.msra.mxu0 0
  %1689 = vmatprep.subr.bf16.mxu0 0
  %1690 = vmatpush1.bf16.msra.mxu0 0
  %1691 = vmatprep.subr.bf16.mxu0 0
  %1692 = vmatpush1.bf16.msra.mxu0 0
  %1693 = vmatprep.subr.bf16.mxu0 0
  %1694 = vmatpush1.bf16.msra.mxu0 0
  %1695 = vmatprep.subr.bf16.mxu0 0
  %1696 = vmatpush1.bf16.msra.mxu0 0
  %1697 = vmatprep.subr.bf16.mxu0 0
  %1698 = vmatpush1.bf16.msra.mxu0 0
  %1699 = vmatprep.subr.bf16.mxu0 0
  %1700 = vmatpush1.bf16.msra.mxu0 0
  %1701 = vmatprep.subr.bf16.mxu0 0
  %1702 = vmatpush1.bf16.msra.mxu0 0
  %1703 = vmatprep.subr.bf16.mxu0 0
  %1704 = vmatpush1.bf16.msra.mxu0 0
  %1705 = vmatprep.subr.bf16.mxu0 0
  %1706 = vmatpush1.bf16.msra.mxu0 0
  %1707 = vmatprep.mubr.bf16.mxu0 0
  %1708 = vmatmul.mubr.bf16.gmra.mrb[0].mxu0 %v1673
  %v1709 = vpop.f32.mrb[0].mxu0
  %v1710 = vadd.f32 0.0, %v1709
  %v1711 = vpop.f32.mrb[0].mxu0
  %v1712 = vpop.f32.mrb[0].mxu0
  %v1713 = vpop.f32.mrb[0].mxu0
  %1714 = vdwg.mxu0
  %v1715 = vadd.f32 %v131, %v1710
  %v1716 = vxor.u32 %v1715, 2147483648
  %v1717 = vmul.f32 %v1716, 1.442695
  %v1718 = vpow.pop %v1717
  %v1719 = vadd.f32 %v1718, 1.0
  %v1720 = vrcp.pop %v1719
  %v1721 = vmul.f32 1.0, %v1720
  %v1722 = vld [vmem:[%s785] sm:$0xf]
  %v1723 = vld [vmem:[%s785 + $0x4] sm:$0xf]
  %v1726 = vunpack.c.l.b16 %v1722
  %v1727 = vunpack.c.l.b16 %v1723
  %v1728 = vpack.c.b16 %v1727, %v1726
  %1730 = vmatprep.subr.bf16.mxu0 0
  %1731 = vmatpush1.bf16.msra.mxu0 %v1728
  %1732 = vmatprep.subr.bf16.mxu0 0
  %1733 = vmatpush1.bf16.msra.mxu0 0
  %1734 = vmatprep.subr.bf16.mxu0 0
  %1735 = vmatpush1.bf16.msra.mxu0 0
  %1736 = vmatprep.subr.bf16.mxu0 0
  %1737 = vmatpush1.bf16.msra.mxu0 0
  %1738 = vmatprep.subr.bf16.mxu0 0
  %1739 = vmatpush1.bf16.msra.mxu0 0
  %1740 = vmatprep.subr.bf16.mxu0 0
  %1741 = vmatpush1.bf16.msra.mxu0 0
  %1742 = vmatprep.subr.bf16.mxu0 0
  %1743 = vmatpush1.bf16.msra.mxu0 0
  %1744 = vmatprep.subr.bf16.mxu0 0
  %1745 = vmatpush1.bf16.msra.mxu0 0
  %1746 = vmatprep.subr.bf16.mxu0 0
  %1747 = vmatpush1.bf16.msra.mxu0 0
  %1748 = vmatprep.subr.bf16.mxu0 0
  %1749 = vmatpush1.bf16.msra.mxu0 0
  %1750 = vmatprep.subr.bf16.mxu0 0
  %1751 = vmatpush1.bf16.msra.mxu0 0
  %1752 = vmatprep.subr.bf16.mxu0 0
  %1753 = vmatpush1.bf16.msra.mxu0 0
  %1754 = vmatprep.subr.bf16.mxu0 0
  %1755 = vmatpush1.bf16.msra.mxu0 0
  %1756 = vmatprep.subr.bf16.mxu0 0
  %1757 = vmatpush1.bf16.msra.mxu0 0
  %1758 = vmatprep.subr.bf16.mxu0 0
  %1759 = vmatpush1.bf16.msra.mxu0 0
  %1760 = vmatprep.subr.bf16.mxu0 0
  %1761 = vmatpush1.bf16.msra.mxu0 0
  %1762 = vmatprep.mubr.bf16.mxu0 0
  %1763 = vmatmul.mubr.bf16.gmra.mrb[0].mxu0 %v1673
  %v1764 = vpop.f32.mrb[0].mxu0
  %v1765 = vadd.f32 0.0, %v1764
  %v1766 = vpop.f32.mrb[0].mxu0
  %v1767 = vpop.f32.mrb[0].mxu0
  %v1768 = vpop.f32.mrb[0].mxu0
  %1769 = vdwg.mxu0
  %v1770 = vadd.f32 %v213, %v1765
  %v1771 = vxor.u32 %v1770, 2147483648
  %v1772 = vmul.f32 %v1771, 1.442695
  %v1773 = vpow.pop %v1772
  %v1774 = vadd.f32 %v1773, 1.0
  %v1775 = vrcp.pop %v1774
  %v1776 = vmul.f32 1.0, %v1775
  %v1777 = vld [vmem:[%s841] sm:$0xf]
  %v1778 = vld [vmem:[%s841 + $0x4] sm:$0xf]
  %v1781 = vunpack.c.l.b16 %v1777
  %v1782 = vunpack.c.l.b16 %v1778
  %v1783 = vpack.c.b16 %v1782, %v1781
  %1785 = vmatprep.subr.bf16.mxu0 0
  %1786 = vmatpush1.bf16.msra.mxu0 %v1783
  %1787 = vmatprep.subr.bf16.mxu0 0
  %1788 = vmatpush1.bf16.msra.mxu0 0
  %1789 = vmatprep.subr.bf16.mxu0 0
  %1790 = vmatpush1.bf16.msra.mxu0 0
  %1791 = vmatprep.subr.bf16.mxu0 0
  %1792 = vmatpush1.bf16.msra.mxu0 0
  %1793 = vmatprep.subr.bf16.mxu0 0
  %1794 = vmatpush1.bf16.msra.mxu0 0
  %1795 = vmatprep.subr.bf16.mxu0 0
  %1796 = vmatpush1.bf16.msra.mxu0 0
  %1797 = vmatprep.subr.bf16.mxu0 0
  %1798 = vmatpush1.bf16.msra.mxu0 0
  %1799 = vmatprep.subr.bf16.mxu0 0
  %1800 = vmatpush1.bf16.msra.mxu0 0
  %1801 = vmatprep.subr.bf16.mxu0 0
  %1802 = vmatpush1.bf16.msra.mxu0 0
  %1803 = vmatprep.subr.bf16.mxu0 0
  %1804 = vmatpush1.bf16.msra.mxu0 0
  %1805 = vmatprep.subr.bf16.mxu0 0
  %1806 = vmatpush1.bf16.msra.mxu0 0
  %1807 = vmatprep.subr.bf16.mxu0 0
  %1808 = vmatpush1.bf16.msra.mxu0 0
  %1809 = vmatprep.subr.bf16.mxu0 0
  %1810 = vmatpush1.bf16.msra.mxu0 0
  %1811 = vmatprep.subr.bf16.mxu0 0
  %1812 = vmatpush1.bf16.msra.mxu0 0
  %1813 = vmatprep.subr.bf16.mxu0 0
  %1814 = vmatpush1.bf16.msra.mxu0 0
  %1815 = vmatprep.subr.bf16.mxu0 0
  %1816 = vmatpush1.bf16.msra.mxu0 0
  %1817 = vmatprep.mubr.bf16.mxu0 0
  %1818 = vmatmul.mubr.bf16.gmra.mrb[0].mxu0 %v1673
  %v1819 = vpop.f32.mrb[0].mxu0
  %v1820 = vadd.f32 0.0, %v1819
  %v1821 = vpop.f32.mrb[0].mxu0
  %v1822 = vpop.f32.mrb[0].mxu0
  %v1823 = vpop.f32.mrb[0].mxu0
  %1824 = vdwg.mxu0
  %v1825 = vadd.f32 %v295, %v1820
  %v1826 = vtanh.pop %v1825
  %v1827 = vld [vmem:[%s892] sm:$0xf]
  %v1828 = vld [vmem:[%s892 + $0x4] sm:$0xf]
  %v1831 = vunpack.c.l.b16 %v1827
  %v1832 = vunpack.c.l.b16 %v1828
  %v1833 = vpack.c.b16 %v1832, %v1831
  %1835 = vmatprep.subr.bf16.mxu0 0
  %1836 = vmatpush1.bf16.msra.mxu0 %v1833
  %1837 = vmatprep.subr.bf16.mxu0 0
  %1838 = vmatpush1.bf16.msra.mxu0 0
  %1839 = vmatprep.subr.bf16.mxu0 0
  %1840 = vmatpush1.bf16.msra.mxu0 0
  %1841 = vmatprep.subr.bf16.mxu0 0
  %1842 = vmatpush1.bf16.msra.mxu0 0
  %1843 = vmatprep.subr.bf16.mxu0 0
  %1844 = vmatpush1.bf16.msra.mxu0 0
  %1845 = vmatprep.subr.bf16.mxu0 0
  %1846 = vmatpush1.bf16.msra.mxu0 0
  %1847 = vmatprep.subr.bf16.mxu0 0
  %1848 = vmatpush1.bf16.msra.mxu0 0
  %1849 = vmatprep.subr.bf16.mxu0 0
  %1850 = vmatpush1.bf16.msra.mxu0 0
  %1851 = vmatprep.subr.bf16.mxu0 0
  %1852 = vmatpush1.bf16.msra.mxu0 0
  %1853 = vmatprep.subr.bf16.mxu0 0
  %1854 = vmatpush1.bf16.msra.mxu0 0
  %1855 = vmatprep.subr.bf16.mxu0 0
  %1856 = vmatpush1.bf16.msra.mxu0 0
  %1857 = vmatprep.subr.bf16.mxu0 0
  %1858 = vmatpush1.bf16.msra.mxu0 0
  %1859 = vmatprep.subr.bf16.mxu0 0
  %1860 = vmatpush1.bf16.msra.mxu0 0
  %1861 = vmatprep.subr.bf16.mxu0 0
  %1862 = vmatpush1.bf16.msra.mxu0 0
  %1863 = vmatprep.subr.bf16.mxu0 0
  %1864 = vmatpush1.bf16.msra.mxu0 0
  %1865 = vmatprep.subr.bf16.mxu0 0
  %1866 = vmatpush1.bf16.msra.mxu0 0
  %1867 = vmatprep.mubr.bf16.mxu0 0
  %1868 = vmatmul.mubr.bf16.gmra.mrb[0].mxu0 %v1673
  %v1869 = vpop.f32.mrb[0].mxu0
  %v1870 = vadd.f32 0.0, %v1869
  %v1871 = vpop.f32.mrb[0].mxu0
  %v1872 = vpop.f32.mrb[0].mxu0
  %v1873 = vpop.f32.mrb[0].mxu0
  %1874 = vdwg.mxu0
  %v1875 = vadd.f32 %v377, %v1870
  %v1876 = vxor.u32 %v1875, 2147483648
  %v1877 = vmul.f32 %v1876, 1.442695
  %v1878 = vpow.pop %v1877
  %v1879 = vadd.f32 %v1878, 1.0
  %v1880 = vrcp.pop %v1879
  %v1881 = vmul.f32 1.0, %v1880
  %v1882 = vmul.f32 %v1776, %v1422
  %v1883 = vmul.f32 %v1721, %v1826
  %v1884 = vadd.f32 %v1882, %v1883
  %v1885 = vsel %vm1662, 1, 0
  %1886 = vset.pattern.permute.xlu0 0
  %1887 = vperm.xlu0 %1886, %v1885
  %v1888 = vpop.permute.xlu0 %1887
  %vm1889 = vcmp.eq.s32.totalorder %v1888, 1
  %v1890 = vsel %vm1889, %v1884, 0.0
  %v1891 = vtanh.pop %v1890
  %v1892 = vmul.f32 %v1881, %v1891
  %v1893 = vsel %vm1889, %v1892, 0.0
  %vm1894 = vcmp.gt.s32.totalorder %v725, 5
  %v1895 = vpack.c.bf16 %v1657, %v1657
  %v1896 = vld [vmem:[%s6] sm:$0xf]
  %v1897 = vld [vmem:[%s6 + $0x4] sm:$0xf]
  %v1900 = vunpack.c.l.b16 %v1896
  %v1901 = vunpack.c.l.b16 %v1897
  %v1902 = vpack.c.b16 %v1901, %v1900
  %v1905 = vsel %vm75, %v1895, 0
  %1907 = vmatprep.subr.bf16.mxu0 0
  %1908 = vmatpush1.bf16.msra.mxu0 %v1902
  %1909 = vmatprep.subr.bf16.mxu0 0
  %1910 = vmatpush1.bf16.msra.mxu0 0
  %1911 = vmatprep.subr.bf16.mxu0 0
  %1912 = vmatpush1.bf16.msra.mxu0 0
  %1913 = vmatprep.subr.bf16.mxu0 0
  %1914 = vmatpush1.bf16.msra.mxu0 0
  %1915 = vmatprep.subr.bf16.mxu0 0
  %1916 = vmatpush1.bf16.msra.mxu0 0
  %1917 = vmatprep.subr.bf16.mxu0 0
  %1918 = vmatpush1.bf16.msra.mxu0 0
  %1919 = vmatprep.subr.bf16.mxu0 0
  %1920 = vmatpush1.bf16.msra.mxu0 0
  %1921 = vmatprep.subr.bf16.mxu0 0
  %1922 = vmatpush1.bf16.msra.mxu0 0
  %1923 = vmatprep.subr.bf16.mxu0 0
  %1924 = vmatpush1.bf16.msra.mxu0 0
  %1925 = vmatprep.subr.bf16.mxu0 0
  %1926 = vmatpush1.bf16.msra.mxu0 0
  %1927 = vmatprep.subr.bf16.mxu0 0
  %1928 = vmatpush1.bf16.msra.mxu0 0
  %1929 = vmatprep.subr.bf16.mxu0 0
  %1930 = vmatpush1.bf16.msra.mxu0 0
  %1931 = vmatprep.subr.bf16.mxu0 0
  %1932 = vmatpush1.bf16.msra.mxu0 0
  %1933 = vmatprep.subr.bf16.mxu0 0
  %1934 = vmatpush1.bf16.msra.mxu0 0
  %1935 = vmatprep.subr.bf16.mxu0 0
  %1936 = vmatpush1.bf16.msra.mxu0 0
  %1937 = vmatprep.subr.bf16.mxu0 0
  %1938 = vmatpush1.bf16.msra.mxu0 0
  %1939 = vmatprep.mubr.bf16.mxu0 0
  %1940 = vmatmul.mubr.bf16.gmra.mrb[0].mxu0 %v1905
  %v1941 = vpop.f32.mrb[0].mxu0
  %v1942 = vadd.f32 0.0, %v1941
  %v1943 = vpop.f32.mrb[0].mxu0
  %v1944 = vpop.f32.mrb[0].mxu0
  %v1945 = vpop.f32.mrb[0].mxu0
  %1946 = vdwg.mxu0
  %v1947 = vadd.f32 %v468, %v1942
  %v1948 = vxor.u32 %v1947, 2147483648
  %v1949 = vmul.f32 %v1948, 1.442695
  %v1950 = vpow.pop %v1949
  %v1951 = vadd.f32 %v1950, 1.0
  %v1952 = vrcp.pop %v1951
  %v1953 = vmul.f32 1.0, %v1952
  %v1954 = vld [vmem:[%s1016] sm:$0xf]
  %v1955 = vld [vmem:[%s1016 + $0x4] sm:$0xf]
  %v1958 = vunpack.c.l.b16 %v1954
  %v1959 = vunpack.c.l.b16 %v1955
  %v1960 = vpack.c.b16 %v1959, %v1958
  %1962 = vmatprep.subr.bf16.mxu0 0
  %1963 = vmatpush1.bf16.msra.mxu0 %v1960
  %1964 = vmatprep.subr.bf16.mxu0 0
  %1965 = vmatpush1.bf16.msra.mxu0 0
  %1966 = vmatprep.subr.bf16.mxu0 0
  %1967 = vmatpush1.bf16.msra.mxu0 0
  %1968 = vmatprep.subr.bf16.mxu0 0
  %1969 = vmatpush1.bf16.msra.mxu0 0
  %1970 = vmatprep.subr.bf16.mxu0 0
  %1971 = vmatpush1.bf16.msra.mxu0 0
  %1972 = vmatprep.subr.bf16.mxu0 0
  %1973 = vmatpush1.bf16.msra.mxu0 0
  %1974 = vmatprep.subr.bf16.mxu0 0
  %1975 = vmatpush1.bf16.msra.mxu0 0
  %1976 = vmatprep.subr.bf16.mxu0 0
  %1977 = vmatpush1.bf16.msra.mxu0 0
  %1978 = vmatprep.subr.bf16.mxu0 0
  %1979 = vmatpush1.bf16.msra.mxu0 0
  %1980 = vmatprep.subr.bf16.mxu0 0
  %1981 = vmatpush1.bf16.msra.mxu0 0
  %1982 = vmatprep.subr.bf16.mxu0 0
  %1983 = vmatpush1.bf16.msra.mxu0 0
  %1984 = vmatprep.subr.bf16.mxu0 0
  %1985 = vmatpush1.bf16.msra.mxu0 0
  %1986 = vmatprep.subr.bf16.mxu0 0
  %1987 = vmatpush1.bf16.msra.mxu0 0
  %1988 = vmatprep.subr.bf16.mxu0 0
  %1989 = vmatpush1.bf16.msra.mxu0 0
  %1990 = vmatprep.subr.bf16.mxu0 0
  %1991 = vmatpush1.bf16.msra.mxu0 0
  %1992 = vmatprep.subr.bf16.mxu0 0
  %1993 = vmatpush1.bf16.msra.mxu0 0
  %1994 = vmatprep.mubr.bf16.mxu0 0
  %1995 = vmatmul.mubr.bf16.gmra.mrb[0].mxu0 %v1905
  %v1996 = vpop.f32.mrb[0].mxu0
  %v1997 = vadd.f32 0.0, %v1996
  %v1998 = vpop.f32.mrb[0].mxu0
  %v1999 = vpop.f32.mrb[0].mxu0
  %v2000 = vpop.f32.mrb[0].mxu0
  %2001 = vdwg.mxu0
  %v2002 = vadd.f32 %v550, %v1997
  %v2003 = vxor.u32 %v2002, 2147483648
  %v2004 = vmul.f32 %v2003, 1.442695
  %v2005 = vpow.pop %v2004
  %v2006 = vadd.f32 %v2005, 1.0
  %v2007 = vrcp.pop %v2006
  %v2008 = vmul.f32 1.0, %v2007
  %v2009 = vld [vmem:[%s1072] sm:$0xf]
  %v2010 = vld [vmem:[%s1072 + $0x4] sm:$0xf]
  %v2013 = vunpack.c.l.b16 %v2009
  %v2014 = vunpack.c.l.b16 %v2010
  %v2015 = vpack.c.b16 %v2014, %v2013
  %2017 = vmatprep.subr.bf16.mxu0 0
  %2018 = vmatpush1.bf16.msra.mxu0 %v2015
  %2019 = vmatprep.subr.bf16.mxu0 0
  %2020 = vmatpush1.bf16.msra.mxu0 0
  %2021 = vmatprep.subr.bf16.mxu0 0
  %2022 = vmatpush1.bf16.msra.mxu0 0
  %2023 = vmatprep.subr.bf16.mxu0 0
  %2024 = vmatpush1.bf16.msra.mxu0 0
  %2025 = vmatprep.subr.bf16.mxu0 0
  %2026 = vmatpush1.bf16.msra.mxu0 0
  %2027 = vmatprep.subr.bf16.mxu0 0
  %2028 = vmatpush1.bf16.msra.mxu0 0
  %2029 = vmatprep.subr.bf16.mxu0 0
  %2030 = vmatpush1.bf16.msra.mxu0 0
  %2031 = vmatprep.subr.bf16.mxu0 0
  %2032 = vmatpush1.bf16.msra.mxu0 0
  %2033 = vmatprep.subr.bf16.mxu0 0
  %2034 = vmatpush1.bf16.msra.mxu0 0
  %2035 = vmatprep.subr.bf16.mxu0 0
  %2036 = vmatpush1.bf16.msra.mxu0 0
  %2037 = vmatprep.subr.bf16.mxu0 0
  %2038 = vmatpush1.bf16.msra.mxu0 0
  %2039 = vmatprep.subr.bf16.mxu0 0
  %2040 = vmatpush1.bf16.msra.mxu0 0
  %2041 = vmatprep.subr.bf16.mxu0 0
  %2042 = vmatpush1.bf16.msra.mxu0 0
  %2043 = vmatprep.subr.bf16.mxu0 0
  %2044 = vmatpush1.bf16.msra.mxu0 0
  %2045 = vmatprep.subr.bf16.mxu0 0
  %2046 = vmatpush1.bf16.msra.mxu0 0
  %2047 = vmatprep.subr.bf16.mxu0 0
  %2048 = vmatpush1.bf16.msra.mxu0 0
  %2049 = vmatprep.mubr.bf16.mxu0 0
  %2050 = vmatmul.mubr.bf16.gmra.mrb[0].mxu0 %v1905
  %v2051 = vpop.f32.mrb[0].mxu0
  %v2052 = vadd.f32 0.0, %v2051
  %v2053 = vpop.f32.mrb[0].mxu0
  %v2054 = vpop.f32.mrb[0].mxu0
  %v2055 = vpop.f32.mrb[0].mxu0
  %2056 = vdwg.mxu0
  %v2057 = vadd.f32 %v632, %v2052
  %v2058 = vtanh.pop %v2057
  %v2059 = vld [vmem:[%s1123] sm:$0xf]
  %v2060 = vld [vmem:[%s1123 + $0x4] sm:$0xf]
  %v2063 = vunpack.c.l.b16 %v2059
  %v2064 = vunpack.c.l.b16 %v2060
  %v2065 = vpack.c.b16 %v2064, %v2063
  %2067 = vmatprep.subr.bf16.mxu0 0
  %2068 = vmatpush1.bf16.msra.mxu0 %v2065
  %2069 = vmatprep.subr.bf16.mxu0 0
  %2070 = vmatpush1.bf16.msra.mxu0 0
  %2071 = vmatprep.subr.bf16.mxu0 0
  %2072 = vmatpush1.bf16.msra.mxu0 0
  %2073 = vmatprep.subr.bf16.mxu0 0
  %2074 = vmatpush1.bf16.msra.mxu0 0
  %2075 = vmatprep.subr.bf16.mxu0 0
  %2076 = vmatpush1.bf16.msra.mxu0 0
  %2077 = vmatprep.subr.bf16.mxu0 0
  %2078 = vmatpush1.bf16.msra.mxu0 0
  %2079 = vmatprep.subr.bf16.mxu0 0
  %2080 = vmatpush1.bf16.msra.mxu0 0
  %2081 = vmatprep.subr.bf16.mxu0 0
  %2082 = vmatpush1.bf16.msra.mxu0 0
  %2083 = vmatprep.subr.bf16.mxu0 0
  %2084 = vmatpush1.bf16.msra.mxu0 0
  %2085 = vmatprep.subr.bf16.mxu0 0
  %2086 = vmatpush1.bf16.msra.mxu0 0
  %2087 = vmatprep.subr.bf16.mxu0 0
  %2088 = vmatpush1.bf16.msra.mxu0 0
  %2089 = vmatprep.subr.bf16.mxu0 0
  %2090 = vmatpush1.bf16.msra.mxu0 0
  %2091 = vmatprep.subr.bf16.mxu0 0
  %2092 = vmatpush1.bf16.msra.mxu0 0
  %2093 = vmatprep.subr.bf16.mxu0 0
  %2094 = vmatpush1.bf16.msra.mxu0 0
  %2095 = vmatprep.subr.bf16.mxu0 0
  %2096 = vmatpush1.bf16.msra.mxu0 0
  %2097 = vmatprep.subr.bf16.mxu0 0
  %2098 = vmatpush1.bf16.msra.mxu0 0
  %2099 = vmatprep.mubr.bf16.mxu0 0
  %2100 = vmatmul.mubr.bf16.gmra.mrb[0].mxu0 %v1905
  %v2101 = vpop.f32.mrb[0].mxu0
  %v2102 = vadd.f32 0.0, %v2101
  %v2103 = vpop.f32.mrb[0].mxu0
  %v2104 = vpop.f32.mrb[0].mxu0
  %v2105 = vpop.f32.mrb[0].mxu0
  %2106 = vdwg.mxu0
  %v2107 = vadd.f32 %v714, %v2102
  %v2108 = vxor.u32 %v2107, 2147483648
  %v2109 = vmul.f32 %v2108, 1.442695
  %v2110 = vpow.pop %v2109
  %v2111 = vadd.f32 %v2110, 1.0
  %v2112 = vrcp.pop %v2111
  %v2113 = vmul.f32 1.0, %v2112
  %v2114 = vmul.f32 %v2008, %v1654
  %v2115 = vmul.f32 %v1953, %v2058
  %v2116 = vadd.f32 %v2114, %v2115
  %v2117 = vsel %vm1894, 1, 0
  %2118 = vset.pattern.permute.xlu0 0
  %2119 = vperm.xlu0 %2118, %v2117
  %v2120 = vpop.permute.xlu0 %2119
  %vm2121 = vcmp.eq.s32.totalorder %v2120, 1
  %v2122 = vsel %vm2121, %v2116, 0.0
  %v2123 = vtanh.pop %v2122
  %v2124 = vmul.f32 %v2113, %v2123
  %v2125 = vsel %vm2121, %v2124, 0.0
  %s2126 = scalar_lea.vmem %s8, 16
  %2127 = vst.msk [vmem:[%s2126] sm:$0xff] %vm75, %v1893
  %s2128 = scalar_lea.vmem %s9, 40
  %2129 = vst.msk [vmem:[%s2128] sm:$0xff] %vm75, %v2125
  %vm2130 = vcmp.gt.s32.totalorder %v725, 3
  %v2131 = vpack.c.bf16 %v1893, %v1893
  %v2132 = vld [vmem:[%s3] sm:$0xf]
  %v2133 = vld [vmem:[%s3 + $0x4] sm:$0xf]
  %v2136 = vunpack.c.l.b16 %v2132
  %v2137 = vunpack.c.l.b16 %v2133
  %v2138 = vpack.c.b16 %v2137, %v2136
  %v2141 = vsel %vm75, %v2131, 0
  %2143 = vmatprep.subr.bf16.mxu0 0
  %2144 = vmatpush1.bf16.msra.mxu0 %v2138
  %2145 = vmatprep.subr.bf16.mxu0 0
  %2146 = vmatpush1.bf16.msra.mxu0 0
  %2147 = vmatprep.subr.bf16.mxu0 0
  %2148 = vmatpush1.bf16.msra.mxu0 0
  %2149 = vmatprep.subr.bf16.mxu0 0
  %2150 = vmatpush1.bf16.msra.mxu0 0
  %2151 = vmatprep.subr.bf16.mxu0 0
  %2152 = vmatpush1.bf16.msra.mxu0 0
  %2153 = vmatprep.subr.bf16.mxu0 0
  %2154 = vmatpush1.bf16.msra.mxu0 0
  %2155 = vmatprep.subr.bf16.mxu0 0
  %2156 = vmatpush1.bf16.msra.mxu0 0
  %2157 = vmatprep.subr.bf16.mxu0 0
  %2158 = vmatpush1.bf16.msra.mxu0 0
  %2159 = vmatprep.subr.bf16.mxu0 0
  %2160 = vmatpush1.bf16.msra.mxu0 0
  %2161 = vmatprep.subr.bf16.mxu0 0
  %2162 = vmatpush1.bf16.msra.mxu0 0
  %2163 = vmatprep.subr.bf16.mxu0 0
  %2164 = vmatpush1.bf16.msra.mxu0 0
  %2165 = vmatprep.subr.bf16.mxu0 0
  %2166 = vmatpush1.bf16.msra.mxu0 0
  %2167 = vmatprep.subr.bf16.mxu0 0
  %2168 = vmatpush1.bf16.msra.mxu0 0
  %2169 = vmatprep.subr.bf16.mxu0 0
  %2170 = vmatpush1.bf16.msra.mxu0 0
  %2171 = vmatprep.subr.bf16.mxu0 0
  %2172 = vmatpush1.bf16.msra.mxu0 0
  %2173 = vmatprep.subr.bf16.mxu0 0
  %2174 = vmatpush1.bf16.msra.mxu0 0
  %2175 = vmatprep.mubr.bf16.mxu0 0
  %2176 = vmatmul.mubr.bf16.gmra.mrb[0].mxu0 %v2141
  %v2177 = vpop.f32.mrb[0].mxu0
  %v2178 = vadd.f32 0.0, %v2177
  %v2179 = vpop.f32.mrb[0].mxu0
  %v2180 = vpop.f32.mrb[0].mxu0
  %v2181 = vpop.f32.mrb[0].mxu0
  %2182 = vdwg.mxu0
  %v2183 = vadd.f32 %v134, %v2178
  %v2184 = vxor.u32 %v2183, 2147483648
  %v2185 = vmul.f32 %v2184, 1.442695
  %v2186 = vpow.pop %v2185
  %v2187 = vadd.f32 %v2186, 1.0
  %v2188 = vrcp.pop %v2187
  %v2189 = vmul.f32 1.0, %v2188
  %v2190 = vld [vmem:[%s785] sm:$0xf]
  %v2191 = vld [vmem:[%s785 + $0x4] sm:$0xf]
  %v2194 = vunpack.c.l.b16 %v2190
  %v2195 = vunpack.c.l.b16 %v2191
  %v2196 = vpack.c.b16 %v2195, %v2194
  %2198 = vmatprep.subr.bf16.mxu0 0
  %2199 = vmatpush1.bf16.msra.mxu0 %v2196
  %2200 = vmatprep.subr.bf16.mxu0 0
  %2201 = vmatpush1.bf16.msra.mxu0 0
  %2202 = vmatprep.subr.bf16.mxu0 0
  %2203 = vmatpush1.bf16.msra.mxu0 0
  %2204 = vmatprep.subr.bf16.mxu0 0
  %2205 = vmatpush1.bf16.msra.mxu0 0
  %2206 = vmatprep.subr.bf16.mxu0 0
  %2207 = vmatpush1.bf16.msra.mxu0 0
  %2208 = vmatprep.subr.bf16.mxu0 0
  %2209 = vmatpush1.bf16.msra.mxu0 0
  %2210 = vmatprep.subr.bf16.mxu0 0
  %2211 = vmatpush1.bf16.msra.mxu0 0
  %2212 = vmatprep.subr.bf16.mxu0 0
  %2213 = vmatpush1.bf16.msra.mxu0 0
  %2214 = vmatprep.subr.bf16.mxu0 0
  %2215 = vmatpush1.bf16.msra.mxu0 0
  %2216 = vmatprep.subr.bf16.mxu0 0
  %2217 = vmatpush1.bf16.msra.mxu0 0
  %2218 = vmatprep.subr.bf16.mxu0 0
  %2219 = vmatpush1.bf16.msra.mxu0 0
  %2220 = vmatprep.subr.bf16.mxu0 0
  %2221 = vmatpush1.bf16.msra.mxu0 0
  %2222 = vmatprep.subr.bf16.mxu0 0
  %2223 = vmatpush1.bf16.msra.mxu0 0
  %2224 = vmatprep.subr.bf16.mxu0 0
  %2225 = vmatpush1.bf16.msra.mxu0 0
  %2226 = vmatprep.subr.bf16.mxu0 0
  %2227 = vmatpush1.bf16.msra.mxu0 0
  %2228 = vmatprep.subr.bf16.mxu0 0
  %2229 = vmatpush1.bf16.msra.mxu0 0
  %2230 = vmatprep.mubr.bf16.mxu0 0
  %2231 = vmatmul.mubr.bf16.gmra.mrb[0].mxu0 %v2141
  %v2232 = vpop.f32.mrb[0].mxu0
  %v2233 = vadd.f32 0.0, %v2232
  %v2234 = vpop.f32.mrb[0].mxu0
  %v2235 = vpop.f32.mrb[0].mxu0
  %v2236 = vpop.f32.mrb[0].mxu0
  %2237 = vdwg.mxu0
  %v2238 = vadd.f32 %v216, %v2233
  %v2239 = vxor.u32 %v2238, 2147483648
  %v2240 = vmul.f32 %v2239, 1.442695
  %v2241 = vpow.pop %v2240
  %v2242 = vadd.f32 %v2241, 1.0
  %v2243 = vrcp.pop %v2242
  %v2244 = vmul.f32 1.0, %v2243
  %v2245 = vld [vmem:[%s841] sm:$0xf]
  %v2246 = vld [vmem:[%s841 + $0x4] sm:$0xf]
  %v2249 = vunpack.c.l.b16 %v2245
  %v2250 = vunpack.c.l.b16 %v2246
  %v2251 = vpack.c.b16 %v2250, %v2249
  %2253 = vmatprep.subr.bf16.mxu0 0
  %2254 = vmatpush1.bf16.msra.mxu0 %v2251
  %2255 = vmatprep.subr.bf16.mxu0 0
  %2256 = vmatpush1.bf16.msra.mxu0 0
  %2257 = vmatprep.subr.bf16.mxu0 0
  %2258 = vmatpush1.bf16.msra.mxu0 0
  %2259 = vmatprep.subr.bf16.mxu0 0
  %2260 = vmatpush1.bf16.msra.mxu0 0
  %2261 = vmatprep.subr.bf16.mxu0 0
  %2262 = vmatpush1.bf16.msra.mxu0 0
  %2263 = vmatprep.subr.bf16.mxu0 0
  %2264 = vmatpush1.bf16.msra.mxu0 0
  %2265 = vmatprep.subr.bf16.mxu0 0
  %2266 = vmatpush1.bf16.msra.mxu0 0
  %2267 = vmatprep.subr.bf16.mxu0 0
  %2268 = vmatpush1.bf16.msra.mxu0 0
  %2269 = vmatprep.subr.bf16.mxu0 0
  %2270 = vmatpush1.bf16.msra.mxu0 0
  %2271 = vmatprep.subr.bf16.mxu0 0
  %2272 = vmatpush1.bf16.msra.mxu0 0
  %2273 = vmatprep.subr.bf16.mxu0 0
  %2274 = vmatpush1.bf16.msra.mxu0 0
  %2275 = vmatprep.subr.bf16.mxu0 0
  %2276 = vmatpush1.bf16.msra.mxu0 0
  %2277 = vmatprep.subr.bf16.mxu0 0
  %2278 = vmatpush1.bf16.msra.mxu0 0
  %2279 = vmatprep.subr.bf16.mxu0 0
  %2280 = vmatpush1.bf16.msra.mxu0 0
  %2281 = vmatprep.subr.bf16.mxu0 0
  %2282 = vmatpush1.bf16.msra.mxu0 0
  %2283 = vmatprep.subr.bf16.mxu0 0
  %2284 = vmatpush1.bf16.msra.mxu0 0
  %2285 = vmatprep.mubr.bf16.mxu0 0
  %2286 = vmatmul.mubr.bf16.gmra.mrb[0].mxu0 %v2141
  %v2287 = vpop.f32.mrb[0].mxu0
  %v2288 = vadd.f32 0.0, %v2287
  %v2289 = vpop.f32.mrb[0].mxu0
  %v2290 = vpop.f32.mrb[0].mxu0
  %v2291 = vpop.f32.mrb[0].mxu0
  %2292 = vdwg.mxu0
  %v2293 = vadd.f32 %v298, %v2288
  %v2294 = vtanh.pop %v2293
  %v2295 = vld [vmem:[%s892] sm:$0xf]
  %v2296 = vld [vmem:[%s892 + $0x4] sm:$0xf]
  %v2299 = vunpack.c.l.b16 %v2295
  %v2300 = vunpack.c.l.b16 %v2296
  %v2301 = vpack.c.b16 %v2300, %v2299
  %2303 = vmatprep.subr.bf16.mxu0 0
  %2304 = vmatpush1.bf16.msra.mxu0 %v2301
  %2305 = vmatprep.subr.bf16.mxu0 0
  %2306 = vmatpush1.bf16.msra.mxu0 0
  %2307 = vmatprep.subr.bf16.mxu0 0
  %2308 = vmatpush1.bf16.msra.mxu0 0
  %2309 = vmatprep.subr.bf16.mxu0 0
  %2310 = vmatpush1.bf16.msra.mxu0 0
  %2311 = vmatprep.subr.bf16.mxu0 0
  %2312 = vmatpush1.bf16.msra.mxu0 0
  %2313 = vmatprep.subr.bf16.mxu0 0
  %2314 = vmatpush1.bf16.msra.mxu0 0
  %2315 = vmatprep.subr.bf16.mxu0 0
  %2316 = vmatpush1.bf16.msra.mxu0 0
  %2317 = vmatprep.subr.bf16.mxu0 0
  %2318 = vmatpush1.bf16.msra.mxu0 0
  %2319 = vmatprep.subr.bf16.mxu0 0
  %2320 = vmatpush1.bf16.msra.mxu0 0
  %2321 = vmatprep.subr.bf16.mxu0 0
  %2322 = vmatpush1.bf16.msra.mxu0 0
  %2323 = vmatprep.subr.bf16.mxu0 0
  %2324 = vmatpush1.bf16.msra.mxu0 0
  %2325 = vmatprep.subr.bf16.mxu0 0
  %2326 = vmatpush1.bf16.msra.mxu0 0
  %2327 = vmatprep.subr.bf16.mxu0 0
  %2328 = vmatpush1.bf16.msra.mxu0 0
  %2329 = vmatprep.subr.bf16.mxu0 0
  %2330 = vmatpush1.bf16.msra.mxu0 0
  %2331 = vmatprep.subr.bf16.mxu0 0
  %2332 = vmatpush1.bf16.msra.mxu0 0
  %2333 = vmatprep.subr.bf16.mxu0 0
  %2334 = vmatpush1.bf16.msra.mxu0 0
  %2335 = vmatprep.mubr.bf16.mxu0 0
  %2336 = vmatmul.mubr.bf16.gmra.mrb[0].mxu0 %v2141
  %v2337 = vpop.f32.mrb[0].mxu0
  %v2338 = vadd.f32 0.0, %v2337
  %v2339 = vpop.f32.mrb[0].mxu0
  %v2340 = vpop.f32.mrb[0].mxu0
  %v2341 = vpop.f32.mrb[0].mxu0
  %2342 = vdwg.mxu0
  %v2343 = vadd.f32 %v380, %v2338
  %v2344 = vxor.u32 %v2343, 2147483648
  %v2345 = vmul.f32 %v2344, 1.442695
  %v2346 = vpow.pop %v2345
  %v2347 = vadd.f32 %v2346, 1.0
  %v2348 = vrcp.pop %v2347
  %v2349 = vmul.f32 1.0, %v2348
  %v2350 = vmul.f32 %v2244, %v1890
  %v2351 = vmul.f32 %v2189, %v2294
  %v2352 = vadd.f32 %v2350, %v2351
  %v2353 = vsel %vm2130, 1, 0
  %2354 = vset.pattern.permute.xlu0 0
  %2355 = vperm.xlu0 %2354, %v2353
  %v2356 = vpop.permute.xlu0 %2355
  %vm2357 = vcmp.eq.s32.totalorder %v2356, 1
  %v2358 = vsel %vm2357, %v2352, 0.0
  %v2359 = vtanh.pop %v2358
  %v2360 = vmul.f32 %v2349, %v2359
  %v2361 = vsel %vm2357, %v2360, 0.0
  %vm2362 = vcmp.gt.s32.totalorder %v725, 4
  %v2363 = vpack.c.bf16 %v2125, %v2125
  %v2364 = vld [vmem:[%s6] sm:$0xf]
  %v2365 = vld [vmem:[%s6 + $0x4] sm:$0xf]
  %v2368 = vunpack.c.l.b16 %v2364
  %v2369 = vunpack.c.l.b16 %v2365
  %v2370 = vpack.c.b16 %v2369, %v2368
  %v2373 = vsel %vm75, %v2363, 0
  %2375 = vmatprep.subr.bf16.mxu0 0
  %2376 = vmatpush1.bf16.msra.mxu0 %v2370
  %2377 = vmatprep.subr.bf16.mxu0 0
  %2378 = vmatpush1.bf16.msra.mxu0 0
  %2379 = vmatprep.subr.bf16.mxu0 0
  %2380 = vmatpush1.bf16.msra.mxu0 0
  %2381 = vmatprep.subr.bf16.mxu0 0
  %2382 = vmatpush1.bf16.msra.mxu0 0
  %2383 = vmatprep.subr.bf16.mxu0 0
  %2384 = vmatpush1.bf16.msra.mxu0 0
  %2385 = vmatprep.subr.bf16.mxu0 0
  %2386 = vmatpush1.bf16.msra.mxu0 0
  %2387 = vmatprep.subr.bf16.mxu0 0
  %2388 = vmatpush1.bf16.msra.mxu0 0
  %2389 = vmatprep.subr.bf16.mxu0 0
  %2390 = vmatpush1.bf16.msra.mxu0 0
  %2391 = vmatprep.subr.bf16.mxu0 0
  %2392 = vmatpush1.bf16.msra.mxu0 0
  %2393 = vmatprep.subr.bf16.mxu0 0
  %2394 = vmatpush1.bf16.msra.mxu0 0
  %2395 = vmatprep.subr.bf16.mxu0 0
  %2396 = vmatpush1.bf16.msra.mxu0 0
  %2397 = vmatprep.subr.bf16.mxu0 0
  %2398 = vmatpush1.bf16.msra.mxu0 0
  %2399 = vmatprep.subr.bf16.mxu0 0
  %2400 = vmatpush1.bf16.msra.mxu0 0
  %2401 = vmatprep.subr.bf16.mxu0 0
  %2402 = vmatpush1.bf16.msra.mxu0 0
  %2403 = vmatprep.subr.bf16.mxu0 0
  %2404 = vmatpush1.bf16.msra.mxu0 0
  %2405 = vmatprep.subr.bf16.mxu0 0
  %2406 = vmatpush1.bf16.msra.mxu0 0
  %2407 = vmatprep.mubr.bf16.mxu0 0
  %2408 = vmatmul.mubr.bf16.gmra.mrb[0].mxu0 %v2373
  %v2409 = vpop.f32.mrb[0].mxu0
  %v2410 = vadd.f32 0.0, %v2409
  %v2411 = vpop.f32.mrb[0].mxu0
  %v2412 = vpop.f32.mrb[0].mxu0
  %v2413 = vpop.f32.mrb[0].mxu0
  %2414 = vdwg.mxu0
  %v2415 = vadd.f32 %v465, %v2410
  %v2416 = vxor.u32 %v2415, 2147483648
  %v2417 = vmul.f32 %v2416, 1.442695
  %v2418 = vpow.pop %v2417
  %v2419 = vadd.f32 %v2418, 1.0
  %v2420 = vrcp.pop %v2419
  %v2421 = vmul.f32 1.0, %v2420
  %v2422 = vld [vmem:[%s1016] sm:$0xf]
  %v2423 = vld [vmem:[%s1016 + $0x4] sm:$0xf]
  %v2426 = vunpack.c.l.b16 %v2422
  %v2427 = vunpack.c.l.b16 %v2423
  %v2428 = vpack.c.b16 %v2427, %v2426
  %2430 = vmatprep.subr.bf16.mxu0 0
  %2431 = vmatpush1.bf16.msra.mxu0 %v2428
  %2432 = vmatprep.subr.bf16.mxu0 0
  %2433 = vmatpush1.bf16.msra.mxu0 0
  %2434 = vmatprep.subr.bf16.mxu0 0
  %2435 = vmatpush1.bf16.msra.mxu0 0
  %2436 = vmatprep.subr.bf16.mxu0 0
  %2437 = vmatpush1.bf16.msra.mxu0 0
  %2438 = vmatprep.subr.bf16.mxu0 0
  %2439 = vmatpush1.bf16.msra.mxu0 0
  %2440 = vmatprep.subr.bf16.mxu0 0
  %2441 = vmatpush1.bf16.msra.mxu0 0
  %2442 = vmatprep.subr.bf16.mxu0 0
  %2443 = vmatpush1.bf16.msra.mxu0 0
  %2444 = vmatprep.subr.bf16.mxu0 0
  %2445 = vmatpush1.bf16.msra.mxu0 0
  %2446 = vmatprep.subr.bf16.mxu0 0
  %2447 = vmatpush1.bf16.msra.mxu0 0
  %2448 = vmatprep.subr.bf16.mxu0 0
  %2449 = vmatpush1.bf16.msra.mxu0 0
  %2450 = vmatprep.subr.bf16.mxu0 0
  %2451 = vmatpush1.bf16.msra.mxu0 0
  %2452 = vmatprep.subr.bf16.mxu0 0
  %2453 = vmatpush1.bf16.msra.mxu0 0
  %2454 = vmatprep.subr.bf16.mxu0 0
  %2455 = vmatpush1.bf16.msra.mxu0 0
  %2456 = vmatprep.subr.bf16.mxu0 0
  %2457 = vmatpush1.bf16.msra.mxu0 0
  %2458 = vmatprep.subr.bf16.mxu0 0
  %2459 = vmatpush1.bf16.msra.mxu0 0
  %2460 = vmatprep.subr.bf16.mxu0 0
  %2461 = vmatpush1.bf16.msra.mxu0 0
  %2462 = vmatprep.mubr.bf16.mxu0 0
  %2463 = vmatmul.mubr.bf16.gmra.mrb[0].mxu0 %v2373
  %v2464 = vpop.f32.mrb[0].mxu0
  %v2465 = vadd.f32 0.0, %v2464
  %v2466 = vpop.f32.mrb[0].mxu0
  %v2467 = vpop.f32.mrb[0].mxu0
  %v2468 = vpop.f32.mrb[0].mxu0
  %2469 = vdwg.mxu0
  %v2470 = vadd.f32 %v547, %v2465
  %v2471 = vxor.u32 %v2470, 2147483648
  %v2472 = vmul.f32 %v2471, 1.442695
  %v2473 = vpow.pop %v2472
  %v2474 = vadd.f32 %v2473, 1.0
  %v2475 = vrcp.pop %v2474
  %v2476 = vmul.f32 1.0, %v2475
  %v2477 = vld [vmem:[%s1072] sm:$0xf]
  %v2478 = vld [vmem:[%s1072 + $0x4] sm:$0xf]
  %v2481 = vunpack.c.l.b16 %v2477
  %v2482 = vunpack.c.l.b16 %v2478
  %v2483 = vpack.c.b16 %v2482, %v2481
  %2485 = vmatprep.subr.bf16.mxu0 0
  %2486 = vmatpush1.bf16.msra.mxu0 %v2483
  %2487 = vmatprep.subr.bf16.mxu0 0
  %2488 = vmatpush1.bf16.msra.mxu0 0
  %2489 = vmatprep.subr.bf16.mxu0 0
  %2490 = vmatpush1.bf16.msra.mxu0 0
  %2491 = vmatprep.subr.bf16.mxu0 0
  %2492 = vmatpush1.bf16.msra.mxu0 0
  %2493 = vmatprep.subr.bf16.mxu0 0
  %2494 = vmatpush1.bf16.msra.mxu0 0
  %2495 = vmatprep.subr.bf16.mxu0 0
  %2496 = vmatpush1.bf16.msra.mxu0 0
  %2497 = vmatprep.subr.bf16.mxu0 0
  %2498 = vmatpush1.bf16.msra.mxu0 0
  %2499 = vmatprep.subr.bf16.mxu0 0
  %2500 = vmatpush1.bf16.msra.mxu0 0
  %2501 = vmatprep.subr.bf16.mxu0 0
  %2502 = vmatpush1.bf16.msra.mxu0 0
  %2503 = vmatprep.subr.bf16.mxu0 0
  %2504 = vmatpush1.bf16.msra.mxu0 0
  %2505 = vmatprep.subr.bf16.mxu0 0
  %2506 = vmatpush1.bf16.msra.mxu0 0
  %2507 = vmatprep.subr.bf16.mxu0 0
  %2508 = vmatpush1.bf16.msra.mxu0 0
  %2509 = vmatprep.subr.bf16.mxu0 0
  %2510 = vmatpush1.bf16.msra.mxu0 0
  %2511 = vmatprep.subr.bf16.mxu0 0
  %2512 = vmatpush1.bf16.msra.mxu0 0
  %2513 = vmatprep.subr.bf16.mxu0 0
  %2514 = vmatpush1.bf16.msra.mxu0 0
  %2515 = vmatprep.subr.bf16.mxu0 0
  %2516 = vmatpush1.bf16.msra.mxu0 0
  %2517 = vmatprep.mubr.bf16.mxu0 0
  %2518 = vmatmul.mubr.bf16.gmra.mrb[0].mxu0 %v2373
  %v2519 = vpop.f32.mrb[0].mxu0
  %v2520 = vadd.f32 0.0, %v2519
  %v2521 = vpop.f32.mrb[0].mxu0
  %v2522 = vpop.f32.mrb[0].mxu0
  %v2523 = vpop.f32.mrb[0].mxu0
  %2524 = vdwg.mxu0
  %v2525 = vadd.f32 %v629, %v2520
  %v2526 = vtanh.pop %v2525
  %v2527 = vld [vmem:[%s1123] sm:$0xf]
  %v2528 = vld [vmem:[%s1123 + $0x4] sm:$0xf]
  %v2531 = vunpack.c.l.b16 %v2527
  %v2532 = vunpack.c.l.b16 %v2528
  %v2533 = vpack.c.b16 %v2532, %v2531
  %2535 = vmatprep.subr.bf16.mxu0 0
  %2536 = vmatpush1.bf16.msra.mxu0 %v2533
  %2537 = vmatprep.subr.bf16.mxu0 0
  %2538 = vmatpush1.bf16.msra.mxu0 0
  %2539 = vmatprep.subr.bf16.mxu0 0
  %2540 = vmatpush1.bf16.msra.mxu0 0
  %2541 = vmatprep.subr.bf16.mxu0 0
  %2542 = vmatpush1.bf16.msra.mxu0 0
  %2543 = vmatprep.subr.bf16.mxu0 0
  %2544 = vmatpush1.bf16.msra.mxu0 0
  %2545 = vmatprep.subr.bf16.mxu0 0
  %2546 = vmatpush1.bf16.msra.mxu0 0
  %2547 = vmatprep.subr.bf16.mxu0 0
  %2548 = vmatpush1.bf16.msra.mxu0 0
  %2549 = vmatprep.subr.bf16.mxu0 0
  %2550 = vmatpush1.bf16.msra.mxu0 0
  %2551 = vmatprep.subr.bf16.mxu0 0
  %2552 = vmatpush1.bf16.msra.mxu0 0
  %2553 = vmatprep.subr.bf16.mxu0 0
  %2554 = vmatpush1.bf16.msra.mxu0 0
  %2555 = vmatprep.subr.bf16.mxu0 0
  %2556 = vmatpush1.bf16.msra.mxu0 0
  %2557 = vmatprep.subr.bf16.mxu0 0
  %2558 = vmatpush1.bf16.msra.mxu0 0
  %2559 = vmatprep.subr.bf16.mxu0 0
  %2560 = vmatpush1.bf16.msra.mxu0 0
  %2561 = vmatprep.subr.bf16.mxu0 0
  %2562 = vmatpush1.bf16.msra.mxu0 0
  %2563 = vmatprep.subr.bf16.mxu0 0
  %2564 = vmatpush1.bf16.msra.mxu0 0
  %2565 = vmatprep.subr.bf16.mxu0 0
  %2566 = vmatpush1.bf16.msra.mxu0 0
  %2567 = vmatprep.mubr.bf16.mxu0 0
  %2568 = vmatmul.mubr.bf16.gmra.mrb[0].mxu0 %v2373
  %v2569 = vpop.f32.mrb[0].mxu0
  %v2570 = vadd.f32 0.0, %v2569
  %v2571 = vpop.f32.mrb[0].mxu0
  %v2572 = vpop.f32.mrb[0].mxu0
  %v2573 = vpop.f32.mrb[0].mxu0
  %2574 = vdwg.mxu0
  %v2575 = vadd.f32 %v711, %v2570
  %v2576 = vxor.u32 %v2575, 2147483648
  %v2577 = vmul.f32 %v2576, 1.442695
  %v2578 = vpow.pop %v2577
  %v2579 = vadd.f32 %v2578, 1.0
  %v2580 = vrcp.pop %v2579
  %v2581 = vmul.f32 1.0, %v2580
  %v2582 = vmul.f32 %v2476, %v2122
  %v2583 = vmul.f32 %v2421, %v2526
  %v2584 = vadd.f32 %v2582, %v2583
  %v2585 = vsel %vm2362, 1, 0
  %2586 = vset.pattern.permute.xlu0 0
  %2587 = vperm.xlu0 %2586, %v2585
  %v2588 = vpop.permute.xlu0 %2587
  %vm2589 = vcmp.eq.s32.totalorder %v2588, 1
  %v2590 = vsel %vm2589, %v2584, 0.0
  %v2591 = vtanh.pop %v2590
  %v2592 = vmul.f32 %v2581, %v2591
  %v2593 = vsel %vm2589, %v2592, 0.0
  %s2594 = scalar_lea.vmem %s8, 24
  %2595 = vst.msk [vmem:[%s2594] sm:$0xff] %vm75, %v2361
  %s2596 = scalar_lea.vmem %s9, 32
  %2597 = vst.msk [vmem:[%s2596] sm:$0xff] %vm75, %v2593
  %v2598 = vpack.c.bf16 %v2361, %v2361
  %v2599 = vld [vmem:[%s3] sm:$0xf]
  %v2600 = vld [vmem:[%s3 + $0x4] sm:$0xf]
  %v2603 = vunpack.c.l.b16 %v2599
  %v2604 = vunpack.c.l.b16 %v2600
  %v2605 = vpack.c.b16 %v2604, %v2603
  %v2608 = vsel %vm75, %v2598, 0
  %2610 = vmatprep.subr.bf16.mxu0 0
  %2611 = vmatpush1.bf16.msra.mxu0 %v2605
  %2612 = vmatprep.subr.bf16.mxu0 0
  %2613 = vmatpush1.bf16.msra.mxu0 0
  %2614 = vmatprep.subr.bf16.mxu0 0
  %2615 = vmatpush1.bf16.msra.mxu0 0
  %2616 = vmatprep.subr.bf16.mxu0 0
  %2617 = vmatpush1.bf16.msra.mxu0 0
  %2618 = vmatprep.subr.bf16.mxu0 0
  %2619 = vmatpush1.bf16.msra.mxu0 0
  %2620 = vmatprep.subr.bf16.mxu0 0
  %2621 = vmatpush1.bf16.msra.mxu0 0
  %2622 = vmatprep.subr.bf16.mxu0 0
  %2623 = vmatpush1.bf16.msra.mxu0 0
  %2624 = vmatprep.subr.bf16.mxu0 0
  %2625 = vmatpush1.bf16.msra.mxu0 0
  %2626 = vmatprep.subr.bf16.mxu0 0
  %2627 = vmatpush1.bf16.msra.mxu0 0
  %2628 = vmatprep.subr.bf16.mxu0 0
  %2629 = vmatpush1.bf16.msra.mxu0 0
  %2630 = vmatprep.subr.bf16.mxu0 0
  %2631 = vmatpush1.bf16.msra.mxu0 0
  %2632 = vmatprep.subr.bf16.mxu0 0
  %2633 = vmatpush1.bf16.msra.mxu0 0
  %2634 = vmatprep.subr.bf16.mxu0 0
  %2635 = vmatpush1.bf16.msra.mxu0 0
  %2636 = vmatprep.subr.bf16.mxu0 0
  %2637 = vmatpush1.bf16.msra.mxu0 0
  %2638 = vmatprep.subr.bf16.mxu0 0
  %2639 = vmatpush1.bf16.msra.mxu0 0
  %2640 = vmatprep.subr.bf16.mxu0 0
  %2641 = vmatpush1.bf16.msra.mxu0 0
  %2642 = vmatprep.mubr.bf16.mxu0 0
  %2643 = vmatmul.mubr.bf16.gmra.mrb[0].mxu0 %v2608
  %v2644 = vpop.f32.mrb[0].mxu0
  %v2645 = vadd.f32 0.0, %v2644
  %v2646 = vpop.f32.mrb[0].mxu0
  %v2647 = vpop.f32.mrb[0].mxu0
  %v2648 = vpop.f32.mrb[0].mxu0
  %2649 = vdwg.mxu0
  %v2650 = vadd.f32 %v139, %v2645
  %v2651 = vxor.u32 %v2650, 2147483648
  %v2652 = vmul.f32 %v2651, 1.442695
  %v2653 = vpow.pop %v2652
  %v2654 = vadd.f32 %v2653, 1.0
  %v2655 = vrcp.pop %v2654
  %v2656 = vmul.f32 1.0, %v2655
  %v2657 = vld [vmem:[%s785] sm:$0xf]
  %v2658 = vld [vmem:[%s785 + $0x4] sm:$0xf]
  %v2661 = vunpack.c.l.b16 %v2657
  %v2662 = vunpack.c.l.b16 %v2658
  %v2663 = vpack.c.b16 %v2662, %v2661
  %2665 = vmatprep.subr.bf16.mxu0 0
  %2666 = vmatpush1.bf16.msra.mxu0 %v2663
  %2667 = vmatprep.subr.bf16.mxu0 0
  %2668 = vmatpush1.bf16.msra.mxu0 0
  %2669 = vmatprep.subr.bf16.mxu0 0
  %2670 = vmatpush1.bf16.msra.mxu0 0
  %2671 = vmatprep.subr.bf16.mxu0 0
  %2672 = vmatpush1.bf16.msra.mxu0 0
  %2673 = vmatprep.subr.bf16.mxu0 0
  %2674 = vmatpush1.bf16.msra.mxu0 0
  %2675 = vmatprep.subr.bf16.mxu0 0
  %2676 = vmatpush1.bf16.msra.mxu0 0
  %2677 = vmatprep.subr.bf16.mxu0 0
  %2678 = vmatpush1.bf16.msra.mxu0 0
  %2679 = vmatprep.subr.bf16.mxu0 0
  %2680 = vmatpush1.bf16.msra.mxu0 0
  %2681 = vmatprep.subr.bf16.mxu0 0
  %2682 = vmatpush1.bf16.msra.mxu0 0
  %2683 = vmatprep.subr.bf16.mxu0 0
  %2684 = vmatpush1.bf16.msra.mxu0 0
  %2685 = vmatprep.subr.bf16.mxu0 0
  %2686 = vmatpush1.bf16.msra.mxu0 0
  %2687 = vmatprep.subr.bf16.mxu0 0
  %2688 = vmatpush1.bf16.msra.mxu0 0
  %2689 = vmatprep.subr.bf16.mxu0 0
  %2690 = vmatpush1.bf16.msra.mxu0 0
  %2691 = vmatprep.subr.bf16.mxu0 0
  %2692 = vmatpush1.bf16.msra.mxu0 0
  %2693 = vmatprep.subr.bf16.mxu0 0
  %2694 = vmatpush1.bf16.msra.mxu0 0
  %2695 = vmatprep.subr.bf16.mxu0 0
  %2696 = vmatpush1.bf16.msra.mxu0 0
  %2697 = vmatprep.mubr.bf16.mxu0 0
  %2698 = vmatmul.mubr.bf16.gmra.mrb[0].mxu0 %v2608
  %v2699 = vpop.f32.mrb[0].mxu0
  %v2700 = vadd.f32 0.0, %v2699
  %v2701 = vpop.f32.mrb[0].mxu0
  %v2702 = vpop.f32.mrb[0].mxu0
  %v2703 = vpop.f32.mrb[0].mxu0
  %2704 = vdwg.mxu0
  %v2705 = vadd.f32 %v221, %v2700
  %v2706 = vxor.u32 %v2705, 2147483648
  %v2707 = vmul.f32 %v2706, 1.442695
  %v2708 = vpow.pop %v2707
  %v2709 = vadd.f32 %v2708, 1.0
  %v2710 = vrcp.pop %v2709
  %v2711 = vmul.f32 1.0, %v2710
  %v2712 = vld [vmem:[%s841] sm:$0xf]
  %v2713 = vld [vmem:[%s841 + $0x4] sm:$0xf]
  %v2716 = vunpack.c.l.b16 %v2712
  %v2717 = vunpack.c.l.b16 %v2713
  %v2718 = vpack.c.b16 %v2717, %v2716
  %2720 = vmatprep.subr.bf16.mxu0 0
  %2721 = vmatpush1.bf16.msra.mxu0 %v2718
  %2722 = vmatprep.subr.bf16.mxu0 0
  %2723 = vmatpush1.bf16.msra.mxu0 0
  %2724 = vmatprep.subr.bf16.mxu0 0
  %2725 = vmatpush1.bf16.msra.mxu0 0
  %2726 = vmatprep.subr.bf16.mxu0 0
  %2727 = vmatpush1.bf16.msra.mxu0 0
  %2728 = vmatprep.subr.bf16.mxu0 0
  %2729 = vmatpush1.bf16.msra.mxu0 0
  %2730 = vmatprep.subr.bf16.mxu0 0
  %2731 = vmatpush1.bf16.msra.mxu0 0
  %2732 = vmatprep.subr.bf16.mxu0 0
  %2733 = vmatpush1.bf16.msra.mxu0 0
  %2734 = vmatprep.subr.bf16.mxu0 0
  %2735 = vmatpush1.bf16.msra.mxu0 0
  %2736 = vmatprep.subr.bf16.mxu0 0
  %2737 = vmatpush1.bf16.msra.mxu0 0
  %2738 = vmatprep.subr.bf16.mxu0 0
  %2739 = vmatpush1.bf16.msra.mxu0 0
  %2740 = vmatprep.subr.bf16.mxu0 0
  %2741 = vmatpush1.bf16.msra.mxu0 0
  %2742 = vmatprep.subr.bf16.mxu0 0
  %2743 = vmatpush1.bf16.msra.mxu0 0
  %2744 = vmatprep.subr.bf16.mxu0 0
  %2745 = vmatpush1.bf16.msra.mxu0 0
  %2746 = vmatprep.subr.bf16.mxu0 0
  %2747 = vmatpush1.bf16.msra.mxu0 0
  %2748 = vmatprep.subr.bf16.mxu0 0
  %2749 = vmatpush1.bf16.msra.mxu0 0
  %2750 = vmatprep.subr.bf16.mxu0 0
  %2751 = vmatpush1.bf16.msra.mxu0 0
  %2752 = vmatprep.mubr.bf16.mxu0 0
  %2753 = vmatmul.mubr.bf16.gmra.mrb[0].mxu0 %v2608
  %v2754 = vpop.f32.mrb[0].mxu0
  %v2755 = vadd.f32 0.0, %v2754
  %v2756 = vpop.f32.mrb[0].mxu0
  %v2757 = vpop.f32.mrb[0].mxu0
  %v2758 = vpop.f32.mrb[0].mxu0
  %2759 = vdwg.mxu0
  %v2760 = vadd.f32 %v303, %v2755
  %v2761 = vtanh.pop %v2760
  %v2762 = vld [vmem:[%s892] sm:$0xf]
  %v2763 = vld [vmem:[%s892 + $0x4] sm:$0xf]
  %v2766 = vunpack.c.l.b16 %v2762
  %v2767 = vunpack.c.l.b16 %v2763
  %v2768 = vpack.c.b16 %v2767, %v2766
  %2770 = vmatprep.subr.bf16.mxu0 0
  %2771 = vmatpush1.bf16.msra.mxu0 %v2768
  %2772 = vmatprep.subr.bf16.mxu0 0
  %2773 = vmatpush1.bf16.msra.mxu0 0
  %2774 = vmatprep.subr.bf16.mxu0 0
  %2775 = vmatpush1.bf16.msra.mxu0 0
  %2776 = vmatprep.subr.bf16.mxu0 0
  %2777 = vmatpush1.bf16.msra.mxu0 0
  %2778 = vmatprep.subr.bf16.mxu0 0
  %2779 = vmatpush1.bf16.msra.mxu0 0
  %2780 = vmatprep.subr.bf16.mxu0 0
  %2781 = vmatpush1.bf16.msra.mxu0 0
  %2782 = vmatprep.subr.bf16.mxu0 0
  %2783 = vmatpush1.bf16.msra.mxu0 0
  %2784 = vmatprep.subr.bf16.mxu0 0
  %2785 = vmatpush1.bf16.msra.mxu0 0
  %2786 = vmatprep.subr.bf16.mxu0 0
  %2787 = vmatpush1.bf16.msra.mxu0 0
  %2788 = vmatprep.subr.bf16.mxu0 0
  %2789 = vmatpush1.bf16.msra.mxu0 0
  %2790 = vmatprep.subr.bf16.mxu0 0
  %2791 = vmatpush1.bf16.msra.mxu0 0
  %2792 = vmatprep.subr.bf16.mxu0 0
  %2793 = vmatpush1.bf16.msra.mxu0 0
  %2794 = vmatprep.subr.bf16.mxu0 0
  %2795 = vmatpush1.bf16.msra.mxu0 0
  %2796 = vmatprep.subr.bf16.mxu0 0
  %2797 = vmatpush1.bf16.msra.mxu0 0
  %2798 = vmatprep.subr.bf16.mxu0 0
  %2799 = vmatpush1.bf16.msra.mxu0 0
  %2800 = vmatprep.subr.bf16.mxu0 0
  %2801 = vmatpush1.bf16.msra.mxu0 0
  %2802 = vmatprep.mubr.bf16.mxu0 0
  %2803 = vmatmul.mubr.bf16.gmra.mrb[0].mxu0 %v2608
  %v2804 = vpop.f32.mrb[0].mxu0
  %v2805 = vadd.f32 0.0, %v2804
  %v2806 = vpop.f32.mrb[0].mxu0
  %v2807 = vpop.f32.mrb[0].mxu0
  %v2808 = vpop.f32.mrb[0].mxu0
  %2809 = vdwg.mxu0
  %v2810 = vadd.f32 %v385, %v2805
  %v2811 = vxor.u32 %v2810, 2147483648
  %v2812 = vmul.f32 %v2811, 1.442695
  %v2813 = vpow.pop %v2812
  %v2814 = vadd.f32 %v2813, 1.0
  %v2815 = vrcp.pop %v2814
  %v2816 = vmul.f32 1.0, %v2815
  %v2817 = vmul.f32 %v2711, %v2358
  %v2818 = vmul.f32 %v2656, %v2761
  %v2819 = vadd.f32 %v2817, %v2818
  %v2820 = vsel %vm2589, %v2819, 0.0
  %v2821 = vtanh.pop %v2820
  %v2822 = vmul.f32 %v2816, %v2821
  %v2823 = vsel %vm2589, %v2822, 0.0
  %v2824 = vpack.c.bf16 %v2593, %v2593
  %v2825 = vld [vmem:[%s6] sm:$0xf]
  %v2826 = vld [vmem:[%s6 + $0x4] sm:$0xf]
  %v2829 = vunpack.c.l.b16 %v2825
  %v2830 = vunpack.c.l.b16 %v2826
  %v2831 = vpack.c.b16 %v2830, %v2829
  %v2834 = vsel %vm75, %v2824, 0
  %2836 = vmatprep.subr.bf16.mxu0 0
  %2837 = vmatpush1.bf16.msra.mxu0 %v2831
  %2838 = vmatprep.subr.bf16.mxu0 0
  %2839 = vmatpush1.bf16.msra.mxu0 0
  %2840 = vmatprep.subr.bf16.mxu0 0
  %2841 = vmatpush1.bf16.msra.mxu0 0
  %2842 = vmatprep.subr.bf16.mxu0 0
  %2843 = vmatpush1.bf16.msra.mxu0 0
  %2844 = vmatprep.subr.bf16.mxu0 0
  %2845 = vmatpush1.bf16.msra.mxu0 0
  %2846 = vmatprep.subr.bf16.mxu0 0
  %2847 = vmatpush1.bf16.msra.mxu0 0
  %2848 = vmatprep.subr.bf16.mxu0 0
  %2849 = vmatpush1.bf16.msra.mxu0 0
  %2850 = vmatprep.subr.bf16.mxu0 0
  %2851 = vmatpush1.bf16.msra.mxu0 0
  %2852 = vmatprep.subr.bf16.mxu0 0
  %2853 = vmatpush1.bf16.msra.mxu0 0
  %2854 = vmatprep.subr.bf16.mxu0 0
  %2855 = vmatpush1.bf16.msra.mxu0 0
  %2856 = vmatprep.subr.bf16.mxu0 0
  %2857 = vmatpush1.bf16.msra.mxu0 0
  %2858 = vmatprep.subr.bf16.mxu0 0
  %2859 = vmatpush1.bf16.msra.mxu0 0
  %2860 = vmatprep.subr.bf16.mxu0 0
  %2861 = vmatpush1.bf16.msra.mxu0 0
  %2862 = vmatprep.subr.bf16.mxu0 0
  %2863 = vmatpush1.bf16.msra.mxu0 0
  %2864 = vmatprep.subr.bf16.mxu0 0
  %2865 = vmatpush1.bf16.msra.mxu0 0
  %2866 = vmatprep.subr.bf16.mxu0 0
  %2867 = vmatpush1.bf16.msra.mxu0 0
  %2868 = vmatprep.mubr.bf16.mxu0 0
  %2869 = vmatmul.mubr.bf16.gmra.mrb[0].mxu0 %v2834
  %v2870 = vpop.f32.mrb[0].mxu0
  %v2871 = vadd.f32 0.0, %v2870
  %v2872 = vpop.f32.mrb[0].mxu0
  %v2873 = vpop.f32.mrb[0].mxu0
  %v2874 = vpop.f32.mrb[0].mxu0
  %2875 = vdwg.mxu0
  %v2876 = vadd.f32 %v460, %v2871
  %v2877 = vxor.u32 %v2876, 2147483648
  %v2878 = vmul.f32 %v2877, 1.442695
  %v2879 = vpow.pop %v2878
  %v2880 = vadd.f32 %v2879, 1.0
  %v2881 = vrcp.pop %v2880
  %v2882 = vmul.f32 1.0, %v2881
  %v2883 = vld [vmem:[%s1016] sm:$0xf]
  %v2884 = vld [vmem:[%s1016 + $0x4] sm:$0xf]
  %v2887 = vunpack.c.l.b16 %v2883
  %v2888 = vunpack.c.l.b16 %v2884
  %v2889 = vpack.c.b16 %v2888, %v2887
  %2891 = vmatprep.subr.bf16.mxu0 0
  %2892 = vmatpush1.bf16.msra.mxu0 %v2889
  %2893 = vmatprep.subr.bf16.mxu0 0
  %2894 = vmatpush1.bf16.msra.mxu0 0
  %2895 = vmatprep.subr.bf16.mxu0 0
  %2896 = vmatpush1.bf16.msra.mxu0 0
  %2897 = vmatprep.subr.bf16.mxu0 0
  %2898 = vmatpush1.bf16.msra.mxu0 0
  %2899 = vmatprep.subr.bf16.mxu0 0
  %2900 = vmatpush1.bf16.msra.mxu0 0
  %2901 = vmatprep.subr.bf16.mxu0 0
  %2902 = vmatpush1.bf16.msra.mxu0 0
  %2903 = vmatprep.subr.bf16.mxu0 0
  %2904 = vmatpush1.bf16.msra.mxu0 0
  %2905 = vmatprep.subr.bf16.mxu0 0
  %2906 = vmatpush1.bf16.msra.mxu0 0
  %2907 = vmatprep.subr.bf16.mxu0 0
  %2908 = vmatpush1.bf16.msra.mxu0 0
  %2909 = vmatprep.subr.bf16.mxu0 0
  %2910 = vmatpush1.bf16.msra.mxu0 0
  %2911 = vmatprep.subr.bf16.mxu0 0
  %2912 = vmatpush1.bf16.msra.mxu0 0
  %2913 = vmatprep.subr.bf16.mxu0 0
  %2914 = vmatpush1.bf16.msra.mxu0 0
  %2915 = vmatprep.subr.bf16.mxu0 0
  %2916 = vmatpush1.bf16.msra.mxu0 0
  %2917 = vmatprep.subr.bf16.mxu0 0
  %2918 = vmatpush1.bf16.msra.mxu0 0
  %2919 = vmatprep.subr.bf16.mxu0 0
  %2920 = vmatpush1.bf16.msra.mxu0 0
  %2921 = vmatprep.subr.bf16.mxu0 0
  %2922 = vmatpush1.bf16.msra.mxu0 0
  %2923 = vmatprep.mubr.bf16.mxu0 0
  %2924 = vmatmul.mubr.bf16.gmra.mrb[0].mxu0 %v2834
  %v2925 = vpop.f32.mrb[0].mxu0
  %v2926 = vadd.f32 0.0, %v2925
  %v2927 = vpop.f32.mrb[0].mxu0
  %v2928 = vpop.f32.mrb[0].mxu0
  %v2929 = vpop.f32.mrb[0].mxu0
  %2930 = vdwg.mxu0
  %v2931 = vadd.f32 %v542, %v2926
  %v2932 = vxor.u32 %v2931, 2147483648
  %v2933 = vmul.f32 %v2932, 1.442695
  %v2934 = vpow.pop %v2933
  %v2935 = vadd.f32 %v2934, 1.0
  %v2936 = vrcp.pop %v2935
  %v2937 = vmul.f32 1.0, %v2936
  %v2938 = vld [vmem:[%s1072] sm:$0xf]
  %v2939 = vld [vmem:[%s1072 + $0x4] sm:$0xf]
  %v2942 = vunpack.c.l.b16 %v2938
  %v2943 = vunpack.c.l.b16 %v2939
  %v2944 = vpack.c.b16 %v2943, %v2942
  %2946 = vmatprep.subr.bf16.mxu0 0
  %2947 = vmatpush1.bf16.msra.mxu0 %v2944
  %2948 = vmatprep.subr.bf16.mxu0 0
  %2949 = vmatpush1.bf16.msra.mxu0 0
  %2950 = vmatprep.subr.bf16.mxu0 0
  %2951 = vmatpush1.bf16.msra.mxu0 0
  %2952 = vmatprep.subr.bf16.mxu0 0
  %2953 = vmatpush1.bf16.msra.mxu0 0
  %2954 = vmatprep.subr.bf16.mxu0 0
  %2955 = vmatpush1.bf16.msra.mxu0 0
  %2956 = vmatprep.subr.bf16.mxu0 0
  %2957 = vmatpush1.bf16.msra.mxu0 0
  %2958 = vmatprep.subr.bf16.mxu0 0
  %2959 = vmatpush1.bf16.msra.mxu0 0
  %2960 = vmatprep.subr.bf16.mxu0 0
  %2961 = vmatpush1.bf16.msra.mxu0 0
  %2962 = vmatprep.subr.bf16.mxu0 0
  %2963 = vmatpush1.bf16.msra.mxu0 0
  %2964 = vmatprep.subr.bf16.mxu0 0
  %2965 = vmatpush1.bf16.msra.mxu0 0
  %2966 = vmatprep.subr.bf16.mxu0 0
  %2967 = vmatpush1.bf16.msra.mxu0 0
  %2968 = vmatprep.subr.bf16.mxu0 0
  %2969 = vmatpush1.bf16.msra.mxu0 0
  %2970 = vmatprep.subr.bf16.mxu0 0
  %2971 = vmatpush1.bf16.msra.mxu0 0
  %2972 = vmatprep.subr.bf16.mxu0 0
  %2973 = vmatpush1.bf16.msra.mxu0 0
  %2974 = vmatprep.subr.bf16.mxu0 0
  %2975 = vmatpush1.bf16.msra.mxu0 0
  %2976 = vmatprep.subr.bf16.mxu0 0
  %2977 = vmatpush1.bf16.msra.mxu0 0
  %2978 = vmatprep.mubr.bf16.mxu0 0
  %2979 = vmatmul.mubr.bf16.gmra.mrb[0].mxu0 %v2834
  %v2980 = vpop.f32.mrb[0].mxu0
  %v2981 = vadd.f32 0.0, %v2980
  %v2982 = vpop.f32.mrb[0].mxu0
  %v2983 = vpop.f32.mrb[0].mxu0
  %v2984 = vpop.f32.mrb[0].mxu0
  %2985 = vdwg.mxu0
  %v2986 = vadd.f32 %v624, %v2981
  %v2987 = vtanh.pop %v2986
  %v2988 = vld [vmem:[%s1123] sm:$0xf]
  %v2989 = vld [vmem:[%s1123 + $0x4] sm:$0xf]
  %v2992 = vunpack.c.l.b16 %v2988
  %v2993 = vunpack.c.l.b16 %v2989
  %v2994 = vpack.c.b16 %v2993, %v2992
  %2996 = vmatprep.subr.bf16.mxu0 0
  %2997 = vmatpush1.bf16.msra.mxu0 %v2994
  %2998 = vmatprep.subr.bf16.mxu0 0
  %2999 = vmatpush1.bf16.msra.mxu0 0
  %3000 = vmatprep.subr.bf16.mxu0 0
  %3001 = vmatpush1.bf16.msra.mxu0 0
  %3002 = vmatprep.subr.bf16.mxu0 0
  %3003 = vmatpush1.bf16.msra.mxu0 0
  %3004 = vmatprep.subr.bf16.mxu0 0
  %3005 = vmatpush1.bf16.msra.mxu0 0
  %3006 = vmatprep.subr.bf16.mxu0 0
  %3007 = vmatpush1.bf16.msra.mxu0 0
  %3008 = vmatprep.subr.bf16.mxu0 0
  %3009 = vmatpush1.bf16.msra.mxu0 0
  %3010 = vmatprep.subr.bf16.mxu0 0
  %3011 = vmatpush1.bf16.msra.mxu0 0
  %3012 = vmatprep.subr.bf16.mxu0 0
  %3013 = vmatpush1.bf16.msra.mxu0 0
  %3014 = vmatprep.subr.bf16.mxu0 0
  %3015 = vmatpush1.bf16.msra.mxu0 0
  %3016 = vmatprep.subr.bf16.mxu0 0
  %3017 = vmatpush1.bf16.msra.mxu0 0
  %3018 = vmatprep.subr.bf16.mxu0 0
  %3019 = vmatpush1.bf16.msra.mxu0 0
  %3020 = vmatprep.subr.bf16.mxu0 0
  %3021 = vmatpush1.bf16.msra.mxu0 0
  %3022 = vmatprep.subr.bf16.mxu0 0
  %3023 = vmatpush1.bf16.msra.mxu0 0
  %3024 = vmatprep.subr.bf16.mxu0 0
  %3025 = vmatpush1.bf16.msra.mxu0 0
  %3026 = vmatprep.subr.bf16.mxu0 0
  %3027 = vmatpush1.bf16.msra.mxu0 0
  %3028 = vmatprep.mubr.bf16.mxu0 0
  %3029 = vmatmul.mubr.bf16.gmra.mrb[0].mxu0 %v2834
  %v3030 = vpop.f32.mrb[0].mxu0
  %v3031 = vadd.f32 0.0, %v3030
  %v3032 = vpop.f32.mrb[0].mxu0
  %v3033 = vpop.f32.mrb[0].mxu0
  %v3034 = vpop.f32.mrb[0].mxu0
  %3035 = vdwg.mxu0
  %v3036 = vadd.f32 %v706, %v3031
  %v3037 = vxor.u32 %v3036, 2147483648
  %v3038 = vmul.f32 %v3037, 1.442695
  %v3039 = vpow.pop %v3038
  %v3040 = vadd.f32 %v3039, 1.0
  %v3041 = vrcp.pop %v3040
  %v3042 = vmul.f32 1.0, %v3041
  %v3043 = vmul.f32 %v2937, %v2590
  %v3044 = vmul.f32 %v2882, %v2987
  %v3045 = vadd.f32 %v3043, %v3044
  %v3046 = vsel %vm2357, %v3045, 0.0
  %v3047 = vtanh.pop %v3046
  %v3048 = vmul.f32 %v3042, %v3047
  %v3049 = vsel %vm2357, %v3048, 0.0
  %s3050 = scalar_lea.vmem %s8, 32
  %3051 = vst.msk [vmem:[%s3050] sm:$0xff] %vm75, %v2823
  %s3052 = scalar_lea.vmem %s9, 24
  %3053 = vst.msk [vmem:[%s3052] sm:$0xff] %vm75, %v3049
  %v3054 = vpack.c.bf16 %v2823, %v2823
  %v3055 = vld [vmem:[%s3] sm:$0xf]
  %v3056 = vld [vmem:[%s3 + $0x4] sm:$0xf]
  %v3059 = vunpack.c.l.b16 %v3055
  %v3060 = vunpack.c.l.b16 %v3056
  %v3061 = vpack.c.b16 %v3060, %v3059
  %v3064 = vsel %vm75, %v3054, 0
  %3066 = vmatprep.subr.bf16.mxu0 0
  %3067 = vmatpush1.bf16.msra.mxu0 %v3061
  %3068 = vmatprep.subr.bf16.mxu0 0
  %3069 = vmatpush1.bf16.msra.mxu0 0
  %3070 = vmatprep.subr.bf16.mxu0 0
  %3071 = vmatpush1.bf16.msra.mxu0 0
  %3072 = vmatprep.subr.bf16.mxu0 0
  %3073 = vmatpush1.bf16.msra.mxu0 0
  %3074 = vmatprep.subr.bf16.mxu0 0
  %3075 = vmatpush1.bf16.msra.mxu0 0
  %3076 = vmatprep.subr.bf16.mxu0 0
  %3077 = vmatpush1.bf16.msra.mxu0 0
  %3078 = vmatprep.subr.bf16.mxu0 0
  %3079 = vmatpush1.bf16.msra.mxu0 0
  %3080 = vmatprep.subr.bf16.mxu0 0
  %3081 = vmatpush1.bf16.msra.mxu0 0
  %3082 = vmatprep.subr.bf16.mxu0 0
  %3083 = vmatpush1.bf16.msra.mxu0 0
  %3084 = vmatprep.subr.bf16.mxu0 0
  %3085 = vmatpush1.bf16.msra.mxu0 0
  %3086 = vmatprep.subr.bf16.mxu0 0
  %3087 = vmatpush1.bf16.msra.mxu0 0
  %3088 = vmatprep.subr.bf16.mxu0 0
  %3089 = vmatpush1.bf16.msra.mxu0 0
  %3090 = vmatprep.subr.bf16.mxu0 0
  %3091 = vmatpush1.bf16.msra.mxu0 0
  %3092 = vmatprep.subr.bf16.mxu0 0
  %3093 = vmatpush1.bf16.msra.mxu0 0
  %3094 = vmatprep.subr.bf16.mxu0 0
  %3095 = vmatpush1.bf16.msra.mxu0 0
  %3096 = vmatprep.subr.bf16.mxu0 0
  %3097 = vmatpush1.bf16.msra.mxu0 0
  %3098 = vmatprep.mubr.bf16.mxu0 0
  %3099 = vmatmul.mubr.bf16.gmra.mrb[0].mxu0 %v3064
  %v3100 = vpop.f32.mrb[0].mxu0
  %v3101 = vadd.f32 0.0, %v3100
  %v3102 = vpop.f32.mrb[0].mxu0
  %v3103 = vpop.f32.mrb[0].mxu0
  %v3104 = vpop.f32.mrb[0].mxu0
  %3105 = vdwg.mxu0
  %v3106 = vadd.f32 %v142, %v3101
  %v3107 = vxor.u32 %v3106, 2147483648
  %v3108 = vmul.f32 %v3107, 1.442695
  %v3109 = vpow.pop %v3108
  %v3110 = vadd.f32 %v3109, 1.0
  %v3111 = vrcp.pop %v3110
  %v3112 = vmul.f32 1.0, %v3111
  %v3113 = vld [vmem:[%s785] sm:$0xf]
  %v3114 = vld [vmem:[%s785 + $0x4] sm:$0xf]
  %v3117 = vunpack.c.l.b16 %v3113
  %v3118 = vunpack.c.l.b16 %v3114
  %v3119 = vpack.c.b16 %v3118, %v3117
  %3121 = vmatprep.subr.bf16.mxu0 0
  %3122 = vmatpush1.bf16.msra.mxu0 %v3119
  %3123 = vmatprep.subr.bf16.mxu0 0
  %3124 = vmatpush1.bf16.msra.mxu0 0
  %3125 = vmatprep.subr.bf16.mxu0 0
  %3126 = vmatpush1.bf16.msra.mxu0 0
  %3127 = vmatprep.subr.bf16.mxu0 0
  %3128 = vmatpush1.bf16.msra.mxu0 0
  %3129 = vmatprep.subr.bf16.mxu0 0
  %3130 = vmatpush1.bf16.msra.mxu0 0
  %3131 = vmatprep.subr.bf16.mxu0 0
  %3132 = vmatpush1.bf16.msra.mxu0 0
  %3133 = vmatprep.subr.bf16.mxu0 0
  %3134 = vmatpush1.bf16.msra.mxu0 0
  %3135 = vmatprep.subr.bf16.mxu0 0
  %3136 = vmatpush1.bf16.msra.mxu0 0
  %3137 = vmatprep.subr.bf16.mxu0 0
  %3138 = vmatpush1.bf16.msra.mxu0 0
  %3139 = vmatprep.subr.bf16.mxu0 0
  %3140 = vmatpush1.bf16.msra.mxu0 0
  %3141 = vmatprep.subr.bf16.mxu0 0
  %3142 = vmatpush1.bf16.msra.mxu0 0
  %3143 = vmatprep.subr.bf16.mxu0 0
  %3144 = vmatpush1.bf16.msra.mxu0 0
  %3145 = vmatprep.subr.bf16.mxu0 0
  %3146 = vmatpush1.bf16.msra.mxu0 0
  %3147 = vmatprep.subr.bf16.mxu0 0
  %3148 = vmatpush1.bf16.msra.mxu0 0
  %3149 = vmatprep.subr.bf16.mxu0 0
  %3150 = vmatpush1.bf16.msra.mxu0 0
  %3151 = vmatprep.subr.bf16.mxu0 0
  %3152 = vmatpush1.bf16.msra.mxu0 0
  %3153 = vmatprep.mubr.bf16.mxu0 0
  %3154 = vmatmul.mubr.bf16.gmra.mrb[0].mxu0 %v3064
  %v3155 = vpop.f32.mrb[0].mxu0
  %v3156 = vadd.f32 0.0, %v3155
  %v3157 = vpop.f32.mrb[0].mxu0
  %v3158 = vpop.f32.mrb[0].mxu0
  %v3159 = vpop.f32.mrb[0].mxu0
  %3160 = vdwg.mxu0
  %v3161 = vadd.f32 %v224, %v3156
  %v3162 = vxor.u32 %v3161, 2147483648
  %v3163 = vmul.f32 %v3162, 1.442695
  %v3164 = vpow.pop %v3163
  %v3165 = vadd.f32 %v3164, 1.0
  %v3166 = vrcp.pop %v3165
  %v3167 = vmul.f32 1.0, %v3166
  %v3168 = vld [vmem:[%s841] sm:$0xf]
  %v3169 = vld [vmem:[%s841 + $0x4] sm:$0xf]
  %v3172 = vunpack.c.l.b16 %v3168
  %v3173 = vunpack.c.l.b16 %v3169
  %v3174 = vpack.c.b16 %v3173, %v3172
  %3176 = vmatprep.subr.bf16.mxu0 0
  %3177 = vmatpush1.bf16.msra.mxu0 %v3174
  %3178 = vmatprep.subr.bf16.mxu0 0
  %3179 = vmatpush1.bf16.msra.mxu0 0
  %3180 = vmatprep.subr.bf16.mxu0 0
  %3181 = vmatpush1.bf16.msra.mxu0 0
  %3182 = vmatprep.subr.bf16.mxu0 0
  %3183 = vmatpush1.bf16.msra.mxu0 0
  %3184 = vmatprep.subr.bf16.mxu0 0
  %3185 = vmatpush1.bf16.msra.mxu0 0
  %3186 = vmatprep.subr.bf16.mxu0 0
  %3187 = vmatpush1.bf16.msra.mxu0 0
  %3188 = vmatprep.subr.bf16.mxu0 0
  %3189 = vmatpush1.bf16.msra.mxu0 0
  %3190 = vmatprep.subr.bf16.mxu0 0
  %3191 = vmatpush1.bf16.msra.mxu0 0
  %3192 = vmatprep.subr.bf16.mxu0 0
  %3193 = vmatpush1.bf16.msra.mxu0 0
  %3194 = vmatprep.subr.bf16.mxu0 0
  %3195 = vmatpush1.bf16.msra.mxu0 0
  %3196 = vmatprep.subr.bf16.mxu0 0
  %3197 = vmatpush1.bf16.msra.mxu0 0
  %3198 = vmatprep.subr.bf16.mxu0 0
  %3199 = vmatpush1.bf16.msra.mxu0 0
  %3200 = vmatprep.subr.bf16.mxu0 0
  %3201 = vmatpush1.bf16.msra.mxu0 0
  %3202 = vmatprep.subr.bf16.mxu0 0
  %3203 = vmatpush1.bf16.msra.mxu0 0
  %3204 = vmatprep.subr.bf16.mxu0 0
  %3205 = vmatpush1.bf16.msra.mxu0 0
  %3206 = vmatprep.subr.bf16.mxu0 0
  %3207 = vmatpush1.bf16.msra.mxu0 0
  %3208 = vmatprep.mubr.bf16.mxu0 0
  %3209 = vmatmul.mubr.bf16.gmra.mrb[0].mxu0 %v3064
  %v3210 = vpop.f32.mrb[0].mxu0
  %v3211 = vadd.f32 0.0, %v3210
  %v3212 = vpop.f32.mrb[0].mxu0
  %v3213 = vpop.f32.mrb[0].mxu0
  %v3214 = vpop.f32.mrb[0].mxu0
  %3215 = vdwg.mxu0
  %v3216 = vadd.f32 %v306, %v3211
  %v3217 = vtanh.pop %v3216
  %v3218 = vld [vmem:[%s892] sm:$0xf]
  %v3219 = vld [vmem:[%s892 + $0x4] sm:$0xf]
  %v3222 = vunpack.c.l.b16 %v3218
  %v3223 = vunpack.c.l.b16 %v3219
  %v3224 = vpack.c.b16 %v3223, %v3222
  %3226 = vmatprep.subr.bf16.mxu0 0
  %3227 = vmatpush1.bf16.msra.mxu0 %v3224
  %3228 = vmatprep.subr.bf16.mxu0 0
  %3229 = vmatpush1.bf16.msra.mxu0 0
  %3230 = vmatprep.subr.bf16.mxu0 0
  %3231 = vmatpush1.bf16.msra.mxu0 0
  %3232 = vmatprep.subr.bf16.mxu0 0
  %3233 = vmatpush1.bf16.msra.mxu0 0
  %3234 = vmatprep.subr.bf16.mxu0 0
  %3235 = vmatpush1.bf16.msra.mxu0 0
  %3236 = vmatprep.subr.bf16.mxu0 0
  %3237 = vmatpush1.bf16.msra.mxu0 0
  %3238 = vmatprep.subr.bf16.mxu0 0
  %3239 = vmatpush1.bf16.msra.mxu0 0
  %3240 = vmatprep.subr.bf16.mxu0 0
  %3241 = vmatpush1.bf16.msra.mxu0 0
  %3242 = vmatprep.subr.bf16.mxu0 0
  %3243 = vmatpush1.bf16.msra.mxu0 0
  %3244 = vmatprep.subr.bf16.mxu0 0
  %3245 = vmatpush1.bf16.msra.mxu0 0
  %3246 = vmatprep.subr.bf16.mxu0 0
  %3247 = vmatpush1.bf16.msra.mxu0 0
  %3248 = vmatprep.subr.bf16.mxu0 0
  %3249 = vmatpush1.bf16.msra.mxu0 0
  %3250 = vmatprep.subr.bf16.mxu0 0
  %3251 = vmatpush1.bf16.msra.mxu0 0
  %3252 = vmatprep.subr.bf16.mxu0 0
  %3253 = vmatpush1.bf16.msra.mxu0 0
  %3254 = vmatprep.subr.bf16.mxu0 0
  %3255 = vmatpush1.bf16.msra.mxu0 0
  %3256 = vmatprep.subr.bf16.mxu0 0
  %3257 = vmatpush1.bf16.msra.mxu0 0
  %3258 = vmatprep.mubr.bf16.mxu0 0
  %3259 = vmatmul.mubr.bf16.gmra.mrb[0].mxu0 %v3064
  %v3260 = vpop.f32.mrb[0].mxu0
  %v3261 = vadd.f32 0.0, %v3260
  %v3262 = vpop.f32.mrb[0].mxu0
  %v3263 = vpop.f32.mrb[0].mxu0
  %v3264 = vpop.f32.mrb[0].mxu0
  %3265 = vdwg.mxu0
  %v3266 = vadd.f32 %v388, %v3261
  %v3267 = vxor.u32 %v3266, 2147483648
  %v3268 = vmul.f32 %v3267, 1.442695
  %v3269 = vpow.pop %v3268
  %v3270 = vadd.f32 %v3269, 1.0
  %v3271 = vrcp.pop %v3270
  %v3272 = vmul.f32 1.0, %v3271
  %v3273 = vmul.f32 %v3167, %v2820
  %v3274 = vmul.f32 %v3112, %v3217
  %v3275 = vadd.f32 %v3273, %v3274
  %v3276 = vsel %vm2121, %v3275, 0.0
  %v3277 = vtanh.pop %v3276
  %v3278 = vmul.f32 %v3272, %v3277
  %v3279 = vsel %vm2121, %v3278, 0.0
  %v3280 = vpack.c.bf16 %v3049, %v3049
  %v3281 = vld [vmem:[%s6] sm:$0xf]
  %v3282 = vld [vmem:[%s6 + $0x4] sm:$0xf]
  %v3285 = vunpack.c.l.b16 %v3281
  %v3286 = vunpack.c.l.b16 %v3282
  %v3287 = vpack.c.b16 %v3286, %v3285
  %v3290 = vsel %vm75, %v3280, 0
  %3292 = vmatprep.subr.bf16.mxu0 0
  %3293 = vmatpush1.bf16.msra.mxu0 %v3287
  %3294 = vmatprep.subr.bf16.mxu0 0
  %3295 = vmatpush1.bf16.msra.mxu0 0
  %3296 = vmatprep.subr.bf16.mxu0 0
  %3297 = vmatpush1.bf16.msra.mxu0 0
  %3298 = vmatprep.subr.bf16.mxu0 0
  %3299 = vmatpush1.bf16.msra.mxu0 0
  %3300 = vmatprep.subr.bf16.mxu0 0
  %3301 = vmatpush1.bf16.msra.mxu0 0
  %3302 = vmatprep.subr.bf16.mxu0 0
  %3303 = vmatpush1.bf16.msra.mxu0 0
  %3304 = vmatprep.subr.bf16.mxu0 0
  %3305 = vmatpush1.bf16.msra.mxu0 0
  %3306 = vmatprep.subr.bf16.mxu0 0
  %3307 = vmatpush1.bf16.msra.mxu0 0
  %3308 = vmatprep.subr.bf16.mxu0 0
  %3309 = vmatpush1.bf16.msra.mxu0 0
  %3310 = vmatprep.subr.bf16.mxu0 0
  %3311 = vmatpush1.bf16.msra.mxu0 0
  %3312 = vmatprep.subr.bf16.mxu0 0
  %3313 = vmatpush1.bf16.msra.mxu0 0
  %3314 = vmatprep.subr.bf16.mxu0 0
  %3315 = vmatpush1.bf16.msra.mxu0 0
  %3316 = vmatprep.subr.bf16.mxu0 0
  %3317 = vmatpush1.bf16.msra.mxu0 0
  %3318 = vmatprep.subr.bf16.mxu0 0
  %3319 = vmatpush1.bf16.msra.mxu0 0
  %3320 = vmatprep.subr.bf16.mxu0 0
  %3321 = vmatpush1.bf16.msra.mxu0 0
  %3322 = vmatprep.subr.bf16.mxu0 0
  %3323 = vmatpush1.bf16.msra.mxu0 0
  %3324 = vmatprep.mubr.bf16.mxu0 0
  %3325 = vmatmul.mubr.bf16.gmra.mrb[0].mxu0 %v3290
  %v3326 = vpop.f32.mrb[0].mxu0
  %v3327 = vadd.f32 0.0, %v3326
  %v3328 = vpop.f32.mrb[0].mxu0
  %v3329 = vpop.f32.mrb[0].mxu0
  %v3330 = vpop.f32.mrb[0].mxu0
  %3331 = vdwg.mxu0
  %v3332 = vadd.f32 %v457, %v3327
  %v3333 = vxor.u32 %v3332, 2147483648
  %v3334 = vmul.f32 %v3333, 1.442695
  %v3335 = vpow.pop %v3334
  %v3336 = vadd.f32 %v3335, 1.0
  %v3337 = vrcp.pop %v3336
  %v3338 = vmul.f32 1.0, %v3337
  %v3339 = vld [vmem:[%s1016] sm:$0xf]
  %v3340 = vld [vmem:[%s1016 + $0x4] sm:$0xf]
  %v3343 = vunpack.c.l.b16 %v3339
  %v3344 = vunpack.c.l.b16 %v3340
  %v3345 = vpack.c.b16 %v3344, %v3343
  %3347 = vmatprep.subr.bf16.mxu0 0
  %3348 = vmatpush1.bf16.msra.mxu0 %v3345
  %3349 = vmatprep.subr.bf16.mxu0 0
  %3350 = vmatpush1.bf16.msra.mxu0 0
  %3351 = vmatprep.subr.bf16.mxu0 0
  %3352 = vmatpush1.bf16.msra.mxu0 0
  %3353 = vmatprep.subr.bf16.mxu0 0
  %3354 = vmatpush1.bf16.msra.mxu0 0
  %3355 = vmatprep.subr.bf16.mxu0 0
  %3356 = vmatpush1.bf16.msra.mxu0 0
  %3357 = vmatprep.subr.bf16.mxu0 0
  %3358 = vmatpush1.bf16.msra.mxu0 0
  %3359 = vmatprep.subr.bf16.mxu0 0
  %3360 = vmatpush1.bf16.msra.mxu0 0
  %3361 = vmatprep.subr.bf16.mxu0 0
  %3362 = vmatpush1.bf16.msra.mxu0 0
  %3363 = vmatprep.subr.bf16.mxu0 0
  %3364 = vmatpush1.bf16.msra.mxu0 0
  %3365 = vmatprep.subr.bf16.mxu0 0
  %3366 = vmatpush1.bf16.msra.mxu0 0
  %3367 = vmatprep.subr.bf16.mxu0 0
  %3368 = vmatpush1.bf16.msra.mxu0 0
  %3369 = vmatprep.subr.bf16.mxu0 0
  %3370 = vmatpush1.bf16.msra.mxu0 0
  %3371 = vmatprep.subr.bf16.mxu0 0
  %3372 = vmatpush1.bf16.msra.mxu0 0
  %3373 = vmatprep.subr.bf16.mxu0 0
  %3374 = vmatpush1.bf16.msra.mxu0 0
  %3375 = vmatprep.subr.bf16.mxu0 0
  %3376 = vmatpush1.bf16.msra.mxu0 0
  %3377 = vmatprep.subr.bf16.mxu0 0
  %3378 = vmatpush1.bf16.msra.mxu0 0
  %3379 = vmatprep.mubr.bf16.mxu0 0
  %3380 = vmatmul.mubr.bf16.gmra.mrb[0].mxu0 %v3290
  %v3381 = vpop.f32.mrb[0].mxu0
  %v3382 = vadd.f32 0.0, %v3381
  %v3383 = vpop.f32.mrb[0].mxu0
  %v3384 = vpop.f32.mrb[0].mxu0
  %v3385 = vpop.f32.mrb[0].mxu0
  %3386 = vdwg.mxu0
  %v3387 = vadd.f32 %v539, %v3382
  %v3388 = vxor.u32 %v3387, 2147483648
  %v3389 = vmul.f32 %v3388, 1.442695
  %v3390 = vpow.pop %v3389
  %v3391 = vadd.f32 %v3390, 1.0
  %v3392 = vrcp.pop %v3391
  %v3393 = vmul.f32 1.0, %v3392
  %v3394 = vld [vmem:[%s1072] sm:$0xf]
  %v3395 = vld [vmem:[%s1072 + $0x4] sm:$0xf]
  %v3398 = vunpack.c.l.b16 %v3394
  %v3399 = vunpack.c.l.b16 %v3395
  %v3400 = vpack.c.b16 %v3399, %v3398
  %3402 = vmatprep.subr.bf16.mxu0 0
  %3403 = vmatpush1.bf16.msra.mxu0 %v3400
  %3404 = vmatprep.subr.bf16.mxu0 0
  %3405 = vmatpush1.bf16.msra.mxu0 0
  %3406 = vmatprep.subr.bf16.mxu0 0
  %3407 = vmatpush1.bf16.msra.mxu0 0
  %3408 = vmatprep.subr.bf16.mxu0 0
  %3409 = vmatpush1.bf16.msra.mxu0 0
  %3410 = vmatprep.subr.bf16.mxu0 0
  %3411 = vmatpush1.bf16.msra.mxu0 0
  %3412 = vmatprep.subr.bf16.mxu0 0
  %3413 = vmatpush1.bf16.msra.mxu0 0
  %3414 = vmatprep.subr.bf16.mxu0 0
  %3415 = vmatpush1.bf16.msra.mxu0 0
  %3416 = vmatprep.subr.bf16.mxu0 0
  %3417 = vmatpush1.bf16.msra.mxu0 0
  %3418 = vmatprep.subr.bf16.mxu0 0
  %3419 = vmatpush1.bf16.msra.mxu0 0
  %3420 = vmatprep.subr.bf16.mxu0 0
  %3421 = vmatpush1.bf16.msra.mxu0 0
  %3422 = vmatprep.subr.bf16.mxu0 0
  %3423 = vmatpush1.bf16.msra.mxu0 0
  %3424 = vmatprep.subr.bf16.mxu0 0
  %3425 = vmatpush1.bf16.msra.mxu0 0
  %3426 = vmatprep.subr.bf16.mxu0 0
  %3427 = vmatpush1.bf16.msra.mxu0 0
  %3428 = vmatprep.subr.bf16.mxu0 0
  %3429 = vmatpush1.bf16.msra.mxu0 0
  %3430 = vmatprep.subr.bf16.mxu0 0
  %3431 = vmatpush1.bf16.msra.mxu0 0
  %3432 = vmatprep.subr.bf16.mxu0 0
  %3433 = vmatpush1.bf16.msra.mxu0 0
  %3434 = vmatprep.mubr.bf16.mxu0 0
  %3435 = vmatmul.mubr.bf16.gmra.mrb[0].mxu0 %v3290
  %v3436 = vpop.f32.mrb[0].mxu0
  %v3437 = vadd.f32 0.0, %v3436
  %v3438 = vpop.f32.mrb[0].mxu0
  %v3439 = vpop.f32.mrb[0].mxu0
  %v3440 = vpop.f32.mrb[0].mxu0
  %3441 = vdwg.mxu0
  %v3442 = vadd.f32 %v621, %v3437
  %v3443 = vtanh.pop %v3442
  %v3444 = vld [vmem:[%s1123] sm:$0xf]
  %v3445 = vld [vmem:[%s1123 + $0x4] sm:$0xf]
  %v3448 = vunpack.c.l.b16 %v3444
  %v3449 = vunpack.c.l.b16 %v3445
  %v3450 = vpack.c.b16 %v3449, %v3448
  %3452 = vmatprep.subr.bf16.mxu0 0
  %3453 = vmatpush1.bf16.msra.mxu0 %v3450
  %3454 = vmatprep.subr.bf16.mxu0 0
  %3455 = vmatpush1.bf16.msra.mxu0 0
  %3456 = vmatprep.subr.bf16.mxu0 0
  %3457 = vmatpush1.bf16.msra.mxu0 0
  %3458 = vmatprep.subr.bf16.mxu0 0
  %3459 = vmatpush1.bf16.msra.mxu0 0
  %3460 = vmatprep.subr.bf16.mxu0 0
  %3461 = vmatpush1.bf16.msra.mxu0 0
  %3462 = vmatprep.subr.bf16.mxu0 0
  %3463 = vmatpush1.bf16.msra.mxu0 0
  %3464 = vmatprep.subr.bf16.mxu0 0
  %3465 = vmatpush1.bf16.msra.mxu0 0
  %3466 = vmatprep.subr.bf16.mxu0 0
  %3467 = vmatpush1.bf16.msra.mxu0 0
  %3468 = vmatprep.subr.bf16.mxu0 0
  %3469 = vmatpush1.bf16.msra.mxu0 0
  %3470 = vmatprep.subr.bf16.mxu0 0
  %3471 = vmatpush1.bf16.msra.mxu0 0
  %3472 = vmatprep.subr.bf16.mxu0 0
  %3473 = vmatpush1.bf16.msra.mxu0 0
  %3474 = vmatprep.subr.bf16.mxu0 0
  %3475 = vmatpush1.bf16.msra.mxu0 0
  %3476 = vmatprep.subr.bf16.mxu0 0
  %3477 = vmatpush1.bf16.msra.mxu0 0
  %3478 = vmatprep.subr.bf16.mxu0 0
  %3479 = vmatpush1.bf16.msra.mxu0 0
  %3480 = vmatprep.subr.bf16.mxu0 0
  %3481 = vmatpush1.bf16.msra.mxu0 0
  %3482 = vmatprep.subr.bf16.mxu0 0
  %3483 = vmatpush1.bf16.msra.mxu0 0
  %3484 = vmatprep.mubr.bf16.mxu0 0
  %3485 = vmatmul.mubr.bf16.gmra.mrb[0].mxu0 %v3290
  %v3486 = vpop.f32.mrb[0].mxu0
  %v3487 = vadd.f32 0.0, %v3486
  %v3488 = vpop.f32.mrb[0].mxu0
  %v3489 = vpop.f32.mrb[0].mxu0
  %v3490 = vpop.f32.mrb[0].mxu0
  %3491 = vdwg.mxu0
  %v3492 = vadd.f32 %v703, %v3487
  %v3493 = vxor.u32 %v3492, 2147483648
  %v3494 = vmul.f32 %v3493, 1.442695
  %v3495 = vpow.pop %v3494
  %v3496 = vadd.f32 %v3495, 1.0
  %v3497 = vrcp.pop %v3496
  %v3498 = vmul.f32 1.0, %v3497
  %v3499 = vmul.f32 %v3393, %v3046
  %v3500 = vmul.f32 %v3338, %v3443
  %v3501 = vadd.f32 %v3499, %v3500
  %v3502 = vsel %vm1889, %v3501, 0.0
  %v3503 = vtanh.pop %v3502
  %v3504 = vmul.f32 %v3498, %v3503
  %v3505 = vsel %vm1889, %v3504, 0.0
  %s3506 = scalar_lea.vmem %s8, 40
  %3507 = vst.msk [vmem:[%s3506] sm:$0xff] %vm75, %v3279
  %s3508 = scalar_lea.vmem %s9, 16
  %3509 = vst.msk [vmem:[%s3508] sm:$0xff] %vm75, %v3505
  %v3510 = vpack.c.bf16 %v3279, %v3279
  %v3511 = vld [vmem:[%s3] sm:$0xf]
  %v3512 = vld [vmem:[%s3 + $0x4] sm:$0xf]
  %v3515 = vunpack.c.l.b16 %v3511
  %v3516 = vunpack.c.l.b16 %v3512
  %v3517 = vpack.c.b16 %v3516, %v3515
  %v3520 = vsel %vm75, %v3510, 0
  %3522 = vmatprep.subr.bf16.mxu0 0
  %3523 = vmatpush1.bf16.msra.mxu0 %v3517
  %3524 = vmatprep.subr.bf16.mxu0 0
  %3525 = vmatpush1.bf16.msra.mxu0 0
  %3526 = vmatprep.subr.bf16.mxu0 0
  %3527 = vmatpush1.bf16.msra.mxu0 0
  %3528 = vmatprep.subr.bf16.mxu0 0
  %3529 = vmatpush1.bf16.msra.mxu0 0
  %3530 = vmatprep.subr.bf16.mxu0 0
  %3531 = vmatpush1.bf16.msra.mxu0 0
  %3532 = vmatprep.subr.bf16.mxu0 0
  %3533 = vmatpush1.bf16.msra.mxu0 0
  %3534 = vmatprep.subr.bf16.mxu0 0
  %3535 = vmatpush1.bf16.msra.mxu0 0
  %3536 = vmatprep.subr.bf16.mxu0 0
  %3537 = vmatpush1.bf16.msra.mxu0 0
  %3538 = vmatprep.subr.bf16.mxu0 0
  %3539 = vmatpush1.bf16.msra.mxu0 0
  %3540 = vmatprep.subr.bf16.mxu0 0
  %3541 = vmatpush1.bf16.msra.mxu0 0
  %3542 = vmatprep.subr.bf16.mxu0 0
  %3543 = vmatpush1.bf16.msra.mxu0 0
  %3544 = vmatprep.subr.bf16.mxu0 0
  %3545 = vmatpush1.bf16.msra.mxu0 0
  %3546 = vmatprep.subr.bf16.mxu0 0
  %3547 = vmatpush1.bf16.msra.mxu0 0
  %3548 = vmatprep.subr.bf16.mxu0 0
  %3549 = vmatpush1.bf16.msra.mxu0 0
  %3550 = vmatprep.subr.bf16.mxu0 0
  %3551 = vmatpush1.bf16.msra.mxu0 0
  %3552 = vmatprep.subr.bf16.mxu0 0
  %3553 = vmatpush1.bf16.msra.mxu0 0
  %3554 = vmatprep.mubr.bf16.mxu0 0
  %3555 = vmatmul.mubr.bf16.gmra.mrb[0].mxu0 %v3520
  %v3556 = vpop.f32.mrb[0].mxu0
  %v3557 = vadd.f32 0.0, %v3556
  %v3558 = vpop.f32.mrb[0].mxu0
  %v3559 = vpop.f32.mrb[0].mxu0
  %v3560 = vpop.f32.mrb[0].mxu0
  %3561 = vdwg.mxu0
  %v3562 = vadd.f32 %v147, %v3557
  %v3563 = vxor.u32 %v3562, 2147483648
  %v3564 = vmul.f32 %v3563, 1.442695
  %v3565 = vpow.pop %v3564
  %v3566 = vadd.f32 %v3565, 1.0
  %v3567 = vrcp.pop %v3566
  %v3568 = vmul.f32 1.0, %v3567
  %v3569 = vld [vmem:[%s785] sm:$0xf]
  %v3570 = vld [vmem:[%s785 + $0x4] sm:$0xf]
  %v3573 = vunpack.c.l.b16 %v3569
  %v3574 = vunpack.c.l.b16 %v3570
  %v3575 = vpack.c.b16 %v3574, %v3573
  %3577 = vmatprep.subr.bf16.mxu0 0
  %3578 = vmatpush1.bf16.msra.mxu0 %v3575
  %3579 = vmatprep.subr.bf16.mxu0 0
  %3580 = vmatpush1.bf16.msra.mxu0 0
  %3581 = vmatprep.subr.bf16.mxu0 0
  %3582 = vmatpush1.bf16.msra.mxu0 0
  %3583 = vmatprep.subr.bf16.mxu0 0
  %3584 = vmatpush1.bf16.msra.mxu0 0
  %3585 = vmatprep.subr.bf16.mxu0 0
  %3586 = vmatpush1.bf16.msra.mxu0 0
  %3587 = vmatprep.subr.bf16.mxu0 0
  %3588 = vmatpush1.bf16.msra.mxu0 0
  %3589 = vmatprep.subr.bf16.mxu0 0
  %3590 = vmatpush1.bf16.msra.mxu0 0
  %3591 = vmatprep.subr.bf16.mxu0 0
  %3592 = vmatpush1.bf16.msra.mxu0 0
  %3593 = vmatprep.subr.bf16.mxu0 0
  %3594 = vmatpush1.bf16.msra.mxu0 0
  %3595 = vmatprep.subr.bf16.mxu0 0
  %3596 = vmatpush1.bf16.msra.mxu0 0
  %3597 = vmatprep.subr.bf16.mxu0 0
  %3598 = vmatpush1.bf16.msra.mxu0 0
  %3599 = vmatprep.subr.bf16.mxu0 0
  %3600 = vmatpush1.bf16.msra.mxu0 0
  %3601 = vmatprep.subr.bf16.mxu0 0
  %3602 = vmatpush1.bf16.msra.mxu0 0
  %3603 = vmatprep.subr.bf16.mxu0 0
  %3604 = vmatpush1.bf16.msra.mxu0 0
  %3605 = vmatprep.subr.bf16.mxu0 0
  %3606 = vmatpush1.bf16.msra.mxu0 0
  %3607 = vmatprep.subr.bf16.mxu0 0
  %3608 = vmatpush1.bf16.msra.mxu0 0
  %3609 = vmatprep.mubr.bf16.mxu0 0
  %3610 = vmatmul.mubr.bf16.gmra.mrb[0].mxu0 %v3520
  %v3611 = vpop.f32.mrb[0].mxu0
  %v3612 = vadd.f32 0.0, %v3611
  %v3613 = vpop.f32.mrb[0].mxu0
  %v3614 = vpop.f32.mrb[0].mxu0
  %v3615 = vpop.f32.mrb[0].mxu0
  %3616 = vdwg.mxu0
  %v3617 = vadd.f32 %v229, %v3612
  %v3618 = vxor.u32 %v3617, 2147483648
  %v3619 = vmul.f32 %v3618, 1.442695
  %v3620 = vpow.pop %v3619
  %v3621 = vadd.f32 %v3620, 1.0
  %v3622 = vrcp.pop %v3621
  %v3623 = vmul.f32 1.0, %v3622
  %v3624 = vld [vmem:[%s841] sm:$0xf]
  %v3625 = vld [vmem:[%s841 + $0x4] sm:$0xf]
  %v3628 = vunpack.c.l.b16 %v3624
  %v3629 = vunpack.c.l.b16 %v3625
  %v3630 = vpack.c.b16 %v3629, %v3628
  %3632 = vmatprep.subr.bf16.mxu0 0
  %3633 = vmatpush1.bf16.msra.mxu0 %v3630
  %3634 = vmatprep.subr.bf16.mxu0 0
  %3635 = vmatpush1.bf16.msra.mxu0 0
  %3636 = vmatprep.subr.bf16.mxu0 0
  %3637 = vmatpush1.bf16.msra.mxu0 0
  %3638 = vmatprep.subr.bf16.mxu0 0
  %3639 = vmatpush1.bf16.msra.mxu0 0
  %3640 = vmatprep.subr.bf16.mxu0 0
  %3641 = vmatpush1.bf16.msra.mxu0 0
  %3642 = vmatprep.subr.bf16.mxu0 0
  %3643 = vmatpush1.bf16.msra.mxu0 0
  %3644 = vmatprep.subr.bf16.mxu0 0
  %3645 = vmatpush1.bf16.msra.mxu0 0
  %3646 = vmatprep.subr.bf16.mxu0 0
  %3647 = vmatpush1.bf16.msra.mxu0 0
  %3648 = vmatprep.subr.bf16.mxu0 0
  %3649 = vmatpush1.bf16.msra.mxu0 0
  %3650 = vmatprep.subr.bf16.mxu0 0
  %3651 = vmatpush1.bf16.msra.mxu0 0
  %3652 = vmatprep.subr.bf16.mxu0 0
  %3653 = vmatpush1.bf16.msra.mxu0 0
  %3654 = vmatprep.subr.bf16.mxu0 0
  %3655 = vmatpush1.bf16.msra.mxu0 0
  %3656 = vmatprep.subr.bf16.mxu0 0
  %3657 = vmatpush1.bf16.msra.mxu0 0
  %3658 = vmatprep.subr.bf16.mxu0 0
  %3659 = vmatpush1.bf16.msra.mxu0 0
  %3660 = vmatprep.subr.bf16.mxu0 0
  %3661 = vmatpush1.bf16.msra.mxu0 0
  %3662 = vmatprep.subr.bf16.mxu0 0
  %3663 = vmatpush1.bf16.msra.mxu0 0
  %3664 = vmatprep.mubr.bf16.mxu0 0
  %3665 = vmatmul.mubr.bf16.gmra.mrb[0].mxu0 %v3520
  %v3666 = vpop.f32.mrb[0].mxu0
  %v3667 = vadd.f32 0.0, %v3666
  %v3668 = vpop.f32.mrb[0].mxu0
  %v3669 = vpop.f32.mrb[0].mxu0
  %v3670 = vpop.f32.mrb[0].mxu0
  %3671 = vdwg.mxu0
  %v3672 = vadd.f32 %v311, %v3667
  %v3673 = vtanh.pop %v3672
  %v3674 = vld [vmem:[%s892] sm:$0xf]
  %v3675 = vld [vmem:[%s892 + $0x4] sm:$0xf]
  %v3678 = vunpack.c.l.b16 %v3674
  %v3679 = vunpack.c.l.b16 %v3675
  %v3680 = vpack.c.b16 %v3679, %v3678
  %3682 = vmatprep.subr.bf16.mxu0 0
  %3683 = vmatpush1.bf16.msra.mxu0 %v3680
  %3684 = vmatprep.subr.bf16.mxu0 0
  %3685 = vmatpush1.bf16.msra.mxu0 0
  %3686 = vmatprep.subr.bf16.mxu0 0
  %3687 = vmatpush1.bf16.msra.mxu0 0
  %3688 = vmatprep.subr.bf16.mxu0 0
  %3689 = vmatpush1.bf16.msra.mxu0 0
  %3690 = vmatprep.subr.bf16.mxu0 0
  %3691 = vmatpush1.bf16.msra.mxu0 0
  %3692 = vmatprep.subr.bf16.mxu0 0
  %3693 = vmatpush1.bf16.msra.mxu0 0
  %3694 = vmatprep.subr.bf16.mxu0 0
  %3695 = vmatpush1.bf16.msra.mxu0 0
  %3696 = vmatprep.subr.bf16.mxu0 0
  %3697 = vmatpush1.bf16.msra.mxu0 0
  %3698 = vmatprep.subr.bf16.mxu0 0
  %3699 = vmatpush1.bf16.msra.mxu0 0
  %3700 = vmatprep.subr.bf16.mxu0 0
  %3701 = vmatpush1.bf16.msra.mxu0 0
  %3702 = vmatprep.subr.bf16.mxu0 0
  %3703 = vmatpush1.bf16.msra.mxu0 0
  %3704 = vmatprep.subr.bf16.mxu0 0
  %3705 = vmatpush1.bf16.msra.mxu0 0
  %3706 = vmatprep.subr.bf16.mxu0 0
  %3707 = vmatpush1.bf16.msra.mxu0 0
  %3708 = vmatprep.subr.bf16.mxu0 0
  %3709 = vmatpush1.bf16.msra.mxu0 0
  %3710 = vmatprep.subr.bf16.mxu0 0
  %3711 = vmatpush1.bf16.msra.mxu0 0
  %3712 = vmatprep.subr.bf16.mxu0 0
  %3713 = vmatpush1.bf16.msra.mxu0 0
  %3714 = vmatprep.mubr.bf16.mxu0 0
  %3715 = vmatmul.mubr.bf16.gmra.mrb[0].mxu0 %v3520
  %v3716 = vpop.f32.mrb[0].mxu0
  %v3717 = vadd.f32 0.0, %v3716
  %v3718 = vpop.f32.mrb[0].mxu0
  %v3719 = vpop.f32.mrb[0].mxu0
  %v3720 = vpop.f32.mrb[0].mxu0
  %3721 = vdwg.mxu0
  %v3722 = vadd.f32 %v393, %v3717
  %v3723 = vxor.u32 %v3722, 2147483648
  %v3724 = vmul.f32 %v3723, 1.442695
  %v3725 = vpow.pop %v3724
  %v3726 = vadd.f32 %v3725, 1.0
  %v3727 = vrcp.pop %v3726
  %v3728 = vmul.f32 1.0, %v3727
  %v3729 = vmul.f32 %v3623, %v3276
  %v3730 = vmul.f32 %v3568, %v3673
  %v3731 = vadd.f32 %v3729, %v3730
  %v3732 = vsel %vm1653, %v3731, 0.0
  %v3733 = vtanh.pop %v3732
  %v3734 = vmul.f32 %v3728, %v3733
  %v3735 = vsel %vm1653, %v3734, 0.0
  %v3736 = vpack.c.bf16 %v3505, %v3505
  %v3737 = vld [vmem:[%s6] sm:$0xf]
  %v3738 = vld [vmem:[%s6 + $0x4] sm:$0xf]
  %v3741 = vunpack.c.l.b16 %v3737
  %v3742 = vunpack.c.l.b16 %v3738
  %v3743 = vpack.c.b16 %v3742, %v3741
  %v3746 = vsel %vm75, %v3736, 0
  %3748 = vmatprep.subr.bf16.mxu0 0
  %3749 = vmatpush1.bf16.msra.mxu0 %v3743
  %3750 = vmatprep.subr.bf16.mxu0 0
  %3751 = vmatpush1.bf16.msra.mxu0 0
  %3752 = vmatprep.subr.bf16.mxu0 0
  %3753 = vmatpush1.bf16.msra.mxu0 0
  %3754 = vmatprep.subr.bf16.mxu0 0
  %3755 = vmatpush1.bf16.msra.mxu0 0
  %3756 = vmatprep.subr.bf16.mxu0 0
  %3757 = vmatpush1.bf16.msra.mxu0 0
  %3758 = vmatprep.subr.bf16.mxu0 0
  %3759 = vmatpush1.bf16.msra.mxu0 0
  %3760 = vmatprep.subr.bf16.mxu0 0
  %3761 = vmatpush1.bf16.msra.mxu0 0
  %3762 = vmatprep.subr.bf16.mxu0 0
  %3763 = vmatpush1.bf16.msra.mxu0 0
  %3764 = vmatprep.subr.bf16.mxu0 0
  %3765 = vmatpush1.bf16.msra.mxu0 0
  %3766 = vmatprep.subr.bf16.mxu0 0
  %3767 = vmatpush1.bf16.msra.mxu0 0
  %3768 = vmatprep.subr.bf16.mxu0 0
  %3769 = vmatpush1.bf16.msra.mxu0 0
  %3770 = vmatprep.subr.bf16.mxu0 0
  %3771 = vmatpush1.bf16.msra.mxu0 0
  %3772 = vmatprep.subr.bf16.mxu0 0
  %3773 = vmatpush1.bf16.msra.mxu0 0
  %3774 = vmatprep.subr.bf16.mxu0 0
  %3775 = vmatpush1.bf16.msra.mxu0 0
  %3776 = vmatprep.subr.bf16.mxu0 0
  %3777 = vmatpush1.bf16.msra.mxu0 0
  %3778 = vmatprep.subr.bf16.mxu0 0
  %3779 = vmatpush1.bf16.msra.mxu0 0
  %3780 = vmatprep.mubr.bf16.mxu0 0
  %3781 = vmatmul.mubr.bf16.gmra.mrb[0].mxu0 %v3746
  %v3782 = vpop.f32.mrb[0].mxu0
  %v3783 = vadd.f32 0.0, %v3782
  %v3784 = vpop.f32.mrb[0].mxu0
  %v3785 = vpop.f32.mrb[0].mxu0
  %v3786 = vpop.f32.mrb[0].mxu0
  %3787 = vdwg.mxu0
  %v3788 = vadd.f32 %v452, %v3783
  %v3789 = vxor.u32 %v3788, 2147483648
  %v3790 = vmul.f32 %v3789, 1.442695
  %v3791 = vpow.pop %v3790
  %v3792 = vadd.f32 %v3791, 1.0
  %v3793 = vrcp.pop %v3792
  %v3794 = vmul.f32 1.0, %v3793
  %v3795 = vld [vmem:[%s1016] sm:$0xf]
  %v3796 = vld [vmem:[%s1016 + $0x4] sm:$0xf]
  %v3799 = vunpack.c.l.b16 %v3795
  %v3800 = vunpack.c.l.b16 %v3796
  %v3801 = vpack.c.b16 %v3800, %v3799
  %3803 = vmatprep.subr.bf16.mxu0 0
  %3804 = vmatpush1.bf16.msra.mxu0 %v3801
  %3805 = vmatprep.subr.bf16.mxu0 0
  %3806 = vmatpush1.bf16.msra.mxu0 0
  %3807 = vmatprep.subr.bf16.mxu0 0
  %3808 = vmatpush1.bf16.msra.mxu0 0
  %3809 = vmatprep.subr.bf16.mxu0 0
  %3810 = vmatpush1.bf16.msra.mxu0 0
  %3811 = vmatprep.subr.bf16.mxu0 0
  %3812 = vmatpush1.bf16.msra.mxu0 0
  %3813 = vmatprep.subr.bf16.mxu0 0
  %3814 = vmatpush1.bf16.msra.mxu0 0
  %3815 = vmatprep.subr.bf16.mxu0 0
  %3816 = vmatpush1.bf16.msra.mxu0 0
  %3817 = vmatprep.subr.bf16.mxu0 0
  %3818 = vmatpush1.bf16.msra.mxu0 0
  %3819 = vmatprep.subr.bf16.mxu0 0
  %3820 = vmatpush1.bf16.msra.mxu0 0
  %3821 = vmatprep.subr.bf16.mxu0 0
  %3822 = vmatpush1.bf16.msra.mxu0 0
  %3823 = vmatprep.subr.bf16.mxu0 0
  %3824 = vmatpush1.bf16.msra.mxu0 0
  %3825 = vmatprep.subr.bf16.mxu0 0
  %3826 = vmatpush1.bf16.msra.mxu0 0
  %3827 = vmatprep.subr.bf16.mxu0 0
  %3828 = vmatpush1.bf16.msra.mxu0 0
  %3829 = vmatprep.subr.bf16.mxu0 0
  %3830 = vmatpush1.bf16.msra.mxu0 0
  %3831 = vmatprep.subr.bf16.mxu0 0
  %3832 = vmatpush1.bf16.msra.mxu0 0
  %3833 = vmatprep.subr.bf16.mxu0 0
  %3834 = vmatpush1.bf16.msra.mxu0 0
  %3835 = vmatprep.mubr.bf16.mxu0 0
  %3836 = vmatmul.mubr.bf16.gmra.mrb[0].mxu0 %v3746
  %v3837 = vpop.f32.mrb[0].mxu0
  %v3838 = vadd.f32 0.0, %v3837
  %v3839 = vpop.f32.mrb[0].mxu0
  %v3840 = vpop.f32.mrb[0].mxu0
  %v3841 = vpop.f32.mrb[0].mxu0
  %3842 = vdwg.mxu0
  %v3843 = vadd.f32 %v534, %v3838
  %v3844 = vxor.u32 %v3843, 2147483648
  %v3845 = vmul.f32 %v3844, 1.442695
  %v3846 = vpow.pop %v3845
  %v3847 = vadd.f32 %v3846, 1.0
  %v3848 = vrcp.pop %v3847
  %v3849 = vmul.f32 1.0, %v3848
  %v3850 = vld [vmem:[%s1072] sm:$0xf]
  %v3851 = vld [vmem:[%s1072 + $0x4] sm:$0xf]
  %v3854 = vunpack.c.l.b16 %v3850
  %v3855 = vunpack.c.l.b16 %v3851
  %v3856 = vpack.c.b16 %v3855, %v3854
  %3858 = vmatprep.subr.bf16.mxu0 0
  %3859 = vmatpush1.bf16.msra.mxu0 %v3856
  %3860 = vmatprep.subr.bf16.mxu0 0
  %3861 = vmatpush1.bf16.msra.mxu0 0
  %3862 = vmatprep.subr.bf16.mxu0 0
  %3863 = vmatpush1.bf16.msra.mxu0 0
  %3864 = vmatprep.subr.bf16.mxu0 0
  %3865 = vmatpush1.bf16.msra.mxu0 0
  %3866 = vmatprep.subr.bf16.mxu0 0
  %3867 = vmatpush1.bf16.msra.mxu0 0
  %3868 = vmatprep.subr.bf16.mxu0 0
  %3869 = vmatpush1.bf16.msra.mxu0 0
  %3870 = vmatprep.subr.bf16.mxu0 0
  %3871 = vmatpush1.bf16.msra.mxu0 0
  %3872 = vmatprep.subr.bf16.mxu0 0
  %3873 = vmatpush1.bf16.msra.mxu0 0
  %3874 = vmatprep.subr.bf16.mxu0 0
  %3875 = vmatpush1.bf16.msra.mxu0 0
  %3876 = vmatprep.subr.bf16.mxu0 0
  %3877 = vmatpush1.bf16.msra.mxu0 0
  %3878 = vmatprep.subr.bf16.mxu0 0
  %3879 = vmatpush1.bf16.msra.mxu0 0
  %3880 = vmatprep.subr.bf16.mxu0 0
  %3881 = vmatpush1.bf16.msra.mxu0 0
  %3882 = vmatprep.subr.bf16.mxu0 0
  %3883 = vmatpush1.bf16.msra.mxu0 0
  %3884 = vmatprep.subr.bf16.mxu0 0
  %3885 = vmatpush1.bf16.msra.mxu0 0
  %3886 = vmatprep.subr.bf16.mxu0 0
  %3887 = vmatpush1.bf16.msra.mxu0 0
  %3888 = vmatprep.subr.bf16.mxu0 0
  %3889 = vmatpush1.bf16.msra.mxu0 0
  %3890 = vmatprep.mubr.bf16.mxu0 0
  %3891 = vmatmul.mubr.bf16.gmra.mrb[0].mxu0 %v3746
  %v3892 = vpop.f32.mrb[0].mxu0
  %v3893 = vadd.f32 0.0, %v3892
  %v3894 = vpop.f32.mrb[0].mxu0
  %v3895 = vpop.f32.mrb[0].mxu0
  %v3896 = vpop.f32.mrb[0].mxu0
  %3897 = vdwg.mxu0
  %v3898 = vadd.f32 %v616, %v3893
  %v3899 = vtanh.pop %v3898
  %v3900 = vld [vmem:[%s1123] sm:$0xf]
  %v3901 = vld [vmem:[%s1123 + $0x4] sm:$0xf]
  %v3904 = vunpack.c.l.b16 %v3900
  %v3905 = vunpack.c.l.b16 %v3901
  %v3906 = vpack.c.b16 %v3905, %v3904
  %3908 = vmatprep.subr.bf16.mxu0 0
  %3909 = vmatpush1.bf16.msra.mxu0 %v3906
  %3910 = vmatprep.subr.bf16.mxu0 0
  %3911 = vmatpush1.bf16.msra.mxu0 0
  %3912 = vmatprep.subr.bf16.mxu0 0
  %3913 = vmatpush1.bf16.msra.mxu0 0
  %3914 = vmatprep.subr.bf16.mxu0 0
  %3915 = vmatpush1.bf16.msra.mxu0 0
  %3916 = vmatprep.subr.bf16.mxu0 0
  %3917 = vmatpush1.bf16.msra.mxu0 0
  %3918 = vmatprep.subr.bf16.mxu0 0
  %3919 = vmatpush1.bf16.msra.mxu0 0
  %3920 = vmatprep.subr.bf16.mxu0 0
  %3921 = vmatpush1.bf16.msra.mxu0 0
  %3922 = vmatprep.subr.bf16.mxu0 0
  %3923 = vmatpush1.bf16.msra.mxu0 0
  %3924 = vmatprep.subr.bf16.mxu0 0
  %3925 = vmatpush1.bf16.msra.mxu0 0
  %3926 = vmatprep.subr.bf16.mxu0 0
  %3927 = vmatpush1.bf16.msra.mxu0 0
  %3928 = vmatprep.subr.bf16.mxu0 0
  %3929 = vmatpush1.bf16.msra.mxu0 0
  %3930 = vmatprep.subr.bf16.mxu0 0
  %3931 = vmatpush1.bf16.msra.mxu0 0
  %3932 = vmatprep.subr.bf16.mxu0 0
  %3933 = vmatpush1.bf16.msra.mxu0 0
  %3934 = vmatprep.subr.bf16.mxu0 0
  %3935 = vmatpush1.bf16.msra.mxu0 0
  %3936 = vmatprep.subr.bf16.mxu0 0
  %3937 = vmatpush1.bf16.msra.mxu0 0
  %3938 = vmatprep.subr.bf16.mxu0 0
  %3939 = vmatpush1.bf16.msra.mxu0 0
  %3940 = vmatprep.mubr.bf16.mxu0 0
  %3941 = vmatmul.mubr.bf16.gmra.mrb[0].mxu0 %v3746
  %v3942 = vpop.f32.mrb[0].mxu0
  %v3943 = vadd.f32 0.0, %v3942
  %v3944 = vpop.f32.mrb[0].mxu0
  %v3945 = vpop.f32.mrb[0].mxu0
  %v3946 = vpop.f32.mrb[0].mxu0
  %3947 = vdwg.mxu0
  %v3948 = vadd.f32 %v698, %v3943
  %v3949 = vxor.u32 %v3948, 2147483648
  %v3950 = vmul.f32 %v3949, 1.442695
  %v3951 = vpow.pop %v3950
  %v3952 = vadd.f32 %v3951, 1.0
  %v3953 = vrcp.pop %v3952
  %v3954 = vmul.f32 1.0, %v3953
  %v3955 = vmul.f32 %v3849, %v3502
  %v3956 = vmul.f32 %v3794, %v3899
  %v3957 = vadd.f32 %v3955, %v3956
  %v3958 = vsel %vm1421, %v3957, 0.0
  %v3959 = vtanh.pop %v3958
  %v3960 = vmul.f32 %v3954, %v3959
  %v3961 = vsel %vm1421, %v3960, 0.0
  %s3962 = scalar_lea.vmem %s8, 48
  %3963 = vst.msk [vmem:[%s3962] sm:$0xff] %vm75, %v3735
  %s3964 = scalar_lea.vmem %s9, 8
  %3965 = vst.msk [vmem:[%s3964] sm:$0xff] %vm75, %v3961
  %v3966 = vpack.c.bf16 %v3735, %v3735
  %v3967 = vld [vmem:[%s3] sm:$0xf]
  %v3968 = vld [vmem:[%s3 + $0x4] sm:$0xf]
  %v3971 = vunpack.c.l.b16 %v3967
  %v3972 = vunpack.c.l.b16 %v3968
  %v3973 = vpack.c.b16 %v3972, %v3971
  %v3976 = vsel %vm75, %v3966, 0
  %3978 = vmatprep.subr.bf16.mxu0 0
  %3979 = vmatpush1.bf16.msra.mxu0 %v3973
  %3980 = vmatprep.subr.bf16.mxu0 0
  %3981 = vmatpush1.bf16.msra.mxu0 0
  %3982 = vmatprep.subr.bf16.mxu0 0
  %3983 = vmatpush1.bf16.msra.mxu0 0
  %3984 = vmatprep.subr.bf16.mxu0 0
  %3985 = vmatpush1.bf16.msra.mxu0 0
  %3986 = vmatprep.subr.bf16.mxu0 0
  %3987 = vmatpush1.bf16.msra.mxu0 0
  %3988 = vmatprep.subr.bf16.mxu0 0
  %3989 = vmatpush1.bf16.msra.mxu0 0
  %3990 = vmatprep.subr.bf16.mxu0 0
  %3991 = vmatpush1.bf16.msra.mxu0 0
  %3992 = vmatprep.subr.bf16.mxu0 0
  %3993 = vmatpush1.bf16.msra.mxu0 0
  %3994 = vmatprep.subr.bf16.mxu0 0
  %3995 = vmatpush1.bf16.msra.mxu0 0
  %3996 = vmatprep.subr.bf16.mxu0 0
  %3997 = vmatpush1.bf16.msra.mxu0 0
  %3998 = vmatprep.subr.bf16.mxu0 0
  %3999 = vmatpush1.bf16.msra.mxu0 0
  %4000 = vmatprep.subr.bf16.mxu0 0
  %4001 = vmatpush1.bf16.msra.mxu0 0
  %4002 = vmatprep.subr.bf16.mxu0 0
  %4003 = vmatpush1.bf16.msra.mxu0 0
  %4004 = vmatprep.subr.bf16.mxu0 0
  %4005 = vmatpush1.bf16.msra.mxu0 0
  %4006 = vmatprep.subr.bf16.mxu0 0
  %4007 = vmatpush1.bf16.msra.mxu0 0
  %4008 = vmatprep.subr.bf16.mxu0 0
  %4009 = vmatpush1.bf16.msra.mxu0 0
  %4010 = vmatprep.mubr.bf16.mxu0 0
  %4011 = vmatmul.mubr.bf16.gmra.mrb[0].mxu0 %v3976
  %v4012 = vpop.f32.mrb[0].mxu0
  %v4013 = vadd.f32 0.0, %v4012
  %v4014 = vpop.f32.mrb[0].mxu0
  %v4015 = vpop.f32.mrb[0].mxu0
  %v4016 = vpop.f32.mrb[0].mxu0
  %4017 = vdwg.mxu0
  %v4018 = vadd.f32 %v150, %v4013
  %v4019 = vxor.u32 %v4018, 2147483648
  %v4020 = vmul.f32 %v4019, 1.442695
  %v4021 = vpow.pop %v4020
  %v4022 = vadd.f32 %v4021, 1.0
  %v4023 = vrcp.pop %v4022
  %v4024 = vmul.f32 1.0, %v4023
  %v4025 = vld [vmem:[%s785] sm:$0xf]
  %v4026 = vld [vmem:[%s785 + $0x4] sm:$0xf]
  %v4029 = vunpack.c.l.b16 %v4025
  %v4030 = vunpack.c.l.b16 %v4026
  %v4031 = vpack.c.b16 %v4030, %v4029
  %4033 = vmatprep.subr.bf16.mxu0 0
  %4034 = vmatpush1.bf16.msra.mxu0 %v4031
  %4035 = vmatprep.subr.bf16.mxu0 0
  %4036 = vmatpush1.bf16.msra.mxu0 0
  %4037 = vmatprep.subr.bf16.mxu0 0
  %4038 = vmatpush1.bf16.msra.mxu0 0
  %4039 = vmatprep.subr.bf16.mxu0 0
  %4040 = vmatpush1.bf16.msra.mxu0 0
  %4041 = vmatprep.subr.bf16.mxu0 0
  %4042 = vmatpush1.bf16.msra.mxu0 0
  %4043 = vmatprep.subr.bf16.mxu0 0
  %4044 = vmatpush1.bf16.msra.mxu0 0
  %4045 = vmatprep.subr.bf16.mxu0 0
  %4046 = vmatpush1.bf16.msra.mxu0 0
  %4047 = vmatprep.subr.bf16.mxu0 0
  %4048 = vmatpush1.bf16.msra.mxu0 0
  %4049 = vmatprep.subr.bf16.mxu0 0
  %4050 = vmatpush1.bf16.msra.mxu0 0
  %4051 = vmatprep.subr.bf16.mxu0 0
  %4052 = vmatpush1.bf16.msra.mxu0 0
  %4053 = vmatprep.subr.bf16.mxu0 0
  %4054 = vmatpush1.bf16.msra.mxu0 0
  %4055 = vmatprep.subr.bf16.mxu0 0
  %4056 = vmatpush1.bf16.msra.mxu0 0
  %4057 = vmatprep.subr.bf16.mxu0 0
  %4058 = vmatpush1.bf16.msra.mxu0 0
  %4059 = vmatprep.subr.bf16.mxu0 0
  %4060 = vmatpush1.bf16.msra.mxu0 0
  %4061 = vmatprep.subr.bf16.mxu0 0
  %4062 = vmatpush1.bf16.msra.mxu0 0
  %4063 = vmatprep.subr.bf16.mxu0 0
  %4064 = vmatpush1.bf16.msra.mxu0 0
  %4065 = vmatprep.mubr.bf16.mxu0 0
  %4066 = vmatmul.mubr.bf16.gmra.mrb[0].mxu0 %v3976
  %v4067 = vpop.f32.mrb[0].mxu0
  %v4068 = vadd.f32 0.0, %v4067
  %v4069 = vpop.f32.mrb[0].mxu0
  %v4070 = vpop.f32.mrb[0].mxu0
  %v4071 = vpop.f32.mrb[0].mxu0
  %4072 = vdwg.mxu0
  %v4073 = vadd.f32 %v232, %v4068
  %v4074 = vxor.u32 %v4073, 2147483648
  %v4075 = vmul.f32 %v4074, 1.442695
  %v4076 = vpow.pop %v4075
  %v4077 = vadd.f32 %v4076, 1.0
  %v4078 = vrcp.pop %v4077
  %v4079 = vmul.f32 1.0, %v4078
  %v4080 = vld [vmem:[%s841] sm:$0xf]
  %v4081 = vld [vmem:[%s841 + $0x4] sm:$0xf]
  %v4084 = vunpack.c.l.b16 %v4080
  %v4085 = vunpack.c.l.b16 %v4081
  %v4086 = vpack.c.b16 %v4085, %v4084
  %4088 = vmatprep.subr.bf16.mxu0 0
  %4089 = vmatpush1.bf16.msra.mxu0 %v4086
  %4090 = vmatprep.subr.bf16.mxu0 0
  %4091 = vmatpush1.bf16.msra.mxu0 0
  %4092 = vmatprep.subr.bf16.mxu0 0
  %4093 = vmatpush1.bf16.msra.mxu0 0
  %4094 = vmatprep.subr.bf16.mxu0 0
  %4095 = vmatpush1.bf16.msra.mxu0 0
  %4096 = vmatprep.subr.bf16.mxu0 0
  %4097 = vmatpush1.bf16.msra.mxu0 0
  %4098 = vmatprep.subr.bf16.mxu0 0
  %4099 = vmatpush1.bf16.msra.mxu0 0
  %4100 = vmatprep.subr.bf16.mxu0 0
  %4101 = vmatpush1.bf16.msra.mxu0 0
  %4102 = vmatprep.subr.bf16.mxu0 0
  %4103 = vmatpush1.bf16.msra.mxu0 0
  %4104 = vmatprep.subr.bf16.mxu0 0
  %4105 = vmatpush1.bf16.msra.mxu0 0
  %4106 = vmatprep.subr.bf16.mxu0 0
  %4107 = vmatpush1.bf16.msra.mxu0 0
  %4108 = vmatprep.subr.bf16.mxu0 0
  %4109 = vmatpush1.bf16.msra.mxu0 0
  %4110 = vmatprep.subr.bf16.mxu0 0
  %4111 = vmatpush1.bf16.msra.mxu0 0
  %4112 = vmatprep.subr.bf16.mxu0 0
  %4113 = vmatpush1.bf16.msra.mxu0 0
  %4114 = vmatprep.subr.bf16.mxu0 0
  %4115 = vmatpush1.bf16.msra.mxu0 0
  %4116 = vmatprep.subr.bf16.mxu0 0
  %4117 = vmatpush1.bf16.msra.mxu0 0
  %4118 = vmatprep.subr.bf16.mxu0 0
  %4119 = vmatpush1.bf16.msra.mxu0 0
  %4120 = vmatprep.mubr.bf16.mxu0 0
  %4121 = vmatmul.mubr.bf16.gmra.mrb[0].mxu0 %v3976
  %v4122 = vpop.f32.mrb[0].mxu0
  %v4123 = vadd.f32 0.0, %v4122
  %v4124 = vpop.f32.mrb[0].mxu0
  %v4125 = vpop.f32.mrb[0].mxu0
  %v4126 = vpop.f32.mrb[0].mxu0
  %4127 = vdwg.mxu0
  %v4128 = vadd.f32 %v314, %v4123
  %v4129 = vtanh.pop %v4128
  %v4130 = vld [vmem:[%s892] sm:$0xf]
  %v4131 = vld [vmem:[%s892 + $0x4] sm:$0xf]
  %v4134 = vunpack.c.l.b16 %v4130
  %v4135 = vunpack.c.l.b16 %v4131
  %v4136 = vpack.c.b16 %v4135, %v4134
  %4138 = vmatprep.subr.bf16.mxu0 0
  %4139 = vmatpush1.bf16.msra.mxu0 %v4136
  %4140 = vmatprep.subr.bf16.mxu0 0
  %4141 = vmatpush1.bf16.msra.mxu0 0
  %4142 = vmatprep.subr.bf16.mxu0 0
  %4143 = vmatpush1.bf16.msra.mxu0 0
  %4144 = vmatprep.subr.bf16.mxu0 0
  %4145 = vmatpush1.bf16.msra.mxu0 0
  %4146 = vmatprep.subr.bf16.mxu0 0
  %4147 = vmatpush1.bf16.msra.mxu0 0
  %4148 = vmatprep.subr.bf16.mxu0 0
  %4149 = vmatpush1.bf16.msra.mxu0 0
  %4150 = vmatprep.subr.bf16.mxu0 0
  %4151 = vmatpush1.bf16.msra.mxu0 0
  %4152 = vmatprep.subr.bf16.mxu0 0
  %4153 = vmatpush1.bf16.msra.mxu0 0
  %4154 = vmatprep.subr.bf16.mxu0 0
  %4155 = vmatpush1.bf16.msra.mxu0 0
  %4156 = vmatprep.subr.bf16.mxu0 0
  %4157 = vmatpush1.bf16.msra.mxu0 0
  %4158 = vmatprep.subr.bf16.mxu0 0
  %4159 = vmatpush1.bf16.msra.mxu0 0
  %4160 = vmatprep.subr.bf16.mxu0 0
  %4161 = vmatpush1.bf16.msra.mxu0 0
  %4162 = vmatprep.subr.bf16.mxu0 0
  %4163 = vmatpush1.bf16.msra.mxu0 0
  %4164 = vmatprep.subr.bf16.mxu0 0
  %4165 = vmatpush1.bf16.msra.mxu0 0
  %4166 = vmatprep.subr.bf16.mxu0 0
  %4167 = vmatpush1.bf16.msra.mxu0 0
  %4168 = vmatprep.subr.bf16.mxu0 0
  %4169 = vmatpush1.bf16.msra.mxu0 0
  %4170 = vmatprep.mubr.bf16.mxu0 0
  %4171 = vmatmul.mubr.bf16.gmra.mrb[0].mxu0 %v3976
  %v4172 = vpop.f32.mrb[0].mxu0
  %v4173 = vadd.f32 0.0, %v4172
  %v4174 = vpop.f32.mrb[0].mxu0
  %v4175 = vpop.f32.mrb[0].mxu0
  %v4176 = vpop.f32.mrb[0].mxu0
  %4177 = vdwg.mxu0
  %v4178 = vadd.f32 %v396, %v4173
  %v4179 = vxor.u32 %v4178, 2147483648
  %v4180 = vmul.f32 %v4179, 1.442695
  %v4181 = vpow.pop %v4180
  %v4182 = vadd.f32 %v4181, 1.0
  %v4183 = vrcp.pop %v4182
  %v4184 = vmul.f32 1.0, %v4183
  %v4185 = vmul.f32 %v4079, %v3732
  %v4186 = vmul.f32 %v4024, %v4129
  %v4187 = vadd.f32 %v4185, %v4186
  %v4188 = vsel %vm1186, %v4187, 0.0
  %v4189 = vtanh.pop %v4188
  %v4190 = vmul.f32 %v4184, %v4189
  %v4191 = vsel %vm1186, %v4190, 0.0
  %v4192 = vpack.c.bf16 %v3961, %v3961
  %v4193 = vld [vmem:[%s6] sm:$0xf]
  %v4194 = vld [vmem:[%s6 + $0x4] sm:$0xf]
  %v4197 = vunpack.c.l.b16 %v4193
  %v4198 = vunpack.c.l.b16 %v4194
  %v4199 = vpack.c.b16 %v4198, %v4197
  %v4202 = vsel %vm75, %v4192, 0
  %4204 = vmatprep.subr.bf16.mxu0 0
  %4205 = vmatpush1.bf16.msra.mxu0 %v4199
  %4206 = vmatprep.subr.bf16.mxu0 0
  %4207 = vmatpush1.bf16.msra.mxu0 0
  %4208 = vmatprep.subr.bf16.mxu0 0
  %4209 = vmatpush1.bf16.msra.mxu0 0
  %4210 = vmatprep.subr.bf16.mxu0 0
  %4211 = vmatpush1.bf16.msra.mxu0 0
  %4212 = vmatprep.subr.bf16.mxu0 0
  %4213 = vmatpush1.bf16.msra.mxu0 0
  %4214 = vmatprep.subr.bf16.mxu0 0
  %4215 = vmatpush1.bf16.msra.mxu0 0
  %4216 = vmatprep.subr.bf16.mxu0 0
  %4217 = vmatpush1.bf16.msra.mxu0 0
  %4218 = vmatprep.subr.bf16.mxu0 0
  %4219 = vmatpush1.bf16.msra.mxu0 0
  %4220 = vmatprep.subr.bf16.mxu0 0
  %4221 = vmatpush1.bf16.msra.mxu0 0
  %4222 = vmatprep.subr.bf16.mxu0 0
  %4223 = vmatpush1.bf16.msra.mxu0 0
  %4224 = vmatprep.subr.bf16.mxu0 0
  %4225 = vmatpush1.bf16.msra.mxu0 0
  %4226 = vmatprep.subr.bf16.mxu0 0
  %4227 = vmatpush1.bf16.msra.mxu0 0
  %4228 = vmatprep.subr.bf16.mxu0 0
  %4229 = vmatpush1.bf16.msra.mxu0 0
  %4230 = vmatprep.subr.bf16.mxu0 0
  %4231 = vmatpush1.bf16.msra.mxu0 0
  %4232 = vmatprep.subr.bf16.mxu0 0
  %4233 = vmatpush1.bf16.msra.mxu0 0
  %4234 = vmatprep.subr.bf16.mxu0 0
  %4235 = vmatpush1.bf16.msra.mxu0 0
  %4236 = vmatprep.mubr.bf16.mxu0 0
  %4237 = vmatmul.mubr.bf16.gmra.mrb[0].mxu0 %v4202
  %v4238 = vpop.f32.mrb[0].mxu0
  %v4239 = vadd.f32 0.0, %v4238
  %v4240 = vpop.f32.mrb[0].mxu0
  %v4241 = vpop.f32.mrb[0].mxu0
  %v4242 = vpop.f32.mrb[0].mxu0
  %4243 = vdwg.mxu0
  %v4244 = vadd.f32 %v449, %v4239
  %v4245 = vxor.u32 %v4244, 2147483648
  %v4246 = vmul.f32 %v4245, 1.442695
  %v4247 = vpow.pop %v4246
  %v4248 = vadd.f32 %v4247, 1.0
  %v4249 = vrcp.pop %v4248
  %v4250 = vmul.f32 1.0, %v4249
  %v4251 = vld [vmem:[%s1016] sm:$0xf]
  %v4252 = vld [vmem:[%s1016 + $0x4] sm:$0xf]
  %v4255 = vunpack.c.l.b16 %v4251
  %v4256 = vunpack.c.l.b16 %v4252
  %v4257 = vpack.c.b16 %v4256, %v4255
  %4259 = vmatprep.subr.bf16.mxu0 0
  %4260 = vmatpush1.bf16.msra.mxu0 %v4257
  %4261 = vmatprep.subr.bf16.mxu0 0
  %4262 = vmatpush1.bf16.msra.mxu0 0
  %4263 = vmatprep.subr.bf16.mxu0 0
  %4264 = vmatpush1.bf16.msra.mxu0 0
  %4265 = vmatprep.subr.bf16.mxu0 0
  %4266 = vmatpush1.bf16.msra.mxu0 0
  %4267 = vmatprep.subr.bf16.mxu0 0
  %4268 = vmatpush1.bf16.msra.mxu0 0
  %4269 = vmatprep.subr.bf16.mxu0 0
  %4270 = vmatpush1.bf16.msra.mxu0 0
  %4271 = vmatprep.subr.bf16.mxu0 0
  %4272 = vmatpush1.bf16.msra.mxu0 0
  %4273 = vmatprep.subr.bf16.mxu0 0
  %4274 = vmatpush1.bf16.msra.mxu0 0
  %4275 = vmatprep.subr.bf16.mxu0 0
  %4276 = vmatpush1.bf16.msra.mxu0 0
  %4277 = vmatprep.subr.bf16.mxu0 0
  %4278 = vmatpush1.bf16.msra.mxu0 0
  %4279 = vmatprep.subr.bf16.mxu0 0
  %4280 = vmatpush1.bf16.msra.mxu0 0
  %4281 = vmatprep.subr.bf16.mxu0 0
  %4282 = vmatpush1.bf16.msra.mxu0 0
  %4283 = vmatprep.subr.bf16.mxu0 0
  %4284 = vmatpush1.bf16.msra.mxu0 0
  %4285 = vmatprep.subr.bf16.mxu0 0
  %4286 = vmatpush1.bf16.msra.mxu0 0
  %4287 = vmatprep.subr.bf16.mxu0 0
  %4288 = vmatpush1.bf16.msra.mxu0 0
  %4289 = vmatprep.subr.bf16.mxu0 0
  %4290 = vmatpush1.bf16.msra.mxu0 0
  %4291 = vmatprep.mubr.bf16.mxu0 0
  %4292 = vmatmul.mubr.bf16.gmra.mrb[0].mxu0 %v4202
  %v4293 = vpop.f32.mrb[0].mxu0
  %v4294 = vadd.f32 0.0, %v4293
  %v4295 = vpop.f32.mrb[0].mxu0
  %v4296 = vpop.f32.mrb[0].mxu0
  %v4297 = vpop.f32.mrb[0].mxu0
  %4298 = vdwg.mxu0
  %v4299 = vadd.f32 %v531, %v4294
  %v4300 = vxor.u32 %v4299, 2147483648
  %v4301 = vmul.f32 %v4300, 1.442695
  %v4302 = vpow.pop %v4301
  %v4303 = vadd.f32 %v4302, 1.0
  %v4304 = vrcp.pop %v4303
  %v4305 = vmul.f32 1.0, %v4304
  %v4306 = vld [vmem:[%s1072] sm:$0xf]
  %v4307 = vld [vmem:[%s1072 + $0x4] sm:$0xf]
  %v4310 = vunpack.c.l.b16 %v4306
  %v4311 = vunpack.c.l.b16 %v4307
  %v4312 = vpack.c.b16 %v4311, %v4310
  %4314 = vmatprep.subr.bf16.mxu0 0
  %4315 = vmatpush1.bf16.msra.mxu0 %v4312
  %4316 = vmatprep.subr.bf16.mxu0 0
  %4317 = vmatpush1.bf16.msra.mxu0 0
  %4318 = vmatprep.subr.bf16.mxu0 0
  %4319 = vmatpush1.bf16.msra.mxu0 0
  %4320 = vmatprep.subr.bf16.mxu0 0
  %4321 = vmatpush1.bf16.msra.mxu0 0
  %4322 = vmatprep.subr.bf16.mxu0 0
  %4323 = vmatpush1.bf16.msra.mxu0 0
  %4324 = vmatprep.subr.bf16.mxu0 0
  %4325 = vmatpush1.bf16.msra.mxu0 0
  %4326 = vmatprep.subr.bf16.mxu0 0
  %4327 = vmatpush1.bf16.msra.mxu0 0
  %4328 = vmatprep.subr.bf16.mxu0 0
  %4329 = vmatpush1.bf16.msra.mxu0 0
  %4330 = vmatprep.subr.bf16.mxu0 0
  %4331 = vmatpush1.bf16.msra.mxu0 0
  %4332 = vmatprep.subr.bf16.mxu0 0
  %4333 = vmatpush1.bf16.msra.mxu0 0
  %4334 = vmatprep.subr.bf16.mxu0 0
  %4335 = vmatpush1.bf16.msra.mxu0 0
  %4336 = vmatprep.subr.bf16.mxu0 0
  %4337 = vmatpush1.bf16.msra.mxu0 0
  %4338 = vmatprep.subr.bf16.mxu0 0
  %4339 = vmatpush1.bf16.msra.mxu0 0
  %4340 = vmatprep.subr.bf16.mxu0 0
  %4341 = vmatpush1.bf16.msra.mxu0 0
  %4342 = vmatprep.subr.bf16.mxu0 0
  %4343 = vmatpush1.bf16.msra.mxu0 0
  %4344 = vmatprep.subr.bf16.mxu0 0
  %4345 = vmatpush1.bf16.msra.mxu0 0
  %4346 = vmatprep.mubr.bf16.mxu0 0
  %4347 = vmatmul.mubr.bf16.gmra.mrb[0].mxu0 %v4202
  %v4348 = vpop.f32.mrb[0].mxu0
  %v4349 = vadd.f32 0.0, %v4348
  %v4350 = vpop.f32.mrb[0].mxu0
  %v4351 = vpop.f32.mrb[0].mxu0
  %v4352 = vpop.f32.mrb[0].mxu0
  %4353 = vdwg.mxu0
  %v4354 = vadd.f32 %v613, %v4349
  %v4355 = vtanh.pop %v4354
  %v4356 = vld [vmem:[%s1123] sm:$0xf]
  %v4357 = vld [vmem:[%s1123 + $0x4] sm:$0xf]
  %v4360 = vunpack.c.l.b16 %v4356
  %v4361 = vunpack.c.l.b16 %v4357
  %v4362 = vpack.c.b16 %v4361, %v4360
  %4364 = vmatprep.subr.bf16.mxu0 0
  %4365 = vmatpush1.bf16.msra.mxu0 %v4362
  %4366 = vmatprep.subr.bf16.mxu0 0
  %4367 = vmatpush1.bf16.msra.mxu0 0
  %4368 = vmatprep.subr.bf16.mxu0 0
  %4369 = vmatpush1.bf16.msra.mxu0 0
  %4370 = vmatprep.subr.bf16.mxu0 0
  %4371 = vmatpush1.bf16.msra.mxu0 0
  %4372 = vmatprep.subr.bf16.mxu0 0
  %4373 = vmatpush1.bf16.msra.mxu0 0
  %4374 = vmatprep.subr.bf16.mxu0 0
  %4375 = vmatpush1.bf16.msra.mxu0 0
  %4376 = vmatprep.subr.bf16.mxu0 0
  %4377 = vmatpush1.bf16.msra.mxu0 0
  %4378 = vmatprep.subr.bf16.mxu0 0
  %4379 = vmatpush1.bf16.msra.mxu0 0
  %4380 = vmatprep.subr.bf16.mxu0 0
  %4381 = vmatpush1.bf16.msra.mxu0 0
  %4382 = vmatprep.subr.bf16.mxu0 0
  %4383 = vmatpush1.bf16.msra.mxu0 0
  %4384 = vmatprep.subr.bf16.mxu0 0
  %4385 = vmatpush1.bf16.msra.mxu0 0
  %4386 = vmatprep.subr.bf16.mxu0 0
  %4387 = vmatpush1.bf16.msra.mxu0 0
  %4388 = vmatprep.subr.bf16.mxu0 0
  %4389 = vmatpush1.bf16.msra.mxu0 0
  %4390 = vmatprep.subr.bf16.mxu0 0
  %4391 = vmatpush1.bf16.msra.mxu0 0
  %4392 = vmatprep.subr.bf16.mxu0 0
  %4393 = vmatpush1.bf16.msra.mxu0 0
  %4394 = vmatprep.subr.bf16.mxu0 0
  %4395 = vmatpush1.bf16.msra.mxu0 0
  %4396 = vmatprep.mubr.bf16.mxu0 0
  %4397 = vmatmul.mubr.bf16.gmra.mrb[0].mxu0 %v4202
  %v4398 = vpop.f32.mrb[0].mxu0
  %v4399 = vadd.f32 0.0, %v4398
  %v4400 = vpop.f32.mrb[0].mxu0
  %v4401 = vpop.f32.mrb[0].mxu0
  %v4402 = vpop.f32.mrb[0].mxu0
  %4403 = vdwg.mxu0
  %v4404 = vadd.f32 %v695, %v4399
  %v4405 = vxor.u32 %v4404, 2147483648
  %v4406 = vmul.f32 %v4405, 1.442695
  %v4407 = vpow.pop %v4406
  %v4408 = vadd.f32 %v4407, 1.0
  %v4409 = vrcp.pop %v4408
  %v4410 = vmul.f32 1.0, %v4409
  %v4411 = vmul.f32 %v4305, %v3958
  %v4412 = vmul.f32 %v4250, %v4355
  %v4413 = vadd.f32 %v4411, %v4412
  %v4414 = vsel %vm955, %v4413, 0.0
  %v4415 = vtanh.pop %v4414
  %v4416 = vmul.f32 %v4410, %v4415
  %v4417 = vsel %vm955, %v4416, 0.0
  %s4418 = scalar_lea.vmem %s8, 56
  %4419 = vst.msk [vmem:[%s4418] sm:$0xff] %vm75, %v4191
  %4420 = vst.msk [vmem:[%s9] sm:$0xff] %vm75, %v4417
  // Predicated region
  $region34: #{semattn_forward.4} parent=0 // pred_check
    _
  $region35: #{semattn_forward.4} parent=0 // pred_check_branch
    %4422 = sbr.rel (0) target = $region37
  $region36: #{semattn_forward.4} parent=0 // pred_region
    _
  $region37: #{semattn_forward.4} parent=0 // pred_fallthru
    _
  // Predicated region
  $region38: #{semattn_forward.4} parent=0 // pred_check
    _
  $region39: #{semattn_forward.4} parent=0 // pred_check_branch
    %4424 = sbr.rel (0) target = $region41
  $region40: #{semattn_forward.4} parent=0 // pred_region
    _
  $region41: #{semattn_forward.4} parent=0 // pred_fallthru
    _
  // Predicated region
  $region42: #{semattn_forward.4} parent=0 // pred_check
    _
  $region43: #{semattn_forward.4} parent=0 // pred_check_branch
    %4426 = sbr.rel (0) target = $region45
  $region44: #{semattn_forward.4} parent=0 // pred_region
    _
  $region45: #{semattn_forward.4} parent=0 // pred_fallthru
    _
  // Predicated region
  $region46: #{semattn_forward.4} parent=0 // pred_check
    _
  $region47: #{semattn_forward.4} parent=0 // pred_check_branch
    %4428 = sbr.rel (0) target = $region49
  $region48: #{semattn_forward.4} parent=0 // pred_region
    _
  $region49: #{semattn_forward.4} parent=0 // pred_fallthru
    _

</llo_original>
